<compile_context>
chip_gen: v7x
topology: tpu7x:2x2x1
jax: 0.10.0
libtpu: 0.0.40
codegen_flags: <defaults>
</compile_context>

<pallas_src>
import functools

import numpy as np
import jax
import jax.numpy as jnp
from jax.experimental import pallas as pl
from jax.experimental.pallas import tpu as pltpu

LANE = 128  # final logits store is padded to a lane-dense 128-wide block


def _round_up(x, m):
    return (x + m - 1) // m * m


# ----------------------------------------------------------------------------
# Kernel A: conv1 + bias + ReLU + 2x2/2 max-pool (pool as quadrant-max epilogue)
# ----------------------------------------------------------------------------
def _conv1_relu_pool_kernel(p00_ref, p01_ref, p10_ref, p11_ref, w_ref, b_ref,
                            o_ref):
    """p*_ref: (rows, 75) bf16 im2col patches of the conv positions mapping to
    one pooling quadrant.  w_ref: (75, 6) bf16.  b_ref: (1, 6) f32.
    o_ref: (rows, 6) bf16 pooled, ReLU'd conv1 output (compact, unpadded)."""
    w = w_ref[...]
    y00 = jnp.dot(p00_ref[...], w, preferred_element_type=jnp.float32)
    y01 = jnp.dot(p01_ref[...], w, preferred_element_type=jnp.float32)
    y10 = jnp.dot(p10_ref[...], w, preferred_element_type=jnp.float32)
    y11 = jnp.dot(p11_ref[...], w, preferred_element_type=jnp.float32)
    m = jnp.maximum(jnp.maximum(y00, y01), jnp.maximum(y10, y11))
    # relu(max_q(conv_q) + b) == maxpool(relu(conv + b)): shared bias, monotone relu.
    o_ref[...] = jnp.maximum(m + b_ref[...], 0.0).astype(o_ref.dtype)


# ----------------------------------------------------------------------------
# Kernel B: conv2 (as dense per-quadrant matmuls) + bias + ReLU + pool
#           + fc1/ReLU + fc2/ReLU + fc3, all VMEM-resident.
# ----------------------------------------------------------------------------
def _conv2_fc_fused_kernel(h1_ref, w2q0_ref, w2q1_ref, w2q2_ref, w2q3_ref,
                           b2_ref, w3_ref, b3_ref, w4_ref, b4_ref, w5_ref,
                           b5_ref, o_ref):
    x = h1_ref[...]                                          # (tm, 1176) bf16
    z0 = jnp.dot(x, w2q0_ref[...], preferred_element_type=jnp.float32)
    z1 = jnp.dot(x, w2q1_ref[...], preferred_element_type=jnp.float32)
    z2 = jnp.dot(x, w2q2_ref[...], preferred_element_type=jnp.float32)
    z3 = jnp.dot(x, w2q3_ref[...], preferred_element_type=jnp.float32)
    h = jnp.maximum(jnp.maximum(z0, z1), jnp.maximum(z2, z3))
    h = jnp.maximum(h + b2_ref[...], 0.0)                    # conv2+pool+relu, (tm, 400) f32
    h = jnp.maximum(
        jnp.dot(h, w3_ref[...], preferred_element_type=jnp.float32)
        + b3_ref[...], 0.0)                                  # fc1 + relu
    h = jnp.maximum(
        jnp.dot(h, w4_ref[...], preferred_element_type=jnp.float32)
        + b4_ref[...], 0.0)                                  # fc2 + relu
    h = jnp.dot(h, w5_ref[...], preferred_element_type=jnp.float32) + b5_ref[...]
    o_ref[...] = h.astype(o_ref.dtype)                       # lane-dense (tm, 128)


# ----------------------------------------------------------------------------
# Pallas wrappers
# ----------------------------------------------------------------------------
def _conv1_pool_quadrant_patches(x_nhwc, a, b):
    """im2col of the conv1 positions landing in pool quadrant (a, b).

    x_nhwc: (N, 32, 32, 3) bf16.  Returns (N*196, 75) bf16; rows ordered
    (image, out_row, out_col), features ordered (di, dj, ci)."""
    n = x_nhwc.shape[0]
    cols = []
    for di in range(5):
        for dj in range(5):
            r0, c0 = a + di, b + dj
            sl = jax.lax.slice(x_nhwc, (0, r0, c0, 0),
                               (n, r0 + 27, c0 + 27, 3), (1, 2, 2, 1))
            cols.append(sl)                                   # (N, 14, 14, 3)
    p = jnp.stack(cols, axis=3)                               # (N, 14, 14, 25, 3)
    return p.reshape(n * 196, 75)


def conv1_relu_pool(x_nhwc, w1, b1, *, bt):
    """Fused conv1+bias+ReLU+pool.  x_nhwc batch must be a multiple of bt.
    Returns (N*196, 6) bf16 (compact: no lane padding)."""
    n = x_nhwc.shape[0]
    quads = [_conv1_pool_quadrant_patches(x_nhwc, a, b)
             for (a, b) in ((0, 0), (0, 1), (1, 0), (1, 1))]
    rows = n * 196
    block_rows = bt * 196
    grid = (rows // block_rows,)
    flops = 2 * 4 * rows * 75 * 6
    bytes_accessed = (4 * rows * 75 * 2      # bf16 patches
                      + 75 * 6 * 2 + 6 * 4   # weights + bias
                      + rows * 6 * 2)        # bf16 compact output
    patch_spec = pl.BlockSpec((block_rows, 75), lambda i: (i, 0))
    return pl.pallas_call(
        _conv1_relu_pool_kernel,
        out_shape=jax.ShapeDtypeStruct((rows, 6), jnp.bfloat16),
        grid=grid,
        in_specs=[patch_spec] * 4 + [
            pl.BlockSpec((75, 6), lambda i: (0, 0)),
            pl.BlockSpec((1, 6), lambda i: (0, 0)),
        ],
        out_specs=pl.BlockSpec((block_rows, 6), lambda i: (i, 0)),
        compiler_params=pltpu.CompilerParams(
            dimension_semantics=("parallel",),
            vmem_limit_bytes=32 * 1024 * 1024),
        cost_estimate=pl.CostEstimate(flops=flops, transcendentals=0,
                                      bytes_accessed=bytes_accessed),
    )(*quads, w1, b1)


def conv2_fc_fused(h1_flat, w2q, b2, w3, b3, w4, b4, w5, b5, *, tile_m):
    """h1_flat: (M_pad, 1176) bf16 -> (M_pad, 128) f32 logits (lane-dense)."""
    m_pad, k1 = h1_flat.shape
    grid = (m_pad // tile_m,)
    n2 = w2q[0].shape[1]                    # 400
    n_fc1, n_fc2, n_out = w3.shape[1], w4.shape[1], w5.shape[1]
    flops = 2 * m_pad * (4 * k1 * n2 + n2 * n_fc1 + n_fc1 * n_fc2
                         + n_fc2 * n_out)
    bytes_accessed = (m_pad * k1 * 2                     # bf16 activations
                      + 4 * k1 * n2 * 2                  # bf16 dense conv2 weights
                      + 4 * (n2 * n_fc1 + n_fc1 * n_fc2 + n_fc2 * n_out)
                      + 4 * (n2 + n_fc1 + n_fc2 + n_out)
                      + 4 * m_pad * n_out)               # f32 logits

    def const(shape):
        return pl.BlockSpec(shape, lambda i: (0, 0))

    return pl.pallas_call(
        _conv2_fc_fused_kernel,
        out_shape=jax.ShapeDtypeStruct((m_pad, n_out), jnp.float32),
        grid=grid,
        in_specs=[pl.BlockSpec((tile_m, k1), lambda i: (i, 0))]
                 + [const((k1, n2))] * 4
                 + [const((1, n2)),
                    const((n2, n_fc1)), const((1, n_fc1)),
                    const((n_fc1, n_fc2)), const((1, n_fc2)),
                    const((n_fc2, n_out)), const((1, n_out))],
        out_specs=pl.BlockSpec((tile_m, n_out), lambda i: (i, 0)),
        compiler_params=pltpu.CompilerParams(
            dimension_semantics=("parallel",),
            vmem_limit_bytes=32 * 1024 * 1024),
        cost_estimate=pl.CostEstimate(flops=flops, transcendentals=0,
                                      bytes_accessed=bytes_accessed),
    )(h1_flat, *w2q, b2, w3, b3, w4, b4, w5, b5)


# ----------------------------------------------------------------------------
# Parameters (PyTorch layout) + one-time kernel-layout preparation
# ----------------------------------------------------------------------------
def init_params(key, num_classes=10):
    ks = jax.random.split(key, 10)

    def rnd(k, shape, scale=0.1):
        return scale * jax.random.normal(k, shape, dtype=jnp.float32)

    return {
        "conv1_w": rnd(ks[0], (6, 3, 5, 5)),
        "conv1_b": rnd(ks[1], (6,)),
        "conv2_w": rnd(ks[2], (16, 6, 5, 5)),
        "conv2_b": rnd(ks[3], (16,)),
        "fc1_w": rnd(ks[4], (120, 16 * 5 * 5)),   # PyTorch Linear: (out, in)
        "fc1_b": rnd(ks[5], (120,)),
        "fc2_w": rnd(ks[6], (84, 120)),
        "fc2_b": rnd(ks[7], (84,)),
        "fc3_w": rnd(ks[8], (num_classes, 84)),
        "fc3_b": rnd(ks[9], (num_classes,)),
    }


def prepare_params(params, *, num_classes):
    """One-time (outside jit) conversion into kernel layouts:
      * conv1 weight -> (75, 6) bf16, rows ordered (di, dj, ci);
      * conv2 im2col + pooling-quadrant selection folded into four dense
        (1176, 400) bf16 matrices (row f1 = (i*14+j)*6+ci matches kernel A's
        flattened output; column f2 = (oi*5+oj)*16+co);
      * fc1 rows permuted so PyTorch's NCHW flatten disappears from the
        jitted path; fc3 zero-padded to a lane-dense 128-wide output."""
    assert num_classes <= LANE

    # conv1: (6, 3, 5, 5) OIHW -> (75, 6)
    w1 = np.asarray(params["conv1_w"], np.float32)
    w1 = w1.transpose(2, 3, 1, 0).reshape(75, 6)
    b1 = np.asarray(params["conv1_b"], np.float32).reshape(1, 6)

    # conv2 dense per-quadrant weights
    w2 = np.asarray(params["conv2_w"], np.float32)            # (16, 6, 5, 5)
    w2q = []
    for a in (0, 1):
        for b in (0, 1):
            dense = np.zeros((14, 14, 6, 5, 5, 16), np.float32)
            for oi in range(5):
                for oj in range(5):
                    for di in range(5):
                        for dj in range(5):
                            dense[2 * oi + a + di, 2 * oj + b + dj, :,
                                  oi, oj, :] = w2[:, :, di, dj].T
            w2q.append(jnp.asarray(dense.reshape(1176, 400), jnp.bfloat16))
    b2 = np.tile(np.asarray(params["conv2_b"], np.float32), 25).reshape(1, 400)

    # fc1: permute input order (co, oi, oj) [PyTorch NCHW flatten] -> (oi, oj, co)
    fc1 = np.asarray(params["fc1_w"], np.float32).T.reshape(16, 5, 5, 120)
    fc1 = fc1.transpose(1, 2, 0, 3).reshape(400, 120)
    b3 = np.asarray(params["fc1_b"], np.float32).reshape(1, 120)

    fc2 = np.asarray(params["fc2_w"], np.float32).T           # (120, 84)
    b4 = np.asarray(params["fc2_b"], np.float32).reshape(1, 84)

    fc3 = np.asarray(params["fc3_w"], np.float32).T           # (84, C)
    fc3 = np.pad(fc3, ((0, 0), (0, LANE - fc3.shape[1])))
    b5 = np.pad(np.asarray(params["fc3_b"], np.float32),
                (0, LANE - num_classes)).reshape(1, LANE)

    return {
        "conv1_w": jnp.asarray(w1, jnp.bfloat16),
        "conv1_b": jnp.asarray(b1),
        "conv2_wq": tuple(w2q),
        "conv2_b": jnp.asarray(b2),
        "fc1_w": jnp.asarray(fc1),
        "fc1_b": jnp.asarray(b3),
        "fc2_w": jnp.asarray(fc2),
        "fc2_b": jnp.asarray(b4),
        "fc3_w": jnp.asarray(fc3),
        "fc3_b": jnp.asarray(b5),
    }


# ----------------------------------------------------------------------------
# Forward pass (semantics of the PyTorch CNNSTL10.forward)
# ----------------------------------------------------------------------------
def _choose_bt(n):
    if n <= 4:
        return n       # single full-rows block
    if n <= 16:
        return 4       # 784-row blocks (>=2 grid steps for 2-TC chips)
    return 8           # 1568-row blocks


def _choose_tile_m(n):
    if n > 256:
        return 256
    tm = _round_up(n, 8)
    if tm >= 32:       # split so a 2-TensorCore chip gets >=2 grid steps
        tm = _round_up(tm // 2, 16)
    return tm


def cnn_stl10_forward(x_nchw, p, *, num_classes):
    n = x_nchw.shape[0]
    x = jnp.transpose(x_nchw, (0, 2, 3, 1)).astype(jnp.bfloat16)  # (N,32,32,3)

    # conv1 + bias + ReLU + 2x2 max-pool -> compact (N*196, 6) bf16.
    bt = _choose_bt(n)
    n_pad1 = _round_up(n, bt)
    if n_pad1 > n:
        x = jnp.pad(x, ((0, n_pad1 - n), (0, 0), (0, 0), (0, 0)))
    h1 = conv1_relu_pool(x, p["conv1_w"], p["conv1_b"], bt=bt)

    # Free, contiguous reshape to (N, 14*14*6); rows feed the dense conv2
    # weights directly (no XLA-side im2col / transpose between the kernels).
    h1 = h1[:n * 196].reshape(n, 14 * 14 * 6)

    tile_m = _choose_tile_m(n)
    m_pad = _round_up(n, tile_m)
    if m_pad > n:
        h1 = jnp.pad(h1, ((0, m_pad - n), (0, 0)))

    out = conv2_fc_fused(h1, p["conv2_wq"], p["conv2_b"],
                         p["fc1_w"], p["fc1_b"], p["fc2_w"], p["fc2_b"],
                         p["fc3_w"], p["fc3_b"], tile_m=tile_m)
    return out[:n, :num_classes]


# ----------------------------------------------------------------------------
# Pure-JAX reference (no Pallas) for a numerics sanity check
# ----------------------------------------------------------------------------
def reference_forward(x_nchw, params):
    x = x_nchw.astype(jnp.float32)

    def conv(x, w, b):
        y = jax.lax.conv_general_dilated(
            x, w, window_strides=(1, 1), padding="VALID",
            dimension_numbers=("NCHW", "OIHW", "NCHW"))
        return y + b[None, :, None, None]

    def pool(x):
        return jax.lax.reduce_window(x, -jnp.inf, jax.lax.max,
                                     (1, 1, 2, 2), (1, 1, 2, 2), "VALID")

    y = pool(jax.nn.relu(conv(x, params["conv1_w"], params["conv1_b"])))
    y = pool(jax.nn.relu(conv(y, params["conv2_w"], params["conv2_b"])))
    y = y.reshape(y.shape[0], -1)
    y = jax.nn.relu(y @ params["fc1_w"].T + params["fc1_b"])
    y = jax.nn.relu(y @ params["fc2_w"].T + params["fc2_b"])
    return y @ params["fc3_w"].T + params["fc3_b"]


if __name__ == "__main__":
    key = jax.random.PRNGKey(0)
    k_param, k_x = jax.random.split(key)

    num_classes = 10
    params = init_params(k_param, num_classes=num_classes)
    prepped = prepare_params(params, num_classes=num_classes)  # one-time, outside jit

    # The 16*5*5 flatten implies a 32x32 spatial input.
    x = jax.random.normal(k_x, (2, 3, 32, 32), dtype=jnp.float32)

    fwd = jax.jit(functools.partial(cnn_stl10_forward,
                                    num_classes=num_classes))
    logits = jax.block_until_ready(fwd(x, prepped))

    assert logits.shape == (2, num_classes), logits.shape
    assert bool(jnp.all(jnp.isfinite(logits)))

    # Sanity check vs the f32 XLA reference.  Tolerance covers bf16 rounding
    # of the conv-path operands (logits are O(0.2); observed error is ~1e-2).
    ref = jax.block_until_ready(jax.jit(reference_forward)(x, params))
    max_err = float(jnp.max(jnp.abs(logits - ref)))
    assert max_err < 1e-1, f"mismatch vs reference: {max_err}"

    print("KERNEL_OK")
</pallas_src>

<mosaic_0001>
module attributes {stable_mosaic.version = 11 : i64} {
  func.func @_conv1_relu_pool_kernel(%arg0: i32, %arg1: memref<392x75xbf16, #tpu.memory_space<vmem>>, %arg2: memref<392x75xbf16, #tpu.memory_space<vmem>>, %arg3: memref<392x75xbf16, #tpu.memory_space<vmem>>, %arg4: memref<392x75xbf16, #tpu.memory_space<vmem>>, %arg5: memref<75x6xbf16, #tpu.memory_space<vmem>>, %arg6: memref<1x6xf32, #tpu.memory_space<vmem>>, %arg7: memref<392x6xbf16, #tpu.memory_space<vmem>>) attributes {dimension_semantics = [#tpu.dimension_semantics<parallel>], iteration_bounds = array<i64: 1>, scalar_prefetch = 0 : i64, scratch_operands = 0 : i64, tpu.core_type = #tpu.core_type<tc>, window_params = [{transform_indices = @transform_0, window_bounds = array<i64: 392, 75>}, {transform_indices = @transform_1, window_bounds = array<i64: 392, 75>}, {transform_indices = @transform_2, window_bounds = array<i64: 392, 75>}, {transform_indices = @transform_3, window_bounds = array<i64: 392, 75>}, {pipeline_mode = #tpu.pipeline_mode<synchronous>, transform_indices = @transform_4, window_bounds = array<i64: 75, 6>}, {pipeline_mode = #tpu.pipeline_mode<synchronous>, transform_indices = @transform_5, window_bounds = array<i64: 1, 6>}, {transform_indices = @transform_6, window_bounds = array<i64: 392, 6>}]} {
    %c0 = arith.constant 0 : index
    %c0_0 = arith.constant 0 : index
    %0 = vector.load %arg5[%c0, %c0_0] : memref<75x6xbf16, #tpu.memory_space<vmem>>, vector<75x6xbf16>
    %c0_1 = arith.constant 0 : index
    %c0_2 = arith.constant 0 : index
    %1 = vector.load %arg1[%c0_1, %c0_2] : memref<392x75xbf16, #tpu.memory_space<vmem>>, vector<392x75xbf16>
    %cst = arith.constant dense<0.000000e+00> : vector<392x6xf32>
    %2 = tpu.matmul %1, %0, %cst {dimension_numbers = #tpu.dot_dimension_numbers<[1], [0], [0], [1], [0, 0, 1, 1], [], []>} : vector<392x75xbf16>, vector<75x6xbf16>, vector<392x6xf32> -> vector<392x6xf32>
    %c0_3 = arith.constant 0 : index
    %c0_4 = arith.constant 0 : index
    %3 = vector.load %arg2[%c0_3, %c0_4] : memref<392x75xbf16, #tpu.memory_space<vmem>>, vector<392x75xbf16>
    %cst_5 = arith.constant dense<0.000000e+00> : vector<392x6xf32>
    %4 = tpu.matmul %3, %0, %cst_5 {dimension_numbers = #tpu.dot_dimension_numbers<[1], [0], [0], [1], [0, 0, 1, 1], [], []>} : vector<392x75xbf16>, vector<75x6xbf16>, vector<392x6xf32> -> vector<392x6xf32>
    %c0_6 = arith.constant 0 : index
    %c0_7 = arith.constant 0 : index
    %5 = vector.load %arg3[%c0_6, %c0_7] : memref<392x75xbf16, #tpu.memory_space<vmem>>, vector<392x75xbf16>
    %cst_8 = arith.constant dense<0.000000e+00> : vector<392x6xf32>
    %6 = tpu.matmul %5, %0, %cst_8 {dimension_numbers = #tpu.dot_dimension_numbers<[1], [0], [0], [1], [0, 0, 1, 1], [], []>} : vector<392x75xbf16>, vector<75x6xbf16>, vector<392x6xf32> -> vector<392x6xf32>
    %c0_9 = arith.constant 0 : index
    %c0_10 = arith.constant 0 : index
    %7 = vector.load %arg4[%c0_9, %c0_10] : memref<392x75xbf16, #tpu.memory_space<vmem>>, vector<392x75xbf16>
    %cst_11 = arith.constant dense<0.000000e+00> : vector<392x6xf32>
    %8 = tpu.matmul %7, %0, %cst_11 {dimension_numbers = #tpu.dot_dimension_numbers<[1], [0], [0], [1], [0, 0, 1, 1], [], []>} : vector<392x75xbf16>, vector<75x6xbf16>, vector<392x6xf32> -> vector<392x6xf32>
    %9 = arith.maximumf %2, %4 : vector<392x6xf32>
    %10 = arith.maximumf %6, %8 : vector<392x6xf32>
    %11 = arith.maximumf %9, %10 : vector<392x6xf32>
    %c0_12 = arith.constant 0 : index
    %c0_13 = arith.constant 0 : index
    %12 = vector.load %arg6[%c0_12, %c0_13] : memref<1x6xf32, #tpu.memory_space<vmem>>, vector<1x6xf32>
    %13 = vector.broadcast %12 : vector<1x6xf32> to vector<392x6xf32>
    %14 = arith.addf %11, %13 : vector<392x6xf32>
    %cst_14 = arith.constant 0.000000e+00 : f32
    %15 = vector.broadcast %cst_14 : f32 to vector<392x6xf32>
    %16 = arith.maximumf %14, %15 : vector<392x6xf32>
    %17 = arith.truncf %16 : vector<392x6xf32> to vector<392x6xbf16>
    %c0_15 = arith.constant 0 : index
    %c0_16 = arith.constant 0 : index
    %18 = vector.load %arg7[%c0_15, %c0_16] : memref<392x6xbf16, #tpu.memory_space<vmem>>, vector<392x6xbf16>
    tpu.vector_store %arg7[%c0_15, %c0_16], %17 {strides = array<i32>} : memref<392x6xbf16, #tpu.memory_space<vmem>>, vector<392x6xbf16>,
    return
  }
  func.func @transform_0(%arg0: i32) -> (i32, i32) {
    %c0_i32 = arith.constant 0 : i32
    %c0_i32_0 = arith.constant 0 : i32
    return %arg0, %c0_i32 : i32, i32
  }
  func.func @transform_1(%arg0: i32) -> (i32, i32) {
    %c0_i32 = arith.constant 0 : i32
    %c0_i32_0 = arith.constant 0 : i32
    return %arg0, %c0_i32 : i32, i32
  }
  func.func @transform_2(%arg0: i32) -> (i32, i32) {
    %c0_i32 = arith.constant 0 : i32
    %c0_i32_0 = arith.constant 0 : i32
    return %arg0, %c0_i32 : i32, i32
  }
  func.func @transform_3(%arg0: i32) -> (i32, i32) {
    %c0_i32 = arith.constant 0 : i32
    %c0_i32_0 = arith.constant 0 : i32
    return %arg0, %c0_i32 : i32, i32
  }
  func.func @transform_4(%arg0: i32) -> (i32, i32) {
    %c0_i32 = arith.constant 0 : i32
    %c0_i32_0 = arith.constant 0 : i32
    %c0_i32_1 = arith.constant 0 : i32
    return %c0_i32, %c0_i32_0 : i32, i32
  }
  func.func @transform_5(%arg0: i32) -> (i32, i32) {
    %c0_i32 = arith.constant 0 : i32
    %c0_i32_0 = arith.constant 0 : i32
    %c0_i32_1 = arith.constant 0 : i32
    return %c0_i32, %c0_i32_0 : i32, i32
  }
  func.func @transform_6(%arg0: i32) -> (i32, i32) {
    %c0_i32 = arith.constant 0 : i32
    %c0_i32_0 = arith.constant 0 : i32
    return %arg0, %c0_i32 : i32, i32
  }
}

module attributes {stable_mosaic.version = 11 : i64} {
  func.func @_conv2_fc_fused_kernel(%arg0: i32, %arg1: memref<8x1176xbf16, #tpu.memory_space<vmem>>, %arg2: memref<1176x400xbf16, #tpu.memory_space<vmem>>, %arg3: memref<1176x400xbf16, #tpu.memory_space<vmem>>, %arg4: memref<1176x400xbf16, #tpu.memory_space<vmem>>, %arg5: memref<1176x400xbf16, #tpu.memory_space<vmem>>, %arg6: memref<1x400xf32, #tpu.memory_space<vmem>>, %arg7: memref<400x120xf32, #tpu.memory_space<vmem>>, %arg8: memref<1x120xf32, #tpu.memory_space<vmem>>, %arg9: memref<120x84xf32, #tpu.memory_space<vmem>>, %arg10: memref<1x84xf32, #tpu.memory_space<vmem>>, %arg11: memref<84x128xf32, #tpu.memory_space<vmem>>, %arg12: memref<1x128xf32, #tpu.memory_space<vmem>>, %arg13: memref<8x128xf32, #tpu.memory_space<vmem>>) attributes {dimension_semantics = [#tpu.dimension_semantics<parallel>], iteration_bounds = array<i64: 1>, scalar_prefetch = 0 : i64, scratch_operands = 0 : i64, tpu.core_type = #tpu.core_type<tc>, window_params = [{transform_indices = @transform_0, window_bounds = array<i64: 8, 1176>}, {pipeline_mode = #tpu.pipeline_mode<synchronous>, transform_indices = @transform_1, window_bounds = array<i64: 1176, 400>}, {pipeline_mode = #tpu.pipeline_mode<synchronous>, transform_indices = @transform_2, window_bounds = array<i64: 1176, 400>}, {pipeline_mode = #tpu.pipeline_mode<synchronous>, transform_indices = @transform_3, window_bounds = array<i64: 1176, 400>}, {pipeline_mode = #tpu.pipeline_mode<synchronous>, transform_indices = @transform_4, window_bounds = array<i64: 1176, 400>}, {pipeline_mode = #tpu.pipeline_mode<synchronous>, transform_indices = @transform_5, window_bounds = array<i64: 1, 400>}, {pipeline_mode = #tpu.pipeline_mode<synchronous>, transform_indices = @transform_6, window_bounds = array<i64: 400, 120>}, {pipeline_mode = #tpu.pipeline_mode<synchronous>, transform_indices = @transform_7, window_bounds = array<i64: 1, 120>}, {pipeline_mode = #tpu.pipeline_mode<synchronous>, transform_indices = @transform_8, window_bounds = array<i64: 120, 84>}, {pipeline_mode = #tpu.pipeline_mode<synchronous>, transform_indices = @transform_9, window_bounds = array<i64: 1, 84>}, {pipeline_mode = #tpu.pipeline_mode<synchronous>, transform_indices = @transform_10, window_bounds = array<i64: 84, 128>}, {pipeline_mode = #tpu.pipeline_mode<synchronous>, transform_indices = @transform_11, window_bounds = array<i64: 1, 128>}, {transform_indices = @transform_12, window_bounds = array<i64: 8, 128>}]} {
    %c0 = arith.constant 0 : index
    %c0_0 = arith.constant 0 : index
    %0 = vector.load %arg1[%c0, %c0_0] : memref<8x1176xbf16, #tpu.memory_space<vmem>>, vector<8x1176xbf16>
    %c0_1 = arith.constant 0 : index
    %c0_2 = arith.constant 0 : index
    %1 = vector.load %arg2[%c0_1, %c0_2] : memref<1176x400xbf16, #tpu.memory_space<vmem>>, vector<1176x400xbf16>
    %cst = arith.constant dense<0.000000e+00> : vector<8x400xf32>
    %2 = tpu.matmul %0, %1, %cst {dimension_numbers = #tpu.dot_dimension_numbers<[1], [0], [0], [1], [0, 0, 1, 1], [], []>} : vector<8x1176xbf16>, vector<1176x400xbf16>, vector<8x400xf32> -> vector<8x400xf32>
    %c0_3 = arith.constant 0 : index
    %c0_4 = arith.constant 0 : index
    %3 = vector.load %arg3[%c0_3, %c0_4] : memref<1176x400xbf16, #tpu.memory_space<vmem>>, vector<1176x400xbf16>
    %cst_5 = arith.constant dense<0.000000e+00> : vector<8x400xf32>
    %4 = tpu.matmul %0, %3, %cst_5 {dimension_numbers = #tpu.dot_dimension_numbers<[1], [0], [0], [1], [0, 0, 1, 1], [], []>} : vector<8x1176xbf16>, vector<1176x400xbf16>, vector<8x400xf32> -> vector<8x400xf32>
    %c0_6 = arith.constant 0 : index
    %c0_7 = arith.constant 0 : index
    %5 = vector.load %arg4[%c0_6, %c0_7] : memref<1176x400xbf16, #tpu.memory_space<vmem>>, vector<1176x400xbf16>
    %cst_8 = arith.constant dense<0.000000e+00> : vector<8x400xf32>
    %6 = tpu.matmul %0, %5, %cst_8 {dimension_numbers = #tpu.dot_dimension_numbers<[1], [0], [0], [1], [0, 0, 1, 1], [], []>} : vector<8x1176xbf16>, vector<1176x400xbf16>, vector<8x400xf32> -> vector<8x400xf32>
    %c0_9 = arith.constant 0 : index
    %c0_10 = arith.constant 0 : index
    %7 = vector.load %arg5[%c0_9, %c0_10] : memref<1176x400xbf16, #tpu.memory_space<vmem>>, vector<1176x400xbf16>
    %cst_11 = arith.constant dense<0.000000e+00> : vector<8x400xf32>
    %8 = tpu.matmul %0, %7, %cst_11 {dimension_numbers = #tpu.dot_dimension_numbers<[1], [0], [0], [1], [0, 0, 1, 1], [], []>} : vector<8x1176xbf16>, vector<1176x400xbf16>, vector<8x400xf32> -> vector<8x400xf32>
    %9 = arith.maximumf %2, %4 : vector<8x400xf32>
    %10 = arith.maximumf %6, %8 : vector<8x400xf32>
    %11 = arith.maximumf %9, %10 : vector<8x400xf32>
    %c0_12 = arith.constant 0 : index
    %c0_13 = arith.constant 0 : index
    %12 = vector.load %arg6[%c0_12, %c0_13] : memref<1x400xf32, #tpu.memory_space<vmem>>, vector<1x400xf32>
    %13 = vector.broadcast %12 : vector<1x400xf32> to vector<8x400xf32>
    %14 = arith.addf %11, %13 : vector<8x400xf32>
    %cst_14 = arith.constant 0.000000e+00 : f32
    %15 = vector.broadcast %cst_14 : f32 to vector<8x400xf32>
    %16 = arith.maximumf %14, %15 : vector<8x400xf32>
    %c0_15 = arith.constant 0 : index
    %c0_16 = arith.constant 0 : index
    %17 = vector.load %arg7[%c0_15, %c0_16] : memref<400x120xf32, #tpu.memory_space<vmem>>, vector<400x120xf32>
    %cst_17 = arith.constant dense<0.000000e+00> : vector<8x120xf32>
    %18 = tpu.matmul %16, %17, %cst_17 {dimension_numbers = #tpu.dot_dimension_numbers<[1], [0], [0], [1], [0, 0, 1, 1], [], []>} : vector<8x400xf32>, vector<400x120xf32>, vector<8x120xf32> -> vector<8x120xf32>
    %c0_18 = arith.constant 0 : index
    %c0_19 = arith.constant 0 : index
    %19 = vector.load %arg8[%c0_18, %c0_19] : memref<1x120xf32, #tpu.memory_space<vmem>>, vector<1x120xf32>
    %20 = vector.broadcast %19 : vector<1x120xf32> to vector<8x120xf32>
    %21 = arith.addf %18, %20 : vector<8x120xf32>
    %cst_20 = arith.constant 0.000000e+00 : f32
    %22 = vector.broadcast %cst_20 : f32 to vector<8x120xf32>
    %23 = arith.maximumf %21, %22 : vector<8x120xf32>
    %c0_21 = arith.constant 0 : index
    %c0_22 = arith.constant 0 : index
    %24 = vector.load %arg9[%c0_21, %c0_22] : memref<120x84xf32, #tpu.memory_space<vmem>>, vector<120x84xf32>
    %cst_23 = arith.constant dense<0.000000e+00> : vector<8x84xf32>
    %25 = tpu.matmul %23, %24, %cst_23 {dimension_numbers = #tpu.dot_dimension_numbers<[1], [0], [0], [1], [0, 0, 1, 1], [], []>} : vector<8x120xf32>, vector<120x84xf32>, vector<8x84xf32> -> vector<8x84xf32>
    %c0_24 = arith.constant 0 : index
    %c0_25 = arith.constant 0 : index
    %26 = vector.load %arg10[%c0_24, %c0_25] : memref<1x84xf32, #tpu.memory_space<vmem>>, vector<1x84xf32>
    %27 = vector.broadcast %26 : vector<1x84xf32> to vector<8x84xf32>
    %28 = arith.addf %25, %27 : vector<8x84xf32>
    %cst_26 = arith.constant 0.000000e+00 : f32
    %29 = vector.broadcast %cst_26 : f32 to vector<8x84xf32>
    %30 = arith.maximumf %28, %29 : vector<8x84xf32>
    %c0_27 = arith.constant 0 : index
    %c0_28 = arith.constant 0 : index
    %31 = vector.load %arg11[%c0_27, %c0_28] : memref<84x128xf32, #tpu.memory_space<vmem>>, vector<84x128xf32>
    %cst_29 = arith.constant dense<0.000000e+00> : vector<8x128xf32>
    %32 = tpu.matmul %30, %31, %cst_29 {dimension_numbers = #tpu.dot_dimension_numbers<[1], [0], [0], [1], [0, 0, 1, 1], [], []>} : vector<8x84xf32>, vector<84x128xf32>, vector<8x128xf32> -> vector<8x128xf32>
    %c0_30 = arith.constant 0 : index
    %c0_31 = arith.constant 0 : index
    %33 = vector.load %arg12[%c0_30, %c0_31] : memref<1x128xf32, #tpu.memory_space<vmem>>, vector<1x128xf32>
    %34 = vector.broadcast %33 : vector<1x128xf32> to vector<8x128xf32>
    %35 = arith.addf %32, %34 : vector<8x128xf32>
    %c0_32 = arith.constant 0 : index
    %c0_33 = arith.constant 0 : index
    %36 = vector.load %arg13[%c0_32, %c0_33] : memref<8x128xf32, #tpu.memory_space<vmem>>, vector<8x128xf32>
    tpu.vector_store %arg13[%c0_32, %c0_33], %35 {strides = array<i32>} : memref<8x128xf32, #tpu.memory_space<vmem>>, vector<8x128xf32>,
    return
  }
  func.func @transform_0(%arg0: i32) -> (i32, i32) {
    %c0_i32 = arith.constant 0 : i32
    %c0_i32_0 = arith.constant 0 : i32
    return %arg0, %c0_i32 : i32, i32
  }
  func.func @transform_1(%arg0: i32) -> (i32, i32) {
    %c0_i32 = arith.constant 0 : i32
    %c0_i32_0 = arith.constant 0 : i32
    %c0_i32_1 = arith.constant 0 : i32
    return %c0_i32, %c0_i32_0 : i32, i32
  }
  func.func @transform_2(%arg0: i32) -> (i32, i32) {
    %c0_i32 = arith.constant 0 : i32
    %c0_i32_0 = arith.constant 0 : i32
    %c0_i32_1 = arith.constant 0 : i32
    return %c0_i32, %c0_i32_0 : i32, i32
  }
  func.func @transform_3(%arg0: i32) -> (i32, i32) {
    %c0_i32 = arith.constant 0 : i32
    %c0_i32_0 = arith.constant 0 : i32
    %c0_i32_1 = arith.constant 0 : i32
    return %c0_i32, %c0_i32_0 : i32, i32
  }
  func.func @transform_4(%arg0: i32) -> (i32, i32) {
    %c0_i32 = arith.constant 0 : i32
    %c0_i32_0 = arith.constant 0 : i32
    %c0_i32_1 = arith.constant 0 : i32
    return %c0_i32, %c0_i32_0 : i32, i32
  }
  func.func @transform_5(%arg0: i32) -> (i32, i32) {
    %c0_i32 = arith.constant 0 : i32
    %c0_i32_0 = arith.constant 0 : i32
    %c0_i32_1 = arith.constant 0 : i32
    return %c0_i32, %c0_i32_0 : i32, i32
  }
  func.func @transform_6(%arg0: i32) -> (i32, i32) {
    %c0_i32 = arith.constant 0 : i32
    %c0_i32_0 = arith.constant 0 : i32
    %c0_i32_1 = arith.constant 0 : i32
    return %c0_i32, %c0_i32_0 : i32, i32
  }
  func.func @transform_7(%arg0: i32) -> (i32, i32) {
    %c0_i32 = arith.constant 0 : i32
    %c0_i32_0 = arith.constant 0 : i32
    %c0_i32_1 = arith.constant 0 : i32
    return %c0_i32, %c0_i32_0 : i32, i32
  }
  func.func @transform_8(%arg0: i32) -> (i32, i32) {
    %c0_i32 = arith.constant 0 : i32
    %c0_i32_0 = arith.constant 0 : i32
    %c0_i32_1 = arith.constant 0 : i32
    return %c0_i32, %c0_i32_0 : i32, i32
  }
  func.func @transform_9(%arg0: i32) -> (i32, i32) {
    %c0_i32 = arith.constant 0 : i32
    %c0_i32_0 = arith.constant 0 : i32
    %c0_i32_1 = arith.constant 0 : i32
    return %c0_i32, %c0_i32_0 : i32, i32
  }
  func.func @transform_10(%arg0: i32) -> (i32, i32) {
    %c0_i32 = arith.constant 0 : i32
    %c0_i32_0 = arith.constant 0 : i32
    %c0_i32_1 = arith.constant 0 : i32
    return %c0_i32, %c0_i32_0 : i32, i32
  }
  func.func @transform_11(%arg0: i32) -> (i32, i32) {
    %c0_i32 = arith.constant 0 : i32
    %c0_i32_0 = arith.constant 0 : i32
    %c0_i32_1 = arith.constant 0 : i32
    return %c0_i32, %c0_i32_0 : i32, i32
  }
  func.func @transform_12(%arg0: i32) -> (i32, i32) {
    %c0_i32 = arith.constant 0 : i32
    %c0_i32_0 = arith.constant 0 : i32
    return %arg0, %c0_i32 : i32, i32
  }
}

</mosaic_0001>

<llo_original>
// kernel: cnn_stl10_forward.2
$region0: #{cnn_stl10_forward.2}
  #allocation0 [shape = 'u32[]', space=smem, size = 0x4, offset = 0x4, fixed_abs, tag = 'smem constant byte address 0x4 - core index']
  #allocation1 [shape = 'u32[144,128]{1,0:T(1,128)}', space=vmem, size = 0x12000, scoped, tag = 'internal scratch']
  %s0 = inlined_call_operand.vmem [shape: bf16[392,75], index: 0, kind: input, shape index: {}]
  %s1 = inlined_call_operand.vmem [shape: bf16[392,75], index: 1, kind: input, shape index: {}]
  %s2 = inlined_call_operand.vmem [shape: bf16[392,75], index: 2, kind: input, shape index: {}]
  %s3 = inlined_call_operand.vmem [shape: bf16[392,75], index: 3, kind: input, shape index: {}]
  %s4 = inlined_call_operand.vmem [shape: bf16[75,6], index: 4, kind: input, shape index: {}]
  %s5 = inlined_call_operand.vmem [shape: f32[1,6], index: 5, kind: input, shape index: {}]
  %s6 = inlined_call_operand.vmem [shape: bf16[392,6], index: 6, kind: output, shape index: {}]
  %s7 = sld [smem:[#allocation0]]
  $region34: #{cnn_stl10_forward.2} parent=0
    _
  %s9 = ssub.s32 1, %s7
  %s10 = scalar_select 0, %s9, %s7
  // Predicated region
  $region2: #{cnn_stl10_forward.2} parent=0 // pred_check
    _
  $region3: #{cnn_stl10_forward.2} parent=0 // pred_check_branch
    %12 = sbr.rel (0) target = $region5
  $region4: #{cnn_stl10_forward.2} parent=0 // pred_region
    _
  $region5: #{cnn_stl10_forward.2} parent=0 // pred_fallthru
    _
  // Predicated region
  $region6: #{cnn_stl10_forward.2} parent=0 // pred_check
    _
  $region7: #{cnn_stl10_forward.2} parent=0 // pred_check_branch
    %14 = sbr.rel (0) target = $region9
  $region8: #{cnn_stl10_forward.2} parent=0 // pred_region
    _
  $region9: #{cnn_stl10_forward.2} parent=0 // pred_fallthru
    _
  // Predicated region
  $region10: #{cnn_stl10_forward.2} parent=0 // pred_check
    _
  $region11: #{cnn_stl10_forward.2} parent=0 // pred_check_branch
    %16 = sbr.rel (0) target = $region13
  $region12: #{cnn_stl10_forward.2} parent=0 // pred_region
    _
  $region13: #{cnn_stl10_forward.2} parent=0 // pred_fallthru
    _
  // Predicated region
  $region14: #{cnn_stl10_forward.2} parent=0 // pred_check
    _
  $region15: #{cnn_stl10_forward.2} parent=0 // pred_check_branch
    %18 = sbr.rel (0) target = $region17
  $region16: #{cnn_stl10_forward.2} parent=0 // pred_region
    _
  $region17: #{cnn_stl10_forward.2} parent=0 // pred_fallthru
    _
  // Predicated region
  $region18: #{cnn_stl10_forward.2} parent=0 // pred_check
    _
  $region19: #{cnn_stl10_forward.2} parent=0 // pred_check_branch
    %20 = sbr.rel (0) target = $region21
  $region20: #{cnn_stl10_forward.2} parent=0 // pred_region
    _
  $region21: #{cnn_stl10_forward.2} parent=0 // pred_fallthru
    _
  // Predicated region
  $region22: #{cnn_stl10_forward.2} parent=0 // pred_check
    _
  $region23: #{cnn_stl10_forward.2} parent=0 // pred_check_branch
    %22 = sbr.rel (0) target = $region25
  $region24: #{cnn_stl10_forward.2} parent=0 // pred_region
    _
  $region25: #{cnn_stl10_forward.2} parent=0 // pred_fallthru
    _
  %v24 = vld [vmem:[%s4] sm:$0xf]
  %v25 = vld [vmem:[%s4 + $0x4] sm:$0xf]
  %v26 = vld [vmem:[%s4 + $0x8] sm:$0xf]
  %v27 = vld [vmem:[%s4 + $0xc] sm:$0xf]
  %v28 = vld [vmem:[%s4 + $0x10] sm:$0xf]
  %v29 = vld [vmem:[%s4 + $0x14] sm:$0xf]
  %v30 = vld [vmem:[%s4 + $0x18] sm:$0xf]
  %v31 = vld [vmem:[%s4 + $0x1c] sm:$0xf]
  %v32 = vld [vmem:[%s4 + $0x20] sm:$0xf]
  %v33 = vld [vmem:[%s4 + $0x24] sm:$0x3]
  %v34 = vld [vmem:[%s0] sm:$0xf]
  %v35 = vld [vmem:[%s0 + $0x4] sm:$0xf]
  %v36 = vld [vmem:[%s0 + $0x8] sm:$0xf]
  %v37 = vld [vmem:[%s0 + $0xc] sm:$0xf]
  %v38 = vld [vmem:[%s0 + $0x10] sm:$0xf]
  %v39 = vld [vmem:[%s0 + $0x14] sm:$0xf]
  %v40 = vld [vmem:[%s0 + $0x18] sm:$0xf]
  %v41 = vld [vmem:[%s0 + $0x1c] sm:$0xf]
  %v42 = vld [vmem:[%s0 + $0x20] sm:$0xf]
  %v43 = vld [vmem:[%s0 + $0x24] sm:$0xf]
  %v44 = vld [vmem:[%s0 + $0x28] sm:$0xf]
  %v45 = vld [vmem:[%s0 + $0x2c] sm:$0xf]
  %v46 = vld [vmem:[%s0 + $0x30] sm:$0xf]
  %v47 = vld [vmem:[%s0 + $0x34] sm:$0xf]
  %v48 = vld [vmem:[%s0 + $0x38] sm:$0xf]
  %v49 = vld [vmem:[%s0 + $0x3c] sm:$0xf]
  %v50 = vld [vmem:[%s0 + $0x40] sm:$0xf]
  %v51 = vld [vmem:[%s0 + $0x44] sm:$0xf]
  %v52 = vld [vmem:[%s0 + $0x48] sm:$0xf]
  %v53 = vld [vmem:[%s0 + $0x4c] sm:$0xf]
  %v54 = vld [vmem:[%s0 + $0x50] sm:$0xf]
  %v55 = vld [vmem:[%s0 + $0x54] sm:$0xf]
  %v56 = vld [vmem:[%s0 + $0x58] sm:$0xf]
  %v57 = vld [vmem:[%s0 + $0x5c] sm:$0xf]
  %v58 = vld [vmem:[%s0 + $0x60] sm:$0xf]
  %v59 = vld [vmem:[%s0 + $0x64] sm:$0xf]
  %v60 = vld [vmem:[%s0 + $0x68] sm:$0xf]
  %v61 = vld [vmem:[%s0 + $0x6c] sm:$0xf]
  %v62 = vld [vmem:[%s0 + $0x70] sm:$0xf]
  %v63 = vld [vmem:[%s0 + $0x74] sm:$0xf]
  %v64 = vld [vmem:[%s0 + $0x78] sm:$0xf]
  %v65 = vld [vmem:[%s0 + $0x7c] sm:$0xf]
  %v66 = vld [vmem:[%s0 + $0x80] sm:$0xf]
  %v67 = vld [vmem:[%s0 + $0x84] sm:$0xf]
  %v68 = vld [vmem:[%s0 + $0x88] sm:$0xf]
  %v69 = vld [vmem:[%s0 + $0x8c] sm:$0xf]
  %v70 = vld [vmem:[%s0 + $0x90] sm:$0xf]
  %v71 = vld [vmem:[%s0 + $0x94] sm:$0xf]
  %v72 = vld [vmem:[%s0 + $0x98] sm:$0xf]
  %v73 = vld [vmem:[%s0 + $0x9c] sm:$0xf]
  %v74 = vld [vmem:[%s0 + $0xa0] sm:$0xf]
  %v75 = vld [vmem:[%s0 + $0xa4] sm:$0xf]
  %v76 = vld [vmem:[%s0 + $0xa8] sm:$0xf]
  %v77 = vld [vmem:[%s0 + $0xac] sm:$0xf]
  %v78 = vld [vmem:[%s0 + $0xb0] sm:$0xf]
  %v79 = vld [vmem:[%s0 + $0xb4] sm:$0xf]
  %v80 = vld [vmem:[%s0 + $0xb8] sm:$0xf]
  %v81 = vld [vmem:[%s0 + $0xbc] sm:$0xf]
  %v82 = vld [vmem:[%s0 + $0xc0] sm:$0xf]
  %v132 = vunpack.c.l.b16 %v34
  %v133 = vunpack.c.l.b16 %v35
  %v134 = vunpack.c.l.b16 %v36
  %v135 = vunpack.c.l.b16 %v37
  %v136 = vunpack.c.l.b16 %v38
  %v137 = vunpack.c.l.b16 %v39
  %v138 = vunpack.c.l.b16 %v40
  %v139 = vunpack.c.l.b16 %v41
  %v140 = vunpack.c.l.b16 %v42
  %v141 = vunpack.c.l.b16 %v43
  %v142 = vunpack.c.l.b16 %v44
  %v143 = vunpack.c.l.b16 %v45
  %v144 = vunpack.c.l.b16 %v46
  %v145 = vunpack.c.l.b16 %v47
  %v146 = vunpack.c.l.b16 %v48
  %v147 = vunpack.c.l.b16 %v49
  %v148 = vunpack.c.l.b16 %v50
  %v149 = vunpack.c.l.b16 %v51
  %v150 = vunpack.c.l.b16 %v52
  %v151 = vunpack.c.l.b16 %v53
  %v152 = vunpack.c.l.b16 %v54
  %v153 = vunpack.c.l.b16 %v55
  %v154 = vunpack.c.l.b16 %v56
  %v155 = vunpack.c.l.b16 %v57
  %v156 = vunpack.c.l.b16 %v58
  %v157 = vunpack.c.l.b16 %v59
  %v158 = vunpack.c.l.b16 %v60
  %v159 = vunpack.c.l.b16 %v61
  %v160 = vunpack.c.l.b16 %v62
  %v161 = vunpack.c.l.b16 %v63
  %v162 = vunpack.c.l.b16 %v64
  %v163 = vunpack.c.l.b16 %v65
  %v164 = vunpack.c.l.b16 %v66
  %v165 = vunpack.c.l.b16 %v67
  %v166 = vunpack.c.l.b16 %v68
  %v167 = vunpack.c.l.b16 %v69
  %v168 = vunpack.c.l.b16 %v70
  %v169 = vunpack.c.l.b16 %v71
  %v170 = vunpack.c.l.b16 %v72
  %v171 = vunpack.c.l.b16 %v73
  %v172 = vunpack.c.l.b16 %v74
  %v173 = vunpack.c.l.b16 %v75
  %v174 = vunpack.c.l.b16 %v76
  %v175 = vunpack.c.l.b16 %v77
  %v176 = vunpack.c.l.b16 %v78
  %v177 = vunpack.c.l.b16 %v79
  %v178 = vunpack.c.l.b16 %v80
  %v179 = vunpack.c.l.b16 %v81
  %v180 = vunpack.c.l.b16 %v82
  %v181 = vpack.c.b16 %v133, %v132
  %v182 = vpack.c.b16 %v135, %v134
  %v183 = vpack.c.b16 %v137, %v136
  %v184 = vpack.c.b16 %v139, %v138
  %v185 = vpack.c.b16 %v141, %v140
  %v186 = vpack.c.b16 %v143, %v142
  %v187 = vpack.c.b16 %v145, %v144
  %v188 = vpack.c.b16 %v147, %v146
  %v189 = vpack.c.b16 %v149, %v148
  %v190 = vpack.c.b16 %v151, %v150
  %v191 = vpack.c.b16 %v153, %v152
  %v192 = vpack.c.b16 %v155, %v154
  %v193 = vpack.c.b16 %v157, %v156
  %v194 = vpack.c.b16 %v159, %v158
  %v195 = vpack.c.b16 %v161, %v160
  %v196 = vpack.c.b16 %v163, %v162
  %v197 = vpack.c.b16 %v165, %v164
  %v198 = vpack.c.b16 %v167, %v166
  %v199 = vpack.c.b16 %v169, %v168
  %v200 = vpack.c.b16 %v171, %v170
  %v201 = vpack.c.b16 %v173, %v172
  %v202 = vpack.c.b16 %v175, %v174
  %v203 = vpack.c.b16 %v177, %v176
  %v204 = vpack.c.b16 %v179, %v178
  %v205 = vpack.c.b16 %v180, %v180
  %v216 = vunpack.c.l.b16 %v24
  %v217 = vunpack.c.l.b16 %v25
  %v218 = vunpack.c.l.b16 %v26
  %v219 = vunpack.c.l.b16 %v27
  %v220 = vunpack.c.l.b16 %v28
  %v221 = vunpack.c.l.b16 %v29
  %v222 = vunpack.c.l.b16 %v30
  %v223 = vunpack.c.l.b16 %v31
  %v224 = vunpack.c.l.b16 %v32
  %v225 = vunpack.c.l.b16 %v33
  %v226 = vpack.c.b16 %v217, %v216
  %v227 = vpack.c.b16 %v219, %v218
  %v228 = vpack.c.b16 %v221, %v220
  %v229 = vpack.c.b16 %v223, %v222
  %v230 = vpack.c.b16 %v225, %v224
  %vm235 = vcmask 613376
  %v237 = vsel %vm235, %v181, 0
  %v240 = vsel %vm235, %v182, 0
  %v243 = vsel %vm235, %v183, 0
  %v246 = vsel %vm235, %v184, 0
  %v249 = vsel %vm235, %v185, 0
  %v252 = vsel %vm235, %v186, 0
  %v255 = vsel %vm235, %v187, 0
  %v258 = vsel %vm235, %v188, 0
  %v261 = vsel %vm235, %v189, 0
  %v264 = vsel %vm235, %v190, 0
  %v267 = vsel %vm235, %v191, 0
  %v270 = vsel %vm235, %v192, 0
  %v273 = vsel %vm235, %v193, 0
  %v276 = vsel %vm235, %v194, 0
  %v279 = vsel %vm235, %v195, 0
  %v282 = vsel %vm235, %v196, 0
  %v285 = vsel %vm235, %v197, 0
  %v288 = vsel %vm235, %v198, 0
  %v291 = vsel %vm235, %v199, 0
  %v294 = vsel %vm235, %v200, 0
  %v297 = vsel %vm235, %v201, 0
  %v300 = vsel %vm235, %v202, 0
  %v303 = vsel %vm235, %v203, 0
  %v306 = vsel %vm235, %v204, 0
  %v309 = vsel %vm235, %v205, 0
  %vm311 = vcmask 1044480
  %vm312 = vcmask 1045504
  %v313 = vsel %vm311, 4294967295, 65535
  %v314 = vsel %vm312, %v313, 0
  %v316 = vand.u32 %v230, %v314
  %318 = vmatprep.subr.bf16.mxu0 0
  %319 = vmatpush1.bf16.msra.mxu0 %v226
  %320 = vmatprep.subr.bf16.mxu0 0
  %321 = vmatpush1.bf16.msra.mxu0 %v227
  %322 = vmatprep.subr.bf16.mxu0 0
  %323 = vmatpush1.bf16.msra.mxu0 %v228
  %324 = vmatprep.subr.bf16.mxu0 0
  %325 = vmatpush1.bf16.msra.mxu0 %v229
  %326 = vmatprep.subr.bf16.mxu0 0
  %327 = vmatpush1.bf16.msra.mxu0 %v316
  %328 = vmatprep.subr.bf16.mxu0 0
  %329 = vmatpush1.bf16.msra.mxu0 0
  %330 = vmatprep.subr.bf16.mxu0 0
  %331 = vmatpush1.bf16.msra.mxu0 0
  %332 = vmatprep.subr.bf16.mxu0 0
  %333 = vmatpush1.bf16.msra.mxu0 0
  %334 = vmatprep.subr.bf16.mxu0 0
  %335 = vmatpush1.bf16.msra.mxu0 0
  %336 = vmatprep.subr.bf16.mxu0 0
  %337 = vmatpush1.bf16.msra.mxu0 0
  %338 = vmatprep.subr.bf16.mxu0 0
  %339 = vmatpush1.bf16.msra.mxu0 0
  %340 = vmatprep.subr.bf16.mxu0 0
  %341 = vmatpush1.bf16.msra.mxu0 0
  %342 = vmatprep.subr.bf16.mxu0 0
  %343 = vmatpush1.bf16.msra.mxu0 0
  %344 = vmatprep.subr.bf16.mxu0 0
  %345 = vmatpush1.bf16.msra.mxu0 0
  %346 = vmatprep.subr.bf16.mxu0 0
  %347 = vmatpush1.bf16.msra.mxu0 0
  %348 = vmatprep.subr.bf16.mxu0 0
  %349 = vmatpush1.bf16.msra.mxu0 0
  %350 = vmatprep.mubr.bf16.mxu0 0
  %351 = vmatmul.mubr.bf16.gmra.mrb[0].mxu0 %v237
  %v352 = vpop.f32.mrb[0].mxu0
  %v353 = vadd.f32 0.0, %v352
  %v354 = vpop.f32.mrb[0].mxu0
  %v355 = vpop.f32.mrb[0].mxu0
  %v356 = vadd.f32 0.0, %v355
  %v357 = vpop.f32.mrb[0].mxu0
  %358 = vmatprep.mubr.bf16.mxu0 0
  %359 = vmatmul.mubr.bf16.gmra.mrb[0].mxu0 %v240
  %v360 = vpop.f32.mrb[0].mxu0
  %v361 = vadd.f32 0.0, %v360
  %v362 = vpop.f32.mrb[0].mxu0
  %v363 = vpop.f32.mrb[0].mxu0
  %v364 = vadd.f32 0.0, %v363
  %v365 = vpop.f32.mrb[0].mxu0
  %366 = vmatprep.mubr.bf16.mxu0 0
  %367 = vmatmul.mubr.bf16.gmra.mrb[0].mxu0 %v243
  %v368 = vpop.f32.mrb[0].mxu0
  %v369 = vadd.f32 0.0, %v368
  %v370 = vpop.f32.mrb[0].mxu0
  %v371 = vpop.f32.mrb[0].mxu0
  %v372 = vadd.f32 0.0, %v371
  %v373 = vpop.f32.mrb[0].mxu0
  %374 = vmatprep.mubr.bf16.mxu0 0
  %375 = vmatmul.mubr.bf16.gmra.mrb[0].mxu0 %v246
  %v376 = vpop.f32.mrb[0].mxu0
  %v377 = vadd.f32 0.0, %v376
  %v378 = vpop.f32.mrb[0].mxu0
  %v379 = vpop.f32.mrb[0].mxu0
  %v380 = vadd.f32 0.0, %v379
  %v381 = vpop.f32.mrb[0].mxu0
  %382 = vmatprep.mubr.bf16.mxu0 0
  %383 = vmatmul.mubr.bf16.gmra.mrb[0].mxu0 %v249
  %v384 = vpop.f32.mrb[0].mxu0
  %v385 = vadd.f32 0.0, %v384
  %v386 = vpop.f32.mrb[0].mxu0
  %v387 = vpop.f32.mrb[0].mxu0
  %v388 = vadd.f32 0.0, %v387
  %v389 = vpop.f32.mrb[0].mxu0
  %390 = vmatprep.mubr.bf16.mxu0 0
  %391 = vmatmul.mubr.bf16.gmra.mrb[0].mxu0 %v252
  %v392 = vpop.f32.mrb[0].mxu0
  %v393 = vadd.f32 0.0, %v392
  %v394 = vpop.f32.mrb[0].mxu0
  %v395 = vpop.f32.mrb[0].mxu0
  %v396 = vadd.f32 0.0, %v395
  %v397 = vpop.f32.mrb[0].mxu0
  %398 = vmatprep.mubr.bf16.mxu0 0
  %399 = vmatmul.mubr.bf16.gmra.mrb[0].mxu0 %v255
  %v400 = vpop.f32.mrb[0].mxu0
  %v401 = vadd.f32 0.0, %v400
  %v402 = vpop.f32.mrb[0].mxu0
  %v403 = vpop.f32.mrb[0].mxu0
  %v404 = vadd.f32 0.0, %v403
  %v405 = vpop.f32.mrb[0].mxu0
  %406 = vmatprep.mubr.bf16.mxu0 0
  %407 = vmatmul.mubr.bf16.gmra.mrb[0].mxu0 %v258
  %v408 = vpop.f32.mrb[0].mxu0
  %v409 = vadd.f32 0.0, %v408
  %v410 = vpop.f32.mrb[0].mxu0
  %v411 = vpop.f32.mrb[0].mxu0
  %v412 = vadd.f32 0.0, %v411
  %v413 = vpop.f32.mrb[0].mxu0
  %414 = vmatprep.mubr.bf16.mxu0 0
  %415 = vmatmul.mubr.bf16.gmra.mrb[0].mxu0 %v261
  %v416 = vpop.f32.mrb[0].mxu0
  %v417 = vadd.f32 0.0, %v416
  %v418 = vpop.f32.mrb[0].mxu0
  %v419 = vpop.f32.mrb[0].mxu0
  %v420 = vadd.f32 0.0, %v419
  %v421 = vpop.f32.mrb[0].mxu0
  %422 = vmatprep.mubr.bf16.mxu0 0
  %423 = vmatmul.mubr.bf16.gmra.mrb[0].mxu0 %v264
  %v424 = vpop.f32.mrb[0].mxu0
  %v425 = vadd.f32 0.0, %v424
  %v426 = vpop.f32.mrb[0].mxu0
  %v427 = vpop.f32.mrb[0].mxu0
  %v428 = vadd.f32 0.0, %v427
  %v429 = vpop.f32.mrb[0].mxu0
  %430 = vmatprep.mubr.bf16.mxu0 0
  %431 = vmatmul.mubr.bf16.gmra.mrb[0].mxu0 %v267
  %v432 = vpop.f32.mrb[0].mxu0
  %v433 = vadd.f32 0.0, %v432
  %v434 = vpop.f32.mrb[0].mxu0
  %v435 = vpop.f32.mrb[0].mxu0
  %v436 = vadd.f32 0.0, %v435
  %v437 = vpop.f32.mrb[0].mxu0
  %438 = vmatprep.mubr.bf16.mxu0 0
  %439 = vmatmul.mubr.bf16.gmra.mrb[0].mxu0 %v270
  %v440 = vpop.f32.mrb[0].mxu0
  %v441 = vadd.f32 0.0, %v440
  %v442 = vpop.f32.mrb[0].mxu0
  %v443 = vpop.f32.mrb[0].mxu0
  %v444 = vadd.f32 0.0, %v443
  %v445 = vpop.f32.mrb[0].mxu0
  %446 = vmatprep.mubr.bf16.mxu0 0
  %447 = vmatmul.mubr.bf16.gmra.mrb[0].mxu0 %v273
  %v448 = vpop.f32.mrb[0].mxu0
  %v449 = vadd.f32 0.0, %v448
  %v450 = vpop.f32.mrb[0].mxu0
  %v451 = vpop.f32.mrb[0].mxu0
  %v452 = vadd.f32 0.0, %v451
  %v453 = vpop.f32.mrb[0].mxu0
  %454 = vmatprep.mubr.bf16.mxu0 0
  %455 = vmatmul.mubr.bf16.gmra.mrb[0].mxu0 %v276
  %v456 = vpop.f32.mrb[0].mxu0
  %v457 = vadd.f32 0.0, %v456
  %v458 = vpop.f32.mrb[0].mxu0
  %v459 = vpop.f32.mrb[0].mxu0
  %v460 = vadd.f32 0.0, %v459
  %v461 = vpop.f32.mrb[0].mxu0
  %462 = vmatprep.mubr.bf16.mxu0 0
  %463 = vmatmul.mubr.bf16.gmra.mrb[0].mxu0 %v279
  %v464 = vpop.f32.mrb[0].mxu0
  %v465 = vadd.f32 0.0, %v464
  %v466 = vpop.f32.mrb[0].mxu0
  %v467 = vpop.f32.mrb[0].mxu0
  %v468 = vadd.f32 0.0, %v467
  %v469 = vpop.f32.mrb[0].mxu0
  %470 = vmatprep.mubr.bf16.mxu0 0
  %471 = vmatmul.mubr.bf16.gmra.mrb[0].mxu0 %v282
  %v472 = vpop.f32.mrb[0].mxu0
  %v473 = vadd.f32 0.0, %v472
  %v474 = vpop.f32.mrb[0].mxu0
  %v475 = vpop.f32.mrb[0].mxu0
  %v476 = vadd.f32 0.0, %v475
  %v477 = vpop.f32.mrb[0].mxu0
  %478 = vmatprep.mubr.bf16.mxu0 0
  %479 = vmatmul.mubr.bf16.gmra.mrb[0].mxu0 %v285
  %v480 = vpop.f32.mrb[0].mxu0
  %v481 = vadd.f32 0.0, %v480
  %v482 = vpop.f32.mrb[0].mxu0
  %v483 = vpop.f32.mrb[0].mxu0
  %v484 = vadd.f32 0.0, %v483
  %v485 = vpop.f32.mrb[0].mxu0
  %486 = vmatprep.mubr.bf16.mxu0 0
  %487 = vmatmul.mubr.bf16.gmra.mrb[0].mxu0 %v288
  %v488 = vpop.f32.mrb[0].mxu0
  %v489 = vadd.f32 0.0, %v488
  %v490 = vpop.f32.mrb[0].mxu0
  %v491 = vpop.f32.mrb[0].mxu0
  %v492 = vadd.f32 0.0, %v491
  %v493 = vpop.f32.mrb[0].mxu0
  %494 = vmatprep.mubr.bf16.mxu0 0
  %495 = vmatmul.mubr.bf16.gmra.mrb[0].mxu0 %v291
  %v496 = vpop.f32.mrb[0].mxu0
  %v497 = vadd.f32 0.0, %v496
  %v498 = vpop.f32.mrb[0].mxu0
  %v499 = vpop.f32.mrb[0].mxu0
  %v500 = vadd.f32 0.0, %v499
  %v501 = vpop.f32.mrb[0].mxu0
  %502 = vmatprep.mubr.bf16.mxu0 0
  %503 = vmatmul.mubr.bf16.gmra.mrb[0].mxu0 %v294
  %v504 = vpop.f32.mrb[0].mxu0
  %v505 = vadd.f32 0.0, %v504
  %v506 = vpop.f32.mrb[0].mxu0
  %v507 = vpop.f32.mrb[0].mxu0
  %v508 = vadd.f32 0.0, %v507
  %v509 = vpop.f32.mrb[0].mxu0
  %510 = vmatprep.mubr.bf16.mxu0 0
  %511 = vmatmul.mubr.bf16.gmra.mrb[0].mxu0 %v297
  %v512 = vpop.f32.mrb[0].mxu0
  %v513 = vadd.f32 0.0, %v512
  %v514 = vpop.f32.mrb[0].mxu0
  %v515 = vpop.f32.mrb[0].mxu0
  %v516 = vadd.f32 0.0, %v515
  %v517 = vpop.f32.mrb[0].mxu0
  %518 = vmatprep.mubr.bf16.mxu0 0
  %519 = vmatmul.mubr.bf16.gmra.mrb[0].mxu0 %v300
  %v520 = vpop.f32.mrb[0].mxu0
  %v521 = vadd.f32 0.0, %v520
  %v522 = vpop.f32.mrb[0].mxu0
  %v523 = vpop.f32.mrb[0].mxu0
  %v524 = vadd.f32 0.0, %v523
  %v525 = vpop.f32.mrb[0].mxu0
  %526 = vmatprep.mubr.bf16.mxu0 0
  %527 = vmatmul.mubr.bf16.gmra.mrb[0].mxu0 %v303
  %v528 = vpop.f32.mrb[0].mxu0
  %v529 = vadd.f32 0.0, %v528
  %v530 = vpop.f32.mrb[0].mxu0
  %v531 = vpop.f32.mrb[0].mxu0
  %v532 = vadd.f32 0.0, %v531
  %v533 = vpop.f32.mrb[0].mxu0
  %534 = vmatprep.mubr.bf16.mxu0 0
  %535 = vmatmul.mubr.bf16.gmra.mrb[0].mxu0 %v306
  %v536 = vpop.f32.mrb[0].mxu0
  %v537 = vadd.f32 0.0, %v536
  %v538 = vpop.f32.mrb[0].mxu0
  %v539 = vpop.f32.mrb[0].mxu0
  %v540 = vadd.f32 0.0, %v539
  %v541 = vpop.f32.mrb[0].mxu0
  %542 = vmatprep.mubr.bf16.mxu0 0
  %543 = vmatmul.mubr.bf16.gmra.mrb[0].mxu0 %v309
  %v544 = vpop.f32.mrb[0].mxu0
  %v545 = vadd.f32 0.0, %v544
  %v546 = vpop.f32.mrb[0].mxu0
  %v547 = vpop.f32.mrb[0].mxu0
  %v548 = vpop.f32.mrb[0].mxu0
  %549 = vdwg.mxu0
  %v550 = vld [vmem:[%s1] sm:$0xf]
  %v551 = vld [vmem:[%s1 + $0x4] sm:$0xf]
  %v552 = vld [vmem:[%s1 + $0x8] sm:$0xf]
  %v553 = vld [vmem:[%s1 + $0xc] sm:$0xf]
  %v554 = vld [vmem:[%s1 + $0x10] sm:$0xf]
  %v555 = vld [vmem:[%s1 + $0x14] sm:$0xf]
  %v556 = vld [vmem:[%s1 + $0x18] sm:$0xf]
  %v557 = vld [vmem:[%s1 + $0x1c] sm:$0xf]
  %v558 = vld [vmem:[%s1 + $0x20] sm:$0xf]
  %v559 = vld [vmem:[%s1 + $0x24] sm:$0xf]
  %v560 = vld [vmem:[%s1 + $0x28] sm:$0xf]
  %v561 = vld [vmem:[%s1 + $0x2c] sm:$0xf]
  %v562 = vld [vmem:[%s1 + $0x30] sm:$0xf]
  %v563 = vld [vmem:[%s1 + $0x34] sm:$0xf]
  %v564 = vld [vmem:[%s1 + $0x38] sm:$0xf]
  %v565 = vld [vmem:[%s1 + $0x3c] sm:$0xf]
  %v566 = vld [vmem:[%s1 + $0x40] sm:$0xf]
  %v567 = vld [vmem:[%s1 + $0x44] sm:$0xf]
  %v568 = vld [vmem:[%s1 + $0x48] sm:$0xf]
  %v569 = vld [vmem:[%s1 + $0x4c] sm:$0xf]
  %v570 = vld [vmem:[%s1 + $0x50] sm:$0xf]
  %v571 = vld [vmem:[%s1 + $0x54] sm:$0xf]
  %v572 = vld [vmem:[%s1 + $0x58] sm:$0xf]
  %v573 = vld [vmem:[%s1 + $0x5c] sm:$0xf]
  %v574 = vld [vmem:[%s1 + $0x60] sm:$0xf]
  %v575 = vld [vmem:[%s1 + $0x64] sm:$0xf]
  %v576 = vld [vmem:[%s1 + $0x68] sm:$0xf]
  %v577 = vld [vmem:[%s1 + $0x6c] sm:$0xf]
  %v578 = vld [vmem:[%s1 + $0x70] sm:$0xf]
  %v579 = vld [vmem:[%s1 + $0x74] sm:$0xf]
  %v580 = vld [vmem:[%s1 + $0x78] sm:$0xf]
  %v581 = vld [vmem:[%s1 + $0x7c] sm:$0xf]
  %v582 = vld [vmem:[%s1 + $0x80] sm:$0xf]
  %v583 = vld [vmem:[%s1 + $0x84] sm:$0xf]
  %v584 = vld [vmem:[%s1 + $0x88] sm:$0xf]
  %v585 = vld [vmem:[%s1 + $0x8c] sm:$0xf]
  %v586 = vld [vmem:[%s1 + $0x90] sm:$0xf]
  %v587 = vld [vmem:[%s1 + $0x94] sm:$0xf]
  %v588 = vld [vmem:[%s1 + $0x98] sm:$0xf]
  %v589 = vld [vmem:[%s1 + $0x9c] sm:$0xf]
  %v590 = vld [vmem:[%s1 + $0xa0] sm:$0xf]
  %v591 = vld [vmem:[%s1 + $0xa4] sm:$0xf]
  %v592 = vld [vmem:[%s1 + $0xa8] sm:$0xf]
  %v593 = vld [vmem:[%s1 + $0xac] sm:$0xf]
  %v594 = vld [vmem:[%s1 + $0xb0] sm:$0xf]
  %v595 = vld [vmem:[%s1 + $0xb4] sm:$0xf]
  %v596 = vld [vmem:[%s1 + $0xb8] sm:$0xf]
  %v597 = vld [vmem:[%s1 + $0xbc] sm:$0xf]
  %v598 = vld [vmem:[%s1 + $0xc0] sm:$0xf]
  %v648 = vunpack.c.l.b16 %v550
  %v649 = vunpack.c.l.b16 %v551
  %v650 = vunpack.c.l.b16 %v552
  %v651 = vunpack.c.l.b16 %v553
  %v652 = vunpack.c.l.b16 %v554
  %v653 = vunpack.c.l.b16 %v555
  %v654 = vunpack.c.l.b16 %v556
  %v655 = vunpack.c.l.b16 %v557
  %v656 = vunpack.c.l.b16 %v558
  %v657 = vunpack.c.l.b16 %v559
  %v658 = vunpack.c.l.b16 %v560
  %v659 = vunpack.c.l.b16 %v561
  %v660 = vunpack.c.l.b16 %v562
  %v661 = vunpack.c.l.b16 %v563
  %v662 = vunpack.c.l.b16 %v564
  %v663 = vunpack.c.l.b16 %v565
  %v664 = vunpack.c.l.b16 %v566
  %v665 = vunpack.c.l.b16 %v567
  %v666 = vunpack.c.l.b16 %v568
  %v667 = vunpack.c.l.b16 %v569
  %v668 = vunpack.c.l.b16 %v570
  %v669 = vunpack.c.l.b16 %v571
  %v670 = vunpack.c.l.b16 %v572
  %v671 = vunpack.c.l.b16 %v573
  %v672 = vunpack.c.l.b16 %v574
  %v673 = vunpack.c.l.b16 %v575
  %v674 = vunpack.c.l.b16 %v576
  %v675 = vunpack.c.l.b16 %v577
  %v676 = vunpack.c.l.b16 %v578
  %v677 = vunpack.c.l.b16 %v579
  %v678 = vunpack.c.l.b16 %v580
  %v679 = vunpack.c.l.b16 %v581
  %v680 = vunpack.c.l.b16 %v582
  %v681 = vunpack.c.l.b16 %v583
  %v682 = vunpack.c.l.b16 %v584
  %v683 = vunpack.c.l.b16 %v585
  %v684 = vunpack.c.l.b16 %v586
  %v685 = vunpack.c.l.b16 %v587
  %v686 = vunpack.c.l.b16 %v588
  %v687 = vunpack.c.l.b16 %v589
  %v688 = vunpack.c.l.b16 %v590
  %v689 = vunpack.c.l.b16 %v591
  %v690 = vunpack.c.l.b16 %v592
  %v691 = vunpack.c.l.b16 %v593
  %v692 = vunpack.c.l.b16 %v594
  %v693 = vunpack.c.l.b16 %v595
  %v694 = vunpack.c.l.b16 %v596
  %v695 = vunpack.c.l.b16 %v597
  %v696 = vunpack.c.l.b16 %v598
  %v697 = vpack.c.b16 %v649, %v648
  %v698 = vpack.c.b16 %v651, %v650
  %v699 = vpack.c.b16 %v653, %v652
  %v700 = vpack.c.b16 %v655, %v654
  %v701 = vpack.c.b16 %v657, %v656
  %v702 = vpack.c.b16 %v659, %v658
  %v703 = vpack.c.b16 %v661, %v660
  %v704 = vpack.c.b16 %v663, %v662
  %v705 = vpack.c.b16 %v665, %v664
  %v706 = vpack.c.b16 %v667, %v666
  %v707 = vpack.c.b16 %v669, %v668
  %v708 = vpack.c.b16 %v671, %v670
  %v709 = vpack.c.b16 %v673, %v672
  %v710 = vpack.c.b16 %v675, %v674
  %v711 = vpack.c.b16 %v677, %v676
  %v712 = vpack.c.b16 %v679, %v678
  %v713 = vpack.c.b16 %v681, %v680
  %v714 = vpack.c.b16 %v683, %v682
  %v715 = vpack.c.b16 %v685, %v684
  %v716 = vpack.c.b16 %v687, %v686
  %v717 = vpack.c.b16 %v689, %v688
  %v718 = vpack.c.b16 %v691, %v690
  %v719 = vpack.c.b16 %v693, %v692
  %v720 = vpack.c.b16 %v695, %v694
  %v721 = vpack.c.b16 %v696, %v696
  %v723 = vsel %vm235, %v697, 0
  %v726 = vsel %vm235, %v698, 0
  %v729 = vsel %vm235, %v699, 0
  %v732 = vsel %vm235, %v700, 0
  %v735 = vsel %vm235, %v701, 0
  %v738 = vsel %vm235, %v702, 0
  %v741 = vsel %vm235, %v703, 0
  %v744 = vsel %vm235, %v704, 0
  %v747 = vsel %vm235, %v705, 0
  %v750 = vsel %vm235, %v706, 0
  %v753 = vsel %vm235, %v707, 0
  %v756 = vsel %vm235, %v708, 0
  %v759 = vsel %vm235, %v709, 0
  %v762 = vsel %vm235, %v710, 0
  %v765 = vsel %vm235, %v711, 0
  %v768 = vsel %vm235, %v712, 0
  %v771 = vsel %vm235, %v713, 0
  %v774 = vsel %vm235, %v714, 0
  %v777 = vsel %vm235, %v715, 0
  %v780 = vsel %vm235, %v716, 0
  %v783 = vsel %vm235, %v717, 0
  %v786 = vsel %vm235, %v718, 0
  %v789 = vsel %vm235, %v719, 0
  %v792 = vsel %vm235, %v720, 0
  %v795 = vsel %vm235, %v721, 0
  %797 = vmatprep.subr.bf16.mxu0 0
  %798 = vmatpush1.bf16.msra.mxu0 %v226
  %799 = vmatprep.subr.bf16.mxu0 0
  %800 = vmatpush1.bf16.msra.mxu0 %v227
  %801 = vmatprep.subr.bf16.mxu0 0
  %802 = vmatpush1.bf16.msra.mxu0 %v228
  %803 = vmatprep.subr.bf16.mxu0 0
  %804 = vmatpush1.bf16.msra.mxu0 %v229
  %805 = vmatprep.subr.bf16.mxu0 0
  %806 = vmatpush1.bf16.msra.mxu0 %v316
  %807 = vmatprep.subr.bf16.mxu0 0
  %808 = vmatpush1.bf16.msra.mxu0 0
  %809 = vmatprep.subr.bf16.mxu0 0
  %810 = vmatpush1.bf16.msra.mxu0 0
  %811 = vmatprep.subr.bf16.mxu0 0
  %812 = vmatpush1.bf16.msra.mxu0 0
  %813 = vmatprep.subr.bf16.mxu0 0
  %814 = vmatpush1.bf16.msra.mxu0 0
  %815 = vmatprep.subr.bf16.mxu0 0
  %816 = vmatpush1.bf16.msra.mxu0 0
  %817 = vmatprep.subr.bf16.mxu0 0
  %818 = vmatpush1.bf16.msra.mxu0 0
  %819 = vmatprep.subr.bf16.mxu0 0
  %820 = vmatpush1.bf16.msra.mxu0 0
  %821 = vmatprep.subr.bf16.mxu0 0
  %822 = vmatpush1.bf16.msra.mxu0 0
  %823 = vmatprep.subr.bf16.mxu0 0
  %824 = vmatpush1.bf16.msra.mxu0 0
  %825 = vmatprep.subr.bf16.mxu0 0
  %826 = vmatpush1.bf16.msra.mxu0 0
  %827 = vmatprep.subr.bf16.mxu0 0
  %828 = vmatpush1.bf16.msra.mxu0 0
  %829 = vmatprep.mubr.bf16.mxu0 0
  %830 = vmatmul.mubr.bf16.gmra.mrb[0].mxu0 %v723
  %v831 = vpop.f32.mrb[0].mxu0
  %v832 = vadd.f32 0.0, %v831
  %v833 = vpop.f32.mrb[0].mxu0
  %v834 = vpop.f32.mrb[0].mxu0
  %v835 = vadd.f32 0.0, %v834
  %v836 = vpop.f32.mrb[0].mxu0
  %837 = vmatprep.mubr.bf16.mxu0 0
  %838 = vmatmul.mubr.bf16.gmra.mrb[0].mxu0 %v726
  %v839 = vpop.f32.mrb[0].mxu0
  %v840 = vadd.f32 0.0, %v839
  %v841 = vpop.f32.mrb[0].mxu0
  %v842 = vpop.f32.mrb[0].mxu0
  %v843 = vadd.f32 0.0, %v842
  %v844 = vpop.f32.mrb[0].mxu0
  %845 = vmatprep.mubr.bf16.mxu0 0
  %846 = vmatmul.mubr.bf16.gmra.mrb[0].mxu0 %v729
  %v847 = vpop.f32.mrb[0].mxu0
  %v848 = vadd.f32 0.0, %v847
  %v849 = vpop.f32.mrb[0].mxu0
  %v850 = vpop.f32.mrb[0].mxu0
  %v851 = vadd.f32 0.0, %v850
  %v852 = vpop.f32.mrb[0].mxu0
  %853 = vmatprep.mubr.bf16.mxu0 0
  %854 = vmatmul.mubr.bf16.gmra.mrb[0].mxu0 %v732
  %v855 = vpop.f32.mrb[0].mxu0
  %v856 = vadd.f32 0.0, %v855
  %v857 = vpop.f32.mrb[0].mxu0
  %v858 = vpop.f32.mrb[0].mxu0
  %v859 = vadd.f32 0.0, %v858
  %v860 = vpop.f32.mrb[0].mxu0
  %861 = vmatprep.mubr.bf16.mxu0 0
  %862 = vmatmul.mubr.bf16.gmra.mrb[0].mxu0 %v735
  %v863 = vpop.f32.mrb[0].mxu0
  %v864 = vadd.f32 0.0, %v863
  %v865 = vpop.f32.mrb[0].mxu0
  %v866 = vpop.f32.mrb[0].mxu0
  %v867 = vadd.f32 0.0, %v866
  %v868 = vpop.f32.mrb[0].mxu0
  %869 = vmatprep.mubr.bf16.mxu0 0
  %870 = vmatmul.mubr.bf16.gmra.mrb[0].mxu0 %v738
  %v871 = vpop.f32.mrb[0].mxu0
  %v872 = vadd.f32 0.0, %v871
  %v873 = vpop.f32.mrb[0].mxu0
  %v874 = vpop.f32.mrb[0].mxu0
  %v875 = vadd.f32 0.0, %v874
  %v876 = vpop.f32.mrb[0].mxu0
  %877 = vmatprep.mubr.bf16.mxu0 0
  %878 = vmatmul.mubr.bf16.gmra.mrb[0].mxu0 %v741
  %v879 = vpop.f32.mrb[0].mxu0
  %v880 = vadd.f32 0.0, %v879
  %v881 = vpop.f32.mrb[0].mxu0
  %v882 = vpop.f32.mrb[0].mxu0
  %v883 = vadd.f32 0.0, %v882
  %v884 = vpop.f32.mrb[0].mxu0
  %885 = vmatprep.mubr.bf16.mxu0 0
  %886 = vmatmul.mubr.bf16.gmra.mrb[0].mxu0 %v744
  %v887 = vpop.f32.mrb[0].mxu0
  %v888 = vadd.f32 0.0, %v887
  %v889 = vpop.f32.mrb[0].mxu0
  %v890 = vpop.f32.mrb[0].mxu0
  %v891 = vadd.f32 0.0, %v890
  %v892 = vpop.f32.mrb[0].mxu0
  %893 = vmatprep.mubr.bf16.mxu0 0
  %894 = vmatmul.mubr.bf16.gmra.mrb[0].mxu0 %v747
  %v895 = vpop.f32.mrb[0].mxu0
  %v896 = vadd.f32 0.0, %v895
  %v897 = vpop.f32.mrb[0].mxu0
  %v898 = vpop.f32.mrb[0].mxu0
  %v899 = vadd.f32 0.0, %v898
  %v900 = vpop.f32.mrb[0].mxu0
  %901 = vmatprep.mubr.bf16.mxu0 0
  %902 = vmatmul.mubr.bf16.gmra.mrb[0].mxu0 %v750
  %v903 = vpop.f32.mrb[0].mxu0
  %v904 = vadd.f32 0.0, %v903
  %v905 = vpop.f32.mrb[0].mxu0
  %v906 = vpop.f32.mrb[0].mxu0
  %v907 = vadd.f32 0.0, %v906
  %v908 = vpop.f32.mrb[0].mxu0
  %909 = vmatprep.mubr.bf16.mxu0 0
  %910 = vmatmul.mubr.bf16.gmra.mrb[0].mxu0 %v753
  %v911 = vpop.f32.mrb[0].mxu0
  %v912 = vadd.f32 0.0, %v911
  %v913 = vpop.f32.mrb[0].mxu0
  %v914 = vpop.f32.mrb[0].mxu0
  %v915 = vadd.f32 0.0, %v914
  %v916 = vpop.f32.mrb[0].mxu0
  %917 = vmatprep.mubr.bf16.mxu0 0
  %918 = vmatmul.mubr.bf16.gmra.mrb[0].mxu0 %v756
  %v919 = vpop.f32.mrb[0].mxu0
  %v920 = vadd.f32 0.0, %v919
  %v921 = vpop.f32.mrb[0].mxu0
  %v922 = vpop.f32.mrb[0].mxu0
  %v923 = vadd.f32 0.0, %v922
  %v924 = vpop.f32.mrb[0].mxu0
  %925 = vmatprep.mubr.bf16.mxu0 0
  %926 = vmatmul.mubr.bf16.gmra.mrb[0].mxu0 %v759
  %v927 = vpop.f32.mrb[0].mxu0
  %v928 = vadd.f32 0.0, %v927
  %v929 = vpop.f32.mrb[0].mxu0
  %v930 = vpop.f32.mrb[0].mxu0
  %v931 = vadd.f32 0.0, %v930
  %v932 = vpop.f32.mrb[0].mxu0
  %933 = vmatprep.mubr.bf16.mxu0 0
  %934 = vmatmul.mubr.bf16.gmra.mrb[0].mxu0 %v762
  %v935 = vpop.f32.mrb[0].mxu0
  %v936 = vadd.f32 0.0, %v935
  %v937 = vpop.f32.mrb[0].mxu0
  %v938 = vpop.f32.mrb[0].mxu0
  %v939 = vadd.f32 0.0, %v938
  %v940 = vpop.f32.mrb[0].mxu0
  %941 = vmatprep.mubr.bf16.mxu0 0
  %942 = vmatmul.mubr.bf16.gmra.mrb[0].mxu0 %v765
  %v943 = vpop.f32.mrb[0].mxu0
  %v944 = vadd.f32 0.0, %v943
  %v945 = vpop.f32.mrb[0].mxu0
  %v946 = vpop.f32.mrb[0].mxu0
  %v947 = vadd.f32 0.0, %v946
  %v948 = vpop.f32.mrb[0].mxu0
  %949 = vmatprep.mubr.bf16.mxu0 0
  %950 = vmatmul.mubr.bf16.gmra.mrb[0].mxu0 %v768
  %v951 = vpop.f32.mrb[0].mxu0
  %v952 = vadd.f32 0.0, %v951
  %v953 = vpop.f32.mrb[0].mxu0
  %v954 = vpop.f32.mrb[0].mxu0
  %v955 = vadd.f32 0.0, %v954
  %v956 = vpop.f32.mrb[0].mxu0
  %957 = vmatprep.mubr.bf16.mxu0 0
  %958 = vmatmul.mubr.bf16.gmra.mrb[0].mxu0 %v771
  %v959 = vpop.f32.mrb[0].mxu0
  %v960 = vadd.f32 0.0, %v959
  %v961 = vpop.f32.mrb[0].mxu0
  %v962 = vpop.f32.mrb[0].mxu0
  %v963 = vadd.f32 0.0, %v962
  %v964 = vpop.f32.mrb[0].mxu0
  %965 = vmatprep.mubr.bf16.mxu0 0
  %966 = vmatmul.mubr.bf16.gmra.mrb[0].mxu0 %v774
  %v967 = vpop.f32.mrb[0].mxu0
  %v968 = vadd.f32 0.0, %v967
  %v969 = vpop.f32.mrb[0].mxu0
  %v970 = vpop.f32.mrb[0].mxu0
  %v971 = vadd.f32 0.0, %v970
  %v972 = vpop.f32.mrb[0].mxu0
  %973 = vmatprep.mubr.bf16.mxu0 0
  %974 = vmatmul.mubr.bf16.gmra.mrb[0].mxu0 %v777
  %v975 = vpop.f32.mrb[0].mxu0
  %v976 = vadd.f32 0.0, %v975
  %v977 = vpop.f32.mrb[0].mxu0
  %v978 = vpop.f32.mrb[0].mxu0
  %v979 = vadd.f32 0.0, %v978
  %v980 = vpop.f32.mrb[0].mxu0
  %981 = vmatprep.mubr.bf16.mxu0 0
  %982 = vmatmul.mubr.bf16.gmra.mrb[0].mxu0 %v780
  %v983 = vpop.f32.mrb[0].mxu0
  %v984 = vadd.f32 0.0, %v983
  %v985 = vpop.f32.mrb[0].mxu0
  %v986 = vpop.f32.mrb[0].mxu0
  %v987 = vadd.f32 0.0, %v986
  %v988 = vpop.f32.mrb[0].mxu0
  %989 = vmatprep.mubr.bf16.mxu0 0
  %990 = vmatmul.mubr.bf16.gmra.mrb[0].mxu0 %v783
  %v991 = vpop.f32.mrb[0].mxu0
  %v992 = vadd.f32 0.0, %v991
  %v993 = vpop.f32.mrb[0].mxu0
  %v994 = vpop.f32.mrb[0].mxu0
  %v995 = vadd.f32 0.0, %v994
  %v996 = vpop.f32.mrb[0].mxu0
  %997 = vmatprep.mubr.bf16.mxu0 0
  %998 = vmatmul.mubr.bf16.gmra.mrb[0].mxu0 %v786
  %v999 = vpop.f32.mrb[0].mxu0
  %v1000 = vadd.f32 0.0, %v999
  %v1001 = vpop.f32.mrb[0].mxu0
  %v1002 = vpop.f32.mrb[0].mxu0
  %v1003 = vadd.f32 0.0, %v1002
  %v1004 = vpop.f32.mrb[0].mxu0
  %1005 = vmatprep.mubr.bf16.mxu0 0
  %1006 = vmatmul.mubr.bf16.gmra.mrb[0].mxu0 %v789
  %v1007 = vpop.f32.mrb[0].mxu0
  %v1008 = vadd.f32 0.0, %v1007
  %v1009 = vpop.f32.mrb[0].mxu0
  %v1010 = vpop.f32.mrb[0].mxu0
  %v1011 = vadd.f32 0.0, %v1010
  %v1012 = vpop.f32.mrb[0].mxu0
  %1013 = vmatprep.mubr.bf16.mxu0 0
  %1014 = vmatmul.mubr.bf16.gmra.mrb[0].mxu0 %v792
  %v1015 = vpop.f32.mrb[0].mxu0
  %v1016 = vadd.f32 0.0, %v1015
  %v1017 = vpop.f32.mrb[0].mxu0
  %v1018 = vpop.f32.mrb[0].mxu0
  %v1019 = vadd.f32 0.0, %v1018
  %v1020 = vpop.f32.mrb[0].mxu0
  %1021 = vmatprep.mubr.bf16.mxu0 0
  %1022 = vmatmul.mubr.bf16.gmra.mrb[0].mxu0 %v795
  %v1023 = vpop.f32.mrb[0].mxu0
  %v1024 = vadd.f32 0.0, %v1023
  %v1025 = vpop.f32.mrb[0].mxu0
  %v1026 = vpop.f32.mrb[0].mxu0
  %v1027 = vpop.f32.mrb[0].mxu0
  %1028 = vdwg.mxu0
  %v1029 = vld [vmem:[%s2] sm:$0xf]
  %v1030 = vld [vmem:[%s2 + $0x4] sm:$0xf]
  %v1031 = vld [vmem:[%s2 + $0x8] sm:$0xf]
  %v1032 = vld [vmem:[%s2 + $0xc] sm:$0xf]
  %v1033 = vld [vmem:[%s2 + $0x10] sm:$0xf]
  %v1034 = vld [vmem:[%s2 + $0x14] sm:$0xf]
  %v1035 = vld [vmem:[%s2 + $0x18] sm:$0xf]
  %v1036 = vld [vmem:[%s2 + $0x1c] sm:$0xf]
  %v1037 = vld [vmem:[%s2 + $0x20] sm:$0xf]
  %v1038 = vld [vmem:[%s2 + $0x24] sm:$0xf]
  %v1039 = vld [vmem:[%s2 + $0x28] sm:$0xf]
  %v1040 = vld [vmem:[%s2 + $0x2c] sm:$0xf]
  %v1041 = vld [vmem:[%s2 + $0x30] sm:$0xf]
  %v1042 = vld [vmem:[%s2 + $0x34] sm:$0xf]
  %v1043 = vld [vmem:[%s2 + $0x38] sm:$0xf]
  %v1044 = vld [vmem:[%s2 + $0x3c] sm:$0xf]
  %v1045 = vld [vmem:[%s2 + $0x40] sm:$0xf]
  %v1046 = vld [vmem:[%s2 + $0x44] sm:$0xf]
  %v1047 = vld [vmem:[%s2 + $0x48] sm:$0xf]
  %v1048 = vld [vmem:[%s2 + $0x4c] sm:$0xf]
  %v1049 = vld [vmem:[%s2 + $0x50] sm:$0xf]
  %v1050 = vld [vmem:[%s2 + $0x54] sm:$0xf]
  %v1051 = vld [vmem:[%s2 + $0x58] sm:$0xf]
  %v1052 = vld [vmem:[%s2 + $0x5c] sm:$0xf]
  %v1053 = vld [vmem:[%s2 + $0x60] sm:$0xf]
  %v1054 = vld [vmem:[%s2 + $0x64] sm:$0xf]
  %v1055 = vld [vmem:[%s2 + $0x68] sm:$0xf]
  %v1056 = vld [vmem:[%s2 + $0x6c] sm:$0xf]
  %v1057 = vld [vmem:[%s2 + $0x70] sm:$0xf]
  %v1058 = vld [vmem:[%s2 + $0x74] sm:$0xf]
  %v1059 = vld [vmem:[%s2 + $0x78] sm:$0xf]
  %v1060 = vld [vmem:[%s2 + $0x7c] sm:$0xf]
  %v1061 = vld [vmem:[%s2 + $0x80] sm:$0xf]
  %v1062 = vld [vmem:[%s2 + $0x84] sm:$0xf]
  %v1063 = vld [vmem:[%s2 + $0x88] sm:$0xf]
  %v1064 = vld [vmem:[%s2 + $0x8c] sm:$0xf]
  %v1065 = vld [vmem:[%s2 + $0x90] sm:$0xf]
  %v1066 = vld [vmem:[%s2 + $0x94] sm:$0xf]
  %v1067 = vld [vmem:[%s2 + $0x98] sm:$0xf]
  %v1068 = vld [vmem:[%s2 + $0x9c] sm:$0xf]
  %v1069 = vld [vmem:[%s2 + $0xa0] sm:$0xf]
  %v1070 = vld [vmem:[%s2 + $0xa4] sm:$0xf]
  %v1071 = vld [vmem:[%s2 + $0xa8] sm:$0xf]
  %v1072 = vld [vmem:[%s2 + $0xac] sm:$0xf]
  %v1073 = vld [vmem:[%s2 + $0xb0] sm:$0xf]
  %v1074 = vld [vmem:[%s2 + $0xb4] sm:$0xf]
  %v1075 = vld [vmem:[%s2 + $0xb8] sm:$0xf]
  %v1076 = vld [vmem:[%s2 + $0xbc] sm:$0xf]
  %v1077 = vld [vmem:[%s2 + $0xc0] sm:$0xf]
  %v1127 = vunpack.c.l.b16 %v1029
  %v1128 = vunpack.c.l.b16 %v1030
  %v1129 = vunpack.c.l.b16 %v1031
  %v1130 = vunpack.c.l.b16 %v1032
  %v1131 = vunpack.c.l.b16 %v1033
  %v1132 = vunpack.c.l.b16 %v1034
  %v1133 = vunpack.c.l.b16 %v1035
  %v1134 = vunpack.c.l.b16 %v1036
  %v1135 = vunpack.c.l.b16 %v1037
  %v1136 = vunpack.c.l.b16 %v1038
  %v1137 = vunpack.c.l.b16 %v1039
  %v1138 = vunpack.c.l.b16 %v1040
  %v1139 = vunpack.c.l.b16 %v1041
  %v1140 = vunpack.c.l.b16 %v1042
  %v1141 = vunpack.c.l.b16 %v1043
  %v1142 = vunpack.c.l.b16 %v1044
  %v1143 = vunpack.c.l.b16 %v1045
  %v1144 = vunpack.c.l.b16 %v1046
  %v1145 = vunpack.c.l.b16 %v1047
  %v1146 = vunpack.c.l.b16 %v1048
  %v1147 = vunpack.c.l.b16 %v1049
  %v1148 = vunpack.c.l.b16 %v1050
  %v1149 = vunpack.c.l.b16 %v1051
  %v1150 = vunpack.c.l.b16 %v1052
  %v1151 = vunpack.c.l.b16 %v1053
  %v1152 = vunpack.c.l.b16 %v1054
  %v1153 = vunpack.c.l.b16 %v1055
  %v1154 = vunpack.c.l.b16 %v1056
  %v1155 = vunpack.c.l.b16 %v1057
  %v1156 = vunpack.c.l.b16 %v1058
  %v1157 = vunpack.c.l.b16 %v1059
  %v1158 = vunpack.c.l.b16 %v1060
  %v1159 = vunpack.c.l.b16 %v1061
  %v1160 = vunpack.c.l.b16 %v1062
  %v1161 = vunpack.c.l.b16 %v1063
  %v1162 = vunpack.c.l.b16 %v1064
  %v1163 = vunpack.c.l.b16 %v1065
  %v1164 = vunpack.c.l.b16 %v1066
  %v1165 = vunpack.c.l.b16 %v1067
  %v1166 = vunpack.c.l.b16 %v1068
  %v1167 = vunpack.c.l.b16 %v1069
  %v1168 = vunpack.c.l.b16 %v1070
  %v1169 = vunpack.c.l.b16 %v1071
  %v1170 = vunpack.c.l.b16 %v1072
  %v1171 = vunpack.c.l.b16 %v1073
  %v1172 = vunpack.c.l.b16 %v1074
  %v1173 = vunpack.c.l.b16 %v1075
  %v1174 = vunpack.c.l.b16 %v1076
  %v1175 = vunpack.c.l.b16 %v1077
  %v1176 = vpack.c.b16 %v1128, %v1127
  %v1177 = vpack.c.b16 %v1130, %v1129
  %v1178 = vpack.c.b16 %v1132, %v1131
  %v1179 = vpack.c.b16 %v1134, %v1133
  %v1180 = vpack.c.b16 %v1136, %v1135
  %v1181 = vpack.c.b16 %v1138, %v1137
  %v1182 = vpack.c.b16 %v1140, %v1139
  %v1183 = vpack.c.b16 %v1142, %v1141
  %v1184 = vpack.c.b16 %v1144, %v1143
  %v1185 = vpack.c.b16 %v1146, %v1145
  %v1186 = vpack.c.b16 %v1148, %v1147
  %v1187 = vpack.c.b16 %v1150, %v1149
  %v1188 = vpack.c.b16 %v1152, %v1151
  %v1189 = vpack.c.b16 %v1154, %v1153
  %v1190 = vpack.c.b16 %v1156, %v1155
  %v1191 = vpack.c.b16 %v1158, %v1157
  %v1192 = vpack.c.b16 %v1160, %v1159
  %v1193 = vpack.c.b16 %v1162, %v1161
  %v1194 = vpack.c.b16 %v1164, %v1163
  %v1195 = vpack.c.b16 %v1166, %v1165
  %v1196 = vpack.c.b16 %v1168, %v1167
  %v1197 = vpack.c.b16 %v1170, %v1169
  %v1198 = vpack.c.b16 %v1172, %v1171
  %v1199 = vpack.c.b16 %v1174, %v1173
  %v1200 = vpack.c.b16 %v1175, %v1175
  %v1202 = vsel %vm235, %v1176, 0
  %v1205 = vsel %vm235, %v1177, 0
  %v1208 = vsel %vm235, %v1178, 0
  %v1211 = vsel %vm235, %v1179, 0
  %v1214 = vsel %vm235, %v1180, 0
  %v1217 = vsel %vm235, %v1181, 0
  %v1220 = vsel %vm235, %v1182, 0
  %v1223 = vsel %vm235, %v1183, 0
  %v1226 = vsel %vm235, %v1184, 0
  %v1229 = vsel %vm235, %v1185, 0
  %v1232 = vsel %vm235, %v1186, 0
  %v1235 = vsel %vm235, %v1187, 0
  %v1238 = vsel %vm235, %v1188, 0
  %v1241 = vsel %vm235, %v1189, 0
  %v1244 = vsel %vm235, %v1190, 0
  %v1247 = vsel %vm235, %v1191, 0
  %v1250 = vsel %vm235, %v1192, 0
  %v1253 = vsel %vm235, %v1193, 0
  %v1256 = vsel %vm235, %v1194, 0
  %v1259 = vsel %vm235, %v1195, 0
  %v1262 = vsel %vm235, %v1196, 0
  %v1265 = vsel %vm235, %v1197, 0
  %v1268 = vsel %vm235, %v1198, 0
  %v1271 = vsel %vm235, %v1199, 0
  %v1274 = vsel %vm235, %v1200, 0
  %1276 = vmatprep.subr.bf16.mxu0 0
  %1277 = vmatpush1.bf16.msra.mxu0 %v226
  %1278 = vmatprep.subr.bf16.mxu0 0
  %1279 = vmatpush1.bf16.msra.mxu0 %v227
  %1280 = vmatprep.subr.bf16.mxu0 0
  %1281 = vmatpush1.bf16.msra.mxu0 %v228
  %1282 = vmatprep.subr.bf16.mxu0 0
  %1283 = vmatpush1.bf16.msra.mxu0 %v229
  %1284 = vmatprep.subr.bf16.mxu0 0
  %1285 = vmatpush1.bf16.msra.mxu0 %v316
  %1286 = vmatprep.subr.bf16.mxu0 0
  %1287 = vmatpush1.bf16.msra.mxu0 0
  %1288 = vmatprep.subr.bf16.mxu0 0
  %1289 = vmatpush1.bf16.msra.mxu0 0
  %1290 = vmatprep.subr.bf16.mxu0 0
  %1291 = vmatpush1.bf16.msra.mxu0 0
  %1292 = vmatprep.subr.bf16.mxu0 0
  %1293 = vmatpush1.bf16.msra.mxu0 0
  %1294 = vmatprep.subr.bf16.mxu0 0
  %1295 = vmatpush1.bf16.msra.mxu0 0
  %1296 = vmatprep.subr.bf16.mxu0 0
  %1297 = vmatpush1.bf16.msra.mxu0 0
  %1298 = vmatprep.subr.bf16.mxu0 0
  %1299 = vmatpush1.bf16.msra.mxu0 0
  %1300 = vmatprep.subr.bf16.mxu0 0
  %1301 = vmatpush1.bf16.msra.mxu0 0
  %1302 = vmatprep.subr.bf16.mxu0 0
  %1303 = vmatpush1.bf16.msra.mxu0 0
  %1304 = vmatprep.subr.bf16.mxu0 0
  %1305 = vmatpush1.bf16.msra.mxu0 0
  %1306 = vmatprep.subr.bf16.mxu0 0
  %1307 = vmatpush1.bf16.msra.mxu0 0
  %1308 = vmatprep.mubr.bf16.mxu0 0
  %1309 = vmatmul.mubr.bf16.gmra.mrb[0].mxu0 %v1202
  %v1310 = vpop.f32.mrb[0].mxu0
  %v1311 = vadd.f32 0.0, %v1310
  %v1312 = vpop.f32.mrb[0].mxu0
  %v1313 = vpop.f32.mrb[0].mxu0
  %v1314 = vadd.f32 0.0, %v1313
  %v1315 = vpop.f32.mrb[0].mxu0
  %1316 = vmatprep.mubr.bf16.mxu0 0
  %1317 = vmatmul.mubr.bf16.gmra.mrb[0].mxu0 %v1205
  %v1318 = vpop.f32.mrb[0].mxu0
  %v1319 = vadd.f32 0.0, %v1318
  %v1320 = vpop.f32.mrb[0].mxu0
  %v1321 = vpop.f32.mrb[0].mxu0
  %v1322 = vadd.f32 0.0, %v1321
  %v1323 = vpop.f32.mrb[0].mxu0
  %1324 = vmatprep.mubr.bf16.mxu0 0
  %1325 = vmatmul.mubr.bf16.gmra.mrb[0].mxu0 %v1208
  %v1326 = vpop.f32.mrb[0].mxu0
  %v1327 = vadd.f32 0.0, %v1326
  %v1328 = vpop.f32.mrb[0].mxu0
  %v1329 = vpop.f32.mrb[0].mxu0
  %v1330 = vadd.f32 0.0, %v1329
  %v1331 = vpop.f32.mrb[0].mxu0
  %1332 = vmatprep.mubr.bf16.mxu0 0
  %1333 = vmatmul.mubr.bf16.gmra.mrb[0].mxu0 %v1211
  %v1334 = vpop.f32.mrb[0].mxu0
  %v1335 = vadd.f32 0.0, %v1334
  %v1336 = vpop.f32.mrb[0].mxu0
  %v1337 = vpop.f32.mrb[0].mxu0
  %v1338 = vadd.f32 0.0, %v1337
  %v1339 = vpop.f32.mrb[0].mxu0
  %1340 = vmatprep.mubr.bf16.mxu0 0
  %1341 = vmatmul.mubr.bf16.gmra.mrb[0].mxu0 %v1214
  %v1342 = vpop.f32.mrb[0].mxu0
  %v1343 = vadd.f32 0.0, %v1342
  %v1344 = vpop.f32.mrb[0].mxu0
  %v1345 = vpop.f32.mrb[0].mxu0
  %v1346 = vadd.f32 0.0, %v1345
  %v1347 = vpop.f32.mrb[0].mxu0
  %1348 = vmatprep.mubr.bf16.mxu0 0
  %1349 = vmatmul.mubr.bf16.gmra.mrb[0].mxu0 %v1217
  %v1350 = vpop.f32.mrb[0].mxu0
  %v1351 = vadd.f32 0.0, %v1350
  %v1352 = vpop.f32.mrb[0].mxu0
  %v1353 = vpop.f32.mrb[0].mxu0
  %v1354 = vadd.f32 0.0, %v1353
  %v1355 = vpop.f32.mrb[0].mxu0
  %1356 = vmatprep.mubr.bf16.mxu0 0
  %1357 = vmatmul.mubr.bf16.gmra.mrb[0].mxu0 %v1220
  %v1358 = vpop.f32.mrb[0].mxu0
  %v1359 = vadd.f32 0.0, %v1358
  %v1360 = vpop.f32.mrb[0].mxu0
  %v1361 = vpop.f32.mrb[0].mxu0
  %v1362 = vadd.f32 0.0, %v1361
  %v1363 = vpop.f32.mrb[0].mxu0
  %1364 = vmatprep.mubr.bf16.mxu0 0
  %1365 = vmatmul.mubr.bf16.gmra.mrb[0].mxu0 %v1223
  %v1366 = vpop.f32.mrb[0].mxu0
  %v1367 = vadd.f32 0.0, %v1366
  %v1368 = vpop.f32.mrb[0].mxu0
  %v1369 = vpop.f32.mrb[0].mxu0
  %v1370 = vadd.f32 0.0, %v1369
  %v1371 = vpop.f32.mrb[0].mxu0
  %1372 = vmatprep.mubr.bf16.mxu0 0
  %1373 = vmatmul.mubr.bf16.gmra.mrb[0].mxu0 %v1226
  %v1374 = vpop.f32.mrb[0].mxu0
  %v1375 = vadd.f32 0.0, %v1374
  %v1376 = vpop.f32.mrb[0].mxu0
  %v1377 = vpop.f32.mrb[0].mxu0
  %v1378 = vadd.f32 0.0, %v1377
  %v1379 = vpop.f32.mrb[0].mxu0
  %1380 = vmatprep.mubr.bf16.mxu0 0
  %1381 = vmatmul.mubr.bf16.gmra.mrb[0].mxu0 %v1229
  %v1382 = vpop.f32.mrb[0].mxu0
  %v1383 = vadd.f32 0.0, %v1382
  %v1384 = vpop.f32.mrb[0].mxu0
  %v1385 = vpop.f32.mrb[0].mxu0
  %v1386 = vadd.f32 0.0, %v1385
  %v1387 = vpop.f32.mrb[0].mxu0
  %1388 = vmatprep.mubr.bf16.mxu0 0
  %1389 = vmatmul.mubr.bf16.gmra.mrb[0].mxu0 %v1232
  %v1390 = vpop.f32.mrb[0].mxu0
  %v1391 = vadd.f32 0.0, %v1390
  %v1392 = vpop.f32.mrb[0].mxu0
  %v1393 = vpop.f32.mrb[0].mxu0
  %v1394 = vadd.f32 0.0, %v1393
  %v1395 = vpop.f32.mrb[0].mxu0
  %1396 = vmatprep.mubr.bf16.mxu0 0
  %1397 = vmatmul.mubr.bf16.gmra.mrb[0].mxu0 %v1235
  %v1398 = vpop.f32.mrb[0].mxu0
  %v1399 = vadd.f32 0.0, %v1398
  %v1400 = vpop.f32.mrb[0].mxu0
  %v1401 = vpop.f32.mrb[0].mxu0
  %v1402 = vadd.f32 0.0, %v1401
  %v1403 = vpop.f32.mrb[0].mxu0
  %1404 = vmatprep.mubr.bf16.mxu0 0
  %1405 = vmatmul.mubr.bf16.gmra.mrb[0].mxu0 %v1238
  %v1406 = vpop.f32.mrb[0].mxu0
  %v1407 = vadd.f32 0.0, %v1406
  %v1408 = vpop.f32.mrb[0].mxu0
  %v1409 = vpop.f32.mrb[0].mxu0
  %v1410 = vadd.f32 0.0, %v1409
  %v1411 = vpop.f32.mrb[0].mxu0
  %1412 = vmatprep.mubr.bf16.mxu0 0
  %1413 = vmatmul.mubr.bf16.gmra.mrb[0].mxu0 %v1241
  %v1414 = vpop.f32.mrb[0].mxu0
  %v1415 = vadd.f32 0.0, %v1414
  %v1416 = vpop.f32.mrb[0].mxu0
  %v1417 = vpop.f32.mrb[0].mxu0
  %v1418 = vadd.f32 0.0, %v1417
  %v1419 = vpop.f32.mrb[0].mxu0
  %1420 = vmatprep.mubr.bf16.mxu0 0
  %1421 = vmatmul.mubr.bf16.gmra.mrb[0].mxu0 %v1244
  %v1422 = vpop.f32.mrb[0].mxu0
  %v1423 = vadd.f32 0.0, %v1422
  %v1424 = vpop.f32.mrb[0].mxu0
  %v1425 = vpop.f32.mrb[0].mxu0
  %v1426 = vadd.f32 0.0, %v1425
  %v1427 = vpop.f32.mrb[0].mxu0
  %1428 = vmatprep.mubr.bf16.mxu0 0
  %1429 = vmatmul.mubr.bf16.gmra.mrb[0].mxu0 %v1247
  %v1430 = vpop.f32.mrb[0].mxu0
  %v1431 = vadd.f32 0.0, %v1430
  %v1432 = vpop.f32.mrb[0].mxu0
  %v1433 = vpop.f32.mrb[0].mxu0
  %v1434 = vadd.f32 0.0, %v1433
  %v1435 = vpop.f32.mrb[0].mxu0
  %1436 = vmatprep.mubr.bf16.mxu0 0
  %1437 = vmatmul.mubr.bf16.gmra.mrb[0].mxu0 %v1250
  %v1438 = vpop.f32.mrb[0].mxu0
  %v1439 = vadd.f32 0.0, %v1438
  %v1440 = vpop.f32.mrb[0].mxu0
  %v1441 = vpop.f32.mrb[0].mxu0
  %v1442 = vadd.f32 0.0, %v1441
  %v1443 = vpop.f32.mrb[0].mxu0
  %1444 = vmatprep.mubr.bf16.mxu0 0
  %1445 = vmatmul.mubr.bf16.gmra.mrb[0].mxu0 %v1253
  %v1446 = vpop.f32.mrb[0].mxu0
  %v1447 = vadd.f32 0.0, %v1446
  %v1448 = vpop.f32.mrb[0].mxu0
  %v1449 = vpop.f32.mrb[0].mxu0
  %v1450 = vadd.f32 0.0, %v1449
  %v1451 = vpop.f32.mrb[0].mxu0
  %1452 = vmatprep.mubr.bf16.mxu0 0
  %1453 = vmatmul.mubr.bf16.gmra.mrb[0].mxu0 %v1256
  %v1454 = vpop.f32.mrb[0].mxu0
  %v1455 = vadd.f32 0.0, %v1454
  %v1456 = vpop.f32.mrb[0].mxu0
  %v1457 = vpop.f32.mrb[0].mxu0
  %v1458 = vadd.f32 0.0, %v1457
  %v1459 = vpop.f32.mrb[0].mxu0
  %1460 = vmatprep.mubr.bf16.mxu0 0
  %1461 = vmatmul.mubr.bf16.gmra.mrb[0].mxu0 %v1259
  %v1462 = vpop.f32.mrb[0].mxu0
  %v1463 = vadd.f32 0.0, %v1462
  %v1464 = vpop.f32.mrb[0].mxu0
  %v1465 = vpop.f32.mrb[0].mxu0
  %v1466 = vadd.f32 0.0, %v1465
  %v1467 = vpop.f32.mrb[0].mxu0
  %1468 = vmatprep.mubr.bf16.mxu0 0
  %1469 = vmatmul.mubr.bf16.gmra.mrb[0].mxu0 %v1262
  %v1470 = vpop.f32.mrb[0].mxu0
  %v1471 = vadd.f32 0.0, %v1470
  %v1472 = vpop.f32.mrb[0].mxu0
  %v1473 = vpop.f32.mrb[0].mxu0
  %v1474 = vadd.f32 0.0, %v1473
  %v1475 = vpop.f32.mrb[0].mxu0
  %1476 = vmatprep.mubr.bf16.mxu0 0
  %1477 = vmatmul.mubr.bf16.gmra.mrb[0].mxu0 %v1265
  %v1478 = vpop.f32.mrb[0].mxu0
  %v1479 = vadd.f32 0.0, %v1478
  %v1480 = vpop.f32.mrb[0].mxu0
  %v1481 = vpop.f32.mrb[0].mxu0
  %v1482 = vadd.f32 0.0, %v1481
  %v1483 = vpop.f32.mrb[0].mxu0
  %1484 = vmatprep.mubr.bf16.mxu0 0
  %1485 = vmatmul.mubr.bf16.gmra.mrb[0].mxu0 %v1268
  %v1486 = vpop.f32.mrb[0].mxu0
  %v1487 = vadd.f32 0.0, %v1486
  %v1488 = vpop.f32.mrb[0].mxu0
  %v1489 = vpop.f32.mrb[0].mxu0
  %v1490 = vadd.f32 0.0, %v1489
  %v1491 = vpop.f32.mrb[0].mxu0
  %1492 = vmatprep.mubr.bf16.mxu0 0
  %1493 = vmatmul.mubr.bf16.gmra.mrb[0].mxu0 %v1271
  %v1494 = vpop.f32.mrb[0].mxu0
  %v1495 = vadd.f32 0.0, %v1494
  %v1496 = vpop.f32.mrb[0].mxu0
  %v1497 = vpop.f32.mrb[0].mxu0
  %v1498 = vadd.f32 0.0, %v1497
  %v1499 = vpop.f32.mrb[0].mxu0
  %1500 = vmatprep.mubr.bf16.mxu0 0
  %1501 = vmatmul.mubr.bf16.gmra.mrb[0].mxu0 %v1274
  %v1502 = vpop.f32.mrb[0].mxu0
  %v1503 = vadd.f32 0.0, %v1502
  %v1504 = vpop.f32.mrb[0].mxu0
  %v1505 = vpop.f32.mrb[0].mxu0
  %v1506 = vpop.f32.mrb[0].mxu0
  %1507 = vdwg.mxu0
  %v1508 = vld [vmem:[%s3] sm:$0xf]
  %v1509 = vld [vmem:[%s3 + $0x4] sm:$0xf]
  %v1510 = vld [vmem:[%s3 + $0x8] sm:$0xf]
  %v1511 = vld [vmem:[%s3 + $0xc] sm:$0xf]
  %v1512 = vld [vmem:[%s3 + $0x10] sm:$0xf]
  %v1513 = vld [vmem:[%s3 + $0x14] sm:$0xf]
  %v1514 = vld [vmem:[%s3 + $0x18] sm:$0xf]
  %v1515 = vld [vmem:[%s3 + $0x1c] sm:$0xf]
  %v1516 = vld [vmem:[%s3 + $0x20] sm:$0xf]
  %v1517 = vld [vmem:[%s3 + $0x24] sm:$0xf]
  %v1518 = vld [vmem:[%s3 + $0x28] sm:$0xf]
  %v1519 = vld [vmem:[%s3 + $0x2c] sm:$0xf]
  %v1520 = vld [vmem:[%s3 + $0x30] sm:$0xf]
  %v1521 = vld [vmem:[%s3 + $0x34] sm:$0xf]
  %v1522 = vld [vmem:[%s3 + $0x38] sm:$0xf]
  %v1523 = vld [vmem:[%s3 + $0x3c] sm:$0xf]
  %v1524 = vld [vmem:[%s3 + $0x40] sm:$0xf]
  %v1525 = vld [vmem:[%s3 + $0x44] sm:$0xf]
  %v1526 = vld [vmem:[%s3 + $0x48] sm:$0xf]
  %v1527 = vld [vmem:[%s3 + $0x4c] sm:$0xf]
  %v1528 = vld [vmem:[%s3 + $0x50] sm:$0xf]
  %v1529 = vld [vmem:[%s3 + $0x54] sm:$0xf]
  %v1530 = vld [vmem:[%s3 + $0x58] sm:$0xf]
  %v1531 = vld [vmem:[%s3 + $0x5c] sm:$0xf]
  %v1532 = vld [vmem:[%s3 + $0x60] sm:$0xf]
  %v1533 = vld [vmem:[%s3 + $0x64] sm:$0xf]
  %v1534 = vld [vmem:[%s3 + $0x68] sm:$0xf]
  %v1535 = vld [vmem:[%s3 + $0x6c] sm:$0xf]
  %v1536 = vld [vmem:[%s3 + $0x70] sm:$0xf]
  %v1537 = vld [vmem:[%s3 + $0x74] sm:$0xf]
  %v1538 = vld [vmem:[%s3 + $0x78] sm:$0xf]
  %v1539 = vld [vmem:[%s3 + $0x7c] sm:$0xf]
  %v1540 = vld [vmem:[%s3 + $0x80] sm:$0xf]
  %v1541 = vld [vmem:[%s3 + $0x84] sm:$0xf]
  %v1542 = vld [vmem:[%s3 + $0x88] sm:$0xf]
  %v1543 = vld [vmem:[%s3 + $0x8c] sm:$0xf]
  %v1544 = vld [vmem:[%s3 + $0x90] sm:$0xf]
  %v1545 = vld [vmem:[%s3 + $0x94] sm:$0xf]
  %v1546 = vld [vmem:[%s3 + $0x98] sm:$0xf]
  %v1547 = vld [vmem:[%s3 + $0x9c] sm:$0xf]
  %v1548 = vld [vmem:[%s3 + $0xa0] sm:$0xf]
  %v1549 = vld [vmem:[%s3 + $0xa4] sm:$0xf]
  %v1550 = vld [vmem:[%s3 + $0xa8] sm:$0xf]
  %v1551 = vld [vmem:[%s3 + $0xac] sm:$0xf]
  %v1552 = vld [vmem:[%s3 + $0xb0] sm:$0xf]
  %v1553 = vld [vmem:[%s3 + $0xb4] sm:$0xf]
  %v1554 = vld [vmem:[%s3 + $0xb8] sm:$0xf]
  %v1555 = vld [vmem:[%s3 + $0xbc] sm:$0xf]
  %v1556 = vld [vmem:[%s3 + $0xc0] sm:$0xf]
  %v1606 = vunpack.c.l.b16 %v1508
  %v1607 = vunpack.c.l.b16 %v1509
  %v1608 = vunpack.c.l.b16 %v1510
  %v1609 = vunpack.c.l.b16 %v1511
  %v1610 = vunpack.c.l.b16 %v1512
  %v1611 = vunpack.c.l.b16 %v1513
  %v1612 = vunpack.c.l.b16 %v1514
  %v1613 = vunpack.c.l.b16 %v1515
  %v1614 = vunpack.c.l.b16 %v1516
  %v1615 = vunpack.c.l.b16 %v1517
  %v1616 = vunpack.c.l.b16 %v1518
  %v1617 = vunpack.c.l.b16 %v1519
  %v1618 = vunpack.c.l.b16 %v1520
  %v1619 = vunpack.c.l.b16 %v1521
  %v1620 = vunpack.c.l.b16 %v1522
  %v1621 = vunpack.c.l.b16 %v1523
  %v1622 = vunpack.c.l.b16 %v1524
  %v1623 = vunpack.c.l.b16 %v1525
  %v1624 = vunpack.c.l.b16 %v1526
  %v1625 = vunpack.c.l.b16 %v1527
  %v1626 = vunpack.c.l.b16 %v1528
  %v1627 = vunpack.c.l.b16 %v1529
  %v1628 = vunpack.c.l.b16 %v1530
  %v1629 = vunpack.c.l.b16 %v1531
  %v1630 = vunpack.c.l.b16 %v1532
  %v1631 = vunpack.c.l.b16 %v1533
  %v1632 = vunpack.c.l.b16 %v1534
  %v1633 = vunpack.c.l.b16 %v1535
  %v1634 = vunpack.c.l.b16 %v1536
  %v1635 = vunpack.c.l.b16 %v1537
  %v1636 = vunpack.c.l.b16 %v1538
  %v1637 = vunpack.c.l.b16 %v1539
  %v1638 = vunpack.c.l.b16 %v1540
  %v1639 = vunpack.c.l.b16 %v1541
  %v1640 = vunpack.c.l.b16 %v1542
  %v1641 = vunpack.c.l.b16 %v1543
  %v1642 = vunpack.c.l.b16 %v1544
  %v1643 = vunpack.c.l.b16 %v1545
  %v1644 = vunpack.c.l.b16 %v1546
  %v1645 = vunpack.c.l.b16 %v1547
  %v1646 = vunpack.c.l.b16 %v1548
  %v1647 = vunpack.c.l.b16 %v1549
  %v1648 = vunpack.c.l.b16 %v1550
  %v1649 = vunpack.c.l.b16 %v1551
  %v1650 = vunpack.c.l.b16 %v1552
  %v1651 = vunpack.c.l.b16 %v1553
  %v1652 = vunpack.c.l.b16 %v1554
  %v1653 = vunpack.c.l.b16 %v1555
  %v1654 = vunpack.c.l.b16 %v1556
  %v1655 = vpack.c.b16 %v1607, %v1606
  %v1656 = vpack.c.b16 %v1609, %v1608
  %v1657 = vpack.c.b16 %v1611, %v1610
  %v1658 = vpack.c.b16 %v1613, %v1612
  %v1659 = vpack.c.b16 %v1615, %v1614
  %v1660 = vpack.c.b16 %v1617, %v1616
  %v1661 = vpack.c.b16 %v1619, %v1618
  %v1662 = vpack.c.b16 %v1621, %v1620
  %v1663 = vpack.c.b16 %v1623, %v1622
  %v1664 = vpack.c.b16 %v1625, %v1624
  %v1665 = vpack.c.b16 %v1627, %v1626
  %v1666 = vpack.c.b16 %v1629, %v1628
  %v1667 = vpack.c.b16 %v1631, %v1630
  %v1668 = vpack.c.b16 %v1633, %v1632
  %v1669 = vpack.c.b16 %v1635, %v1634
  %v1670 = vpack.c.b16 %v1637, %v1636
  %v1671 = vpack.c.b16 %v1639, %v1638
  %v1672 = vpack.c.b16 %v1641, %v1640
  %v1673 = vpack.c.b16 %v1643, %v1642
  %v1674 = vpack.c.b16 %v1645, %v1644
  %v1675 = vpack.c.b16 %v1647, %v1646
  %v1676 = vpack.c.b16 %v1649, %v1648
  %v1677 = vpack.c.b16 %v1651, %v1650
  %v1678 = vpack.c.b16 %v1653, %v1652
  %v1679 = vpack.c.b16 %v1654, %v1654
  %v1681 = vsel %vm235, %v1655, 0
  %v1684 = vsel %vm235, %v1656, 0
  %v1687 = vsel %vm235, %v1657, 0
  %v1690 = vsel %vm235, %v1658, 0
  %v1693 = vsel %vm235, %v1659, 0
  %v1696 = vsel %vm235, %v1660, 0
  %v1699 = vsel %vm235, %v1661, 0
  %v1702 = vsel %vm235, %v1662, 0
  %v1705 = vsel %vm235, %v1663, 0
  %v1708 = vsel %vm235, %v1664, 0
  %v1711 = vsel %vm235, %v1665, 0
  %v1714 = vsel %vm235, %v1666, 0
  %v1717 = vsel %vm235, %v1667, 0
  %v1720 = vsel %vm235, %v1668, 0
  %v1723 = vsel %vm235, %v1669, 0
  %v1726 = vsel %vm235, %v1670, 0
  %v1729 = vsel %vm235, %v1671, 0
  %v1732 = vsel %vm235, %v1672, 0
  %v1735 = vsel %vm235, %v1673, 0
  %v1738 = vsel %vm235, %v1674, 0
  %v1741 = vsel %vm235, %v1675, 0
  %v1744 = vsel %vm235, %v1676, 0
  %v1747 = vsel %vm235, %v1677, 0
  %v1750 = vsel %vm235, %v1678, 0
  %v1753 = vsel %vm235, %v1679, 0
  %1755 = vmatprep.subr.bf16.mxu0 0
  %1756 = vmatpush1.bf16.msra.mxu0 %v226
  %1757 = vmatprep.subr.bf16.mxu0 0
  %1758 = vmatpush1.bf16.msra.mxu0 %v227
  %1759 = vmatprep.subr.bf16.mxu0 0
  %1760 = vmatpush1.bf16.msra.mxu0 %v228
  %1761 = vmatprep.subr.bf16.mxu0 0
  %1762 = vmatpush1.bf16.msra.mxu0 %v229
  %1763 = vmatprep.subr.bf16.mxu0 0
  %1764 = vmatpush1.bf16.msra.mxu0 %v316
  %1765 = vmatprep.subr.bf16.mxu0 0
  %1766 = vmatpush1.bf16.msra.mxu0 0
  %1767 = vmatprep.subr.bf16.mxu0 0
  %1768 = vmatpush1.bf16.msra.mxu0 0
  %1769 = vmatprep.subr.bf16.mxu0 0
  %1770 = vmatpush1.bf16.msra.mxu0 0
  %1771 = vmatprep.subr.bf16.mxu0 0
  %1772 = vmatpush1.bf16.msra.mxu0 0
  %1773 = vmatprep.subr.bf16.mxu0 0
  %1774 = vmatpush1.bf16.msra.mxu0 0
  %1775 = vmatprep.subr.bf16.mxu0 0
  %1776 = vmatpush1.bf16.msra.mxu0 0
  %1777 = vmatprep.subr.bf16.mxu0 0
  %1778 = vmatpush1.bf16.msra.mxu0 0
  %1779 = vmatprep.subr.bf16.mxu0 0
  %1780 = vmatpush1.bf16.msra.mxu0 0
  %1781 = vmatprep.subr.bf16.mxu0 0
  %1782 = vmatpush1.bf16.msra.mxu0 0
  %1783 = vmatprep.subr.bf16.mxu0 0
  %1784 = vmatpush1.bf16.msra.mxu0 0
  %1785 = vmatprep.subr.bf16.mxu0 0
  %1786 = vmatpush1.bf16.msra.mxu0 0
  %1787 = vmatprep.mubr.bf16.mxu0 0
  %1788 = vmatmul.mubr.bf16.gmra.mrb[0].mxu0 %v1681
  %v1789 = vpop.f32.mrb[0].mxu0
  %v1790 = vadd.f32 0.0, %v1789
  %v1791 = vpop.f32.mrb[0].mxu0
  %v1792 = vpop.f32.mrb[0].mxu0
  %v1793 = vadd.f32 0.0, %v1792
  %v1794 = vpop.f32.mrb[0].mxu0
  %1795 = vmatprep.mubr.bf16.mxu0 0
  %1796 = vmatmul.mubr.bf16.gmra.mrb[0].mxu0 %v1684
  %v1797 = vpop.f32.mrb[0].mxu0
  %v1798 = vadd.f32 0.0, %v1797
  %v1799 = vpop.f32.mrb[0].mxu0
  %v1800 = vpop.f32.mrb[0].mxu0
  %v1801 = vadd.f32 0.0, %v1800
  %v1802 = vpop.f32.mrb[0].mxu0
  %1803 = vmatprep.mubr.bf16.mxu0 0
  %1804 = vmatmul.mubr.bf16.gmra.mrb[0].mxu0 %v1687
  %v1805 = vpop.f32.mrb[0].mxu0
  %v1806 = vadd.f32 0.0, %v1805
  %v1807 = vpop.f32.mrb[0].mxu0
  %v1808 = vpop.f32.mrb[0].mxu0
  %v1809 = vadd.f32 0.0, %v1808
  %v1810 = vpop.f32.mrb[0].mxu0
  %1811 = vmatprep.mubr.bf16.mxu0 0
  %1812 = vmatmul.mubr.bf16.gmra.mrb[0].mxu0 %v1690
  %v1813 = vpop.f32.mrb[0].mxu0
  %v1814 = vadd.f32 0.0, %v1813
  %v1815 = vpop.f32.mrb[0].mxu0
  %v1816 = vpop.f32.mrb[0].mxu0
  %v1817 = vadd.f32 0.0, %v1816
  %v1818 = vpop.f32.mrb[0].mxu0
  %1819 = vmatprep.mubr.bf16.mxu0 0
  %1820 = vmatmul.mubr.bf16.gmra.mrb[0].mxu0 %v1693
  %v1821 = vpop.f32.mrb[0].mxu0
  %v1822 = vadd.f32 0.0, %v1821
  %v1823 = vpop.f32.mrb[0].mxu0
  %v1824 = vpop.f32.mrb[0].mxu0
  %v1825 = vadd.f32 0.0, %v1824
  %v1826 = vpop.f32.mrb[0].mxu0
  %1827 = vmatprep.mubr.bf16.mxu0 0
  %1828 = vmatmul.mubr.bf16.gmra.mrb[0].mxu0 %v1696
  %v1829 = vpop.f32.mrb[0].mxu0
  %v1830 = vadd.f32 0.0, %v1829
  %v1831 = vpop.f32.mrb[0].mxu0
  %v1832 = vpop.f32.mrb[0].mxu0
  %v1833 = vadd.f32 0.0, %v1832
  %v1834 = vpop.f32.mrb[0].mxu0
  %1835 = vmatprep.mubr.bf16.mxu0 0
  %1836 = vmatmul.mubr.bf16.gmra.mrb[0].mxu0 %v1699
  %v1837 = vpop.f32.mrb[0].mxu0
  %v1838 = vadd.f32 0.0, %v1837
  %v1839 = vpop.f32.mrb[0].mxu0
  %v1840 = vpop.f32.mrb[0].mxu0
  %v1841 = vadd.f32 0.0, %v1840
  %v1842 = vpop.f32.mrb[0].mxu0
  %1843 = vmatprep.mubr.bf16.mxu0 0
  %1844 = vmatmul.mubr.bf16.gmra.mrb[0].mxu0 %v1702
  %v1845 = vpop.f32.mrb[0].mxu0
  %v1846 = vadd.f32 0.0, %v1845
  %v1847 = vpop.f32.mrb[0].mxu0
  %v1848 = vpop.f32.mrb[0].mxu0
  %v1849 = vadd.f32 0.0, %v1848
  %v1850 = vpop.f32.mrb[0].mxu0
  %1851 = vmatprep.mubr.bf16.mxu0 0
  %1852 = vmatmul.mubr.bf16.gmra.mrb[0].mxu0 %v1705
  %v1853 = vpop.f32.mrb[0].mxu0
  %v1854 = vadd.f32 0.0, %v1853
  %v1855 = vpop.f32.mrb[0].mxu0
  %v1856 = vpop.f32.mrb[0].mxu0
  %v1857 = vadd.f32 0.0, %v1856
  %v1858 = vpop.f32.mrb[0].mxu0
  %1859 = vmatprep.mubr.bf16.mxu0 0
  %1860 = vmatmul.mubr.bf16.gmra.mrb[0].mxu0 %v1708
  %v1861 = vpop.f32.mrb[0].mxu0
  %v1862 = vadd.f32 0.0, %v1861
  %v1863 = vpop.f32.mrb[0].mxu0
  %v1864 = vpop.f32.mrb[0].mxu0
  %v1865 = vadd.f32 0.0, %v1864
  %v1866 = vpop.f32.mrb[0].mxu0
  %1867 = vmatprep.mubr.bf16.mxu0 0
  %1868 = vmatmul.mubr.bf16.gmra.mrb[0].mxu0 %v1711
  %v1869 = vpop.f32.mrb[0].mxu0
  %v1870 = vadd.f32 0.0, %v1869
  %v1871 = vpop.f32.mrb[0].mxu0
  %v1872 = vpop.f32.mrb[0].mxu0
  %v1873 = vadd.f32 0.0, %v1872
  %v1874 = vpop.f32.mrb[0].mxu0
  %1875 = vmatprep.mubr.bf16.mxu0 0
  %1876 = vmatmul.mubr.bf16.gmra.mrb[0].mxu0 %v1714
  %v1877 = vpop.f32.mrb[0].mxu0
  %v1878 = vadd.f32 0.0, %v1877
  %v1879 = vpop.f32.mrb[0].mxu0
  %v1880 = vpop.f32.mrb[0].mxu0
  %v1881 = vadd.f32 0.0, %v1880
  %v1882 = vpop.f32.mrb[0].mxu0
  %1883 = vmatprep.mubr.bf16.mxu0 0
  %1884 = vmatmul.mubr.bf16.gmra.mrb[0].mxu0 %v1717
  %v1885 = vpop.f32.mrb[0].mxu0
  %v1886 = vadd.f32 0.0, %v1885
  %v1887 = vpop.f32.mrb[0].mxu0
  %v1888 = vpop.f32.mrb[0].mxu0
  %v1889 = vadd.f32 0.0, %v1888
  %v1890 = vpop.f32.mrb[0].mxu0
  %1891 = vmatprep.mubr.bf16.mxu0 0
  %1892 = vmatmul.mubr.bf16.gmra.mrb[0].mxu0 %v1720
  %v1893 = vpop.f32.mrb[0].mxu0
  %v1894 = vadd.f32 0.0, %v1893
  %v1895 = vpop.f32.mrb[0].mxu0
  %v1896 = vpop.f32.mrb[0].mxu0
  %v1897 = vadd.f32 0.0, %v1896
  %v1898 = vpop.f32.mrb[0].mxu0
  %1899 = vmatprep.mubr.bf16.mxu0 0
  %1900 = vmatmul.mubr.bf16.gmra.mrb[0].mxu0 %v1723
  %v1901 = vpop.f32.mrb[0].mxu0
  %v1902 = vadd.f32 0.0, %v1901
  %v1903 = vpop.f32.mrb[0].mxu0
  %v1904 = vpop.f32.mrb[0].mxu0
  %v1905 = vadd.f32 0.0, %v1904
  %v1906 = vpop.f32.mrb[0].mxu0
  %1907 = vmatprep.mubr.bf16.mxu0 0
  %1908 = vmatmul.mubr.bf16.gmra.mrb[0].mxu0 %v1726
  %v1909 = vpop.f32.mrb[0].mxu0
  %v1910 = vadd.f32 0.0, %v1909
  %v1911 = vpop.f32.mrb[0].mxu0
  %v1912 = vpop.f32.mrb[0].mxu0
  %v1913 = vadd.f32 0.0, %v1912
  %v1914 = vpop.f32.mrb[0].mxu0
  %1915 = vmatprep.mubr.bf16.mxu0 0
  %1916 = vmatmul.mubr.bf16.gmra.mrb[0].mxu0 %v1729
  %v1917 = vpop.f32.mrb[0].mxu0
  %v1918 = vadd.f32 0.0, %v1917
  %v1919 = vpop.f32.mrb[0].mxu0
  %v1920 = vpop.f32.mrb[0].mxu0
  %v1921 = vadd.f32 0.0, %v1920
  %v1922 = vpop.f32.mrb[0].mxu0
  %1923 = vmatprep.mubr.bf16.mxu0 0
  %1924 = vmatmul.mubr.bf16.gmra.mrb[0].mxu0 %v1732
  %v1925 = vpop.f32.mrb[0].mxu0
  %v1926 = vadd.f32 0.0, %v1925
  %v1927 = vpop.f32.mrb[0].mxu0
  %v1928 = vpop.f32.mrb[0].mxu0
  %v1929 = vadd.f32 0.0, %v1928
  %v1930 = vpop.f32.mrb[0].mxu0
  %1931 = vmatprep.mubr.bf16.mxu0 0
  %1932 = vmatmul.mubr.bf16.gmra.mrb[0].mxu0 %v1735
  %v1933 = vpop.f32.mrb[0].mxu0
  %v1934 = vadd.f32 0.0, %v1933
  %v1935 = vpop.f32.mrb[0].mxu0
  %v1936 = vpop.f32.mrb[0].mxu0
  %v1937 = vadd.f32 0.0, %v1936
  %v1938 = vpop.f32.mrb[0].mxu0
  %1939 = vmatprep.mubr.bf16.mxu0 0
  %1940 = vmatmul.mubr.bf16.gmra.mrb[0].mxu0 %v1738
  %v1941 = vpop.f32.mrb[0].mxu0
  %v1942 = vadd.f32 0.0, %v1941
  %v1943 = vpop.f32.mrb[0].mxu0
  %v1944 = vpop.f32.mrb[0].mxu0
  %v1945 = vadd.f32 0.0, %v1944
  %v1946 = vpop.f32.mrb[0].mxu0
  %1947 = vmatprep.mubr.bf16.mxu0 0
  %1948 = vmatmul.mubr.bf16.gmra.mrb[0].mxu0 %v1741
  %v1949 = vpop.f32.mrb[0].mxu0
  %v1950 = vadd.f32 0.0, %v1949
  %v1951 = vpop.f32.mrb[0].mxu0
  %v1952 = vpop.f32.mrb[0].mxu0
  %v1953 = vadd.f32 0.0, %v1952
  %v1954 = vpop.f32.mrb[0].mxu0
  %1955 = vmatprep.mubr.bf16.mxu0 0
  %1956 = vmatmul.mubr.bf16.gmra.mrb[0].mxu0 %v1744
  %v1957 = vpop.f32.mrb[0].mxu0
  %v1958 = vadd.f32 0.0, %v1957
  %v1959 = vpop.f32.mrb[0].mxu0
  %v1960 = vpop.f32.mrb[0].mxu0
  %v1961 = vadd.f32 0.0, %v1960
  %v1962 = vpop.f32.mrb[0].mxu0
  %1963 = vmatprep.mubr.bf16.mxu0 0
  %1964 = vmatmul.mubr.bf16.gmra.mrb[0].mxu0 %v1747
  %v1965 = vpop.f32.mrb[0].mxu0
  %v1966 = vadd.f32 0.0, %v1965
  %v1967 = vpop.f32.mrb[0].mxu0
  %v1968 = vpop.f32.mrb[0].mxu0
  %v1969 = vadd.f32 0.0, %v1968
  %v1970 = vpop.f32.mrb[0].mxu0
  %1971 = vmatprep.mubr.bf16.mxu0 0
  %1972 = vmatmul.mubr.bf16.gmra.mrb[0].mxu0 %v1750
  %v1973 = vpop.f32.mrb[0].mxu0
  %v1974 = vadd.f32 0.0, %v1973
  %v1975 = vpop.f32.mrb[0].mxu0
  %v1976 = vpop.f32.mrb[0].mxu0
  %v1977 = vadd.f32 0.0, %v1976
  %v1978 = vpop.f32.mrb[0].mxu0
  %1979 = vmatprep.mubr.bf16.mxu0 0
  %1980 = vmatmul.mubr.bf16.gmra.mrb[0].mxu0 %v1753
  %v1981 = vpop.f32.mrb[0].mxu0
  %v1982 = vadd.f32 0.0, %v1981
  %v1983 = vpop.f32.mrb[0].mxu0
  %v1984 = vpop.f32.mrb[0].mxu0
  %v1985 = vpop.f32.mrb[0].mxu0
  %1986 = vdwg.mxu0
  %v1987 = vmax.f32 %v353, %v832
  %v1988 = vmax.f32 %v356, %v835
  %v1989 = vmax.f32 %v361, %v840
  %v1990 = vmax.f32 %v364, %v843
  %v1991 = vmax.f32 %v369, %v848
  %v1992 = vmax.f32 %v372, %v851
  %v1993 = vmax.f32 %v377, %v856
  %v1994 = vmax.f32 %v380, %v859
  %v1995 = vmax.f32 %v385, %v864
  %v1996 = vmax.f32 %v388, %v867
  %v1997 = vmax.f32 %v393, %v872
  %v1998 = vmax.f32 %v396, %v875
  %v1999 = vmax.f32 %v401, %v880
  %v2000 = vmax.f32 %v404, %v883
  %v2001 = vmax.f32 %v409, %v888
  %v2002 = vmax.f32 %v412, %v891
  %v2003 = vmax.f32 %v417, %v896
  %v2004 = vmax.f32 %v420, %v899
  %v2005 = vmax.f32 %v425, %v904
  %v2006 = vmax.f32 %v428, %v907
  %v2007 = vmax.f32 %v433, %v912
  %v2008 = vmax.f32 %v436, %v915
  %v2009 = vmax.f32 %v441, %v920
  %v2010 = vmax.f32 %v444, %v923
  %v2011 = vmax.f32 %v449, %v928
  %v2012 = vmax.f32 %v452, %v931
  %v2013 = vmax.f32 %v457, %v936
  %v2014 = vmax.f32 %v460, %v939
  %v2015 = vmax.f32 %v465, %v944
  %v2016 = vmax.f32 %v468, %v947
  %v2017 = vmax.f32 %v473, %v952
  %v2018 = vmax.f32 %v476, %v955
  %v2019 = vmax.f32 %v481, %v960
  %v2020 = vmax.f32 %v484, %v963
  %v2021 = vmax.f32 %v489, %v968
  %v2022 = vmax.f32 %v492, %v971
  %v2023 = vmax.f32 %v497, %v976
  %v2024 = vmax.f32 %v500, %v979
  %v2025 = vmax.f32 %v505, %v984
  %v2026 = vmax.f32 %v508, %v987
  %v2027 = vmax.f32 %v513, %v992
  %v2028 = vmax.f32 %v516, %v995
  %v2029 = vmax.f32 %v521, %v1000
  %v2030 = vmax.f32 %v524, %v1003
  %v2031 = vmax.f32 %v529, %v1008
  %v2032 = vmax.f32 %v532, %v1011
  %v2033 = vmax.f32 %v537, %v1016
  %v2034 = vmax.f32 %v540, %v1019
  %v2035 = vmax.f32 %v545, %v1024
  %v2036 = vmax.f32 %v1311, %v1790
  %v2037 = vmax.f32 %v1314, %v1793
  %v2038 = vmax.f32 %v1319, %v1798
  %v2039 = vmax.f32 %v1322, %v1801
  %v2040 = vmax.f32 %v1327, %v1806
  %v2041 = vmax.f32 %v1330, %v1809
  %v2042 = vmax.f32 %v1335, %v1814
  %v2043 = vmax.f32 %v1338, %v1817
  %v2044 = vmax.f32 %v1343, %v1822
  %v2045 = vmax.f32 %v1346, %v1825
  %v2046 = vmax.f32 %v1351, %v1830
  %v2047 = vmax.f32 %v1354, %v1833
  %v2048 = vmax.f32 %v1359, %v1838
  %v2049 = vmax.f32 %v1362, %v1841
  %v2050 = vmax.f32 %v1367, %v1846
  %v2051 = vmax.f32 %v1370, %v1849
  %v2052 = vmax.f32 %v1375, %v1854
  %v2053 = vmax.f32 %v1378, %v1857
  %v2054 = vmax.f32 %v1383, %v1862
  %v2055 = vmax.f32 %v1386, %v1865
  %v2056 = vmax.f32 %v1391, %v1870
  %v2057 = vmax.f32 %v1394, %v1873
  %v2058 = vmax.f32 %v1399, %v1878
  %v2059 = vmax.f32 %v1402, %v1881
  %v2060 = vmax.f32 %v1407, %v1886
  %v2061 = vmax.f32 %v1410, %v1889
  %v2062 = vmax.f32 %v1415, %v1894
  %v2063 = vmax.f32 %v1418, %v1897
  %v2064 = vmax.f32 %v1423, %v1902
  %v2065 = vmax.f32 %v1426, %v1905
  %v2066 = vmax.f32 %v1431, %v1910
  %v2067 = vmax.f32 %v1434, %v1913
  %v2068 = vmax.f32 %v1439, %v1918
  %v2069 = vmax.f32 %v1442, %v1921
  %v2070 = vmax.f32 %v1447, %v1926
  %v2071 = vmax.f32 %v1450, %v1929
  %v2072 = vmax.f32 %v1455, %v1934
  %v2073 = vmax.f32 %v1458, %v1937
  %v2074 = vmax.f32 %v1463, %v1942
  %v2075 = vmax.f32 %v1466, %v1945
  %v2076 = vmax.f32 %v1471, %v1950
  %v2077 = vmax.f32 %v1474, %v1953
  %v2078 = vmax.f32 %v1479, %v1958
  %v2079 = vmax.f32 %v1482, %v1961
  %v2080 = vmax.f32 %v1487, %v1966
  %v2081 = vmax.f32 %v1490, %v1969
  %v2082 = vmax.f32 %v1495, %v1974
  %v2083 = vmax.f32 %v1498, %v1977
  %v2084 = vmax.f32 %v1503, %v1982
  %v2085 = vmax.f32 %v1987, %v2036
  %v2086 = vmax.f32 %v1988, %v2037
  %v2087 = vmax.f32 %v1989, %v2038
  %v2088 = vmax.f32 %v1990, %v2039
  %v2089 = vmax.f32 %v1991, %v2040
  %v2090 = vmax.f32 %v1992, %v2041
  %v2091 = vmax.f32 %v1993, %v2042
  %v2092 = vmax.f32 %v1994, %v2043
  %v2093 = vmax.f32 %v1995, %v2044
  %v2094 = vmax.f32 %v1996, %v2045
  %v2095 = vmax.f32 %v1997, %v2046
  %v2096 = vmax.f32 %v1998, %v2047
  %v2097 = vmax.f32 %v1999, %v2048
  %v2098 = vmax.f32 %v2000, %v2049
  %v2099 = vmax.f32 %v2001, %v2050
  %v2100 = vmax.f32 %v2002, %v2051
  %v2101 = vmax.f32 %v2003, %v2052
  %v2102 = vmax.f32 %v2004, %v2053
  %v2103 = vmax.f32 %v2005, %v2054
  %v2104 = vmax.f32 %v2006, %v2055
  %v2105 = vmax.f32 %v2007, %v2056
  %v2106 = vmax.f32 %v2008, %v2057
  %v2107 = vmax.f32 %v2009, %v2058
  %v2108 = vmax.f32 %v2010, %v2059
  %v2109 = vmax.f32 %v2011, %v2060
  %v2110 = vmax.f32 %v2012, %v2061
  %v2111 = vmax.f32 %v2013, %v2062
  %v2112 = vmax.f32 %v2014, %v2063
  %v2113 = vmax.f32 %v2015, %v2064
  %v2114 = vmax.f32 %v2016, %v2065
  %v2115 = vmax.f32 %v2017, %v2066
  %v2116 = vmax.f32 %v2018, %v2067
  %v2117 = vmax.f32 %v2019, %v2068
  %v2118 = vmax.f32 %v2020, %v2069
  %v2119 = vmax.f32 %v2021, %v2070
  %v2120 = vmax.f32 %v2022, %v2071
  %v2121 = vmax.f32 %v2023, %v2072
  %v2122 = vmax.f32 %v2024, %v2073
  %v2123 = vmax.f32 %v2025, %v2074
  %v2124 = vmax.f32 %v2026, %v2075
  %v2125 = vmax.f32 %v2027, %v2076
  %v2126 = vmax.f32 %v2028, %v2077
  %v2127 = vmax.f32 %v2029, %v2078
  %v2128 = vmax.f32 %v2030, %v2079
  %v2129 = vmax.f32 %v2031, %v2080
  %v2130 = vmax.f32 %v2032, %v2081
  %v2131 = vmax.f32 %v2033, %v2082
  %v2132 = vmax.f32 %v2034, %v2083
  %v2133 = vmax.f32 %v2035, %v2084
  %v2134 = vld [vmem:[%s5] sm:$0x1]
  %v2136 = vlaneseq
  %v2137 = vshrl.u32 %v2136, 7
  %v2138 = vsub.s32 0, %v2137
  %v2139 = vrot.slane %v2134, %v2138
  %v2141 = vadd.f32 %v2085, %v2139
  %v2142 = vadd.f32 %v2086, %v2139
  %v2143 = vadd.f32 %v2087, %v2139
  %v2144 = vadd.f32 %v2088, %v2139
  %v2145 = vadd.f32 %v2089, %v2139
  %v2146 = vadd.f32 %v2090, %v2139
  %v2147 = vadd.f32 %v2091, %v2139
  %v2148 = vadd.f32 %v2092, %v2139
  %v2149 = vadd.f32 %v2093, %v2139
  %v2150 = vadd.f32 %v2094, %v2139
  %v2151 = vadd.f32 %v2095, %v2139
  %v2152 = vadd.f32 %v2096, %v2139
  %v2153 = vadd.f32 %v2097, %v2139
  %v2154 = vadd.f32 %v2098, %v2139
  %v2155 = vadd.f32 %v2099, %v2139
  %v2156 = vadd.f32 %v2100, %v2139
  %v2157 = vadd.f32 %v2101, %v2139
  %v2158 = vadd.f32 %v2102, %v2139
  %v2159 = vadd.f32 %v2103, %v2139
  %v2160 = vadd.f32 %v2104, %v2139
  %v2161 = vadd.f32 %v2105, %v2139
  %v2162 = vadd.f32 %v2106, %v2139
  %v2163 = vadd.f32 %v2107, %v2139
  %v2164 = vadd.f32 %v2108, %v2139
  %v2165 = vadd.f32 %v2109, %v2139
  %v2166 = vadd.f32 %v2110, %v2139
  %v2167 = vadd.f32 %v2111, %v2139
  %v2168 = vadd.f32 %v2112, %v2139
  %v2169 = vadd.f32 %v2113, %v2139
  %v2170 = vadd.f32 %v2114, %v2139
  %v2171 = vadd.f32 %v2115, %v2139
  %v2172 = vadd.f32 %v2116, %v2139
  %v2173 = vadd.f32 %v2117, %v2139
  %v2174 = vadd.f32 %v2118, %v2139
  %v2175 = vadd.f32 %v2119, %v2139
  %v2176 = vadd.f32 %v2120, %v2139
  %v2177 = vadd.f32 %v2121, %v2139
  %v2178 = vadd.f32 %v2122, %v2139
  %v2179 = vadd.f32 %v2123, %v2139
  %v2180 = vadd.f32 %v2124, %v2139
  %v2181 = vadd.f32 %v2125, %v2139
  %v2182 = vadd.f32 %v2126, %v2139
  %v2183 = vadd.f32 %v2127, %v2139
  %v2184 = vadd.f32 %v2128, %v2139
  %v2185 = vadd.f32 %v2129, %v2139
  %v2186 = vadd.f32 %v2130, %v2139
  %v2187 = vadd.f32 %v2131, %v2139
  %v2188 = vadd.f32 %v2132, %v2139
  %v2189 = vadd.f32 %v2133, %v2139
  %v2190 = vmax.f32 %v2141, 0.0
  %v2191 = vmax.f32 %v2142, 0.0
  %v2192 = vmax.f32 %v2143, 0.0
  %v2193 = vmax.f32 %v2144, 0.0
  %v2194 = vmax.f32 %v2145, 0.0
  %v2195 = vmax.f32 %v2146, 0.0
  %v2196 = vmax.f32 %v2147, 0.0
  %v2197 = vmax.f32 %v2148, 0.0
  %v2198 = vmax.f32 %v2149, 0.0
  %v2199 = vmax.f32 %v2150, 0.0
  %v2200 = vmax.f32 %v2151, 0.0
  %v2201 = vmax.f32 %v2152, 0.0
  %v2202 = vmax.f32 %v2153, 0.0
  %v2203 = vmax.f32 %v2154, 0.0
  %v2204 = vmax.f32 %v2155, 0.0
  %v2205 = vmax.f32 %v2156, 0.0
  %v2206 = vmax.f32 %v2157, 0.0
  %v2207 = vmax.f32 %v2158, 0.0
  %v2208 = vmax.f32 %v2159, 0.0
  %v2209 = vmax.f32 %v2160, 0.0
  %v2210 = vmax.f32 %v2161, 0.0
  %v2211 = vmax.f32 %v2162, 0.0
  %v2212 = vmax.f32 %v2163, 0.0
  %v2213 = vmax.f32 %v2164, 0.0
  %v2214 = vmax.f32 %v2165, 0.0
  %v2215 = vmax.f32 %v2166, 0.0
  %v2216 = vmax.f32 %v2167, 0.0
  %v2217 = vmax.f32 %v2168, 0.0
  %v2218 = vmax.f32 %v2169, 0.0
  %v2219 = vmax.f32 %v2170, 0.0
  %v2220 = vmax.f32 %v2171, 0.0
  %v2221 = vmax.f32 %v2172, 0.0
  %v2222 = vmax.f32 %v2173, 0.0
  %v2223 = vmax.f32 %v2174, 0.0
  %v2224 = vmax.f32 %v2175, 0.0
  %v2225 = vmax.f32 %v2176, 0.0
  %v2226 = vmax.f32 %v2177, 0.0
  %v2227 = vmax.f32 %v2178, 0.0
  %v2228 = vmax.f32 %v2179, 0.0
  %v2229 = vmax.f32 %v2180, 0.0
  %v2230 = vmax.f32 %v2181, 0.0
  %v2231 = vmax.f32 %v2182, 0.0
  %v2232 = vmax.f32 %v2183, 0.0
  %v2233 = vmax.f32 %v2184, 0.0
  %v2234 = vmax.f32 %v2185, 0.0
  %v2235 = vmax.f32 %v2186, 0.0
  %v2236 = vmax.f32 %v2187, 0.0
  %v2237 = vmax.f32 %v2188, 0.0
  %v2238 = vmax.f32 %v2189, 0.0
  %v2239 = vpack.c.bf16 %v2191, %v2190
  %v2240 = vpack.c.bf16 %v2193, %v2192
  %v2241 = vpack.c.bf16 %v2195, %v2194
  %v2242 = vpack.c.bf16 %v2197, %v2196
  %v2243 = vpack.c.bf16 %v2199, %v2198
  %v2244 = vpack.c.bf16 %v2201, %v2200
  %v2245 = vpack.c.bf16 %v2203, %v2202
  %v2246 = vpack.c.bf16 %v2205, %v2204
  %v2247 = vpack.c.bf16 %v2207, %v2206
  %v2248 = vpack.c.bf16 %v2209, %v2208
  %v2249 = vpack.c.bf16 %v2211, %v2210
  %v2250 = vpack.c.bf16 %v2213, %v2212
  %v2251 = vpack.c.bf16 %v2215, %v2214
  %v2252 = vpack.c.bf16 %v2217, %v2216
  %v2253 = vpack.c.bf16 %v2219, %v2218
  %v2254 = vpack.c.bf16 %v2221, %v2220
  %v2255 = vpack.c.bf16 %v2223, %v2222
  %v2256 = vpack.c.bf16 %v2225, %v2224
  %v2257 = vpack.c.bf16 %v2227, %v2226
  %v2258 = vpack.c.bf16 %v2229, %v2228
  %v2259 = vpack.c.bf16 %v2231, %v2230
  %v2260 = vpack.c.bf16 %v2233, %v2232
  %v2261 = vpack.c.bf16 %v2235, %v2234
  %v2262 = vpack.c.bf16 %v2237, %v2236
  %v2263 = vpack.c.bf16 %v2238, %v2238
  %v2289 = vunpack.c.l.b16 %v2239
  %v2290 = vunpack.c.h.b16 %v2239
  %v2291 = vunpack.c.l.b16 %v2240
  %v2292 = vunpack.c.h.b16 %v2240
  %v2293 = vunpack.c.l.b16 %v2241
  %v2294 = vunpack.c.h.b16 %v2241
  %v2295 = vunpack.c.l.b16 %v2242
  %v2296 = vunpack.c.h.b16 %v2242
  %v2297 = vunpack.c.l.b16 %v2243
  %v2298 = vunpack.c.h.b16 %v2243
  %v2299 = vunpack.c.l.b16 %v2244
  %v2300 = vunpack.c.h.b16 %v2244
  %v2301 = vunpack.c.l.b16 %v2245
  %v2302 = vunpack.c.h.b16 %v2245
  %v2303 = vunpack.c.l.b16 %v2246
  %v2304 = vunpack.c.h.b16 %v2246
  %v2305 = vunpack.c.l.b16 %v2247
  %v2306 = vunpack.c.h.b16 %v2247
  %v2307 = vunpack.c.l.b16 %v2248
  %v2308 = vunpack.c.h.b16 %v2248
  %v2309 = vunpack.c.l.b16 %v2249
  %v2310 = vunpack.c.h.b16 %v2249
  %v2311 = vunpack.c.l.b16 %v2250
  %v2312 = vunpack.c.h.b16 %v2250
  %v2313 = vunpack.c.l.b16 %v2251
  %v2314 = vunpack.c.h.b16 %v2251
  %v2315 = vunpack.c.l.b16 %v2252
  %v2316 = vunpack.c.h.b16 %v2252
  %v2317 = vunpack.c.l.b16 %v2253
  %v2318 = vunpack.c.h.b16 %v2253
  %v2319 = vunpack.c.l.b16 %v2254
  %v2320 = vunpack.c.h.b16 %v2254
  %v2321 = vunpack.c.l.b16 %v2255
  %v2322 = vunpack.c.h.b16 %v2255
  %v2323 = vunpack.c.l.b16 %v2256
  %v2324 = vunpack.c.h.b16 %v2256
  %v2325 = vunpack.c.l.b16 %v2257
  %v2326 = vunpack.c.h.b16 %v2257
  %v2327 = vunpack.c.l.b16 %v2258
  %v2328 = vunpack.c.h.b16 %v2258
  %v2329 = vunpack.c.l.b16 %v2259
  %v2330 = vunpack.c.h.b16 %v2259
  %v2331 = vunpack.c.l.b16 %v2260
  %v2332 = vunpack.c.h.b16 %v2260
  %v2333 = vunpack.c.l.b16 %v2261
  %v2334 = vunpack.c.h.b16 %v2261
  %v2335 = vunpack.c.l.b16 %v2262
  %v2336 = vunpack.c.h.b16 %v2262
  %v2337 = vunpack.c.l.b16 %v2263
  %v2338 = vpack.c.b16 %v2289, %v2289
  %v2339 = vpack.c.b16 %v2290, %v2290
  %v2340 = vpack.c.b16 %v2291, %v2291
  %v2341 = vpack.c.b16 %v2292, %v2292
  %v2342 = vpack.c.b16 %v2293, %v2293
  %v2343 = vpack.c.b16 %v2294, %v2294
  %v2344 = vpack.c.b16 %v2295, %v2295
  %v2345 = vpack.c.b16 %v2296, %v2296
  %v2346 = vpack.c.b16 %v2297, %v2297
  %v2347 = vpack.c.b16 %v2298, %v2298
  %v2348 = vpack.c.b16 %v2299, %v2299
  %v2349 = vpack.c.b16 %v2300, %v2300
  %v2350 = vpack.c.b16 %v2301, %v2301
  %v2351 = vpack.c.b16 %v2302, %v2302
  %v2352 = vpack.c.b16 %v2303, %v2303
  %v2353 = vpack.c.b16 %v2304, %v2304
  %v2354 = vpack.c.b16 %v2305, %v2305
  %v2355 = vpack.c.b16 %v2306, %v2306
  %v2356 = vpack.c.b16 %v2307, %v2307
  %v2357 = vpack.c.b16 %v2308, %v2308
  %v2358 = vpack.c.b16 %v2309, %v2309
  %v2359 = vpack.c.b16 %v2310, %v2310
  %v2360 = vpack.c.b16 %v2311, %v2311
  %v2361 = vpack.c.b16 %v2312, %v2312
  %v2362 = vpack.c.b16 %v2313, %v2313
  %v2363 = vpack.c.b16 %v2314, %v2314
  %v2364 = vpack.c.b16 %v2315, %v2315
  %v2365 = vpack.c.b16 %v2316, %v2316
  %v2366 = vpack.c.b16 %v2317, %v2317
  %v2367 = vpack.c.b16 %v2318, %v2318
  %v2368 = vpack.c.b16 %v2319, %v2319
  %v2369 = vpack.c.b16 %v2320, %v2320
  %v2370 = vpack.c.b16 %v2321, %v2321
  %v2371 = vpack.c.b16 %v2322, %v2322
  %v2372 = vpack.c.b16 %v2323, %v2323
  %v2373 = vpack.c.b16 %v2324, %v2324
  %v2374 = vpack.c.b16 %v2325, %v2325
  %v2375 = vpack.c.b16 %v2326, %v2326
  %v2376 = vpack.c.b16 %v2327, %v2327
  %v2377 = vpack.c.b16 %v2328, %v2328
  %v2378 = vpack.c.b16 %v2329, %v2329
  %v2379 = vpack.c.b16 %v2330, %v2330
  %v2380 = vpack.c.b16 %v2331, %v2331
  %v2381 = vpack.c.b16 %v2332, %v2332
  %v2382 = vpack.c.b16 %v2333, %v2333
  %v2383 = vpack.c.b16 %v2334, %v2334
  %v2384 = vpack.c.b16 %v2335, %v2335
  %v2385 = vpack.c.b16 %v2336, %v2336
  %v2386 = vpack.c.b16 %v2337, %v2337
  %vm2436 = vcmask 44032
  %2437 = vst.msk [vmem:[%s6] sm:$0xf] %vm2436, %v2338
  %2438 = vst.msk [vmem:[%s6 + $0x4] sm:$0xf] %vm2436, %v2339
  %2439 = vst.msk [vmem:[%s6 + $0x8] sm:$0xf] %vm2436, %v2340
  %2440 = vst.msk [vmem:[%s6 + $0xc] sm:$0xf] %vm2436, %v2341
  %2441 = vst.msk [vmem:[%s6 + $0x10] sm:$0xf] %vm2436, %v2342
  %2442 = vst.msk [vmem:[%s6 + $0x14] sm:$0xf] %vm2436, %v2343
  %2443 = vst.msk [vmem:[%s6 + $0x18] sm:$0xf] %vm2436, %v2344
  %2444 = vst.msk [vmem:[%s6 + $0x1c] sm:$0xf] %vm2436, %v2345
  %2445 = vst.msk [vmem:[%s6 + $0x20] sm:$0xf] %vm2436, %v2346
  %2446 = vst.msk [vmem:[%s6 + $0x24] sm:$0xf] %vm2436, %v2347
  %2447 = vst.msk [vmem:[%s6 + $0x28] sm:$0xf] %vm2436, %v2348
  %2448 = vst.msk [vmem:[%s6 + $0x2c] sm:$0xf] %vm2436, %v2349
  %2449 = vst.msk [vmem:[%s6 + $0x30] sm:$0xf] %vm2436, %v2350
  %2450 = vst.msk [vmem:[%s6 + $0x34] sm:$0xf] %vm2436, %v2351
  %2451 = vst.msk [vmem:[%s6 + $0x38] sm:$0xf] %vm2436, %v2352
  %2452 = vst.msk [vmem:[%s6 + $0x3c] sm:$0xf] %vm2436, %v2353
  %2453 = vst.msk [vmem:[%s6 + $0x40] sm:$0xf] %vm2436, %v2354
  %2454 = vst.msk [vmem:[%s6 + $0x44] sm:$0xf] %vm2436, %v2355
  %2455 = vst.msk [vmem:[%s6 + $0x48] sm:$0xf] %vm2436, %v2356
  %2456 = vst.msk [vmem:[%s6 + $0x4c] sm:$0xf] %vm2436, %v2357
  %2457 = vst.msk [vmem:[%s6 + $0x50] sm:$0xf] %vm2436, %v2358
  %2458 = vst.msk [vmem:[%s6 + $0x54] sm:$0xf] %vm2436, %v2359
  %2459 = vst.msk [vmem:[%s6 + $0x58] sm:$0xf] %vm2436, %v2360
  %2460 = vst.msk [vmem:[%s6 + $0x5c] sm:$0xf] %vm2436, %v2361
  %2461 = vst.msk [vmem:[%s6 + $0x60] sm:$0xf] %vm2436, %v2362
  %2462 = vst.msk [vmem:[%s6 + $0x64] sm:$0xf] %vm2436, %v2363
  %2463 = vst.msk [vmem:[%s6 + $0x68] sm:$0xf] %vm2436, %v2364
  %2464 = vst.msk [vmem:[%s6 + $0x6c] sm:$0xf] %vm2436, %v2365
  %2465 = vst.msk [vmem:[%s6 + $0x70] sm:$0xf] %vm2436, %v2366
  %2466 = vst.msk [vmem:[%s6 + $0x74] sm:$0xf] %vm2436, %v2367
  %2467 = vst.msk [vmem:[%s6 + $0x78] sm:$0xf] %vm2436, %v2368
  %2468 = vst.msk [vmem:[%s6 + $0x7c] sm:$0xf] %vm2436, %v2369
  %2469 = vst.msk [vmem:[%s6 + $0x80] sm:$0xf] %vm2436, %v2370
  %2470 = vst.msk [vmem:[%s6 + $0x84] sm:$0xf] %vm2436, %v2371
  %2471 = vst.msk [vmem:[%s6 + $0x88] sm:$0xf] %vm2436, %v2372
  %2472 = vst.msk [vmem:[%s6 + $0x8c] sm:$0xf] %vm2436, %v2373
  %2473 = vst.msk [vmem:[%s6 + $0x90] sm:$0xf] %vm2436, %v2374
  %2474 = vst.msk [vmem:[%s6 + $0x94] sm:$0xf] %vm2436, %v2375
  %2475 = vst.msk [vmem:[%s6 + $0x98] sm:$0xf] %vm2436, %v2376
  %2476 = vst.msk [vmem:[%s6 + $0x9c] sm:$0xf] %vm2436, %v2377
  %2477 = vst.msk [vmem:[%s6 + $0xa0] sm:$0xf] %vm2436, %v2378
  %2478 = vst.msk [vmem:[%s6 + $0xa4] sm:$0xf] %vm2436, %v2379
  %2479 = vst.msk [vmem:[%s6 + $0xa8] sm:$0xf] %vm2436, %v2380
  %2480 = vst.msk [vmem:[%s6 + $0xac] sm:$0xf] %vm2436, %v2381
  %2481 = vst.msk [vmem:[%s6 + $0xb0] sm:$0xf] %vm2436, %v2382
  %2482 = vst.msk [vmem:[%s6 + $0xb4] sm:$0xf] %vm2436, %v2383
  %2483 = vst.msk [vmem:[%s6 + $0xb8] sm:$0xf] %vm2436, %v2384
  %2484 = vst.msk [vmem:[%s6 + $0xbc] sm:$0xf] %vm2436, %v2385
  %2485 = vst.msk [vmem:[%s6 + $0xc0] sm:$0xf] %vm2436, %v2386
  // Predicated region
  $region26: #{cnn_stl10_forward.2} parent=0 // pred_check
    _
  $region27: #{cnn_stl10_forward.2} parent=0 // pred_check_branch
    %2487 = sbr.rel (0) target = $region29
  $region28: #{cnn_stl10_forward.2} parent=0 // pred_region
    _
  $region29: #{cnn_stl10_forward.2} parent=0 // pred_fallthru
    _
  // Predicated region
  $region30: #{cnn_stl10_forward.2} parent=0 // pred_check
    _
  $region31: #{cnn_stl10_forward.2} parent=0 // pred_check_branch
    %2489 = sbr.rel (0) target = $region33
  $region32: #{cnn_stl10_forward.2} parent=0 // pred_region
    _
  $region33: #{cnn_stl10_forward.2} parent=0 // pred_fallthru
    _

// kernel: cnn_stl10_forward.3
$region0: #{cnn_stl10_forward.3}
  #allocation0 [shape = 'u32[]', space=smem, size = 0x4, offset = 0x4, fixed_abs, tag = 'smem constant byte address 0x4 - core index']
  #allocation1 [shape = 'u32[144,128]{1,0:T(1,128)}', space=vmem, size = 0x12000, scoped, tag = 'internal scratch']
  %s0 = inlined_call_operand.vmem [shape: bf16[8,1176], index: 0, kind: input, shape index: {}]
  %s1 = inlined_call_operand.vmem [shape: bf16[1176,400], index: 1, kind: input, shape index: {}]
  %s2 = inlined_call_operand.vmem [shape: bf16[1176,400], index: 2, kind: input, shape index: {}]
  %s3 = inlined_call_operand.vmem [shape: bf16[1176,400], index: 3, kind: input, shape index: {}]
  %s4 = inlined_call_operand.vmem [shape: bf16[1176,400], index: 4, kind: input, shape index: {}]
  %s5 = inlined_call_operand.vmem [shape: f32[1,400], index: 5, kind: input, shape index: {}]
  %s6 = inlined_call_operand.vmem [shape: f32[400,120], index: 6, kind: input, shape index: {}]
  %s7 = inlined_call_operand.vmem [shape: f32[1,120], index: 7, kind: input, shape index: {}]
  %s8 = inlined_call_operand.vmem [shape: f32[120,84], index: 8, kind: input, shape index: {}]
  %s9 = inlined_call_operand.vmem [shape: f32[1,84], index: 9, kind: input, shape index: {}]
  %s10 = inlined_call_operand.vmem [shape: f32[84,128], index: 10, kind: input, shape index: {}]
  %s11 = inlined_call_operand.vmem [shape: f32[1,128], index: 11, kind: input, shape index: {}]
  %s12 = inlined_call_operand.vmem [shape: f32[8,128], index: 12, kind: output, shape index: {}]
  %s13 = sld [smem:[#allocation0]]
  $region58: #{cnn_stl10_forward.3} parent=0
    _
  %s15 = ssub.s32 1, %s13
  %s16 = scalar_select 0, %s15, %s13
  // Predicated region
  $region2: #{cnn_stl10_forward.3} parent=0 // pred_check
    _
  $region3: #{cnn_stl10_forward.3} parent=0 // pred_check_branch
    %18 = sbr.rel (0) target = $region5
  $region4: #{cnn_stl10_forward.3} parent=0 // pred_region
    _
  $region5: #{cnn_stl10_forward.3} parent=0 // pred_fallthru
    _
  // Predicated region
  $region6: #{cnn_stl10_forward.3} parent=0 // pred_check
    _
  $region7: #{cnn_stl10_forward.3} parent=0 // pred_check_branch
    %20 = sbr.rel (0) target = $region9
  $region8: #{cnn_stl10_forward.3} parent=0 // pred_region
    _
  $region9: #{cnn_stl10_forward.3} parent=0 // pred_fallthru
    _
  // Predicated region
  $region10: #{cnn_stl10_forward.3} parent=0 // pred_check
    _
  $region11: #{cnn_stl10_forward.3} parent=0 // pred_check_branch
    %22 = sbr.rel (0) target = $region13
  $region12: #{cnn_stl10_forward.3} parent=0 // pred_region
    _
  $region13: #{cnn_stl10_forward.3} parent=0 // pred_fallthru
    _
  // Predicated region
  $region14: #{cnn_stl10_forward.3} parent=0 // pred_check
    _
  $region15: #{cnn_stl10_forward.3} parent=0 // pred_check_branch
    %24 = sbr.rel (0) target = $region17
  $region16: #{cnn_stl10_forward.3} parent=0 // pred_region
    _
  $region17: #{cnn_stl10_forward.3} parent=0 // pred_fallthru
    _
  // Predicated region
  $region18: #{cnn_stl10_forward.3} parent=0 // pred_check
    _
  $region19: #{cnn_stl10_forward.3} parent=0 // pred_check_branch
    %26 = sbr.rel (0) target = $region21
  $region20: #{cnn_stl10_forward.3} parent=0 // pred_region
    _
  $region21: #{cnn_stl10_forward.3} parent=0 // pred_fallthru
    _
  // Predicated region
  $region22: #{cnn_stl10_forward.3} parent=0 // pred_check
    _
  $region23: #{cnn_stl10_forward.3} parent=0 // pred_check_branch
    %28 = sbr.rel (0) target = $region25
  $region24: #{cnn_stl10_forward.3} parent=0 // pred_region
    _
  $region25: #{cnn_stl10_forward.3} parent=0 // pred_fallthru
    _
  // Predicated region
  $region26: #{cnn_stl10_forward.3} parent=0 // pred_check
    _
  $region27: #{cnn_stl10_forward.3} parent=0 // pred_check_branch
    %30 = sbr.rel (0) target = $region29
  $region28: #{cnn_stl10_forward.3} parent=0 // pred_region
    _
  $region29: #{cnn_stl10_forward.3} parent=0 // pred_fallthru
    _
  // Predicated region
  $region30: #{cnn_stl10_forward.3} parent=0 // pred_check
    _
  $region31: #{cnn_stl10_forward.3} parent=0 // pred_check_branch
    %32 = sbr.rel (0) target = $region33
  $region32: #{cnn_stl10_forward.3} parent=0 // pred_region
    _
  $region33: #{cnn_stl10_forward.3} parent=0 // pred_fallthru
    _
  // Predicated region
  $region34: #{cnn_stl10_forward.3} parent=0 // pred_check
    _
  $region35: #{cnn_stl10_forward.3} parent=0 // pred_check_branch
    %34 = sbr.rel (0) target = $region37
  $region36: #{cnn_stl10_forward.3} parent=0 // pred_region
    _
  $region37: #{cnn_stl10_forward.3} parent=0 // pred_fallthru
    _
  // Predicated region
  $region38: #{cnn_stl10_forward.3} parent=0 // pred_check
    _
  $region39: #{cnn_stl10_forward.3} parent=0 // pred_check_branch
    %36 = sbr.rel (0) target = $region41
  $region40: #{cnn_stl10_forward.3} parent=0 // pred_region
    _
  $region41: #{cnn_stl10_forward.3} parent=0 // pred_fallthru
    _
  // Predicated region
  $region42: #{cnn_stl10_forward.3} parent=0 // pred_check
    _
  $region43: #{cnn_stl10_forward.3} parent=0 // pred_check_branch
    %38 = sbr.rel (0) target = $region45
  $region44: #{cnn_stl10_forward.3} parent=0 // pred_region
    _
  $region45: #{cnn_stl10_forward.3} parent=0 // pred_fallthru
    _
  // Predicated region
  $region46: #{cnn_stl10_forward.3} parent=0 // pred_check
    _
  $region47: #{cnn_stl10_forward.3} parent=0 // pred_check_branch
    %40 = sbr.rel (0) target = $region49
  $region48: #{cnn_stl10_forward.3} parent=0 // pred_region
    _
  $region49: #{cnn_stl10_forward.3} parent=0 // pred_fallthru
    _
  %v42 = vld [vmem:[%s0] sm:$0xff]
  %v43 = vld [vmem:[%s0 + $0x8] sm:$0xff]
  %v44 = vld [vmem:[%s0 + $0x10] sm:$0xff]
  %v45 = vld [vmem:[%s0 + $0x18] sm:$0xff]
  %v46 = vld [vmem:[%s0 + $0x20] sm:$0xff]
  %v47 = vld [vmem:[%s1] sm:$0xff]
  %v48 = vld [vmem:[%s1 + $0x8] sm:$0xff]
  %v49 = vld [vmem:[%s1 + $0x10] sm:$0xff]
  %v50 = vld [vmem:[%s1 + $0x18] sm:$0xff]
  %v51 = vld [vmem:[%s1 + $0x20] sm:$0xff]
  %v52 = vld [vmem:[%s1 + $0x28] sm:$0xff]
  %v53 = vld [vmem:[%s1 + $0x30] sm:$0xff]
  %v54 = vld [vmem:[%s1 + $0x38] sm:$0xff]
  %v55 = vld [vmem:[%s1 + $0x40] sm:$0xff]
  %v56 = vld [vmem:[%s1 + $0x48] sm:$0xff]
  %v57 = vld [vmem:[%s1 + $0x50] sm:$0xff]
  %v58 = vld [vmem:[%s1 + $0x58] sm:$0xff]
  %v59 = vld [vmem:[%s1 + $0x60] sm:$0xff]
  %v60 = vld [vmem:[%s1 + $0x68] sm:$0xff]
  %v61 = vld [vmem:[%s1 + $0x70] sm:$0xff]
  %v62 = vld [vmem:[%s1 + $0x78] sm:$0xff]
  %v63 = vld [vmem:[%s1 + $0x80] sm:$0xff]
  %v64 = vld [vmem:[%s1 + $0x88] sm:$0xff]
  %v65 = vld [vmem:[%s1 + $0x90] sm:$0xff]
  %v66 = vld [vmem:[%s1 + $0x98] sm:$0xff]
  %v67 = vld [vmem:[%s1 + $0xa0] sm:$0xff]
  %v68 = vld [vmem:[%s1 + $0xa8] sm:$0xff]
  %v69 = vld [vmem:[%s1 + $0xb0] sm:$0xff]
  %v70 = vld [vmem:[%s1 + $0xb8] sm:$0xff]
  %v71 = vld [vmem:[%s1 + $0xc0] sm:$0xff]
  %v72 = vld [vmem:[%s1 + $0xc8] sm:$0xff]
  %v73 = vld [vmem:[%s1 + $0xd0] sm:$0xff]
  %v74 = vld [vmem:[%s1 + $0xd8] sm:$0xff]
  %v75 = vld [vmem:[%s1 + $0xe0] sm:$0xff]
  %v76 = vld [vmem:[%s1 + $0xe8] sm:$0xff]
  %v77 = vld [vmem:[%s1 + $0xf0] sm:$0xff]
  %v78 = vld [vmem:[%s1 + $0xf8] sm:$0xff]
  %v79 = vld [vmem:[%s1 + $0x100] sm:$0xff]
  %v80 = vld [vmem:[%s1 + $0x108] sm:$0xff]
  %v81 = vld [vmem:[%s1 + $0x110] sm:$0xff]
  %v82 = vld [vmem:[%s1 + $0x118] sm:$0xff]
  %v83 = vld [vmem:[%s1 + $0x120] sm:$0xff]
  %v84 = vld [vmem:[%s1 + $0x128] sm:$0xff]
  %v85 = vld [vmem:[%s1 + $0x130] sm:$0xff]
  %v86 = vld [vmem:[%s1 + $0x138] sm:$0xff]
  %v87 = vld [vmem:[%s1 + $0x140] sm:$0xff]
  %v88 = vld [vmem:[%s1 + $0x148] sm:$0xff]
  %v89 = vld [vmem:[%s1 + $0x150] sm:$0xff]
  %v90 = vld [vmem:[%s1 + $0x158] sm:$0xff]
  %v91 = vld [vmem:[%s1 + $0x160] sm:$0xff]
  %v92 = vld [vmem:[%s1 + $0x168] sm:$0xff]
  %v93 = vld [vmem:[%s1 + $0x170] sm:$0xff]
  %v94 = vld [vmem:[%s1 + $0x178] sm:$0xff]
  %v95 = vld [vmem:[%s1 + $0x180] sm:$0xff]
  %v96 = vld [vmem:[%s1 + $0x188] sm:$0xff]
  %v97 = vld [vmem:[%s1 + $0x190] sm:$0xff]
  %v98 = vld [vmem:[%s1 + $0x198] sm:$0xff]
  %v99 = vld [vmem:[%s1 + $0x1a0] sm:$0xff]
  %v100 = vld [vmem:[%s1 + $0x1a8] sm:$0xff]
  %v101 = vld [vmem:[%s1 + $0x1b0] sm:$0xff]
  %v102 = vld [vmem:[%s1 + $0x1b8] sm:$0xff]
  %v103 = vld [vmem:[%s1 + $0x1c0] sm:$0xff]
  %v104 = vld [vmem:[%s1 + $0x1c8] sm:$0xff]
  %v105 = vld [vmem:[%s1 + $0x1d0] sm:$0xff]
  %v106 = vld [vmem:[%s1 + $0x1d8] sm:$0xff]
  %v107 = vld [vmem:[%s1 + $0x1e0] sm:$0xff]
  %v108 = vld [vmem:[%s1 + $0x1e8] sm:$0xff]
  %v109 = vld [vmem:[%s1 + $0x1f0] sm:$0xff]
  %v110 = vld [vmem:[%s1 + $0x1f8] sm:$0xff]
  %v111 = vld [vmem:[%s1 + $0x200] sm:$0xff]
  %v112 = vld [vmem:[%s1 + $0x208] sm:$0xff]
  %v113 = vld [vmem:[%s1 + $0x210] sm:$0xff]
  %v114 = vld [vmem:[%s1 + $0x218] sm:$0xff]
  %v115 = vld [vmem:[%s1 + $0x220] sm:$0xff]
  %v116 = vld [vmem:[%s1 + $0x228] sm:$0xff]
  %v117 = vld [vmem:[%s1 + $0x230] sm:$0xff]
  %v118 = vld [vmem:[%s1 + $0x238] sm:$0xff]
  %v119 = vld [vmem:[%s1 + $0x240] sm:$0xff]
  %v120 = vld [vmem:[%s1 + $0x248] sm:$0xff]
  %v121 = vld [vmem:[%s1 + $0x250] sm:$0xff]
  %v122 = vld [vmem:[%s1 + $0x258] sm:$0xff]
  %v123 = vld [vmem:[%s1 + $0x260] sm:$0xff]
  %v124 = vld [vmem:[%s1 + $0x268] sm:$0xff]
  %v125 = vld [vmem:[%s1 + $0x270] sm:$0xff]
  %v126 = vld [vmem:[%s1 + $0x278] sm:$0xff]
  %v127 = vld [vmem:[%s1 + $0x280] sm:$0xff]
  %v128 = vld [vmem:[%s1 + $0x288] sm:$0xff]
  %v129 = vld [vmem:[%s1 + $0x290] sm:$0xff]
  %v130 = vld [vmem:[%s1 + $0x298] sm:$0xff]
  %v131 = vld [vmem:[%s1 + $0x2a0] sm:$0xff]
  %v132 = vld [vmem:[%s1 + $0x2a8] sm:$0xff]
  %v133 = vld [vmem:[%s1 + $0x2b0] sm:$0xff]
  %v134 = vld [vmem:[%s1 + $0x2b8] sm:$0xff]
  %v135 = vld [vmem:[%s1 + $0x2c0] sm:$0xff]
  %v136 = vld [vmem:[%s1 + $0x2c8] sm:$0xff]
  %v137 = vld [vmem:[%s1 + $0x2d0] sm:$0xff]
  %v138 = vld [vmem:[%s1 + $0x2d8] sm:$0xff]
  %v139 = vld [vmem:[%s1 + $0x2e0] sm:$0xff]
  %v140 = vld [vmem:[%s1 + $0x2e8] sm:$0xff]
  %v141 = vld [vmem:[%s1 + $0x2f0] sm:$0xff]
  %v142 = vld [vmem:[%s1 + $0x2f8] sm:$0xff]
  %v143 = vld [vmem:[%s1 + $0x300] sm:$0xff]
  %v144 = vld [vmem:[%s1 + $0x308] sm:$0xff]
  %v145 = vld [vmem:[%s1 + $0x310] sm:$0xff]
  %v146 = vld [vmem:[%s1 + $0x318] sm:$0xff]
  %v147 = vld [vmem:[%s1 + $0x320] sm:$0xff]
  %v148 = vld [vmem:[%s1 + $0x328] sm:$0xff]
  %v149 = vld [vmem:[%s1 + $0x330] sm:$0xff]
  %v150 = vld [vmem:[%s1 + $0x338] sm:$0xff]
  %v151 = vld [vmem:[%s1 + $0x340] sm:$0xff]
  %v152 = vld [vmem:[%s1 + $0x348] sm:$0xff]
  %v153 = vld [vmem:[%s1 + $0x350] sm:$0xff]
  %v154 = vld [vmem:[%s1 + $0x358] sm:$0xff]
  %v155 = vld [vmem:[%s1 + $0x360] sm:$0xff]
  %v156 = vld [vmem:[%s1 + $0x368] sm:$0xff]
  %v157 = vld [vmem:[%s1 + $0x370] sm:$0xff]
  %v158 = vld [vmem:[%s1 + $0x378] sm:$0xff]
  %v159 = vld [vmem:[%s1 + $0x380] sm:$0xff]
  %v160 = vld [vmem:[%s1 + $0x388] sm:$0xff]
  %v161 = vld [vmem:[%s1 + $0x390] sm:$0xff]
  %v162 = vld [vmem:[%s1 + $0x398] sm:$0xff]
  %v163 = vld [vmem:[%s1 + $0x3a0] sm:$0xff]
  %v164 = vld [vmem:[%s1 + $0x3a8] sm:$0xff]
  %v165 = vld [vmem:[%s1 + $0x3b0] sm:$0xff]
  %v166 = vld [vmem:[%s1 + $0x3b8] sm:$0xff]
  %v167 = vld [vmem:[%s1 + $0x3c0] sm:$0xff]
  %v168 = vld [vmem:[%s1 + $0x3c8] sm:$0xff]
  %v169 = vld [vmem:[%s1 + $0x3d0] sm:$0xff]
  %v170 = vld [vmem:[%s1 + $0x3d8] sm:$0xff]
  %v171 = vld [vmem:[%s1 + $0x3e0] sm:$0xff]
  %v172 = vld [vmem:[%s1 + $0x3e8] sm:$0xff]
  %v173 = vld [vmem:[%s1 + $0x3f0] sm:$0xff]
  %v174 = vld [vmem:[%s1 + $0x3f8] sm:$0xff]
  %v175 = vld [vmem:[%s1 + $0x400] sm:$0xff]
  %v176 = vld [vmem:[%s1 + $0x408] sm:$0xff]
  %v177 = vld [vmem:[%s1 + $0x410] sm:$0xff]
  %v178 = vld [vmem:[%s1 + $0x418] sm:$0xff]
  %v179 = vld [vmem:[%s1 + $0x420] sm:$0xff]
  %v180 = vld [vmem:[%s1 + $0x428] sm:$0xff]
  %v181 = vld [vmem:[%s1 + $0x430] sm:$0xff]
  %v182 = vld [vmem:[%s1 + $0x438] sm:$0xff]
  %v183 = vld [vmem:[%s1 + $0x440] sm:$0xff]
  %v184 = vld [vmem:[%s1 + $0x448] sm:$0xff]
  %v185 = vld [vmem:[%s1 + $0x450] sm:$0xff]
  %v186 = vld [vmem:[%s1 + $0x458] sm:$0xff]
  %v187 = vld [vmem:[%s1 + $0x460] sm:$0xff]
  %v188 = vld [vmem:[%s1 + $0x468] sm:$0xff]
  %v189 = vld [vmem:[%s1 + $0x470] sm:$0xff]
  %v190 = vld [vmem:[%s1 + $0x478] sm:$0xff]
  %v191 = vld [vmem:[%s1 + $0x480] sm:$0xff]
  %v192 = vld [vmem:[%s1 + $0x488] sm:$0xff]
  %v193 = vld [vmem:[%s1 + $0x490] sm:$0xff]
  %v194 = vld [vmem:[%s1 + $0x498] sm:$0xff]
  %v195 = vld [vmem:[%s1 + $0x4a0] sm:$0xff]
  %v196 = vld [vmem:[%s1 + $0x4a8] sm:$0xff]
  %v197 = vld [vmem:[%s1 + $0x4b0] sm:$0xff]
  %v198 = vld [vmem:[%s1 + $0x4b8] sm:$0xff]
  %v199 = vld [vmem:[%s1 + $0x4c0] sm:$0xff]
  %v200 = vld [vmem:[%s1 + $0x4c8] sm:$0xff]
  %v201 = vld [vmem:[%s1 + $0x4d0] sm:$0xff]
  %v202 = vld [vmem:[%s1 + $0x4d8] sm:$0xff]
  %v203 = vld [vmem:[%s1 + $0x4e0] sm:$0xff]
  %v204 = vld [vmem:[%s1 + $0x4e8] sm:$0xff]
  %v205 = vld [vmem:[%s1 + $0x4f0] sm:$0xff]
  %v206 = vld [vmem:[%s1 + $0x4f8] sm:$0xff]
  %v207 = vld [vmem:[%s1 + $0x500] sm:$0xff]
  %v208 = vld [vmem:[%s1 + $0x508] sm:$0xff]
  %v209 = vld [vmem:[%s1 + $0x510] sm:$0xff]
  %v210 = vld [vmem:[%s1 + $0x518] sm:$0xff]
  %v211 = vld [vmem:[%s1 + $0x520] sm:$0xff]
  %v212 = vld [vmem:[%s1 + $0x528] sm:$0xff]
  %v213 = vld [vmem:[%s1 + $0x530] sm:$0xff]
  %v214 = vld [vmem:[%s1 + $0x538] sm:$0xff]
  %v215 = vld [vmem:[%s1 + $0x540] sm:$0xff]
  %v216 = vld [vmem:[%s1 + $0x548] sm:$0xff]
  %v217 = vld [vmem:[%s1 + $0x550] sm:$0xff]
  %v218 = vld [vmem:[%s1 + $0x558] sm:$0xff]
  %v219 = vld [vmem:[%s1 + $0x560] sm:$0xff]
  %v220 = vld [vmem:[%s1 + $0x568] sm:$0xff]
  %v221 = vld [vmem:[%s1 + $0x570] sm:$0xff]
  %v222 = vld [vmem:[%s1 + $0x578] sm:$0xff]
  %v223 = vld [vmem:[%s1 + $0x580] sm:$0xff]
  %v224 = vld [vmem:[%s1 + $0x588] sm:$0xff]
  %v225 = vld [vmem:[%s1 + $0x590] sm:$0xff]
  %v226 = vld [vmem:[%s1 + $0x598] sm:$0xff]
  %v227 = vld [vmem:[%s1 + $0x5a0] sm:$0xff]
  %v228 = vld [vmem:[%s1 + $0x5a8] sm:$0xff]
  %v229 = vld [vmem:[%s1 + $0x5b0] sm:$0xff]
  %v230 = vld [vmem:[%s1 + $0x5b8] sm:$0xff]
  %v231 = vld [vmem:[%s1 + $0x5c0] sm:$0xff]
  %v232 = vld [vmem:[%s1 + $0x5c8] sm:$0xff]
  %v233 = vld [vmem:[%s1 + $0x5d0] sm:$0xff]
  %v234 = vld [vmem:[%s1 + $0x5d8] sm:$0xff]
  %v235 = vld [vmem:[%s1 + $0x5e0] sm:$0xff]
  %v236 = vld [vmem:[%s1 + $0x5e8] sm:$0xff]
  %v237 = vld [vmem:[%s1 + $0x5f0] sm:$0xff]
  %v238 = vld [vmem:[%s1 + $0x5f8] sm:$0xff]
  %v239 = vld [vmem:[%s1 + $0x600] sm:$0xff]
  %v240 = vld [vmem:[%s1 + $0x608] sm:$0xff]
  %v241 = vld [vmem:[%s1 + $0x610] sm:$0xff]
  %v242 = vld [vmem:[%s1 + $0x618] sm:$0xff]
  %v243 = vld [vmem:[%s1 + $0x620] sm:$0xff]
  %v244 = vld [vmem:[%s1 + $0x628] sm:$0xff]
  %v245 = vld [vmem:[%s1 + $0x630] sm:$0xff]
  %v246 = vld [vmem:[%s1 + $0x638] sm:$0xff]
  %v247 = vld [vmem:[%s1 + $0x640] sm:$0xff]
  %v248 = vld [vmem:[%s1 + $0x648] sm:$0xff]
  %v249 = vld [vmem:[%s1 + $0x650] sm:$0xff]
  %v250 = vld [vmem:[%s1 + $0x658] sm:$0xff]
  %v251 = vld [vmem:[%s1 + $0x660] sm:$0xff]
  %v252 = vld [vmem:[%s1 + $0x668] sm:$0xff]
  %v253 = vld [vmem:[%s1 + $0x670] sm:$0xff]
  %v254 = vld [vmem:[%s1 + $0x678] sm:$0xff]
  %v255 = vld [vmem:[%s1 + $0x680] sm:$0xff]
  %v256 = vld [vmem:[%s1 + $0x688] sm:$0xff]
  %v257 = vld [vmem:[%s1 + $0x690] sm:$0xff]
  %v258 = vld [vmem:[%s1 + $0x698] sm:$0xff]
  %v259 = vld [vmem:[%s1 + $0x6a0] sm:$0xff]
  %v260 = vld [vmem:[%s1 + $0x6a8] sm:$0xff]
  %v261 = vld [vmem:[%s1 + $0x6b0] sm:$0xff]
  %v262 = vld [vmem:[%s1 + $0x6b8] sm:$0xff]
  %v263 = vld [vmem:[%s1 + $0x6c0] sm:$0xff]
  %v264 = vld [vmem:[%s1 + $0x6c8] sm:$0xff]
  %v265 = vld [vmem:[%s1 + $0x6d0] sm:$0xff]
  %v266 = vld [vmem:[%s1 + $0x6d8] sm:$0xff]
  %v267 = vld [vmem:[%s1 + $0x6e0] sm:$0xff]
  %v268 = vld [vmem:[%s1 + $0x6e8] sm:$0xff]
  %v269 = vld [vmem:[%s1 + $0x6f0] sm:$0xff]
  %v270 = vld [vmem:[%s1 + $0x6f8] sm:$0xff]
  %v271 = vld [vmem:[%s1 + $0x700] sm:$0xff]
  %v272 = vld [vmem:[%s1 + $0x708] sm:$0xff]
  %v273 = vld [vmem:[%s1 + $0x710] sm:$0xff]
  %v274 = vld [vmem:[%s1 + $0x718] sm:$0xff]
  %v275 = vld [vmem:[%s1 + $0x720] sm:$0xff]
  %v276 = vld [vmem:[%s1 + $0x728] sm:$0xff]
  %v277 = vld [vmem:[%s1 + $0x730] sm:$0xff]
  %v278 = vld [vmem:[%s1 + $0x738] sm:$0xff]
  %v279 = vld [vmem:[%s1 + $0x740] sm:$0xff]
  %v280 = vld [vmem:[%s1 + $0x748] sm:$0xff]
  %v281 = vld [vmem:[%s1 + $0x750] sm:$0xff]
  %v282 = vld [vmem:[%s1 + $0x758] sm:$0xff]
  %v283 = vld [vmem:[%s1 + $0x760] sm:$0xff]
  %v284 = vld [vmem:[%s1 + $0x768] sm:$0xff]
  %v285 = vld [vmem:[%s1 + $0x770] sm:$0xff]
  %v286 = vld [vmem:[%s1 + $0x778] sm:$0xff]
  %v287 = vld [vmem:[%s1 + $0x780] sm:$0xff]
  %v288 = vld [vmem:[%s1 + $0x788] sm:$0xff]
  %v289 = vld [vmem:[%s1 + $0x790] sm:$0xff]
  %v290 = vld [vmem:[%s1 + $0x798] sm:$0xff]
  %v291 = vld [vmem:[%s1 + $0x7a0] sm:$0xff]
  %v292 = vld [vmem:[%s1 + $0x7a8] sm:$0xff]
  %v293 = vld [vmem:[%s1 + $0x7b0] sm:$0xff]
  %v294 = vld [vmem:[%s1 + $0x7b8] sm:$0xff]
  %v295 = vld [vmem:[%s1 + $0x7c0] sm:$0xff]
  %v296 = vld [vmem:[%s1 + $0x7c8] sm:$0xff]
  %v297 = vld [vmem:[%s1 + $0x7d0] sm:$0xff]
  %v298 = vld [vmem:[%s1 + $0x7d8] sm:$0xff]
  %v299 = vld [vmem:[%s1 + $0x7e0] sm:$0xff]
  %v300 = vld [vmem:[%s1 + $0x7e8] sm:$0xff]
  %v301 = vld [vmem:[%s1 + $0x7f0] sm:$0xff]
  %v302 = vld [vmem:[%s1 + $0x7f8] sm:$0xff]
  %v303 = vld [vmem:[%s1 + $0x800] sm:$0xff]
  %v304 = vld [vmem:[%s1 + $0x808] sm:$0xff]
  %v305 = vld [vmem:[%s1 + $0x810] sm:$0xff]
  %v306 = vld [vmem:[%s1 + $0x818] sm:$0xff]
  %v307 = vld [vmem:[%s1 + $0x820] sm:$0xff]
  %v308 = vld [vmem:[%s1 + $0x828] sm:$0xff]
  %v309 = vld [vmem:[%s1 + $0x830] sm:$0xff]
  %v310 = vld [vmem:[%s1 + $0x838] sm:$0xff]
  %v311 = vld [vmem:[%s1 + $0x840] sm:$0xff]
  %v312 = vld [vmem:[%s1 + $0x848] sm:$0xff]
  %v313 = vld [vmem:[%s1 + $0x850] sm:$0xff]
  %v314 = vld [vmem:[%s1 + $0x858] sm:$0xff]
  %v315 = vld [vmem:[%s1 + $0x860] sm:$0xff]
  %v316 = vld [vmem:[%s1 + $0x868] sm:$0xff]
  %v317 = vld [vmem:[%s1 + $0x870] sm:$0xff]
  %v318 = vld [vmem:[%s1 + $0x878] sm:$0xff]
  %v319 = vld [vmem:[%s1 + $0x880] sm:$0xff]
  %v320 = vld [vmem:[%s1 + $0x888] sm:$0xff]
  %v321 = vld [vmem:[%s1 + $0x890] sm:$0xff]
  %v322 = vld [vmem:[%s1 + $0x898] sm:$0xff]
  %v323 = vld [vmem:[%s1 + $0x8a0] sm:$0xff]
  %v324 = vld [vmem:[%s1 + $0x8a8] sm:$0xff]
  %v325 = vld [vmem:[%s1 + $0x8b0] sm:$0xff]
  %v326 = vld [vmem:[%s1 + $0x8b8] sm:$0xff]
  %v327 = vld [vmem:[%s1 + $0x8c0] sm:$0xff]
  %v328 = vld [vmem:[%s1 + $0x8c8] sm:$0xff]
  %v329 = vld [vmem:[%s1 + $0x8d0] sm:$0xff]
  %v330 = vld [vmem:[%s1 + $0x8d8] sm:$0xff]
  %v331 = vld [vmem:[%s1 + $0x8e0] sm:$0xff]
  %v332 = vld [vmem:[%s1 + $0x8e8] sm:$0xff]
  %v333 = vld [vmem:[%s1 + $0x8f0] sm:$0xff]
  %v334 = vld [vmem:[%s1 + $0x8f8] sm:$0xff]
  %v335 = vld [vmem:[%s1 + $0x900] sm:$0xff]
  %v336 = vld [vmem:[%s1 + $0x908] sm:$0xff]
  %v337 = vld [vmem:[%s1 + $0x910] sm:$0xff]
  %v338 = vld [vmem:[%s1 + $0x918] sm:$0xff]
  %v339 = vld [vmem:[%s1 + $0x920] sm:$0xff]
  %v340 = vld [vmem:[%s1 + $0x928] sm:$0xff]
  %v346 = vunpack.c.l.b16 %v42
  %v347 = vunpack.c.h.b16 %v42
  %v348 = vunpack.c.l.b16 %v43
  %v349 = vunpack.c.h.b16 %v43
  %v350 = vunpack.c.l.b16 %v44
  %v351 = vunpack.c.h.b16 %v44
  %v352 = vunpack.c.l.b16 %v45
  %v353 = vunpack.c.h.b16 %v45
  %v354 = vunpack.c.l.b16 %v46
  %v355 = vunpack.c.h.b16 %v46
  %v356 = vpack.c.b16 %v346, %v346
  %v357 = vpack.c.b16 %v347, %v347
  %v358 = vpack.c.b16 %v348, %v348
  %v359 = vpack.c.b16 %v349, %v349
  %v360 = vpack.c.b16 %v350, %v350
  %v361 = vpack.c.b16 %v351, %v351
  %v362 = vpack.c.b16 %v352, %v352
  %v363 = vpack.c.b16 %v353, %v353
  %v364 = vpack.c.b16 %v354, %v354
  %v365 = vpack.c.b16 %v355, %v355
  %v669 = vunpack.c.l.b16 %v47
  %v670 = vunpack.c.h.b16 %v47
  %v671 = vunpack.c.l.b16 %v48
  %v672 = vunpack.c.h.b16 %v48
  %v673 = vunpack.c.l.b16 %v49
  %v674 = vunpack.c.h.b16 %v49
  %v675 = vunpack.c.l.b16 %v50
  %v676 = vunpack.c.h.b16 %v50
  %v677 = vunpack.c.l.b16 %v51
  %v678 = vunpack.c.h.b16 %v51
  %v679 = vunpack.c.l.b16 %v52
  %v680 = vunpack.c.h.b16 %v52
  %v681 = vunpack.c.l.b16 %v53
  %v682 = vunpack.c.h.b16 %v53
  %v683 = vunpack.c.l.b16 %v54
  %v684 = vunpack.c.h.b16 %v54
  %v685 = vunpack.c.l.b16 %v55
  %v686 = vunpack.c.h.b16 %v55
  %v687 = vunpack.c.l.b16 %v56
  %v688 = vunpack.c.h.b16 %v56
  %v689 = vunpack.c.l.b16 %v57
  %v690 = vunpack.c.h.b16 %v57
  %v691 = vunpack.c.l.b16 %v58
  %v692 = vunpack.c.h.b16 %v58
  %v693 = vunpack.c.l.b16 %v59
  %v694 = vunpack.c.h.b16 %v59
  %v695 = vunpack.c.l.b16 %v60
  %v696 = vunpack.c.h.b16 %v60
  %v697 = vunpack.c.l.b16 %v61
  %v698 = vunpack.c.h.b16 %v61
  %v699 = vunpack.c.l.b16 %v62
  %v700 = vunpack.c.h.b16 %v62
  %v701 = vunpack.c.l.b16 %v63
  %v702 = vunpack.c.h.b16 %v63
  %v703 = vunpack.c.l.b16 %v64
  %v704 = vunpack.c.h.b16 %v64
  %v705 = vunpack.c.l.b16 %v65
  %v706 = vunpack.c.h.b16 %v65
  %v707 = vunpack.c.l.b16 %v66
  %v708 = vunpack.c.h.b16 %v66
  %v709 = vunpack.c.l.b16 %v67
  %v710 = vunpack.c.h.b16 %v67
  %v711 = vunpack.c.l.b16 %v68
  %v712 = vunpack.c.h.b16 %v68
  %v713 = vunpack.c.l.b16 %v69
  %v714 = vunpack.c.h.b16 %v69
  %v715 = vunpack.c.l.b16 %v70
  %v716 = vunpack.c.h.b16 %v70
  %v717 = vunpack.c.l.b16 %v71
  %v718 = vunpack.c.h.b16 %v71
  %v719 = vunpack.c.l.b16 %v72
  %v720 = vunpack.c.h.b16 %v72
  %v721 = vunpack.c.l.b16 %v73
  %v722 = vunpack.c.h.b16 %v73
  %v723 = vunpack.c.l.b16 %v74
  %v724 = vunpack.c.h.b16 %v74
  %v725 = vunpack.c.l.b16 %v75
  %v726 = vunpack.c.h.b16 %v75
  %v727 = vunpack.c.l.b16 %v76
  %v728 = vunpack.c.h.b16 %v76
  %v729 = vunpack.c.l.b16 %v77
  %v730 = vunpack.c.h.b16 %v77
  %v731 = vunpack.c.l.b16 %v78
  %v732 = vunpack.c.h.b16 %v78
  %v733 = vunpack.c.l.b16 %v79
  %v734 = vunpack.c.h.b16 %v79
  %v735 = vunpack.c.l.b16 %v80
  %v736 = vunpack.c.h.b16 %v80
  %v737 = vunpack.c.l.b16 %v81
  %v738 = vunpack.c.h.b16 %v81
  %v739 = vunpack.c.l.b16 %v82
  %v740 = vunpack.c.h.b16 %v82
  %v741 = vunpack.c.l.b16 %v83
  %v742 = vunpack.c.h.b16 %v83
  %v743 = vunpack.c.l.b16 %v84
  %v744 = vunpack.c.h.b16 %v84
  %v745 = vunpack.c.l.b16 %v85
  %v746 = vunpack.c.h.b16 %v85
  %v747 = vunpack.c.l.b16 %v86
  %v748 = vunpack.c.h.b16 %v86
  %v749 = vunpack.c.l.b16 %v87
  %v750 = vunpack.c.h.b16 %v87
  %v751 = vunpack.c.l.b16 %v88
  %v752 = vunpack.c.h.b16 %v88
  %v753 = vunpack.c.l.b16 %v89
  %v754 = vunpack.c.h.b16 %v89
  %v755 = vunpack.c.l.b16 %v90
  %v756 = vunpack.c.h.b16 %v90
  %v757 = vunpack.c.l.b16 %v91
  %v758 = vunpack.c.h.b16 %v91
  %v759 = vunpack.c.l.b16 %v92
  %v760 = vunpack.c.h.b16 %v92
  %v761 = vunpack.c.l.b16 %v93
  %v762 = vunpack.c.h.b16 %v93
  %v763 = vunpack.c.l.b16 %v94
  %v764 = vunpack.c.h.b16 %v94
  %v765 = vunpack.c.l.b16 %v95
  %v766 = vunpack.c.h.b16 %v95
  %v767 = vunpack.c.l.b16 %v96
  %v768 = vunpack.c.h.b16 %v96
  %v769 = vunpack.c.l.b16 %v97
  %v770 = vunpack.c.h.b16 %v97
  %v771 = vunpack.c.l.b16 %v98
  %v772 = vunpack.c.h.b16 %v98
  %v773 = vunpack.c.l.b16 %v99
  %v774 = vunpack.c.h.b16 %v99
  %v775 = vunpack.c.l.b16 %v100
  %v776 = vunpack.c.h.b16 %v100
  %v777 = vunpack.c.l.b16 %v101
  %v778 = vunpack.c.h.b16 %v101
  %v779 = vunpack.c.l.b16 %v102
  %v780 = vunpack.c.h.b16 %v102
  %v781 = vunpack.c.l.b16 %v103
  %v782 = vunpack.c.h.b16 %v103
  %v783 = vunpack.c.l.b16 %v104
  %v784 = vunpack.c.h.b16 %v104
  %v785 = vunpack.c.l.b16 %v105
  %v786 = vunpack.c.h.b16 %v105
  %v787 = vunpack.c.l.b16 %v106
  %v788 = vunpack.c.h.b16 %v106
  %v789 = vunpack.c.l.b16 %v107
  %v790 = vunpack.c.h.b16 %v107
  %v791 = vunpack.c.l.b16 %v108
  %v792 = vunpack.c.h.b16 %v108
  %v793 = vunpack.c.l.b16 %v109
  %v794 = vunpack.c.h.b16 %v109
  %v795 = vunpack.c.l.b16 %v110
  %v796 = vunpack.c.h.b16 %v110
  %v797 = vunpack.c.l.b16 %v111
  %v798 = vunpack.c.h.b16 %v111
  %v799 = vunpack.c.l.b16 %v112
  %v800 = vunpack.c.h.b16 %v112
  %v801 = vunpack.c.l.b16 %v113
  %v802 = vunpack.c.h.b16 %v113
  %v803 = vunpack.c.l.b16 %v114
  %v804 = vunpack.c.h.b16 %v114
  %v805 = vunpack.c.l.b16 %v115
  %v806 = vunpack.c.h.b16 %v115
  %v807 = vunpack.c.l.b16 %v116
  %v808 = vunpack.c.h.b16 %v116
  %v809 = vunpack.c.l.b16 %v117
  %v810 = vunpack.c.h.b16 %v117
  %v811 = vunpack.c.l.b16 %v118
  %v812 = vunpack.c.h.b16 %v118
  %v813 = vunpack.c.l.b16 %v119
  %v814 = vunpack.c.h.b16 %v119
  %v815 = vunpack.c.l.b16 %v120
  %v816 = vunpack.c.h.b16 %v120
  %v817 = vunpack.c.l.b16 %v121
  %v818 = vunpack.c.h.b16 %v121
  %v819 = vunpack.c.l.b16 %v122
  %v820 = vunpack.c.h.b16 %v122
  %v821 = vunpack.c.l.b16 %v123
  %v822 = vunpack.c.h.b16 %v123
  %v823 = vunpack.c.l.b16 %v124
  %v824 = vunpack.c.h.b16 %v124
  %v825 = vunpack.c.l.b16 %v125
  %v826 = vunpack.c.h.b16 %v125
  %v827 = vunpack.c.l.b16 %v126
  %v828 = vunpack.c.h.b16 %v126
  %v829 = vunpack.c.l.b16 %v127
  %v830 = vunpack.c.h.b16 %v127
  %v831 = vunpack.c.l.b16 %v128
  %v832 = vunpack.c.h.b16 %v128
  %v833 = vunpack.c.l.b16 %v129
  %v834 = vunpack.c.h.b16 %v129
  %v835 = vunpack.c.l.b16 %v130
  %v836 = vunpack.c.h.b16 %v130
  %v837 = vunpack.c.l.b16 %v131
  %v838 = vunpack.c.h.b16 %v131
  %v839 = vunpack.c.l.b16 %v132
  %v840 = vunpack.c.h.b16 %v132
  %v841 = vunpack.c.l.b16 %v133
  %v842 = vunpack.c.h.b16 %v133
  %v843 = vunpack.c.l.b16 %v134
  %v844 = vunpack.c.h.b16 %v134
  %v845 = vunpack.c.l.b16 %v135
  %v846 = vunpack.c.h.b16 %v135
  %v847 = vunpack.c.l.b16 %v136
  %v848 = vunpack.c.h.b16 %v136
  %v849 = vunpack.c.l.b16 %v137
  %v850 = vunpack.c.h.b16 %v137
  %v851 = vunpack.c.l.b16 %v138
  %v852 = vunpack.c.h.b16 %v138
  %v853 = vunpack.c.l.b16 %v139
  %v854 = vunpack.c.h.b16 %v139
  %v855 = vunpack.c.l.b16 %v140
  %v856 = vunpack.c.h.b16 %v140
  %v857 = vunpack.c.l.b16 %v141
  %v858 = vunpack.c.h.b16 %v141
  %v859 = vunpack.c.l.b16 %v142
  %v860 = vunpack.c.h.b16 %v142
  %v861 = vunpack.c.l.b16 %v143
  %v862 = vunpack.c.h.b16 %v143
  %v863 = vunpack.c.l.b16 %v144
  %v864 = vunpack.c.h.b16 %v144
  %v865 = vunpack.c.l.b16 %v145
  %v866 = vunpack.c.h.b16 %v145
  %v867 = vunpack.c.l.b16 %v146
  %v868 = vunpack.c.h.b16 %v146
  %v869 = vunpack.c.l.b16 %v147
  %v870 = vunpack.c.h.b16 %v147
  %v871 = vunpack.c.l.b16 %v148
  %v872 = vunpack.c.h.b16 %v148
  %v873 = vunpack.c.l.b16 %v149
  %v874 = vunpack.c.h.b16 %v149
  %v875 = vunpack.c.l.b16 %v150
  %v876 = vunpack.c.h.b16 %v150
  %v877 = vunpack.c.l.b16 %v151
  %v878 = vunpack.c.h.b16 %v151
  %v879 = vunpack.c.l.b16 %v152
  %v880 = vunpack.c.h.b16 %v152
  %v881 = vunpack.c.l.b16 %v153
  %v882 = vunpack.c.h.b16 %v153
  %v883 = vunpack.c.l.b16 %v154
  %v884 = vunpack.c.h.b16 %v154
  %v885 = vunpack.c.l.b16 %v155
  %v886 = vunpack.c.h.b16 %v155
  %v887 = vunpack.c.l.b16 %v156
  %v888 = vunpack.c.h.b16 %v156
  %v889 = vunpack.c.l.b16 %v157
  %v890 = vunpack.c.h.b16 %v157
  %v891 = vunpack.c.l.b16 %v158
  %v892 = vunpack.c.h.b16 %v158
  %v893 = vunpack.c.l.b16 %v159
  %v894 = vunpack.c.h.b16 %v159
  %v895 = vunpack.c.l.b16 %v160
  %v896 = vunpack.c.h.b16 %v160
  %v897 = vunpack.c.l.b16 %v161
  %v898 = vunpack.c.h.b16 %v161
  %v899 = vunpack.c.l.b16 %v162
  %v900 = vunpack.c.h.b16 %v162
  %v901 = vunpack.c.l.b16 %v163
  %v902 = vunpack.c.h.b16 %v163
  %v903 = vunpack.c.l.b16 %v164
  %v904 = vunpack.c.h.b16 %v164
  %v905 = vunpack.c.l.b16 %v165
  %v906 = vunpack.c.h.b16 %v165
  %v907 = vunpack.c.l.b16 %v166
  %v908 = vunpack.c.h.b16 %v166
  %v909 = vunpack.c.l.b16 %v167
  %v910 = vunpack.c.h.b16 %v167
  %v911 = vunpack.c.l.b16 %v168
  %v912 = vunpack.c.h.b16 %v168
  %v913 = vunpack.c.l.b16 %v169
  %v914 = vunpack.c.h.b16 %v169
  %v915 = vunpack.c.l.b16 %v170
  %v916 = vunpack.c.h.b16 %v170
  %v917 = vunpack.c.l.b16 %v171
  %v918 = vunpack.c.h.b16 %v171
  %v919 = vunpack.c.l.b16 %v172
  %v920 = vunpack.c.h.b16 %v172
  %v921 = vunpack.c.l.b16 %v173
  %v922 = vunpack.c.h.b16 %v173
  %v923 = vunpack.c.l.b16 %v174
  %v924 = vunpack.c.h.b16 %v174
  %v925 = vunpack.c.l.b16 %v175
  %v926 = vunpack.c.h.b16 %v175
  %v927 = vunpack.c.l.b16 %v176
  %v928 = vunpack.c.h.b16 %v176
  %v929 = vunpack.c.l.b16 %v177
  %v930 = vunpack.c.h.b16 %v177
  %v931 = vunpack.c.l.b16 %v178
  %v932 = vunpack.c.h.b16 %v178
  %v933 = vunpack.c.l.b16 %v179
  %v934 = vunpack.c.h.b16 %v179
  %v935 = vunpack.c.l.b16 %v180
  %v936 = vunpack.c.h.b16 %v180
  %v937 = vunpack.c.l.b16 %v181
  %v938 = vunpack.c.h.b16 %v181
  %v939 = vunpack.c.l.b16 %v182
  %v940 = vunpack.c.h.b16 %v182
  %v941 = vunpack.c.l.b16 %v183
  %v942 = vunpack.c.h.b16 %v183
  %v943 = vunpack.c.l.b16 %v184
  %v944 = vunpack.c.h.b16 %v184
  %v945 = vunpack.c.l.b16 %v185
  %v946 = vunpack.c.h.b16 %v185
  %v947 = vunpack.c.l.b16 %v186
  %v948 = vunpack.c.h.b16 %v186
  %v949 = vunpack.c.l.b16 %v187
  %v950 = vunpack.c.h.b16 %v187
  %v951 = vunpack.c.l.b16 %v188
  %v952 = vunpack.c.h.b16 %v188
  %v953 = vunpack.c.l.b16 %v189
  %v954 = vunpack.c.h.b16 %v189
  %v955 = vunpack.c.l.b16 %v190
  %v956 = vunpack.c.h.b16 %v190
  %v957 = vunpack.c.l.b16 %v191
  %v958 = vunpack.c.h.b16 %v191
  %v959 = vunpack.c.l.b16 %v192
  %v960 = vunpack.c.h.b16 %v192
  %v961 = vunpack.c.l.b16 %v193
  %v962 = vunpack.c.h.b16 %v193
  %v963 = vunpack.c.l.b16 %v194
  %v964 = vunpack.c.h.b16 %v194
  %v965 = vunpack.c.l.b16 %v195
  %v966 = vunpack.c.h.b16 %v195
  %v967 = vunpack.c.l.b16 %v196
  %v968 = vunpack.c.h.b16 %v196
  %v969 = vunpack.c.l.b16 %v197
  %v970 = vunpack.c.h.b16 %v197
  %v971 = vunpack.c.l.b16 %v198
  %v972 = vunpack.c.h.b16 %v198
  %v973 = vunpack.c.l.b16 %v199
  %v974 = vunpack.c.h.b16 %v199
  %v975 = vunpack.c.l.b16 %v200
  %v976 = vunpack.c.h.b16 %v200
  %v977 = vunpack.c.l.b16 %v201
  %v978 = vunpack.c.h.b16 %v201
  %v979 = vunpack.c.l.b16 %v202
  %v980 = vunpack.c.h.b16 %v202
  %v981 = vunpack.c.l.b16 %v203
  %v982 = vunpack.c.h.b16 %v203
  %v983 = vunpack.c.l.b16 %v204
  %v984 = vunpack.c.h.b16 %v204
  %v985 = vunpack.c.l.b16 %v205
  %v986 = vunpack.c.h.b16 %v205
  %v987 = vunpack.c.l.b16 %v206
  %v988 = vunpack.c.h.b16 %v206
  %v989 = vunpack.c.l.b16 %v207
  %v990 = vunpack.c.h.b16 %v207
  %v991 = vunpack.c.l.b16 %v208
  %v992 = vunpack.c.h.b16 %v208
  %v993 = vunpack.c.l.b16 %v209
  %v994 = vunpack.c.h.b16 %v209
  %v995 = vunpack.c.l.b16 %v210
  %v996 = vunpack.c.h.b16 %v210
  %v997 = vunpack.c.l.b16 %v211
  %v998 = vunpack.c.h.b16 %v211
  %v999 = vunpack.c.l.b16 %v212
  %v1000 = vunpack.c.h.b16 %v212
  %v1001 = vunpack.c.l.b16 %v213
  %v1002 = vunpack.c.h.b16 %v213
  %v1003 = vunpack.c.l.b16 %v214
  %v1004 = vunpack.c.h.b16 %v214
  %v1005 = vunpack.c.l.b16 %v215
  %v1006 = vunpack.c.h.b16 %v215
  %v1007 = vunpack.c.l.b16 %v216
  %v1008 = vunpack.c.h.b16 %v216
  %v1009 = vunpack.c.l.b16 %v217
  %v1010 = vunpack.c.h.b16 %v217
  %v1011 = vunpack.c.l.b16 %v218
  %v1012 = vunpack.c.h.b16 %v218
  %v1013 = vunpack.c.l.b16 %v219
  %v1014 = vunpack.c.h.b16 %v219
  %v1015 = vunpack.c.l.b16 %v220
  %v1016 = vunpack.c.h.b16 %v220
  %v1017 = vunpack.c.l.b16 %v221
  %v1018 = vunpack.c.h.b16 %v221
  %v1019 = vunpack.c.l.b16 %v222
  %v1020 = vunpack.c.h.b16 %v222
  %v1021 = vunpack.c.l.b16 %v223
  %v1022 = vunpack.c.h.b16 %v223
  %v1023 = vunpack.c.l.b16 %v224
  %v1024 = vunpack.c.h.b16 %v224
  %v1025 = vunpack.c.l.b16 %v225
  %v1026 = vunpack.c.h.b16 %v225
  %v1027 = vunpack.c.l.b16 %v226
  %v1028 = vunpack.c.h.b16 %v226
  %v1029 = vunpack.c.l.b16 %v227
  %v1030 = vunpack.c.h.b16 %v227
  %v1031 = vunpack.c.l.b16 %v228
  %v1032 = vunpack.c.h.b16 %v228
  %v1033 = vunpack.c.l.b16 %v229
  %v1034 = vunpack.c.h.b16 %v229
  %v1035 = vunpack.c.l.b16 %v230
  %v1036 = vunpack.c.h.b16 %v230
  %v1037 = vunpack.c.l.b16 %v231
  %v1038 = vunpack.c.h.b16 %v231
  %v1039 = vunpack.c.l.b16 %v232
  %v1040 = vunpack.c.h.b16 %v232
  %v1041 = vunpack.c.l.b16 %v233
  %v1042 = vunpack.c.h.b16 %v233
  %v1043 = vunpack.c.l.b16 %v234
  %v1044 = vunpack.c.h.b16 %v234
  %v1045 = vunpack.c.l.b16 %v235
  %v1046 = vunpack.c.h.b16 %v235
  %v1047 = vunpack.c.l.b16 %v236
  %v1048 = vunpack.c.h.b16 %v236
  %v1049 = vunpack.c.l.b16 %v237
  %v1050 = vunpack.c.h.b16 %v237
  %v1051 = vunpack.c.l.b16 %v238
  %v1052 = vunpack.c.h.b16 %v238
  %v1053 = vunpack.c.l.b16 %v239
  %v1054 = vunpack.c.h.b16 %v239
  %v1055 = vunpack.c.l.b16 %v240
  %v1056 = vunpack.c.h.b16 %v240
  %v1057 = vunpack.c.l.b16 %v241
  %v1058 = vunpack.c.h.b16 %v241
  %v1059 = vunpack.c.l.b16 %v242
  %v1060 = vunpack.c.h.b16 %v242
  %v1061 = vunpack.c.l.b16 %v243
  %v1062 = vunpack.c.h.b16 %v243
  %v1063 = vunpack.c.l.b16 %v244
  %v1064 = vunpack.c.h.b16 %v244
  %v1065 = vunpack.c.l.b16 %v245
  %v1066 = vunpack.c.h.b16 %v245
  %v1067 = vunpack.c.l.b16 %v246
  %v1068 = vunpack.c.h.b16 %v246
  %v1069 = vunpack.c.l.b16 %v247
  %v1070 = vunpack.c.h.b16 %v247
  %v1071 = vunpack.c.l.b16 %v248
  %v1072 = vunpack.c.h.b16 %v248
  %v1073 = vunpack.c.l.b16 %v249
  %v1074 = vunpack.c.h.b16 %v249
  %v1075 = vunpack.c.l.b16 %v250
  %v1076 = vunpack.c.h.b16 %v250
  %v1077 = vunpack.c.l.b16 %v251
  %v1078 = vunpack.c.h.b16 %v251
  %v1079 = vunpack.c.l.b16 %v252
  %v1080 = vunpack.c.h.b16 %v252
  %v1081 = vunpack.c.l.b16 %v253
  %v1082 = vunpack.c.h.b16 %v253
  %v1083 = vunpack.c.l.b16 %v254
  %v1084 = vunpack.c.h.b16 %v254
  %v1085 = vunpack.c.l.b16 %v255
  %v1086 = vunpack.c.h.b16 %v255
  %v1087 = vunpack.c.l.b16 %v256
  %v1088 = vunpack.c.h.b16 %v256
  %v1089 = vunpack.c.l.b16 %v257
  %v1090 = vunpack.c.h.b16 %v257
  %v1091 = vunpack.c.l.b16 %v258
  %v1092 = vunpack.c.h.b16 %v258
  %v1093 = vunpack.c.l.b16 %v259
  %v1094 = vunpack.c.h.b16 %v259
  %v1095 = vunpack.c.l.b16 %v260
  %v1096 = vunpack.c.h.b16 %v260
  %v1097 = vunpack.c.l.b16 %v261
  %v1098 = vunpack.c.h.b16 %v261
  %v1099 = vunpack.c.l.b16 %v262
  %v1100 = vunpack.c.h.b16 %v262
  %v1101 = vunpack.c.l.b16 %v263
  %v1102 = vunpack.c.h.b16 %v263
  %v1103 = vunpack.c.l.b16 %v264
  %v1104 = vunpack.c.h.b16 %v264
  %v1105 = vunpack.c.l.b16 %v265
  %v1106 = vunpack.c.h.b16 %v265
  %v1107 = vunpack.c.l.b16 %v266
  %v1108 = vunpack.c.h.b16 %v266
  %v1109 = vunpack.c.l.b16 %v267
  %v1110 = vunpack.c.h.b16 %v267
  %v1111 = vunpack.c.l.b16 %v268
  %v1112 = vunpack.c.h.b16 %v268
  %v1113 = vunpack.c.l.b16 %v269
  %v1114 = vunpack.c.h.b16 %v269
  %v1115 = vunpack.c.l.b16 %v270
  %v1116 = vunpack.c.h.b16 %v270
  %v1117 = vunpack.c.l.b16 %v271
  %v1118 = vunpack.c.h.b16 %v271
  %v1119 = vunpack.c.l.b16 %v272
  %v1120 = vunpack.c.h.b16 %v272
  %v1121 = vunpack.c.l.b16 %v273
  %v1122 = vunpack.c.h.b16 %v273
  %v1123 = vunpack.c.l.b16 %v274
  %v1124 = vunpack.c.h.b16 %v274
  %v1125 = vunpack.c.l.b16 %v275
  %v1126 = vunpack.c.h.b16 %v275
  %v1127 = vunpack.c.l.b16 %v276
  %v1128 = vunpack.c.h.b16 %v276
  %v1129 = vunpack.c.l.b16 %v277
  %v1130 = vunpack.c.h.b16 %v277
  %v1131 = vunpack.c.l.b16 %v278
  %v1132 = vunpack.c.h.b16 %v278
  %v1133 = vunpack.c.l.b16 %v279
  %v1134 = vunpack.c.h.b16 %v279
  %v1135 = vunpack.c.l.b16 %v280
  %v1136 = vunpack.c.h.b16 %v280
  %v1137 = vunpack.c.l.b16 %v281
  %v1138 = vunpack.c.h.b16 %v281
  %v1139 = vunpack.c.l.b16 %v282
  %v1140 = vunpack.c.h.b16 %v282
  %v1141 = vunpack.c.l.b16 %v283
  %v1142 = vunpack.c.h.b16 %v283
  %v1143 = vunpack.c.l.b16 %v284
  %v1144 = vunpack.c.h.b16 %v284
  %v1145 = vunpack.c.l.b16 %v285
  %v1146 = vunpack.c.h.b16 %v285
  %v1147 = vunpack.c.l.b16 %v286
  %v1148 = vunpack.c.h.b16 %v286
  %v1149 = vunpack.c.l.b16 %v287
  %v1150 = vunpack.c.h.b16 %v287
  %v1151 = vunpack.c.l.b16 %v288
  %v1152 = vunpack.c.h.b16 %v288
  %v1153 = vunpack.c.l.b16 %v289
  %v1154 = vunpack.c.h.b16 %v289
  %v1155 = vunpack.c.l.b16 %v290
  %v1156 = vunpack.c.h.b16 %v290
  %v1157 = vunpack.c.l.b16 %v291
  %v1158 = vunpack.c.h.b16 %v291
  %v1159 = vunpack.c.l.b16 %v292
  %v1160 = vunpack.c.h.b16 %v292
  %v1161 = vunpack.c.l.b16 %v293
  %v1162 = vunpack.c.h.b16 %v293
  %v1163 = vunpack.c.l.b16 %v294
  %v1164 = vunpack.c.h.b16 %v294
  %v1165 = vunpack.c.l.b16 %v295
  %v1166 = vunpack.c.h.b16 %v295
  %v1167 = vunpack.c.l.b16 %v296
  %v1168 = vunpack.c.h.b16 %v296
  %v1169 = vunpack.c.l.b16 %v297
  %v1170 = vunpack.c.h.b16 %v297
  %v1171 = vunpack.c.l.b16 %v298
  %v1172 = vunpack.c.h.b16 %v298
  %v1173 = vunpack.c.l.b16 %v299
  %v1174 = vunpack.c.h.b16 %v299
  %v1175 = vunpack.c.l.b16 %v300
  %v1176 = vunpack.c.h.b16 %v300
  %v1177 = vunpack.c.l.b16 %v301
  %v1178 = vunpack.c.h.b16 %v301
  %v1179 = vunpack.c.l.b16 %v302
  %v1180 = vunpack.c.h.b16 %v302
  %v1181 = vunpack.c.l.b16 %v303
  %v1182 = vunpack.c.h.b16 %v303
  %v1183 = vunpack.c.l.b16 %v304
  %v1184 = vunpack.c.h.b16 %v304
  %v1185 = vunpack.c.l.b16 %v305
  %v1186 = vunpack.c.h.b16 %v305
  %v1187 = vunpack.c.l.b16 %v306
  %v1188 = vunpack.c.h.b16 %v306
  %v1189 = vunpack.c.l.b16 %v307
  %v1190 = vunpack.c.h.b16 %v307
  %v1191 = vunpack.c.l.b16 %v308
  %v1192 = vunpack.c.h.b16 %v308
  %v1193 = vunpack.c.l.b16 %v309
  %v1194 = vunpack.c.h.b16 %v309
  %v1195 = vunpack.c.l.b16 %v310
  %v1196 = vunpack.c.h.b16 %v310
  %v1197 = vunpack.c.l.b16 %v311
  %v1198 = vunpack.c.h.b16 %v311
  %v1199 = vunpack.c.l.b16 %v312
  %v1200 = vunpack.c.h.b16 %v312
  %v1201 = vunpack.c.l.b16 %v313
  %v1202 = vunpack.c.h.b16 %v313
  %v1203 = vunpack.c.l.b16 %v314
  %v1204 = vunpack.c.h.b16 %v314
  %v1205 = vunpack.c.l.b16 %v315
  %v1206 = vunpack.c.h.b16 %v315
  %v1207 = vunpack.c.l.b16 %v316
  %v1208 = vunpack.c.h.b16 %v316
  %v1209 = vunpack.c.l.b16 %v317
  %v1210 = vunpack.c.h.b16 %v317
  %v1211 = vunpack.c.l.b16 %v318
  %v1212 = vunpack.c.h.b16 %v318
  %v1213 = vunpack.c.l.b16 %v319
  %v1214 = vunpack.c.h.b16 %v319
  %v1215 = vunpack.c.l.b16 %v320
  %v1216 = vunpack.c.h.b16 %v320
  %v1217 = vunpack.c.l.b16 %v321
  %v1218 = vunpack.c.h.b16 %v321
  %v1219 = vunpack.c.l.b16 %v322
  %v1220 = vunpack.c.h.b16 %v322
  %v1221 = vunpack.c.l.b16 %v323
  %v1222 = vunpack.c.h.b16 %v323
  %v1223 = vunpack.c.l.b16 %v324
  %v1224 = vunpack.c.h.b16 %v324
  %v1225 = vunpack.c.l.b16 %v325
  %v1226 = vunpack.c.h.b16 %v325
  %v1227 = vunpack.c.l.b16 %v326
  %v1228 = vunpack.c.h.b16 %v326
  %v1229 = vunpack.c.l.b16 %v327
  %v1230 = vunpack.c.h.b16 %v327
  %v1231 = vunpack.c.l.b16 %v328
  %v1232 = vunpack.c.h.b16 %v328
  %v1233 = vunpack.c.l.b16 %v329
  %v1234 = vunpack.c.h.b16 %v329
  %v1235 = vunpack.c.l.b16 %v330
  %v1236 = vunpack.c.h.b16 %v330
  %v1237 = vunpack.c.l.b16 %v331
  %v1238 = vunpack.c.h.b16 %v331
  %v1239 = vunpack.c.l.b16 %v332
  %v1240 = vunpack.c.h.b16 %v332
  %v1241 = vunpack.c.l.b16 %v333
  %v1242 = vunpack.c.h.b16 %v333
  %v1243 = vunpack.c.l.b16 %v334
  %v1244 = vunpack.c.h.b16 %v334
  %v1245 = vunpack.c.l.b16 %v335
  %v1246 = vunpack.c.h.b16 %v335
  %v1247 = vunpack.c.l.b16 %v336
  %v1248 = vunpack.c.h.b16 %v336
  %v1249 = vunpack.c.l.b16 %v337
  %v1250 = vunpack.c.h.b16 %v337
  %v1251 = vunpack.c.l.b16 %v338
  %v1252 = vunpack.c.h.b16 %v338
  %v1253 = vunpack.c.l.b16 %v339
  %v1254 = vunpack.c.h.b16 %v339
  %v1255 = vunpack.c.l.b16 %v340
  %v1256 = vunpack.c.h.b16 %v340
  %v1257 = vpack.c.b16 %v673, %v669
  %v1258 = vpack.c.b16 %v674, %v670
  %v1259 = vpack.c.b16 %v675, %v671
  %v1260 = vpack.c.b16 %v676, %v672
  %v1261 = vpack.c.b16 %v681, %v677
  %v1262 = vpack.c.b16 %v682, %v678
  %v1263 = vpack.c.b16 %v683, %v679
  %v1264 = vpack.c.b16 %v684, %v680
  %v1265 = vpack.c.b16 %v689, %v685
  %v1266 = vpack.c.b16 %v690, %v686
  %v1267 = vpack.c.b16 %v691, %v687
  %v1268 = vpack.c.b16 %v692, %v688
  %v1269 = vpack.c.b16 %v697, %v693
  %v1270 = vpack.c.b16 %v698, %v694
  %v1271 = vpack.c.b16 %v699, %v695
  %v1272 = vpack.c.b16 %v700, %v696
  %v1273 = vpack.c.b16 %v705, %v701
  %v1274 = vpack.c.b16 %v706, %v702
  %v1275 = vpack.c.b16 %v707, %v703
  %v1276 = vpack.c.b16 %v708, %v704
  %v1277 = vpack.c.b16 %v713, %v709
  %v1278 = vpack.c.b16 %v714, %v710
  %v1279 = vpack.c.b16 %v715, %v711
  %v1280 = vpack.c.b16 %v716, %v712
  %v1281 = vpack.c.b16 %v721, %v717
  %v1282 = vpack.c.b16 %v722, %v718
  %v1283 = vpack.c.b16 %v723, %v719
  %v1284 = vpack.c.b16 %v724, %v720
  %v1285 = vpack.c.b16 %v729, %v725
  %v1286 = vpack.c.b16 %v730, %v726
  %v1287 = vpack.c.b16 %v731, %v727
  %v1288 = vpack.c.b16 %v732, %v728
  %v1289 = vpack.c.b16 %v737, %v733
  %v1290 = vpack.c.b16 %v738, %v734
  %v1291 = vpack.c.b16 %v739, %v735
  %v1292 = vpack.c.b16 %v740, %v736
  %v1293 = vpack.c.b16 %v745, %v741
  %v1294 = vpack.c.b16 %v746, %v742
  %v1295 = vpack.c.b16 %v747, %v743
  %v1296 = vpack.c.b16 %v748, %v744
  %v1297 = vpack.c.b16 %v753, %v749
  %v1298 = vpack.c.b16 %v754, %v750
  %v1299 = vpack.c.b16 %v755, %v751
  %v1300 = vpack.c.b16 %v756, %v752
  %v1301 = vpack.c.b16 %v761, %v757
  %v1302 = vpack.c.b16 %v762, %v758
  %v1303 = vpack.c.b16 %v763, %v759
  %v1304 = vpack.c.b16 %v764, %v760
  %v1305 = vpack.c.b16 %v769, %v765
  %v1306 = vpack.c.b16 %v770, %v766
  %v1307 = vpack.c.b16 %v771, %v767
  %v1308 = vpack.c.b16 %v772, %v768
  %v1309 = vpack.c.b16 %v777, %v773
  %v1310 = vpack.c.b16 %v778, %v774
  %v1311 = vpack.c.b16 %v779, %v775
  %v1312 = vpack.c.b16 %v780, %v776
  %v1313 = vpack.c.b16 %v785, %v781
  %v1314 = vpack.c.b16 %v786, %v782
  %v1315 = vpack.c.b16 %v787, %v783
  %v1316 = vpack.c.b16 %v788, %v784
  %v1317 = vpack.c.b16 %v793, %v789
  %v1318 = vpack.c.b16 %v794, %v790
  %v1319 = vpack.c.b16 %v795, %v791
  %v1320 = vpack.c.b16 %v796, %v792
  %v1321 = vpack.c.b16 %v801, %v797
  %v1322 = vpack.c.b16 %v802, %v798
  %v1323 = vpack.c.b16 %v803, %v799
  %v1324 = vpack.c.b16 %v804, %v800
  %v1325 = vpack.c.b16 %v809, %v805
  %v1326 = vpack.c.b16 %v810, %v806
  %v1327 = vpack.c.b16 %v811, %v807
  %v1328 = vpack.c.b16 %v812, %v808
  %v1329 = vpack.c.b16 %v817, %v813
  %v1330 = vpack.c.b16 %v818, %v814
  %v1331 = vpack.c.b16 %v819, %v815
  %v1332 = vpack.c.b16 %v820, %v816
  %v1333 = vpack.c.b16 %v825, %v821
  %v1334 = vpack.c.b16 %v826, %v822
  %v1335 = vpack.c.b16 %v827, %v823
  %v1336 = vpack.c.b16 %v828, %v824
  %v1337 = vpack.c.b16 %v833, %v829
  %v1338 = vpack.c.b16 %v834, %v830
  %v1339 = vpack.c.b16 %v835, %v831
  %v1340 = vpack.c.b16 %v836, %v832
  %v1341 = vpack.c.b16 %v841, %v837
  %v1342 = vpack.c.b16 %v842, %v838
  %v1343 = vpack.c.b16 %v843, %v839
  %v1344 = vpack.c.b16 %v844, %v840
  %v1345 = vpack.c.b16 %v849, %v845
  %v1346 = vpack.c.b16 %v850, %v846
  %v1347 = vpack.c.b16 %v851, %v847
  %v1348 = vpack.c.b16 %v852, %v848
  %v1349 = vpack.c.b16 %v857, %v853
  %v1350 = vpack.c.b16 %v858, %v854
  %v1351 = vpack.c.b16 %v859, %v855
  %v1352 = vpack.c.b16 %v860, %v856
  %v1353 = vpack.c.b16 %v865, %v861
  %v1354 = vpack.c.b16 %v866, %v862
  %v1355 = vpack.c.b16 %v867, %v863
  %v1356 = vpack.c.b16 %v868, %v864
  %v1357 = vpack.c.b16 %v873, %v869
  %v1358 = vpack.c.b16 %v874, %v870
  %v1359 = vpack.c.b16 %v875, %v871
  %v1360 = vpack.c.b16 %v876, %v872
  %v1361 = vpack.c.b16 %v881, %v877
  %v1362 = vpack.c.b16 %v882, %v878
  %v1363 = vpack.c.b16 %v883, %v879
  %v1364 = vpack.c.b16 %v884, %v880
  %v1365 = vpack.c.b16 %v889, %v885
  %v1366 = vpack.c.b16 %v890, %v886
  %v1367 = vpack.c.b16 %v891, %v887
  %v1368 = vpack.c.b16 %v892, %v888
  %v1369 = vpack.c.b16 %v897, %v893
  %v1370 = vpack.c.b16 %v898, %v894
  %v1371 = vpack.c.b16 %v899, %v895
  %v1372 = vpack.c.b16 %v900, %v896
  %v1373 = vpack.c.b16 %v905, %v901
  %v1374 = vpack.c.b16 %v906, %v902
  %v1375 = vpack.c.b16 %v907, %v903
  %v1376 = vpack.c.b16 %v908, %v904
  %v1377 = vpack.c.b16 %v913, %v909
  %v1378 = vpack.c.b16 %v914, %v910
  %v1379 = vpack.c.b16 %v915, %v911
  %v1380 = vpack.c.b16 %v916, %v912
  %v1381 = vpack.c.b16 %v921, %v917
  %v1382 = vpack.c.b16 %v922, %v918
  %v1383 = vpack.c.b16 %v923, %v919
  %v1384 = vpack.c.b16 %v924, %v920
  %v1385 = vpack.c.b16 %v929, %v925
  %v1386 = vpack.c.b16 %v930, %v926
  %v1387 = vpack.c.b16 %v931, %v927
  %v1388 = vpack.c.b16 %v932, %v928
  %v1389 = vpack.c.b16 %v937, %v933
  %v1390 = vpack.c.b16 %v938, %v934
  %v1391 = vpack.c.b16 %v939, %v935
  %v1392 = vpack.c.b16 %v940, %v936
  %v1393 = vpack.c.b16 %v945, %v941
  %v1394 = vpack.c.b16 %v946, %v942
  %v1395 = vpack.c.b16 %v947, %v943
  %v1396 = vpack.c.b16 %v948, %v944
  %v1397 = vpack.c.b16 %v953, %v949
  %v1398 = vpack.c.b16 %v954, %v950
  %v1399 = vpack.c.b16 %v955, %v951
  %v1400 = vpack.c.b16 %v956, %v952
  %v1401 = vpack.c.b16 %v961, %v957
  %v1402 = vpack.c.b16 %v962, %v958
  %v1403 = vpack.c.b16 %v963, %v959
  %v1404 = vpack.c.b16 %v964, %v960
  %v1405 = vpack.c.b16 %v969, %v965
  %v1406 = vpack.c.b16 %v970, %v966
  %v1407 = vpack.c.b16 %v971, %v967
  %v1408 = vpack.c.b16 %v972, %v968
  %v1409 = vpack.c.b16 %v977, %v973
  %v1410 = vpack.c.b16 %v978, %v974
  %v1411 = vpack.c.b16 %v979, %v975
  %v1412 = vpack.c.b16 %v980, %v976
  %v1413 = vpack.c.b16 %v985, %v981
  %v1414 = vpack.c.b16 %v986, %v982
  %v1415 = vpack.c.b16 %v987, %v983
  %v1416 = vpack.c.b16 %v988, %v984
  %v1417 = vpack.c.b16 %v993, %v989
  %v1418 = vpack.c.b16 %v994, %v990
  %v1419 = vpack.c.b16 %v995, %v991
  %v1420 = vpack.c.b16 %v996, %v992
  %v1421 = vpack.c.b16 %v1001, %v997
  %v1422 = vpack.c.b16 %v1002, %v998
  %v1423 = vpack.c.b16 %v1003, %v999
  %v1424 = vpack.c.b16 %v1004, %v1000
  %v1425 = vpack.c.b16 %v1009, %v1005
  %v1426 = vpack.c.b16 %v1010, %v1006
  %v1427 = vpack.c.b16 %v1011, %v1007
  %v1428 = vpack.c.b16 %v1012, %v1008
  %v1429 = vpack.c.b16 %v1017, %v1013
  %v1430 = vpack.c.b16 %v1018, %v1014
  %v1431 = vpack.c.b16 %v1019, %v1015
  %v1432 = vpack.c.b16 %v1020, %v1016
  %v1433 = vpack.c.b16 %v1025, %v1021
  %v1434 = vpack.c.b16 %v1026, %v1022
  %v1435 = vpack.c.b16 %v1027, %v1023
  %v1436 = vpack.c.b16 %v1028, %v1024
  %v1437 = vpack.c.b16 %v1033, %v1029
  %v1438 = vpack.c.b16 %v1034, %v1030
  %v1439 = vpack.c.b16 %v1035, %v1031
  %v1440 = vpack.c.b16 %v1036, %v1032
  %v1441 = vpack.c.b16 %v1041, %v1037
  %v1442 = vpack.c.b16 %v1042, %v1038
  %v1443 = vpack.c.b16 %v1043, %v1039
  %v1444 = vpack.c.b16 %v1044, %v1040
  %v1445 = vpack.c.b16 %v1049, %v1045
  %v1446 = vpack.c.b16 %v1050, %v1046
  %v1447 = vpack.c.b16 %v1051, %v1047
  %v1448 = vpack.c.b16 %v1052, %v1048
  %v1449 = vpack.c.b16 %v1057, %v1053
  %v1450 = vpack.c.b16 %v1058, %v1054
  %v1451 = vpack.c.b16 %v1059, %v1055
  %v1452 = vpack.c.b16 %v1060, %v1056
  %v1453 = vpack.c.b16 %v1065, %v1061
  %v1454 = vpack.c.b16 %v1066, %v1062
  %v1455 = vpack.c.b16 %v1067, %v1063
  %v1456 = vpack.c.b16 %v1068, %v1064
  %v1457 = vpack.c.b16 %v1073, %v1069
  %v1458 = vpack.c.b16 %v1074, %v1070
  %v1459 = vpack.c.b16 %v1075, %v1071
  %v1460 = vpack.c.b16 %v1076, %v1072
  %v1461 = vpack.c.b16 %v1081, %v1077
  %v1462 = vpack.c.b16 %v1082, %v1078
  %v1463 = vpack.c.b16 %v1083, %v1079
  %v1464 = vpack.c.b16 %v1084, %v1080
  %v1465 = vpack.c.b16 %v1089, %v1085
  %v1466 = vpack.c.b16 %v1090, %v1086
  %v1467 = vpack.c.b16 %v1091, %v1087
  %v1468 = vpack.c.b16 %v1092, %v1088
  %v1469 = vpack.c.b16 %v1097, %v1093
  %v1470 = vpack.c.b16 %v1098, %v1094
  %v1471 = vpack.c.b16 %v1099, %v1095
  %v1472 = vpack.c.b16 %v1100, %v1096
  %v1473 = vpack.c.b16 %v1105, %v1101
  %v1474 = vpack.c.b16 %v1106, %v1102
  %v1475 = vpack.c.b16 %v1107, %v1103
  %v1476 = vpack.c.b16 %v1108, %v1104
  %v1477 = vpack.c.b16 %v1113, %v1109
  %v1478 = vpack.c.b16 %v1114, %v1110
  %v1479 = vpack.c.b16 %v1115, %v1111
  %v1480 = vpack.c.b16 %v1116, %v1112
  %v1481 = vpack.c.b16 %v1121, %v1117
  %v1482 = vpack.c.b16 %v1122, %v1118
  %v1483 = vpack.c.b16 %v1123, %v1119
  %v1484 = vpack.c.b16 %v1124, %v1120
  %v1485 = vpack.c.b16 %v1129, %v1125
  %v1486 = vpack.c.b16 %v1130, %v1126
  %v1487 = vpack.c.b16 %v1131, %v1127
  %v1488 = vpack.c.b16 %v1132, %v1128
  %v1489 = vpack.c.b16 %v1137, %v1133
  %v1490 = vpack.c.b16 %v1138, %v1134
  %v1491 = vpack.c.b16 %v1139, %v1135
  %v1492 = vpack.c.b16 %v1140, %v1136
  %v1493 = vpack.c.b16 %v1145, %v1141
  %v1494 = vpack.c.b16 %v1146, %v1142
  %v1495 = vpack.c.b16 %v1147, %v1143
  %v1496 = vpack.c.b16 %v1148, %v1144
  %v1497 = vpack.c.b16 %v1153, %v1149
  %v1498 = vpack.c.b16 %v1154, %v1150
  %v1499 = vpack.c.b16 %v1155, %v1151
  %v1500 = vpack.c.b16 %v1156, %v1152
  %v1501 = vpack.c.b16 %v1161, %v1157
  %v1502 = vpack.c.b16 %v1162, %v1158
  %v1503 = vpack.c.b16 %v1163, %v1159
  %v1504 = vpack.c.b16 %v1164, %v1160
  %v1505 = vpack.c.b16 %v1169, %v1165
  %v1506 = vpack.c.b16 %v1170, %v1166
  %v1507 = vpack.c.b16 %v1171, %v1167
  %v1508 = vpack.c.b16 %v1172, %v1168
  %v1509 = vpack.c.b16 %v1177, %v1173
  %v1510 = vpack.c.b16 %v1178, %v1174
  %v1511 = vpack.c.b16 %v1179, %v1175
  %v1512 = vpack.c.b16 %v1180, %v1176
  %v1513 = vpack.c.b16 %v1185, %v1181
  %v1514 = vpack.c.b16 %v1186, %v1182
  %v1515 = vpack.c.b16 %v1187, %v1183
  %v1516 = vpack.c.b16 %v1188, %v1184
  %v1517 = vpack.c.b16 %v1193, %v1189
  %v1518 = vpack.c.b16 %v1194, %v1190
  %v1519 = vpack.c.b16 %v1195, %v1191
  %v1520 = vpack.c.b16 %v1196, %v1192
  %v1521 = vpack.c.b16 %v1201, %v1197
  %v1522 = vpack.c.b16 %v1202, %v1198
  %v1523 = vpack.c.b16 %v1203, %v1199
  %v1524 = vpack.c.b16 %v1204, %v1200
  %v1525 = vpack.c.b16 %v1209, %v1205
  %v1526 = vpack.c.b16 %v1210, %v1206
  %v1527 = vpack.c.b16 %v1211, %v1207
  %v1528 = vpack.c.b16 %v1212, %v1208
  %v1529 = vpack.c.b16 %v1217, %v1213
  %v1530 = vpack.c.b16 %v1218, %v1214
  %v1531 = vpack.c.b16 %v1219, %v1215
  %v1532 = vpack.c.b16 %v1220, %v1216
  %v1533 = vpack.c.b16 %v1225, %v1221
  %v1534 = vpack.c.b16 %v1226, %v1222
  %v1535 = vpack.c.b16 %v1227, %v1223
  %v1536 = vpack.c.b16 %v1228, %v1224
  %v1537 = vpack.c.b16 %v1233, %v1229
  %v1538 = vpack.c.b16 %v1234, %v1230
  %v1539 = vpack.c.b16 %v1235, %v1231
  %v1540 = vpack.c.b16 %v1236, %v1232
  %v1541 = vpack.c.b16 %v1241, %v1237
  %v1542 = vpack.c.b16 %v1242, %v1238
  %v1543 = vpack.c.b16 %v1243, %v1239
  %v1544 = vpack.c.b16 %v1244, %v1240
  %v1545 = vpack.c.b16 %v1249, %v1245
  %v1546 = vpack.c.b16 %v1250, %v1246
  %v1547 = vpack.c.b16 %v1251, %v1247
  %v1548 = vpack.c.b16 %v1252, %v1248
  %v1549 = vpack.c.b16 %v1253, %v1253
  %v1550 = vpack.c.b16 %v1254, %v1254
  %v1551 = vpack.c.b16 %v1255, %v1255
  %v1552 = vpack.c.b16 %v1256, %v1256
  %vm1845 = vcmask 195584
  %v1847 = vsel %vm1845, %v365, 0
  %vm1849 = vcmask 1043456
  %v1851 = vsel %vm1849, %v1549, 0
  %v1854 = vsel %vm1849, %v1550, 0
  %v1857 = vsel %vm1849, %v1551, 0
  %v1860 = vsel %vm1849, %v1552, 0
  %1862 = vmatprep.subr.bf16.mxu0 %v1258
  %1863 = vmatpush1.bf16.msra.mxu0 %v1257
  %1864 = vmatprep.subr.bf16.mxu0 %v1262
  %1865 = vmatpush1.bf16.msra.mxu0 %v1261
  %1866 = vmatprep.subr.bf16.mxu0 %v1266
  %1867 = vmatpush1.bf16.msra.mxu0 %v1265
  %1868 = vmatprep.subr.bf16.mxu0 %v1270
  %1869 = vmatpush1.bf16.msra.mxu0 %v1269
  %1870 = vmatprep.subr.bf16.mxu0 %v1274
  %1871 = vmatpush1.bf16.msra.mxu0 %v1273
  %1872 = vmatprep.subr.bf16.mxu0 %v1278
  %1873 = vmatpush1.bf16.msra.mxu0 %v1277
  %1874 = vmatprep.subr.bf16.mxu0 %v1282
  %1875 = vmatpush1.bf16.msra.mxu0 %v1281
  %1876 = vmatprep.subr.bf16.mxu0 %v1286
  %1877 = vmatpush1.bf16.msra.mxu0 %v1285
  %1878 = vmatprep.subr.bf16.mxu0 %v1290
  %1879 = vmatpush1.bf16.msra.mxu0 %v1289
  %1880 = vmatprep.subr.bf16.mxu0 %v1294
  %1881 = vmatpush1.bf16.msra.mxu0 %v1293
  %1882 = vmatprep.subr.bf16.mxu0 %v1298
  %1883 = vmatpush1.bf16.msra.mxu0 %v1297
  %1884 = vmatprep.subr.bf16.mxu0 %v1302
  %1885 = vmatpush1.bf16.msra.mxu0 %v1301
  %1886 = vmatprep.subr.bf16.mxu0 %v1306
  %1887 = vmatpush1.bf16.msra.mxu0 %v1305
  %1888 = vmatprep.subr.bf16.mxu0 %v1310
  %1889 = vmatpush1.bf16.msra.mxu0 %v1309
  %1890 = vmatprep.subr.bf16.mxu0 %v1314
  %1891 = vmatpush1.bf16.msra.mxu0 %v1313
  %1892 = vmatprep.subr.bf16.mxu0 %v1318
  %1893 = vmatpush1.bf16.msra.mxu0 %v1317
  %1894 = vmatprep.mubr.bf16.mxu0 %v357
  %1895 = vmatmul.mubr.bf16.gmra.mrb[0].mxu0 %v356
  %v1896 = vpop.f32.mrb[0].mxu0
  %v1897 = vadd.f32 0.0, %v1896
  %v1898 = vpop.f32.mrb[0].mxu0
  %v1899 = vadd.f32 0.0, %v1898
  %v1900 = vpop.f32.mrb[0].mxu0
  %v1901 = vpop.f32.mrb[0].mxu0
  %1902 = vdwg.mxu0
  %1903 = vmatprep.subr.bf16.mxu0 %v1322
  %1904 = vmatpush1.bf16.msra.mxu0 %v1321
  %1905 = vmatprep.subr.bf16.mxu0 %v1326
  %1906 = vmatpush1.bf16.msra.mxu0 %v1325
  %1907 = vmatprep.subr.bf16.mxu0 %v1330
  %1908 = vmatpush1.bf16.msra.mxu0 %v1329
  %1909 = vmatprep.subr.bf16.mxu0 %v1334
  %1910 = vmatpush1.bf16.msra.mxu0 %v1333
  %1911 = vmatprep.subr.bf16.mxu0 %v1338
  %1912 = vmatpush1.bf16.msra.mxu0 %v1337
  %1913 = vmatprep.subr.bf16.mxu0 %v1342
  %1914 = vmatpush1.bf16.msra.mxu0 %v1341
  %1915 = vmatprep.subr.bf16.mxu0 %v1346
  %1916 = vmatpush1.bf16.msra.mxu0 %v1345
  %1917 = vmatprep.subr.bf16.mxu0 %v1350
  %1918 = vmatpush1.bf16.msra.mxu0 %v1349
  %1919 = vmatprep.subr.bf16.mxu0 %v1354
  %1920 = vmatpush1.bf16.msra.mxu0 %v1353
  %1921 = vmatprep.subr.bf16.mxu0 %v1358
  %1922 = vmatpush1.bf16.msra.mxu0 %v1357
  %1923 = vmatprep.subr.bf16.mxu0 %v1362
  %1924 = vmatpush1.bf16.msra.mxu0 %v1361
  %1925 = vmatprep.subr.bf16.mxu0 %v1366
  %1926 = vmatpush1.bf16.msra.mxu0 %v1365
  %1927 = vmatprep.subr.bf16.mxu0 %v1370
  %1928 = vmatpush1.bf16.msra.mxu0 %v1369
  %1929 = vmatprep.subr.bf16.mxu0 %v1374
  %1930 = vmatpush1.bf16.msra.mxu0 %v1373
  %1931 = vmatprep.subr.bf16.mxu0 %v1378
  %1932 = vmatpush1.bf16.msra.mxu0 %v1377
  %1933 = vmatprep.subr.bf16.mxu0 %v1382
  %1934 = vmatpush1.bf16.msra.mxu0 %v1381
  %1935 = vmatprep.mubr.bf16.mxu0 %v359
  %1936 = vmatmul.mubr.bf16.gmra.mrb[0].mxu0 %v358
  %v1937 = vpop.f32.mrb[0].mxu0
  %v1938 = vadd.f32 %v1897, %v1937
  %v1939 = vpop.f32.mrb[0].mxu0
  %v1940 = vadd.f32 %v1899, %v1939
  %v1941 = vpop.f32.mrb[0].mxu0
  %v1942 = vpop.f32.mrb[0].mxu0
  %1943 = vdwg.mxu0
  %1944 = vmatprep.subr.bf16.mxu0 %v1386
  %1945 = vmatpush1.bf16.msra.mxu0 %v1385
  %1946 = vmatprep.subr.bf16.mxu0 %v1390
  %1947 = vmatpush1.bf16.msra.mxu0 %v1389
  %1948 = vmatprep.subr.bf16.mxu0 %v1394
  %1949 = vmatpush1.bf16.msra.mxu0 %v1393
  %1950 = vmatprep.subr.bf16.mxu0 %v1398
  %1951 = vmatpush1.bf16.msra.mxu0 %v1397
  %1952 = vmatprep.subr.bf16.mxu0 %v1402
  %1953 = vmatpush1.bf16.msra.mxu0 %v1401
  %1954 = vmatprep.subr.bf16.mxu0 %v1406
  %1955 = vmatpush1.bf16.msra.mxu0 %v1405
  %1956 = vmatprep.subr.bf16.mxu0 %v1410
  %1957 = vmatpush1.bf16.msra.mxu0 %v1409
  %1958 = vmatprep.subr.bf16.mxu0 %v1414
  %1959 = vmatpush1.bf16.msra.mxu0 %v1413
  %1960 = vmatprep.subr.bf16.mxu0 %v1418
  %1961 = vmatpush1.bf16.msra.mxu0 %v1417
  %1962 = vmatprep.subr.bf16.mxu0 %v1422
  %1963 = vmatpush1.bf16.msra.mxu0 %v1421
  %1964 = vmatprep.subr.bf16.mxu0 %v1426
  %1965 = vmatpush1.bf16.msra.mxu0 %v1425
  %1966 = vmatprep.subr.bf16.mxu0 %v1430
  %1967 = vmatpush1.bf16.msra.mxu0 %v1429
  %1968 = vmatprep.subr.bf16.mxu0 %v1434
  %1969 = vmatpush1.bf16.msra.mxu0 %v1433
  %1970 = vmatprep.subr.bf16.mxu0 %v1438
  %1971 = vmatpush1.bf16.msra.mxu0 %v1437
  %1972 = vmatprep.subr.bf16.mxu0 %v1442
  %1973 = vmatpush1.bf16.msra.mxu0 %v1441
  %1974 = vmatprep.subr.bf16.mxu0 %v1446
  %1975 = vmatpush1.bf16.msra.mxu0 %v1445
  %1976 = vmatprep.mubr.bf16.mxu0 %v361
  %1977 = vmatmul.mubr.bf16.gmra.mrb[0].mxu0 %v360
  %v1978 = vpop.f32.mrb[0].mxu0
  %v1979 = vadd.f32 %v1938, %v1978
  %v1980 = vpop.f32.mrb[0].mxu0
  %v1981 = vadd.f32 %v1940, %v1980
  %v1982 = vpop.f32.mrb[0].mxu0
  %v1983 = vpop.f32.mrb[0].mxu0
  %1984 = vdwg.mxu0
  %1985 = vmatprep.subr.bf16.mxu0 %v1450
  %1986 = vmatpush1.bf16.msra.mxu0 %v1449
  %1987 = vmatprep.subr.bf16.mxu0 %v1454
  %1988 = vmatpush1.bf16.msra.mxu0 %v1453
  %1989 = vmatprep.subr.bf16.mxu0 %v1458
  %1990 = vmatpush1.bf16.msra.mxu0 %v1457
  %1991 = vmatprep.subr.bf16.mxu0 %v1462
  %1992 = vmatpush1.bf16.msra.mxu0 %v1461
  %1993 = vmatprep.subr.bf16.mxu0 %v1466
  %1994 = vmatpush1.bf16.msra.mxu0 %v1465
  %1995 = vmatprep.subr.bf16.mxu0 %v1470
  %1996 = vmatpush1.bf16.msra.mxu0 %v1469
  %1997 = vmatprep.subr.bf16.mxu0 %v1474
  %1998 = vmatpush1.bf16.msra.mxu0 %v1473
  %1999 = vmatprep.subr.bf16.mxu0 %v1478
  %2000 = vmatpush1.bf16.msra.mxu0 %v1477
  %2001 = vmatprep.subr.bf16.mxu0 %v1482
  %2002 = vmatpush1.bf16.msra.mxu0 %v1481
  %2003 = vmatprep.subr.bf16.mxu0 %v1486
  %2004 = vmatpush1.bf16.msra.mxu0 %v1485
  %2005 = vmatprep.subr.bf16.mxu0 %v1490
  %2006 = vmatpush1.bf16.msra.mxu0 %v1489
  %2007 = vmatprep.subr.bf16.mxu0 %v1494
  %2008 = vmatpush1.bf16.msra.mxu0 %v1493
  %2009 = vmatprep.subr.bf16.mxu0 %v1498
  %2010 = vmatpush1.bf16.msra.mxu0 %v1497
  %2011 = vmatprep.subr.bf16.mxu0 %v1502
  %2012 = vmatpush1.bf16.msra.mxu0 %v1501
  %2013 = vmatprep.subr.bf16.mxu0 %v1506
  %2014 = vmatpush1.bf16.msra.mxu0 %v1505
  %2015 = vmatprep.subr.bf16.mxu0 %v1510
  %2016 = vmatpush1.bf16.msra.mxu0 %v1509
  %2017 = vmatprep.mubr.bf16.mxu0 %v363
  %2018 = vmatmul.mubr.bf16.gmra.mrb[0].mxu0 %v362
  %v2019 = vpop.f32.mrb[0].mxu0
  %v2020 = vadd.f32 %v1979, %v2019
  %v2021 = vpop.f32.mrb[0].mxu0
  %v2022 = vadd.f32 %v1981, %v2021
  %v2023 = vpop.f32.mrb[0].mxu0
  %v2024 = vpop.f32.mrb[0].mxu0
  %2025 = vdwg.mxu0
  %2026 = vmatprep.subr.bf16.mxu0 %v1514
  %2027 = vmatpush1.bf16.msra.mxu0 %v1513
  %2028 = vmatprep.subr.bf16.mxu0 %v1518
  %2029 = vmatpush1.bf16.msra.mxu0 %v1517
  %2030 = vmatprep.subr.bf16.mxu0 %v1522
  %2031 = vmatpush1.bf16.msra.mxu0 %v1521
  %2032 = vmatprep.subr.bf16.mxu0 %v1526
  %2033 = vmatpush1.bf16.msra.mxu0 %v1525
  %2034 = vmatprep.subr.bf16.mxu0 %v1530
  %2035 = vmatpush1.bf16.msra.mxu0 %v1529
  %2036 = vmatprep.subr.bf16.mxu0 %v1534
  %2037 = vmatpush1.bf16.msra.mxu0 %v1533
  %2038 = vmatprep.subr.bf16.mxu0 %v1538
  %2039 = vmatpush1.bf16.msra.mxu0 %v1537
  %2040 = vmatprep.subr.bf16.mxu0 %v1542
  %2041 = vmatpush1.bf16.msra.mxu0 %v1541
  %2042 = vmatprep.subr.bf16.mxu0 %v1546
  %2043 = vmatpush1.bf16.msra.mxu0 %v1545
  %2044 = vmatprep.subr.bf16.mxu0 %v1854
  %2045 = vmatpush1.bf16.msra.mxu0 %v1851
  %2046 = vmatprep.subr.bf16.mxu0 0
  %2047 = vmatpush1.bf16.msra.mxu0 0
  %2048 = vmatprep.subr.bf16.mxu0 0
  %2049 = vmatpush1.bf16.msra.mxu0 0
  %2050 = vmatprep.subr.bf16.mxu0 0
  %2051 = vmatpush1.bf16.msra.mxu0 0
  %2052 = vmatprep.subr.bf16.mxu0 0
  %2053 = vmatpush1.bf16.msra.mxu0 0
  %2054 = vmatprep.subr.bf16.mxu0 0
  %2055 = vmatpush1.bf16.msra.mxu0 0
  %2056 = vmatprep.subr.bf16.mxu0 0
  %2057 = vmatpush1.bf16.msra.mxu0 0
  %2058 = vmatprep.mubr.bf16.mxu0 %v1847
  %2059 = vmatmul.mubr.bf16.gmra.mrb[0].mxu0 %v364
  %v2060 = vpop.f32.mrb[0].mxu0
  %v2061 = vadd.f32 %v2020, %v2060
  %v2062 = vpop.f32.mrb[0].mxu0
  %v2063 = vadd.f32 %v2022, %v2062
  %v2064 = vpop.f32.mrb[0].mxu0
  %v2065 = vpop.f32.mrb[0].mxu0
  %2066 = vdwg.mxu0
  %2067 = vmatprep.subr.bf16.mxu0 %v1260
  %2068 = vmatpush1.bf16.msra.mxu0 %v1259
  %2069 = vmatprep.subr.bf16.mxu0 %v1264
  %2070 = vmatpush1.bf16.msra.mxu0 %v1263
  %2071 = vmatprep.subr.bf16.mxu0 %v1268
  %2072 = vmatpush1.bf16.msra.mxu0 %v1267
  %2073 = vmatprep.subr.bf16.mxu0 %v1272
  %2074 = vmatpush1.bf16.msra.mxu0 %v1271
  %2075 = vmatprep.subr.bf16.mxu0 %v1276
  %2076 = vmatpush1.bf16.msra.mxu0 %v1275
  %2077 = vmatprep.subr.bf16.mxu0 %v1280
  %2078 = vmatpush1.bf16.msra.mxu0 %v1279
  %2079 = vmatprep.subr.bf16.mxu0 %v1284
  %2080 = vmatpush1.bf16.msra.mxu0 %v1283
  %2081 = vmatprep.subr.bf16.mxu0 %v1288
  %2082 = vmatpush1.bf16.msra.mxu0 %v1287
  %2083 = vmatprep.subr.bf16.mxu0 %v1292
  %2084 = vmatpush1.bf16.msra.mxu0 %v1291
  %2085 = vmatprep.subr.bf16.mxu0 %v1296
  %2086 = vmatpush1.bf16.msra.mxu0 %v1295
  %2087 = vmatprep.subr.bf16.mxu0 %v1300
  %2088 = vmatpush1.bf16.msra.mxu0 %v1299
  %2089 = vmatprep.subr.bf16.mxu0 %v1304
  %2090 = vmatpush1.bf16.msra.mxu0 %v1303
  %2091 = vmatprep.subr.bf16.mxu0 %v1308
  %2092 = vmatpush1.bf16.msra.mxu0 %v1307
  %2093 = vmatprep.subr.bf16.mxu0 %v1312
  %2094 = vmatpush1.bf16.msra.mxu0 %v1311
  %2095 = vmatprep.subr.bf16.mxu0 %v1316
  %2096 = vmatpush1.bf16.msra.mxu0 %v1315
  %2097 = vmatprep.subr.bf16.mxu0 %v1320
  %2098 = vmatpush1.bf16.msra.mxu0 %v1319
  %2099 = vmatprep.mubr.bf16.mxu0 %v357
  %2100 = vmatmul.mubr.bf16.gmra.mrb[0].mxu0 %v356
  %v2101 = vpop.f32.mrb[0].mxu0
  %v2102 = vadd.f32 0.0, %v2101
  %v2103 = vpop.f32.mrb[0].mxu0
  %v2104 = vadd.f32 0.0, %v2103
  %v2105 = vpop.f32.mrb[0].mxu0
  %v2106 = vpop.f32.mrb[0].mxu0
  %2107 = vdwg.mxu0
  %2108 = vmatprep.subr.bf16.mxu0 %v1324
  %2109 = vmatpush1.bf16.msra.mxu0 %v1323
  %2110 = vmatprep.subr.bf16.mxu0 %v1328
  %2111 = vmatpush1.bf16.msra.mxu0 %v1327
  %2112 = vmatprep.subr.bf16.mxu0 %v1332
  %2113 = vmatpush1.bf16.msra.mxu0 %v1331
  %2114 = vmatprep.subr.bf16.mxu0 %v1336
  %2115 = vmatpush1.bf16.msra.mxu0 %v1335
  %2116 = vmatprep.subr.bf16.mxu0 %v1340
  %2117 = vmatpush1.bf16.msra.mxu0 %v1339
  %2118 = vmatprep.subr.bf16.mxu0 %v1344
  %2119 = vmatpush1.bf16.msra.mxu0 %v1343
  %2120 = vmatprep.subr.bf16.mxu0 %v1348
  %2121 = vmatpush1.bf16.msra.mxu0 %v1347
  %2122 = vmatprep.subr.bf16.mxu0 %v1352
  %2123 = vmatpush1.bf16.msra.mxu0 %v1351
  %2124 = vmatprep.subr.bf16.mxu0 %v1356
  %2125 = vmatpush1.bf16.msra.mxu0 %v1355
  %2126 = vmatprep.subr.bf16.mxu0 %v1360
  %2127 = vmatpush1.bf16.msra.mxu0 %v1359
  %2128 = vmatprep.subr.bf16.mxu0 %v1364
  %2129 = vmatpush1.bf16.msra.mxu0 %v1363
  %2130 = vmatprep.subr.bf16.mxu0 %v1368
  %2131 = vmatpush1.bf16.msra.mxu0 %v1367
  %2132 = vmatprep.subr.bf16.mxu0 %v1372
  %2133 = vmatpush1.bf16.msra.mxu0 %v1371
  %2134 = vmatprep.subr.bf16.mxu0 %v1376
  %2135 = vmatpush1.bf16.msra.mxu0 %v1375
  %2136 = vmatprep.subr.bf16.mxu0 %v1380
  %2137 = vmatpush1.bf16.msra.mxu0 %v1379
  %2138 = vmatprep.subr.bf16.mxu0 %v1384
  %2139 = vmatpush1.bf16.msra.mxu0 %v1383
  %2140 = vmatprep.mubr.bf16.mxu0 %v359
  %2141 = vmatmul.mubr.bf16.gmra.mrb[0].mxu0 %v358
  %v2142 = vpop.f32.mrb[0].mxu0
  %v2143 = vadd.f32 %v2102, %v2142
  %v2144 = vpop.f32.mrb[0].mxu0
  %v2145 = vadd.f32 %v2104, %v2144
  %v2146 = vpop.f32.mrb[0].mxu0
  %v2147 = vpop.f32.mrb[0].mxu0
  %2148 = vdwg.mxu0
  %2149 = vmatprep.subr.bf16.mxu0 %v1388
  %2150 = vmatpush1.bf16.msra.mxu0 %v1387
  %2151 = vmatprep.subr.bf16.mxu0 %v1392
  %2152 = vmatpush1.bf16.msra.mxu0 %v1391
  %2153 = vmatprep.subr.bf16.mxu0 %v1396
  %2154 = vmatpush1.bf16.msra.mxu0 %v1395
  %2155 = vmatprep.subr.bf16.mxu0 %v1400
  %2156 = vmatpush1.bf16.msra.mxu0 %v1399
  %2157 = vmatprep.subr.bf16.mxu0 %v1404
  %2158 = vmatpush1.bf16.msra.mxu0 %v1403
  %2159 = vmatprep.subr.bf16.mxu0 %v1408
  %2160 = vmatpush1.bf16.msra.mxu0 %v1407
  %2161 = vmatprep.subr.bf16.mxu0 %v1412
  %2162 = vmatpush1.bf16.msra.mxu0 %v1411
  %2163 = vmatprep.subr.bf16.mxu0 %v1416
  %2164 = vmatpush1.bf16.msra.mxu0 %v1415
  %2165 = vmatprep.subr.bf16.mxu0 %v1420
  %2166 = vmatpush1.bf16.msra.mxu0 %v1419
  %2167 = vmatprep.subr.bf16.mxu0 %v1424
  %2168 = vmatpush1.bf16.msra.mxu0 %v1423
  %2169 = vmatprep.subr.bf16.mxu0 %v1428
  %2170 = vmatpush1.bf16.msra.mxu0 %v1427
  %2171 = vmatprep.subr.bf16.mxu0 %v1432
  %2172 = vmatpush1.bf16.msra.mxu0 %v1431
  %2173 = vmatprep.subr.bf16.mxu0 %v1436
  %2174 = vmatpush1.bf16.msra.mxu0 %v1435
  %2175 = vmatprep.subr.bf16.mxu0 %v1440
  %2176 = vmatpush1.bf16.msra.mxu0 %v1439
  %2177 = vmatprep.subr.bf16.mxu0 %v1444
  %2178 = vmatpush1.bf16.msra.mxu0 %v1443
  %2179 = vmatprep.subr.bf16.mxu0 %v1448
  %2180 = vmatpush1.bf16.msra.mxu0 %v1447
  %2181 = vmatprep.mubr.bf16.mxu0 %v361
  %2182 = vmatmul.mubr.bf16.gmra.mrb[0].mxu0 %v360
  %v2183 = vpop.f32.mrb[0].mxu0
  %v2184 = vadd.f32 %v2143, %v2183
  %v2185 = vpop.f32.mrb[0].mxu0
  %v2186 = vadd.f32 %v2145, %v2185
  %v2187 = vpop.f32.mrb[0].mxu0
  %v2188 = vpop.f32.mrb[0].mxu0
  %2189 = vdwg.mxu0
  %2190 = vmatprep.subr.bf16.mxu0 %v1452
  %2191 = vmatpush1.bf16.msra.mxu0 %v1451
  %2192 = vmatprep.subr.bf16.mxu0 %v1456
  %2193 = vmatpush1.bf16.msra.mxu0 %v1455
  %2194 = vmatprep.subr.bf16.mxu0 %v1460
  %2195 = vmatpush1.bf16.msra.mxu0 %v1459
  %2196 = vmatprep.subr.bf16.mxu0 %v1464
  %2197 = vmatpush1.bf16.msra.mxu0 %v1463
  %2198 = vmatprep.subr.bf16.mxu0 %v1468
  %2199 = vmatpush1.bf16.msra.mxu0 %v1467
  %2200 = vmatprep.subr.bf16.mxu0 %v1472
  %2201 = vmatpush1.bf16.msra.mxu0 %v1471
  %2202 = vmatprep.subr.bf16.mxu0 %v1476
  %2203 = vmatpush1.bf16.msra.mxu0 %v1475
  %2204 = vmatprep.subr.bf16.mxu0 %v1480
  %2205 = vmatpush1.bf16.msra.mxu0 %v1479
  %2206 = vmatprep.subr.bf16.mxu0 %v1484
  %2207 = vmatpush1.bf16.msra.mxu0 %v1483
  %2208 = vmatprep.subr.bf16.mxu0 %v1488
  %2209 = vmatpush1.bf16.msra.mxu0 %v1487
  %2210 = vmatprep.subr.bf16.mxu0 %v1492
  %2211 = vmatpush1.bf16.msra.mxu0 %v1491
  %2212 = vmatprep.subr.bf16.mxu0 %v1496
  %2213 = vmatpush1.bf16.msra.mxu0 %v1495
  %2214 = vmatprep.subr.bf16.mxu0 %v1500
  %2215 = vmatpush1.bf16.msra.mxu0 %v1499
  %2216 = vmatprep.subr.bf16.mxu0 %v1504
  %2217 = vmatpush1.bf16.msra.mxu0 %v1503
  %2218 = vmatprep.subr.bf16.mxu0 %v1508
  %2219 = vmatpush1.bf16.msra.mxu0 %v1507
  %2220 = vmatprep.subr.bf16.mxu0 %v1512
  %2221 = vmatpush1.bf16.msra.mxu0 %v1511
  %2222 = vmatprep.mubr.bf16.mxu0 %v363
  %2223 = vmatmul.mubr.bf16.gmra.mrb[0].mxu0 %v362
  %v2224 = vpop.f32.mrb[0].mxu0
  %v2225 = vadd.f32 %v2184, %v2224
  %v2226 = vpop.f32.mrb[0].mxu0
  %v2227 = vadd.f32 %v2186, %v2226
  %v2228 = vpop.f32.mrb[0].mxu0
  %v2229 = vpop.f32.mrb[0].mxu0
  %2230 = vdwg.mxu0
  %2231 = vmatprep.subr.bf16.mxu0 %v1516
  %2232 = vmatpush1.bf16.msra.mxu0 %v1515
  %2233 = vmatprep.subr.bf16.mxu0 %v1520
  %2234 = vmatpush1.bf16.msra.mxu0 %v1519
  %2235 = vmatprep.subr.bf16.mxu0 %v1524
  %2236 = vmatpush1.bf16.msra.mxu0 %v1523
  %2237 = vmatprep.subr.bf16.mxu0 %v1528
  %2238 = vmatpush1.bf16.msra.mxu0 %v1527
  %2239 = vmatprep.subr.bf16.mxu0 %v1532
  %2240 = vmatpush1.bf16.msra.mxu0 %v1531
  %2241 = vmatprep.subr.bf16.mxu0 %v1536
  %2242 = vmatpush1.bf16.msra.mxu0 %v1535
  %2243 = vmatprep.subr.bf16.mxu0 %v1540
  %2244 = vmatpush1.bf16.msra.mxu0 %v1539
  %2245 = vmatprep.subr.bf16.mxu0 %v1544
  %2246 = vmatpush1.bf16.msra.mxu0 %v1543
  %2247 = vmatprep.subr.bf16.mxu0 %v1548
  %2248 = vmatpush1.bf16.msra.mxu0 %v1547
  %2249 = vmatprep.subr.bf16.mxu0 %v1860
  %2250 = vmatpush1.bf16.msra.mxu0 %v1857
  %2251 = vmatprep.subr.bf16.mxu0 0
  %2252 = vmatpush1.bf16.msra.mxu0 0
  %2253 = vmatprep.subr.bf16.mxu0 0
  %2254 = vmatpush1.bf16.msra.mxu0 0
  %2255 = vmatprep.subr.bf16.mxu0 0
  %2256 = vmatpush1.bf16.msra.mxu0 0
  %2257 = vmatprep.subr.bf16.mxu0 0
  %2258 = vmatpush1.bf16.msra.mxu0 0
  %2259 = vmatprep.subr.bf16.mxu0 0
  %2260 = vmatpush1.bf16.msra.mxu0 0
  %2261 = vmatprep.subr.bf16.mxu0 0
  %2262 = vmatpush1.bf16.msra.mxu0 0
  %2263 = vmatprep.mubr.bf16.mxu0 %v1847
  %2264 = vmatmul.mubr.bf16.gmra.mrb[0].mxu0 %v364
  %v2265 = vpop.f32.mrb[0].mxu0
  %v2266 = vadd.f32 %v2225, %v2265
  %v2267 = vpop.f32.mrb[0].mxu0
  %v2268 = vadd.f32 %v2227, %v2267
  %v2269 = vpop.f32.mrb[0].mxu0
  %v2270 = vpop.f32.mrb[0].mxu0
  %2271 = vdwg.mxu0
  %v2272 = vld [vmem:[%s2] sm:$0xff]
  %v2273 = vld [vmem:[%s2 + $0x8] sm:$0xff]
  %v2274 = vld [vmem:[%s2 + $0x10] sm:$0xff]
  %v2275 = vld [vmem:[%s2 + $0x18] sm:$0xff]
  %v2276 = vld [vmem:[%s2 + $0x20] sm:$0xff]
  %v2277 = vld [vmem:[%s2 + $0x28] sm:$0xff]
  %v2278 = vld [vmem:[%s2 + $0x30] sm:$0xff]
  %v2279 = vld [vmem:[%s2 + $0x38] sm:$0xff]
  %v2280 = vld [vmem:[%s2 + $0x40] sm:$0xff]
  %v2281 = vld [vmem:[%s2 + $0x48] sm:$0xff]
  %v2282 = vld [vmem:[%s2 + $0x50] sm:$0xff]
  %v2283 = vld [vmem:[%s2 + $0x58] sm:$0xff]
  %v2284 = vld [vmem:[%s2 + $0x60] sm:$0xff]
  %v2285 = vld [vmem:[%s2 + $0x68] sm:$0xff]
  %v2286 = vld [vmem:[%s2 + $0x70] sm:$0xff]
  %v2287 = vld [vmem:[%s2 + $0x78] sm:$0xff]
  %v2288 = vld [vmem:[%s2 + $0x80] sm:$0xff]
  %v2289 = vld [vmem:[%s2 + $0x88] sm:$0xff]
  %v2290 = vld [vmem:[%s2 + $0x90] sm:$0xff]
  %v2291 = vld [vmem:[%s2 + $0x98] sm:$0xff]
  %v2292 = vld [vmem:[%s2 + $0xa0] sm:$0xff]
  %v2293 = vld [vmem:[%s2 + $0xa8] sm:$0xff]
  %v2294 = vld [vmem:[%s2 + $0xb0] sm:$0xff]
  %v2295 = vld [vmem:[%s2 + $0xb8] sm:$0xff]
  %v2296 = vld [vmem:[%s2 + $0xc0] sm:$0xff]
  %v2297 = vld [vmem:[%s2 + $0xc8] sm:$0xff]
  %v2298 = vld [vmem:[%s2 + $0xd0] sm:$0xff]
  %v2299 = vld [vmem:[%s2 + $0xd8] sm:$0xff]
  %v2300 = vld [vmem:[%s2 + $0xe0] sm:$0xff]
  %v2301 = vld [vmem:[%s2 + $0xe8] sm:$0xff]
  %v2302 = vld [vmem:[%s2 + $0xf0] sm:$0xff]
  %v2303 = vld [vmem:[%s2 + $0xf8] sm:$0xff]
  %v2304 = vld [vmem:[%s2 + $0x100] sm:$0xff]
  %v2305 = vld [vmem:[%s2 + $0x108] sm:$0xff]
  %v2306 = vld [vmem:[%s2 + $0x110] sm:$0xff]
  %v2307 = vld [vmem:[%s2 + $0x118] sm:$0xff]
  %v2308 = vld [vmem:[%s2 + $0x120] sm:$0xff]
  %v2309 = vld [vmem:[%s2 + $0x128] sm:$0xff]
  %v2310 = vld [vmem:[%s2 + $0x130] sm:$0xff]
  %v2311 = vld [vmem:[%s2 + $0x138] sm:$0xff]
  %v2312 = vld [vmem:[%s2 + $0x140] sm:$0xff]
  %v2313 = vld [vmem:[%s2 + $0x148] sm:$0xff]
  %v2314 = vld [vmem:[%s2 + $0x150] sm:$0xff]
  %v2315 = vld [vmem:[%s2 + $0x158] sm:$0xff]
  %v2316 = vld [vmem:[%s2 + $0x160] sm:$0xff]
  %v2317 = vld [vmem:[%s2 + $0x168] sm:$0xff]
  %v2318 = vld [vmem:[%s2 + $0x170] sm:$0xff]
  %v2319 = vld [vmem:[%s2 + $0x178] sm:$0xff]
  %v2320 = vld [vmem:[%s2 + $0x180] sm:$0xff]
  %v2321 = vld [vmem:[%s2 + $0x188] sm:$0xff]
  %v2322 = vld [vmem:[%s2 + $0x190] sm:$0xff]
  %v2323 = vld [vmem:[%s2 + $0x198] sm:$0xff]
  %v2324 = vld [vmem:[%s2 + $0x1a0] sm:$0xff]
  %v2325 = vld [vmem:[%s2 + $0x1a8] sm:$0xff]
  %v2326 = vld [vmem:[%s2 + $0x1b0] sm:$0xff]
  %v2327 = vld [vmem:[%s2 + $0x1b8] sm:$0xff]
  %v2328 = vld [vmem:[%s2 + $0x1c0] sm:$0xff]
  %v2329 = vld [vmem:[%s2 + $0x1c8] sm:$0xff]
  %v2330 = vld [vmem:[%s2 + $0x1d0] sm:$0xff]
  %v2331 = vld [vmem:[%s2 + $0x1d8] sm:$0xff]
  %v2332 = vld [vmem:[%s2 + $0x1e0] sm:$0xff]
  %v2333 = vld [vmem:[%s2 + $0x1e8] sm:$0xff]
  %v2334 = vld [vmem:[%s2 + $0x1f0] sm:$0xff]
  %v2335 = vld [vmem:[%s2 + $0x1f8] sm:$0xff]
  %v2336 = vld [vmem:[%s2 + $0x200] sm:$0xff]
  %v2337 = vld [vmem:[%s2 + $0x208] sm:$0xff]
  %v2338 = vld [vmem:[%s2 + $0x210] sm:$0xff]
  %v2339 = vld [vmem:[%s2 + $0x218] sm:$0xff]
  %v2340 = vld [vmem:[%s2 + $0x220] sm:$0xff]
  %v2341 = vld [vmem:[%s2 + $0x228] sm:$0xff]
  %v2342 = vld [vmem:[%s2 + $0x230] sm:$0xff]
  %v2343 = vld [vmem:[%s2 + $0x238] sm:$0xff]
  %v2344 = vld [vmem:[%s2 + $0x240] sm:$0xff]
  %v2345 = vld [vmem:[%s2 + $0x248] sm:$0xff]
  %v2346 = vld [vmem:[%s2 + $0x250] sm:$0xff]
  %v2347 = vld [vmem:[%s2 + $0x258] sm:$0xff]
  %v2348 = vld [vmem:[%s2 + $0x260] sm:$0xff]
  %v2349 = vld [vmem:[%s2 + $0x268] sm:$0xff]
  %v2350 = vld [vmem:[%s2 + $0x270] sm:$0xff]
  %v2351 = vld [vmem:[%s2 + $0x278] sm:$0xff]
  %v2352 = vld [vmem:[%s2 + $0x280] sm:$0xff]
  %v2353 = vld [vmem:[%s2 + $0x288] sm:$0xff]
  %v2354 = vld [vmem:[%s2 + $0x290] sm:$0xff]
  %v2355 = vld [vmem:[%s2 + $0x298] sm:$0xff]
  %v2356 = vld [vmem:[%s2 + $0x2a0] sm:$0xff]
  %v2357 = vld [vmem:[%s2 + $0x2a8] sm:$0xff]
  %v2358 = vld [vmem:[%s2 + $0x2b0] sm:$0xff]
  %v2359 = vld [vmem:[%s2 + $0x2b8] sm:$0xff]
  %v2360 = vld [vmem:[%s2 + $0x2c0] sm:$0xff]
  %v2361 = vld [vmem:[%s2 + $0x2c8] sm:$0xff]
  %v2362 = vld [vmem:[%s2 + $0x2d0] sm:$0xff]
  %v2363 = vld [vmem:[%s2 + $0x2d8] sm:$0xff]
  %v2364 = vld [vmem:[%s2 + $0x2e0] sm:$0xff]
  %v2365 = vld [vmem:[%s2 + $0x2e8] sm:$0xff]
  %v2366 = vld [vmem:[%s2 + $0x2f0] sm:$0xff]
  %v2367 = vld [vmem:[%s2 + $0x2f8] sm:$0xff]
  %v2368 = vld [vmem:[%s2 + $0x300] sm:$0xff]
  %v2369 = vld [vmem:[%s2 + $0x308] sm:$0xff]
  %v2370 = vld [vmem:[%s2 + $0x310] sm:$0xff]
  %v2371 = vld [vmem:[%s2 + $0x318] sm:$0xff]
  %v2372 = vld [vmem:[%s2 + $0x320] sm:$0xff]
  %v2373 = vld [vmem:[%s2 + $0x328] sm:$0xff]
  %v2374 = vld [vmem:[%s2 + $0x330] sm:$0xff]
  %v2375 = vld [vmem:[%s2 + $0x338] sm:$0xff]
  %v2376 = vld [vmem:[%s2 + $0x340] sm:$0xff]
  %v2377 = vld [vmem:[%s2 + $0x348] sm:$0xff]
  %v2378 = vld [vmem:[%s2 + $0x350] sm:$0xff]
  %v2379 = vld [vmem:[%s2 + $0x358] sm:$0xff]
  %v2380 = vld [vmem:[%s2 + $0x360] sm:$0xff]
  %v2381 = vld [vmem:[%s2 + $0x368] sm:$0xff]
  %v2382 = vld [vmem:[%s2 + $0x370] sm:$0xff]
  %v2383 = vld [vmem:[%s2 + $0x378] sm:$0xff]
  %v2384 = vld [vmem:[%s2 + $0x380] sm:$0xff]
  %v2385 = vld [vmem:[%s2 + $0x388] sm:$0xff]
  %v2386 = vld [vmem:[%s2 + $0x390] sm:$0xff]
  %v2387 = vld [vmem:[%s2 + $0x398] sm:$0xff]
  %v2388 = vld [vmem:[%s2 + $0x3a0] sm:$0xff]
  %v2389 = vld [vmem:[%s2 + $0x3a8] sm:$0xff]
  %v2390 = vld [vmem:[%s2 + $0x3b0] sm:$0xff]
  %v2391 = vld [vmem:[%s2 + $0x3b8] sm:$0xff]
  %v2392 = vld [vmem:[%s2 + $0x3c0] sm:$0xff]
  %v2393 = vld [vmem:[%s2 + $0x3c8] sm:$0xff]
  %v2394 = vld [vmem:[%s2 + $0x3d0] sm:$0xff]
  %v2395 = vld [vmem:[%s2 + $0x3d8] sm:$0xff]
  %v2396 = vld [vmem:[%s2 + $0x3e0] sm:$0xff]
  %v2397 = vld [vmem:[%s2 + $0x3e8] sm:$0xff]
  %v2398 = vld [vmem:[%s2 + $0x3f0] sm:$0xff]
  %v2399 = vld [vmem:[%s2 + $0x3f8] sm:$0xff]
  %v2400 = vld [vmem:[%s2 + $0x400] sm:$0xff]
  %v2401 = vld [vmem:[%s2 + $0x408] sm:$0xff]
  %v2402 = vld [vmem:[%s2 + $0x410] sm:$0xff]
  %v2403 = vld [vmem:[%s2 + $0x418] sm:$0xff]
  %v2404 = vld [vmem:[%s2 + $0x420] sm:$0xff]
  %v2405 = vld [vmem:[%s2 + $0x428] sm:$0xff]
  %v2406 = vld [vmem:[%s2 + $0x430] sm:$0xff]
  %v2407 = vld [vmem:[%s2 + $0x438] sm:$0xff]
  %v2408 = vld [vmem:[%s2 + $0x440] sm:$0xff]
  %v2409 = vld [vmem:[%s2 + $0x448] sm:$0xff]
  %v2410 = vld [vmem:[%s2 + $0x450] sm:$0xff]
  %v2411 = vld [vmem:[%s2 + $0x458] sm:$0xff]
  %v2412 = vld [vmem:[%s2 + $0x460] sm:$0xff]
  %v2413 = vld [vmem:[%s2 + $0x468] sm:$0xff]
  %v2414 = vld [vmem:[%s2 + $0x470] sm:$0xff]
  %v2415 = vld [vmem:[%s2 + $0x478] sm:$0xff]
  %v2416 = vld [vmem:[%s2 + $0x480] sm:$0xff]
  %v2417 = vld [vmem:[%s2 + $0x488] sm:$0xff]
  %v2418 = vld [vmem:[%s2 + $0x490] sm:$0xff]
  %v2419 = vld [vmem:[%s2 + $0x498] sm:$0xff]
  %v2420 = vld [vmem:[%s2 + $0x4a0] sm:$0xff]
  %v2421 = vld [vmem:[%s2 + $0x4a8] sm:$0xff]
  %v2422 = vld [vmem:[%s2 + $0x4b0] sm:$0xff]
  %v2423 = vld [vmem:[%s2 + $0x4b8] sm:$0xff]
  %v2424 = vld [vmem:[%s2 + $0x4c0] sm:$0xff]
  %v2425 = vld [vmem:[%s2 + $0x4c8] sm:$0xff]
  %v2426 = vld [vmem:[%s2 + $0x4d0] sm:$0xff]
  %v2427 = vld [vmem:[%s2 + $0x4d8] sm:$0xff]
  %v2428 = vld [vmem:[%s2 + $0x4e0] sm:$0xff]
  %v2429 = vld [vmem:[%s2 + $0x4e8] sm:$0xff]
  %v2430 = vld [vmem:[%s2 + $0x4f0] sm:$0xff]
  %v2431 = vld [vmem:[%s2 + $0x4f8] sm:$0xff]
  %v2432 = vld [vmem:[%s2 + $0x500] sm:$0xff]
  %v2433 = vld [vmem:[%s2 + $0x508] sm:$0xff]
  %v2434 = vld [vmem:[%s2 + $0x510] sm:$0xff]
  %v2435 = vld [vmem:[%s2 + $0x518] sm:$0xff]
  %v2436 = vld [vmem:[%s2 + $0x520] sm:$0xff]
  %v2437 = vld [vmem:[%s2 + $0x528] sm:$0xff]
  %v2438 = vld [vmem:[%s2 + $0x530] sm:$0xff]
  %v2439 = vld [vmem:[%s2 + $0x538] sm:$0xff]
  %v2440 = vld [vmem:[%s2 + $0x540] sm:$0xff]
  %v2441 = vld [vmem:[%s2 + $0x548] sm:$0xff]
  %v2442 = vld [vmem:[%s2 + $0x550] sm:$0xff]
  %v2443 = vld [vmem:[%s2 + $0x558] sm:$0xff]
  %v2444 = vld [vmem:[%s2 + $0x560] sm:$0xff]
  %v2445 = vld [vmem:[%s2 + $0x568] sm:$0xff]
  %v2446 = vld [vmem:[%s2 + $0x570] sm:$0xff]
  %v2447 = vld [vmem:[%s2 + $0x578] sm:$0xff]
  %v2448 = vld [vmem:[%s2 + $0x580] sm:$0xff]
  %v2449 = vld [vmem:[%s2 + $0x588] sm:$0xff]
  %v2450 = vld [vmem:[%s2 + $0x590] sm:$0xff]
  %v2451 = vld [vmem:[%s2 + $0x598] sm:$0xff]
  %v2452 = vld [vmem:[%s2 + $0x5a0] sm:$0xff]
  %v2453 = vld [vmem:[%s2 + $0x5a8] sm:$0xff]
  %v2454 = vld [vmem:[%s2 + $0x5b0] sm:$0xff]
  %v2455 = vld [vmem:[%s2 + $0x5b8] sm:$0xff]
  %v2456 = vld [vmem:[%s2 + $0x5c0] sm:$0xff]
  %v2457 = vld [vmem:[%s2 + $0x5c8] sm:$0xff]
  %v2458 = vld [vmem:[%s2 + $0x5d0] sm:$0xff]
  %v2459 = vld [vmem:[%s2 + $0x5d8] sm:$0xff]
  %v2460 = vld [vmem:[%s2 + $0x5e0] sm:$0xff]
  %v2461 = vld [vmem:[%s2 + $0x5e8] sm:$0xff]
  %v2462 = vld [vmem:[%s2 + $0x5f0] sm:$0xff]
  %v2463 = vld [vmem:[%s2 + $0x5f8] sm:$0xff]
  %v2464 = vld [vmem:[%s2 + $0x600] sm:$0xff]
  %v2465 = vld [vmem:[%s2 + $0x608] sm:$0xff]
  %v2466 = vld [vmem:[%s2 + $0x610] sm:$0xff]
  %v2467 = vld [vmem:[%s2 + $0x618] sm:$0xff]
  %v2468 = vld [vmem:[%s2 + $0x620] sm:$0xff]
  %v2469 = vld [vmem:[%s2 + $0x628] sm:$0xff]
  %v2470 = vld [vmem:[%s2 + $0x630] sm:$0xff]
  %v2471 = vld [vmem:[%s2 + $0x638] sm:$0xff]
  %v2472 = vld [vmem:[%s2 + $0x640] sm:$0xff]
  %v2473 = vld [vmem:[%s2 + $0x648] sm:$0xff]
  %v2474 = vld [vmem:[%s2 + $0x650] sm:$0xff]
  %v2475 = vld [vmem:[%s2 + $0x658] sm:$0xff]
  %v2476 = vld [vmem:[%s2 + $0x660] sm:$0xff]
  %v2477 = vld [vmem:[%s2 + $0x668] sm:$0xff]
  %v2478 = vld [vmem:[%s2 + $0x670] sm:$0xff]
  %v2479 = vld [vmem:[%s2 + $0x678] sm:$0xff]
  %v2480 = vld [vmem:[%s2 + $0x680] sm:$0xff]
  %v2481 = vld [vmem:[%s2 + $0x688] sm:$0xff]
  %v2482 = vld [vmem:[%s2 + $0x690] sm:$0xff]
  %v2483 = vld [vmem:[%s2 + $0x698] sm:$0xff]
  %v2484 = vld [vmem:[%s2 + $0x6a0] sm:$0xff]
  %v2485 = vld [vmem:[%s2 + $0x6a8] sm:$0xff]
  %v2486 = vld [vmem:[%s2 + $0x6b0] sm:$0xff]
  %v2487 = vld [vmem:[%s2 + $0x6b8] sm:$0xff]
  %v2488 = vld [vmem:[%s2 + $0x6c0] sm:$0xff]
  %v2489 = vld [vmem:[%s2 + $0x6c8] sm:$0xff]
  %v2490 = vld [vmem:[%s2 + $0x6d0] sm:$0xff]
  %v2491 = vld [vmem:[%s2 + $0x6d8] sm:$0xff]
  %v2492 = vld [vmem:[%s2 + $0x6e0] sm:$0xff]
  %v2493 = vld [vmem:[%s2 + $0x6e8] sm:$0xff]
  %v2494 = vld [vmem:[%s2 + $0x6f0] sm:$0xff]
  %v2495 = vld [vmem:[%s2 + $0x6f8] sm:$0xff]
  %v2496 = vld [vmem:[%s2 + $0x700] sm:$0xff]
  %v2497 = vld [vmem:[%s2 + $0x708] sm:$0xff]
  %v2498 = vld [vmem:[%s2 + $0x710] sm:$0xff]
  %v2499 = vld [vmem:[%s2 + $0x718] sm:$0xff]
  %v2500 = vld [vmem:[%s2 + $0x720] sm:$0xff]
  %v2501 = vld [vmem:[%s2 + $0x728] sm:$0xff]
  %v2502 = vld [vmem:[%s2 + $0x730] sm:$0xff]
  %v2503 = vld [vmem:[%s2 + $0x738] sm:$0xff]
  %v2504 = vld [vmem:[%s2 + $0x740] sm:$0xff]
  %v2505 = vld [vmem:[%s2 + $0x748] sm:$0xff]
  %v2506 = vld [vmem:[%s2 + $0x750] sm:$0xff]
  %v2507 = vld [vmem:[%s2 + $0x758] sm:$0xff]
  %v2508 = vld [vmem:[%s2 + $0x760] sm:$0xff]
  %v2509 = vld [vmem:[%s2 + $0x768] sm:$0xff]
  %v2510 = vld [vmem:[%s2 + $0x770] sm:$0xff]
  %v2511 = vld [vmem:[%s2 + $0x778] sm:$0xff]
  %v2512 = vld [vmem:[%s2 + $0x780] sm:$0xff]
  %v2513 = vld [vmem:[%s2 + $0x788] sm:$0xff]
  %v2514 = vld [vmem:[%s2 + $0x790] sm:$0xff]
  %v2515 = vld [vmem:[%s2 + $0x798] sm:$0xff]
  %v2516 = vld [vmem:[%s2 + $0x7a0] sm:$0xff]
  %v2517 = vld [vmem:[%s2 + $0x7a8] sm:$0xff]
  %v2518 = vld [vmem:[%s2 + $0x7b0] sm:$0xff]
  %v2519 = vld [vmem:[%s2 + $0x7b8] sm:$0xff]
  %v2520 = vld [vmem:[%s2 + $0x7c0] sm:$0xff]
  %v2521 = vld [vmem:[%s2 + $0x7c8] sm:$0xff]
  %v2522 = vld [vmem:[%s2 + $0x7d0] sm:$0xff]
  %v2523 = vld [vmem:[%s2 + $0x7d8] sm:$0xff]
  %v2524 = vld [vmem:[%s2 + $0x7e0] sm:$0xff]
  %v2525 = vld [vmem:[%s2 + $0x7e8] sm:$0xff]
  %v2526 = vld [vmem:[%s2 + $0x7f0] sm:$0xff]
  %v2527 = vld [vmem:[%s2 + $0x7f8] sm:$0xff]
  %v2528 = vld [vmem:[%s2 + $0x800] sm:$0xff]
  %v2529 = vld [vmem:[%s2 + $0x808] sm:$0xff]
  %v2530 = vld [vmem:[%s2 + $0x810] sm:$0xff]
  %v2531 = vld [vmem:[%s2 + $0x818] sm:$0xff]
  %v2532 = vld [vmem:[%s2 + $0x820] sm:$0xff]
  %v2533 = vld [vmem:[%s2 + $0x828] sm:$0xff]
  %v2534 = vld [vmem:[%s2 + $0x830] sm:$0xff]
  %v2535 = vld [vmem:[%s2 + $0x838] sm:$0xff]
  %v2536 = vld [vmem:[%s2 + $0x840] sm:$0xff]
  %v2537 = vld [vmem:[%s2 + $0x848] sm:$0xff]
  %v2538 = vld [vmem:[%s2 + $0x850] sm:$0xff]
  %v2539 = vld [vmem:[%s2 + $0x858] sm:$0xff]
  %v2540 = vld [vmem:[%s2 + $0x860] sm:$0xff]
  %v2541 = vld [vmem:[%s2 + $0x868] sm:$0xff]
  %v2542 = vld [vmem:[%s2 + $0x870] sm:$0xff]
  %v2543 = vld [vmem:[%s2 + $0x878] sm:$0xff]
  %v2544 = vld [vmem:[%s2 + $0x880] sm:$0xff]
  %v2545 = vld [vmem:[%s2 + $0x888] sm:$0xff]
  %v2546 = vld [vmem:[%s2 + $0x890] sm:$0xff]
  %v2547 = vld [vmem:[%s2 + $0x898] sm:$0xff]
  %v2548 = vld [vmem:[%s2 + $0x8a0] sm:$0xff]
  %v2549 = vld [vmem:[%s2 + $0x8a8] sm:$0xff]
  %v2550 = vld [vmem:[%s2 + $0x8b0] sm:$0xff]
  %v2551 = vld [vmem:[%s2 + $0x8b8] sm:$0xff]
  %v2552 = vld [vmem:[%s2 + $0x8c0] sm:$0xff]
  %v2553 = vld [vmem:[%s2 + $0x8c8] sm:$0xff]
  %v2554 = vld [vmem:[%s2 + $0x8d0] sm:$0xff]
  %v2555 = vld [vmem:[%s2 + $0x8d8] sm:$0xff]
  %v2556 = vld [vmem:[%s2 + $0x8e0] sm:$0xff]
  %v2557 = vld [vmem:[%s2 + $0x8e8] sm:$0xff]
  %v2558 = vld [vmem:[%s2 + $0x8f0] sm:$0xff]
  %v2559 = vld [vmem:[%s2 + $0x8f8] sm:$0xff]
  %v2560 = vld [vmem:[%s2 + $0x900] sm:$0xff]
  %v2561 = vld [vmem:[%s2 + $0x908] sm:$0xff]
  %v2562 = vld [vmem:[%s2 + $0x910] sm:$0xff]
  %v2563 = vld [vmem:[%s2 + $0x918] sm:$0xff]
  %v2564 = vld [vmem:[%s2 + $0x920] sm:$0xff]
  %v2565 = vld [vmem:[%s2 + $0x928] sm:$0xff]
  %v2860 = vunpack.c.l.b16 %v2272
  %v2861 = vunpack.c.h.b16 %v2272
  %v2862 = vunpack.c.l.b16 %v2273
  %v2863 = vunpack.c.h.b16 %v2273
  %v2864 = vunpack.c.l.b16 %v2274
  %v2865 = vunpack.c.h.b16 %v2274
  %v2866 = vunpack.c.l.b16 %v2275
  %v2867 = vunpack.c.h.b16 %v2275
  %v2868 = vunpack.c.l.b16 %v2276
  %v2869 = vunpack.c.h.b16 %v2276
  %v2870 = vunpack.c.l.b16 %v2277
  %v2871 = vunpack.c.h.b16 %v2277
  %v2872 = vunpack.c.l.b16 %v2278
  %v2873 = vunpack.c.h.b16 %v2278
  %v2874 = vunpack.c.l.b16 %v2279
  %v2875 = vunpack.c.h.b16 %v2279
  %v2876 = vunpack.c.l.b16 %v2280
  %v2877 = vunpack.c.h.b16 %v2280
  %v2878 = vunpack.c.l.b16 %v2281
  %v2879 = vunpack.c.h.b16 %v2281
  %v2880 = vunpack.c.l.b16 %v2282
  %v2881 = vunpack.c.h.b16 %v2282
  %v2882 = vunpack.c.l.b16 %v2283
  %v2883 = vunpack.c.h.b16 %v2283
  %v2884 = vunpack.c.l.b16 %v2284
  %v2885 = vunpack.c.h.b16 %v2284
  %v2886 = vunpack.c.l.b16 %v2285
  %v2887 = vunpack.c.h.b16 %v2285
  %v2888 = vunpack.c.l.b16 %v2286
  %v2889 = vunpack.c.h.b16 %v2286
  %v2890 = vunpack.c.l.b16 %v2287
  %v2891 = vunpack.c.h.b16 %v2287
  %v2892 = vunpack.c.l.b16 %v2288
  %v2893 = vunpack.c.h.b16 %v2288
  %v2894 = vunpack.c.l.b16 %v2289
  %v2895 = vunpack.c.h.b16 %v2289
  %v2896 = vunpack.c.l.b16 %v2290
  %v2897 = vunpack.c.h.b16 %v2290
  %v2898 = vunpack.c.l.b16 %v2291
  %v2899 = vunpack.c.h.b16 %v2291
  %v2900 = vunpack.c.l.b16 %v2292
  %v2901 = vunpack.c.h.b16 %v2292
  %v2902 = vunpack.c.l.b16 %v2293
  %v2903 = vunpack.c.h.b16 %v2293
  %v2904 = vunpack.c.l.b16 %v2294
  %v2905 = vunpack.c.h.b16 %v2294
  %v2906 = vunpack.c.l.b16 %v2295
  %v2907 = vunpack.c.h.b16 %v2295
  %v2908 = vunpack.c.l.b16 %v2296
  %v2909 = vunpack.c.h.b16 %v2296
  %v2910 = vunpack.c.l.b16 %v2297
  %v2911 = vunpack.c.h.b16 %v2297
  %v2912 = vunpack.c.l.b16 %v2298
  %v2913 = vunpack.c.h.b16 %v2298
  %v2914 = vunpack.c.l.b16 %v2299
  %v2915 = vunpack.c.h.b16 %v2299
  %v2916 = vunpack.c.l.b16 %v2300
  %v2917 = vunpack.c.h.b16 %v2300
  %v2918 = vunpack.c.l.b16 %v2301
  %v2919 = vunpack.c.h.b16 %v2301
  %v2920 = vunpack.c.l.b16 %v2302
  %v2921 = vunpack.c.h.b16 %v2302
  %v2922 = vunpack.c.l.b16 %v2303
  %v2923 = vunpack.c.h.b16 %v2303
  %v2924 = vunpack.c.l.b16 %v2304
  %v2925 = vunpack.c.h.b16 %v2304
  %v2926 = vunpack.c.l.b16 %v2305
  %v2927 = vunpack.c.h.b16 %v2305
  %v2928 = vunpack.c.l.b16 %v2306
  %v2929 = vunpack.c.h.b16 %v2306
  %v2930 = vunpack.c.l.b16 %v2307
  %v2931 = vunpack.c.h.b16 %v2307
  %v2932 = vunpack.c.l.b16 %v2308
  %v2933 = vunpack.c.h.b16 %v2308
  %v2934 = vunpack.c.l.b16 %v2309
  %v2935 = vunpack.c.h.b16 %v2309
  %v2936 = vunpack.c.l.b16 %v2310
  %v2937 = vunpack.c.h.b16 %v2310
  %v2938 = vunpack.c.l.b16 %v2311
  %v2939 = vunpack.c.h.b16 %v2311
  %v2940 = vunpack.c.l.b16 %v2312
  %v2941 = vunpack.c.h.b16 %v2312
  %v2942 = vunpack.c.l.b16 %v2313
  %v2943 = vunpack.c.h.b16 %v2313
  %v2944 = vunpack.c.l.b16 %v2314
  %v2945 = vunpack.c.h.b16 %v2314
  %v2946 = vunpack.c.l.b16 %v2315
  %v2947 = vunpack.c.h.b16 %v2315
  %v2948 = vunpack.c.l.b16 %v2316
  %v2949 = vunpack.c.h.b16 %v2316
  %v2950 = vunpack.c.l.b16 %v2317
  %v2951 = vunpack.c.h.b16 %v2317
  %v2952 = vunpack.c.l.b16 %v2318
  %v2953 = vunpack.c.h.b16 %v2318
  %v2954 = vunpack.c.l.b16 %v2319
  %v2955 = vunpack.c.h.b16 %v2319
  %v2956 = vunpack.c.l.b16 %v2320
  %v2957 = vunpack.c.h.b16 %v2320
  %v2958 = vunpack.c.l.b16 %v2321
  %v2959 = vunpack.c.h.b16 %v2321
  %v2960 = vunpack.c.l.b16 %v2322
  %v2961 = vunpack.c.h.b16 %v2322
  %v2962 = vunpack.c.l.b16 %v2323
  %v2963 = vunpack.c.h.b16 %v2323
  %v2964 = vunpack.c.l.b16 %v2324
  %v2965 = vunpack.c.h.b16 %v2324
  %v2966 = vunpack.c.l.b16 %v2325
  %v2967 = vunpack.c.h.b16 %v2325
  %v2968 = vunpack.c.l.b16 %v2326
  %v2969 = vunpack.c.h.b16 %v2326
  %v2970 = vunpack.c.l.b16 %v2327
  %v2971 = vunpack.c.h.b16 %v2327
  %v2972 = vunpack.c.l.b16 %v2328
  %v2973 = vunpack.c.h.b16 %v2328
  %v2974 = vunpack.c.l.b16 %v2329
  %v2975 = vunpack.c.h.b16 %v2329
  %v2976 = vunpack.c.l.b16 %v2330
  %v2977 = vunpack.c.h.b16 %v2330
  %v2978 = vunpack.c.l.b16 %v2331
  %v2979 = vunpack.c.h.b16 %v2331
  %v2980 = vunpack.c.l.b16 %v2332
  %v2981 = vunpack.c.h.b16 %v2332
  %v2982 = vunpack.c.l.b16 %v2333
  %v2983 = vunpack.c.h.b16 %v2333
  %v2984 = vunpack.c.l.b16 %v2334
  %v2985 = vunpack.c.h.b16 %v2334
  %v2986 = vunpack.c.l.b16 %v2335
  %v2987 = vunpack.c.h.b16 %v2335
  %v2988 = vunpack.c.l.b16 %v2336
  %v2989 = vunpack.c.h.b16 %v2336
  %v2990 = vunpack.c.l.b16 %v2337
  %v2991 = vunpack.c.h.b16 %v2337
  %v2992 = vunpack.c.l.b16 %v2338
  %v2993 = vunpack.c.h.b16 %v2338
  %v2994 = vunpack.c.l.b16 %v2339
  %v2995 = vunpack.c.h.b16 %v2339
  %v2996 = vunpack.c.l.b16 %v2340
  %v2997 = vunpack.c.h.b16 %v2340
  %v2998 = vunpack.c.l.b16 %v2341
  %v2999 = vunpack.c.h.b16 %v2341
  %v3000 = vunpack.c.l.b16 %v2342
  %v3001 = vunpack.c.h.b16 %v2342
  %v3002 = vunpack.c.l.b16 %v2343
  %v3003 = vunpack.c.h.b16 %v2343
  %v3004 = vunpack.c.l.b16 %v2344
  %v3005 = vunpack.c.h.b16 %v2344
  %v3006 = vunpack.c.l.b16 %v2345
  %v3007 = vunpack.c.h.b16 %v2345
  %v3008 = vunpack.c.l.b16 %v2346
  %v3009 = vunpack.c.h.b16 %v2346
  %v3010 = vunpack.c.l.b16 %v2347
  %v3011 = vunpack.c.h.b16 %v2347
  %v3012 = vunpack.c.l.b16 %v2348
  %v3013 = vunpack.c.h.b16 %v2348
  %v3014 = vunpack.c.l.b16 %v2349
  %v3015 = vunpack.c.h.b16 %v2349
  %v3016 = vunpack.c.l.b16 %v2350
  %v3017 = vunpack.c.h.b16 %v2350
  %v3018 = vunpack.c.l.b16 %v2351
  %v3019 = vunpack.c.h.b16 %v2351
  %v3020 = vunpack.c.l.b16 %v2352
  %v3021 = vunpack.c.h.b16 %v2352
  %v3022 = vunpack.c.l.b16 %v2353
  %v3023 = vunpack.c.h.b16 %v2353
  %v3024 = vunpack.c.l.b16 %v2354
  %v3025 = vunpack.c.h.b16 %v2354
  %v3026 = vunpack.c.l.b16 %v2355
  %v3027 = vunpack.c.h.b16 %v2355
  %v3028 = vunpack.c.l.b16 %v2356
  %v3029 = vunpack.c.h.b16 %v2356
  %v3030 = vunpack.c.l.b16 %v2357
  %v3031 = vunpack.c.h.b16 %v2357
  %v3032 = vunpack.c.l.b16 %v2358
  %v3033 = vunpack.c.h.b16 %v2358
  %v3034 = vunpack.c.l.b16 %v2359
  %v3035 = vunpack.c.h.b16 %v2359
  %v3036 = vunpack.c.l.b16 %v2360
  %v3037 = vunpack.c.h.b16 %v2360
  %v3038 = vunpack.c.l.b16 %v2361
  %v3039 = vunpack.c.h.b16 %v2361
  %v3040 = vunpack.c.l.b16 %v2362
  %v3041 = vunpack.c.h.b16 %v2362
  %v3042 = vunpack.c.l.b16 %v2363
  %v3043 = vunpack.c.h.b16 %v2363
  %v3044 = vunpack.c.l.b16 %v2364
  %v3045 = vunpack.c.h.b16 %v2364
  %v3046 = vunpack.c.l.b16 %v2365
  %v3047 = vunpack.c.h.b16 %v2365
  %v3048 = vunpack.c.l.b16 %v2366
  %v3049 = vunpack.c.h.b16 %v2366
  %v3050 = vunpack.c.l.b16 %v2367
  %v3051 = vunpack.c.h.b16 %v2367
  %v3052 = vunpack.c.l.b16 %v2368
  %v3053 = vunpack.c.h.b16 %v2368
  %v3054 = vunpack.c.l.b16 %v2369
  %v3055 = vunpack.c.h.b16 %v2369
  %v3056 = vunpack.c.l.b16 %v2370
  %v3057 = vunpack.c.h.b16 %v2370
  %v3058 = vunpack.c.l.b16 %v2371
  %v3059 = vunpack.c.h.b16 %v2371
  %v3060 = vunpack.c.l.b16 %v2372
  %v3061 = vunpack.c.h.b16 %v2372
  %v3062 = vunpack.c.l.b16 %v2373
  %v3063 = vunpack.c.h.b16 %v2373
  %v3064 = vunpack.c.l.b16 %v2374
  %v3065 = vunpack.c.h.b16 %v2374
  %v3066 = vunpack.c.l.b16 %v2375
  %v3067 = vunpack.c.h.b16 %v2375
  %v3068 = vunpack.c.l.b16 %v2376
  %v3069 = vunpack.c.h.b16 %v2376
  %v3070 = vunpack.c.l.b16 %v2377
  %v3071 = vunpack.c.h.b16 %v2377
  %v3072 = vunpack.c.l.b16 %v2378
  %v3073 = vunpack.c.h.b16 %v2378
  %v3074 = vunpack.c.l.b16 %v2379
  %v3075 = vunpack.c.h.b16 %v2379
  %v3076 = vunpack.c.l.b16 %v2380
  %v3077 = vunpack.c.h.b16 %v2380
  %v3078 = vunpack.c.l.b16 %v2381
  %v3079 = vunpack.c.h.b16 %v2381
  %v3080 = vunpack.c.l.b16 %v2382
  %v3081 = vunpack.c.h.b16 %v2382
  %v3082 = vunpack.c.l.b16 %v2383
  %v3083 = vunpack.c.h.b16 %v2383
  %v3084 = vunpack.c.l.b16 %v2384
  %v3085 = vunpack.c.h.b16 %v2384
  %v3086 = vunpack.c.l.b16 %v2385
  %v3087 = vunpack.c.h.b16 %v2385
  %v3088 = vunpack.c.l.b16 %v2386
  %v3089 = vunpack.c.h.b16 %v2386
  %v3090 = vunpack.c.l.b16 %v2387
  %v3091 = vunpack.c.h.b16 %v2387
  %v3092 = vunpack.c.l.b16 %v2388
  %v3093 = vunpack.c.h.b16 %v2388
  %v3094 = vunpack.c.l.b16 %v2389
  %v3095 = vunpack.c.h.b16 %v2389
  %v3096 = vunpack.c.l.b16 %v2390
  %v3097 = vunpack.c.h.b16 %v2390
  %v3098 = vunpack.c.l.b16 %v2391
  %v3099 = vunpack.c.h.b16 %v2391
  %v3100 = vunpack.c.l.b16 %v2392
  %v3101 = vunpack.c.h.b16 %v2392
  %v3102 = vunpack.c.l.b16 %v2393
  %v3103 = vunpack.c.h.b16 %v2393
  %v3104 = vunpack.c.l.b16 %v2394
  %v3105 = vunpack.c.h.b16 %v2394
  %v3106 = vunpack.c.l.b16 %v2395
  %v3107 = vunpack.c.h.b16 %v2395
  %v3108 = vunpack.c.l.b16 %v2396
  %v3109 = vunpack.c.h.b16 %v2396
  %v3110 = vunpack.c.l.b16 %v2397
  %v3111 = vunpack.c.h.b16 %v2397
  %v3112 = vunpack.c.l.b16 %v2398
  %v3113 = vunpack.c.h.b16 %v2398
  %v3114 = vunpack.c.l.b16 %v2399
  %v3115 = vunpack.c.h.b16 %v2399
  %v3116 = vunpack.c.l.b16 %v2400
  %v3117 = vunpack.c.h.b16 %v2400
  %v3118 = vunpack.c.l.b16 %v2401
  %v3119 = vunpack.c.h.b16 %v2401
  %v3120 = vunpack.c.l.b16 %v2402
  %v3121 = vunpack.c.h.b16 %v2402
  %v3122 = vunpack.c.l.b16 %v2403
  %v3123 = vunpack.c.h.b16 %v2403
  %v3124 = vunpack.c.l.b16 %v2404
  %v3125 = vunpack.c.h.b16 %v2404
  %v3126 = vunpack.c.l.b16 %v2405
  %v3127 = vunpack.c.h.b16 %v2405
  %v3128 = vunpack.c.l.b16 %v2406
  %v3129 = vunpack.c.h.b16 %v2406
  %v3130 = vunpack.c.l.b16 %v2407
  %v3131 = vunpack.c.h.b16 %v2407
  %v3132 = vunpack.c.l.b16 %v2408
  %v3133 = vunpack.c.h.b16 %v2408
  %v3134 = vunpack.c.l.b16 %v2409
  %v3135 = vunpack.c.h.b16 %v2409
  %v3136 = vunpack.c.l.b16 %v2410
  %v3137 = vunpack.c.h.b16 %v2410
  %v3138 = vunpack.c.l.b16 %v2411
  %v3139 = vunpack.c.h.b16 %v2411
  %v3140 = vunpack.c.l.b16 %v2412
  %v3141 = vunpack.c.h.b16 %v2412
  %v3142 = vunpack.c.l.b16 %v2413
  %v3143 = vunpack.c.h.b16 %v2413
  %v3144 = vunpack.c.l.b16 %v2414
  %v3145 = vunpack.c.h.b16 %v2414
  %v3146 = vunpack.c.l.b16 %v2415
  %v3147 = vunpack.c.h.b16 %v2415
  %v3148 = vunpack.c.l.b16 %v2416
  %v3149 = vunpack.c.h.b16 %v2416
  %v3150 = vunpack.c.l.b16 %v2417
  %v3151 = vunpack.c.h.b16 %v2417
  %v3152 = vunpack.c.l.b16 %v2418
  %v3153 = vunpack.c.h.b16 %v2418
  %v3154 = vunpack.c.l.b16 %v2419
  %v3155 = vunpack.c.h.b16 %v2419
  %v3156 = vunpack.c.l.b16 %v2420
  %v3157 = vunpack.c.h.b16 %v2420
  %v3158 = vunpack.c.l.b16 %v2421
  %v3159 = vunpack.c.h.b16 %v2421
  %v3160 = vunpack.c.l.b16 %v2422
  %v3161 = vunpack.c.h.b16 %v2422
  %v3162 = vunpack.c.l.b16 %v2423
  %v3163 = vunpack.c.h.b16 %v2423
  %v3164 = vunpack.c.l.b16 %v2424
  %v3165 = vunpack.c.h.b16 %v2424
  %v3166 = vunpack.c.l.b16 %v2425
  %v3167 = vunpack.c.h.b16 %v2425
  %v3168 = vunpack.c.l.b16 %v2426
  %v3169 = vunpack.c.h.b16 %v2426
  %v3170 = vunpack.c.l.b16 %v2427
  %v3171 = vunpack.c.h.b16 %v2427
  %v3172 = vunpack.c.l.b16 %v2428
  %v3173 = vunpack.c.h.b16 %v2428
  %v3174 = vunpack.c.l.b16 %v2429
  %v3175 = vunpack.c.h.b16 %v2429
  %v3176 = vunpack.c.l.b16 %v2430
  %v3177 = vunpack.c.h.b16 %v2430
  %v3178 = vunpack.c.l.b16 %v2431
  %v3179 = vunpack.c.h.b16 %v2431
  %v3180 = vunpack.c.l.b16 %v2432
  %v3181 = vunpack.c.h.b16 %v2432
  %v3182 = vunpack.c.l.b16 %v2433
  %v3183 = vunpack.c.h.b16 %v2433
  %v3184 = vunpack.c.l.b16 %v2434
  %v3185 = vunpack.c.h.b16 %v2434
  %v3186 = vunpack.c.l.b16 %v2435
  %v3187 = vunpack.c.h.b16 %v2435
  %v3188 = vunpack.c.l.b16 %v2436
  %v3189 = vunpack.c.h.b16 %v2436
  %v3190 = vunpack.c.l.b16 %v2437
  %v3191 = vunpack.c.h.b16 %v2437
  %v3192 = vunpack.c.l.b16 %v2438
  %v3193 = vunpack.c.h.b16 %v2438
  %v3194 = vunpack.c.l.b16 %v2439
  %v3195 = vunpack.c.h.b16 %v2439
  %v3196 = vunpack.c.l.b16 %v2440
  %v3197 = vunpack.c.h.b16 %v2440
  %v3198 = vunpack.c.l.b16 %v2441
  %v3199 = vunpack.c.h.b16 %v2441
  %v3200 = vunpack.c.l.b16 %v2442
  %v3201 = vunpack.c.h.b16 %v2442
  %v3202 = vunpack.c.l.b16 %v2443
  %v3203 = vunpack.c.h.b16 %v2443
  %v3204 = vunpack.c.l.b16 %v2444
  %v3205 = vunpack.c.h.b16 %v2444
  %v3206 = vunpack.c.l.b16 %v2445
  %v3207 = vunpack.c.h.b16 %v2445
  %v3208 = vunpack.c.l.b16 %v2446
  %v3209 = vunpack.c.h.b16 %v2446
  %v3210 = vunpack.c.l.b16 %v2447
  %v3211 = vunpack.c.h.b16 %v2447
  %v3212 = vunpack.c.l.b16 %v2448
  %v3213 = vunpack.c.h.b16 %v2448
  %v3214 = vunpack.c.l.b16 %v2449
  %v3215 = vunpack.c.h.b16 %v2449
  %v3216 = vunpack.c.l.b16 %v2450
  %v3217 = vunpack.c.h.b16 %v2450
  %v3218 = vunpack.c.l.b16 %v2451
  %v3219 = vunpack.c.h.b16 %v2451
  %v3220 = vunpack.c.l.b16 %v2452
  %v3221 = vunpack.c.h.b16 %v2452
  %v3222 = vunpack.c.l.b16 %v2453
  %v3223 = vunpack.c.h.b16 %v2453
  %v3224 = vunpack.c.l.b16 %v2454
  %v3225 = vunpack.c.h.b16 %v2454
  %v3226 = vunpack.c.l.b16 %v2455
  %v3227 = vunpack.c.h.b16 %v2455
  %v3228 = vunpack.c.l.b16 %v2456
  %v3229 = vunpack.c.h.b16 %v2456
  %v3230 = vunpack.c.l.b16 %v2457
  %v3231 = vunpack.c.h.b16 %v2457
  %v3232 = vunpack.c.l.b16 %v2458
  %v3233 = vunpack.c.h.b16 %v2458
  %v3234 = vunpack.c.l.b16 %v2459
  %v3235 = vunpack.c.h.b16 %v2459
  %v3236 = vunpack.c.l.b16 %v2460
  %v3237 = vunpack.c.h.b16 %v2460
  %v3238 = vunpack.c.l.b16 %v2461
  %v3239 = vunpack.c.h.b16 %v2461
  %v3240 = vunpack.c.l.b16 %v2462
  %v3241 = vunpack.c.h.b16 %v2462
  %v3242 = vunpack.c.l.b16 %v2463
  %v3243 = vunpack.c.h.b16 %v2463
  %v3244 = vunpack.c.l.b16 %v2464
  %v3245 = vunpack.c.h.b16 %v2464
  %v3246 = vunpack.c.l.b16 %v2465
  %v3247 = vunpack.c.h.b16 %v2465
  %v3248 = vunpack.c.l.b16 %v2466
  %v3249 = vunpack.c.h.b16 %v2466
  %v3250 = vunpack.c.l.b16 %v2467
  %v3251 = vunpack.c.h.b16 %v2467
  %v3252 = vunpack.c.l.b16 %v2468
  %v3253 = vunpack.c.h.b16 %v2468
  %v3254 = vunpack.c.l.b16 %v2469
  %v3255 = vunpack.c.h.b16 %v2469
  %v3256 = vunpack.c.l.b16 %v2470
  %v3257 = vunpack.c.h.b16 %v2470
  %v3258 = vunpack.c.l.b16 %v2471
  %v3259 = vunpack.c.h.b16 %v2471
  %v3260 = vunpack.c.l.b16 %v2472
  %v3261 = vunpack.c.h.b16 %v2472
  %v3262 = vunpack.c.l.b16 %v2473
  %v3263 = vunpack.c.h.b16 %v2473
  %v3264 = vunpack.c.l.b16 %v2474
  %v3265 = vunpack.c.h.b16 %v2474
  %v3266 = vunpack.c.l.b16 %v2475
  %v3267 = vunpack.c.h.b16 %v2475
  %v3268 = vunpack.c.l.b16 %v2476
  %v3269 = vunpack.c.h.b16 %v2476
  %v3270 = vunpack.c.l.b16 %v2477
  %v3271 = vunpack.c.h.b16 %v2477
  %v3272 = vunpack.c.l.b16 %v2478
  %v3273 = vunpack.c.h.b16 %v2478
  %v3274 = vunpack.c.l.b16 %v2479
  %v3275 = vunpack.c.h.b16 %v2479
  %v3276 = vunpack.c.l.b16 %v2480
  %v3277 = vunpack.c.h.b16 %v2480
  %v3278 = vunpack.c.l.b16 %v2481
  %v3279 = vunpack.c.h.b16 %v2481
  %v3280 = vunpack.c.l.b16 %v2482
  %v3281 = vunpack.c.h.b16 %v2482
  %v3282 = vunpack.c.l.b16 %v2483
  %v3283 = vunpack.c.h.b16 %v2483
  %v3284 = vunpack.c.l.b16 %v2484
  %v3285 = vunpack.c.h.b16 %v2484
  %v3286 = vunpack.c.l.b16 %v2485
  %v3287 = vunpack.c.h.b16 %v2485
  %v3288 = vunpack.c.l.b16 %v2486
  %v3289 = vunpack.c.h.b16 %v2486
  %v3290 = vunpack.c.l.b16 %v2487
  %v3291 = vunpack.c.h.b16 %v2487
  %v3292 = vunpack.c.l.b16 %v2488
  %v3293 = vunpack.c.h.b16 %v2488
  %v3294 = vunpack.c.l.b16 %v2489
  %v3295 = vunpack.c.h.b16 %v2489
  %v3296 = vunpack.c.l.b16 %v2490
  %v3297 = vunpack.c.h.b16 %v2490
  %v3298 = vunpack.c.l.b16 %v2491
  %v3299 = vunpack.c.h.b16 %v2491
  %v3300 = vunpack.c.l.b16 %v2492
  %v3301 = vunpack.c.h.b16 %v2492
  %v3302 = vunpack.c.l.b16 %v2493
  %v3303 = vunpack.c.h.b16 %v2493
  %v3304 = vunpack.c.l.b16 %v2494
  %v3305 = vunpack.c.h.b16 %v2494
  %v3306 = vunpack.c.l.b16 %v2495
  %v3307 = vunpack.c.h.b16 %v2495
  %v3308 = vunpack.c.l.b16 %v2496
  %v3309 = vunpack.c.h.b16 %v2496
  %v3310 = vunpack.c.l.b16 %v2497
  %v3311 = vunpack.c.h.b16 %v2497
  %v3312 = vunpack.c.l.b16 %v2498
  %v3313 = vunpack.c.h.b16 %v2498
  %v3314 = vunpack.c.l.b16 %v2499
  %v3315 = vunpack.c.h.b16 %v2499
  %v3316 = vunpack.c.l.b16 %v2500
  %v3317 = vunpack.c.h.b16 %v2500
  %v3318 = vunpack.c.l.b16 %v2501
  %v3319 = vunpack.c.h.b16 %v2501
  %v3320 = vunpack.c.l.b16 %v2502
  %v3321 = vunpack.c.h.b16 %v2502
  %v3322 = vunpack.c.l.b16 %v2503
  %v3323 = vunpack.c.h.b16 %v2503
  %v3324 = vunpack.c.l.b16 %v2504
  %v3325 = vunpack.c.h.b16 %v2504
  %v3326 = vunpack.c.l.b16 %v2505
  %v3327 = vunpack.c.h.b16 %v2505
  %v3328 = vunpack.c.l.b16 %v2506
  %v3329 = vunpack.c.h.b16 %v2506
  %v3330 = vunpack.c.l.b16 %v2507
  %v3331 = vunpack.c.h.b16 %v2507
  %v3332 = vunpack.c.l.b16 %v2508
  %v3333 = vunpack.c.h.b16 %v2508
  %v3334 = vunpack.c.l.b16 %v2509
  %v3335 = vunpack.c.h.b16 %v2509
  %v3336 = vunpack.c.l.b16 %v2510
  %v3337 = vunpack.c.h.b16 %v2510
  %v3338 = vunpack.c.l.b16 %v2511
  %v3339 = vunpack.c.h.b16 %v2511
  %v3340 = vunpack.c.l.b16 %v2512
  %v3341 = vunpack.c.h.b16 %v2512
  %v3342 = vunpack.c.l.b16 %v2513
  %v3343 = vunpack.c.h.b16 %v2513
  %v3344 = vunpack.c.l.b16 %v2514
  %v3345 = vunpack.c.h.b16 %v2514
  %v3346 = vunpack.c.l.b16 %v2515
  %v3347 = vunpack.c.h.b16 %v2515
  %v3348 = vunpack.c.l.b16 %v2516
  %v3349 = vunpack.c.h.b16 %v2516
  %v3350 = vunpack.c.l.b16 %v2517
  %v3351 = vunpack.c.h.b16 %v2517
  %v3352 = vunpack.c.l.b16 %v2518
  %v3353 = vunpack.c.h.b16 %v2518
  %v3354 = vunpack.c.l.b16 %v2519
  %v3355 = vunpack.c.h.b16 %v2519
  %v3356 = vunpack.c.l.b16 %v2520
  %v3357 = vunpack.c.h.b16 %v2520
  %v3358 = vunpack.c.l.b16 %v2521
  %v3359 = vunpack.c.h.b16 %v2521
  %v3360 = vunpack.c.l.b16 %v2522
  %v3361 = vunpack.c.h.b16 %v2522
  %v3362 = vunpack.c.l.b16 %v2523
  %v3363 = vunpack.c.h.b16 %v2523
  %v3364 = vunpack.c.l.b16 %v2524
  %v3365 = vunpack.c.h.b16 %v2524
  %v3366 = vunpack.c.l.b16 %v2525
  %v3367 = vunpack.c.h.b16 %v2525
  %v3368 = vunpack.c.l.b16 %v2526
  %v3369 = vunpack.c.h.b16 %v2526
  %v3370 = vunpack.c.l.b16 %v2527
  %v3371 = vunpack.c.h.b16 %v2527
  %v3372 = vunpack.c.l.b16 %v2528
  %v3373 = vunpack.c.h.b16 %v2528
  %v3374 = vunpack.c.l.b16 %v2529
  %v3375 = vunpack.c.h.b16 %v2529
  %v3376 = vunpack.c.l.b16 %v2530
  %v3377 = vunpack.c.h.b16 %v2530
  %v3378 = vunpack.c.l.b16 %v2531
  %v3379 = vunpack.c.h.b16 %v2531
  %v3380 = vunpack.c.l.b16 %v2532
  %v3381 = vunpack.c.h.b16 %v2532
  %v3382 = vunpack.c.l.b16 %v2533
  %v3383 = vunpack.c.h.b16 %v2533
  %v3384 = vunpack.c.l.b16 %v2534
  %v3385 = vunpack.c.h.b16 %v2534
  %v3386 = vunpack.c.l.b16 %v2535
  %v3387 = vunpack.c.h.b16 %v2535
  %v3388 = vunpack.c.l.b16 %v2536
  %v3389 = vunpack.c.h.b16 %v2536
  %v3390 = vunpack.c.l.b16 %v2537
  %v3391 = vunpack.c.h.b16 %v2537
  %v3392 = vunpack.c.l.b16 %v2538
  %v3393 = vunpack.c.h.b16 %v2538
  %v3394 = vunpack.c.l.b16 %v2539
  %v3395 = vunpack.c.h.b16 %v2539
  %v3396 = vunpack.c.l.b16 %v2540
  %v3397 = vunpack.c.h.b16 %v2540
  %v3398 = vunpack.c.l.b16 %v2541
  %v3399 = vunpack.c.h.b16 %v2541
  %v3400 = vunpack.c.l.b16 %v2542
  %v3401 = vunpack.c.h.b16 %v2542
  %v3402 = vunpack.c.l.b16 %v2543
  %v3403 = vunpack.c.h.b16 %v2543
  %v3404 = vunpack.c.l.b16 %v2544
  %v3405 = vunpack.c.h.b16 %v2544
  %v3406 = vunpack.c.l.b16 %v2545
  %v3407 = vunpack.c.h.b16 %v2545
  %v3408 = vunpack.c.l.b16 %v2546
  %v3409 = vunpack.c.h.b16 %v2546
  %v3410 = vunpack.c.l.b16 %v2547
  %v3411 = vunpack.c.h.b16 %v2547
  %v3412 = vunpack.c.l.b16 %v2548
  %v3413 = vunpack.c.h.b16 %v2548
  %v3414 = vunpack.c.l.b16 %v2549
  %v3415 = vunpack.c.h.b16 %v2549
  %v3416 = vunpack.c.l.b16 %v2550
  %v3417 = vunpack.c.h.b16 %v2550
  %v3418 = vunpack.c.l.b16 %v2551
  %v3419 = vunpack.c.h.b16 %v2551
  %v3420 = vunpack.c.l.b16 %v2552
  %v3421 = vunpack.c.h.b16 %v2552
  %v3422 = vunpack.c.l.b16 %v2553
  %v3423 = vunpack.c.h.b16 %v2553
  %v3424 = vunpack.c.l.b16 %v2554
  %v3425 = vunpack.c.h.b16 %v2554
  %v3426 = vunpack.c.l.b16 %v2555
  %v3427 = vunpack.c.h.b16 %v2555
  %v3428 = vunpack.c.l.b16 %v2556
  %v3429 = vunpack.c.h.b16 %v2556
  %v3430 = vunpack.c.l.b16 %v2557
  %v3431 = vunpack.c.h.b16 %v2557
  %v3432 = vunpack.c.l.b16 %v2558
  %v3433 = vunpack.c.h.b16 %v2558
  %v3434 = vunpack.c.l.b16 %v2559
  %v3435 = vunpack.c.h.b16 %v2559
  %v3436 = vunpack.c.l.b16 %v2560
  %v3437 = vunpack.c.h.b16 %v2560
  %v3438 = vunpack.c.l.b16 %v2561
  %v3439 = vunpack.c.h.b16 %v2561
  %v3440 = vunpack.c.l.b16 %v2562
  %v3441 = vunpack.c.h.b16 %v2562
  %v3442 = vunpack.c.l.b16 %v2563
  %v3443 = vunpack.c.h.b16 %v2563
  %v3444 = vunpack.c.l.b16 %v2564
  %v3445 = vunpack.c.h.b16 %v2564
  %v3446 = vunpack.c.l.b16 %v2565
  %v3447 = vunpack.c.h.b16 %v2565
  %v3448 = vpack.c.b16 %v2864, %v2860
  %v3449 = vpack.c.b16 %v2865, %v2861
  %v3450 = vpack.c.b16 %v2866, %v2862
  %v3451 = vpack.c.b16 %v2867, %v2863
  %v3452 = vpack.c.b16 %v2872, %v2868
  %v3453 = vpack.c.b16 %v2873, %v2869
  %v3454 = vpack.c.b16 %v2874, %v2870
  %v3455 = vpack.c.b16 %v2875, %v2871
  %v3456 = vpack.c.b16 %v2880, %v2876
  %v3457 = vpack.c.b16 %v2881, %v2877
  %v3458 = vpack.c.b16 %v2882, %v2878
  %v3459 = vpack.c.b16 %v2883, %v2879
  %v3460 = vpack.c.b16 %v2888, %v2884
  %v3461 = vpack.c.b16 %v2889, %v2885
  %v3462 = vpack.c.b16 %v2890, %v2886
  %v3463 = vpack.c.b16 %v2891, %v2887
  %v3464 = vpack.c.b16 %v2896, %v2892
  %v3465 = vpack.c.b16 %v2897, %v2893
  %v3466 = vpack.c.b16 %v2898, %v2894
  %v3467 = vpack.c.b16 %v2899, %v2895
  %v3468 = vpack.c.b16 %v2904, %v2900
  %v3469 = vpack.c.b16 %v2905, %v2901
  %v3470 = vpack.c.b16 %v2906, %v2902
  %v3471 = vpack.c.b16 %v2907, %v2903
  %v3472 = vpack.c.b16 %v2912, %v2908
  %v3473 = vpack.c.b16 %v2913, %v2909
  %v3474 = vpack.c.b16 %v2914, %v2910
  %v3475 = vpack.c.b16 %v2915, %v2911
  %v3476 = vpack.c.b16 %v2920, %v2916
  %v3477 = vpack.c.b16 %v2921, %v2917
  %v3478 = vpack.c.b16 %v2922, %v2918
  %v3479 = vpack.c.b16 %v2923, %v2919
  %v3480 = vpack.c.b16 %v2928, %v2924
  %v3481 = vpack.c.b16 %v2929, %v2925
  %v3482 = vpack.c.b16 %v2930, %v2926
  %v3483 = vpack.c.b16 %v2931, %v2927
  %v3484 = vpack.c.b16 %v2936, %v2932
  %v3485 = vpack.c.b16 %v2937, %v2933
  %v3486 = vpack.c.b16 %v2938, %v2934
  %v3487 = vpack.c.b16 %v2939, %v2935
  %v3488 = vpack.c.b16 %v2944, %v2940
  %v3489 = vpack.c.b16 %v2945, %v2941
  %v3490 = vpack.c.b16 %v2946, %v2942
  %v3491 = vpack.c.b16 %v2947, %v2943
  %v3492 = vpack.c.b16 %v2952, %v2948
  %v3493 = vpack.c.b16 %v2953, %v2949
  %v3494 = vpack.c.b16 %v2954, %v2950
  %v3495 = vpack.c.b16 %v2955, %v2951
  %v3496 = vpack.c.b16 %v2960, %v2956
  %v3497 = vpack.c.b16 %v2961, %v2957
  %v3498 = vpack.c.b16 %v2962, %v2958
  %v3499 = vpack.c.b16 %v2963, %v2959
  %v3500 = vpack.c.b16 %v2968, %v2964
  %v3501 = vpack.c.b16 %v2969, %v2965
  %v3502 = vpack.c.b16 %v2970, %v2966
  %v3503 = vpack.c.b16 %v2971, %v2967
  %v3504 = vpack.c.b16 %v2976, %v2972
  %v3505 = vpack.c.b16 %v2977, %v2973
  %v3506 = vpack.c.b16 %v2978, %v2974
  %v3507 = vpack.c.b16 %v2979, %v2975
  %v3508 = vpack.c.b16 %v2984, %v2980
  %v3509 = vpack.c.b16 %v2985, %v2981
  %v3510 = vpack.c.b16 %v2986, %v2982
  %v3511 = vpack.c.b16 %v2987, %v2983
  %v3512 = vpack.c.b16 %v2992, %v2988
  %v3513 = vpack.c.b16 %v2993, %v2989
  %v3514 = vpack.c.b16 %v2994, %v2990
  %v3515 = vpack.c.b16 %v2995, %v2991
  %v3516 = vpack.c.b16 %v3000, %v2996
  %v3517 = vpack.c.b16 %v3001, %v2997
  %v3518 = vpack.c.b16 %v3002, %v2998
  %v3519 = vpack.c.b16 %v3003, %v2999
  %v3520 = vpack.c.b16 %v3008, %v3004
  %v3521 = vpack.c.b16 %v3009, %v3005
  %v3522 = vpack.c.b16 %v3010, %v3006
  %v3523 = vpack.c.b16 %v3011, %v3007
  %v3524 = vpack.c.b16 %v3016, %v3012
  %v3525 = vpack.c.b16 %v3017, %v3013
  %v3526 = vpack.c.b16 %v3018, %v3014
  %v3527 = vpack.c.b16 %v3019, %v3015
  %v3528 = vpack.c.b16 %v3024, %v3020
  %v3529 = vpack.c.b16 %v3025, %v3021
  %v3530 = vpack.c.b16 %v3026, %v3022
  %v3531 = vpack.c.b16 %v3027, %v3023
  %v3532 = vpack.c.b16 %v3032, %v3028
  %v3533 = vpack.c.b16 %v3033, %v3029
  %v3534 = vpack.c.b16 %v3034, %v3030
  %v3535 = vpack.c.b16 %v3035, %v3031
  %v3536 = vpack.c.b16 %v3040, %v3036
  %v3537 = vpack.c.b16 %v3041, %v3037
  %v3538 = vpack.c.b16 %v3042, %v3038
  %v3539 = vpack.c.b16 %v3043, %v3039
  %v3540 = vpack.c.b16 %v3048, %v3044
  %v3541 = vpack.c.b16 %v3049, %v3045
  %v3542 = vpack.c.b16 %v3050, %v3046
  %v3543 = vpack.c.b16 %v3051, %v3047
  %v3544 = vpack.c.b16 %v3056, %v3052
  %v3545 = vpack.c.b16 %v3057, %v3053
  %v3546 = vpack.c.b16 %v3058, %v3054
  %v3547 = vpack.c.b16 %v3059, %v3055
  %v3548 = vpack.c.b16 %v3064, %v3060
  %v3549 = vpack.c.b16 %v3065, %v3061
  %v3550 = vpack.c.b16 %v3066, %v3062
  %v3551 = vpack.c.b16 %v3067, %v3063
  %v3552 = vpack.c.b16 %v3072, %v3068
  %v3553 = vpack.c.b16 %v3073, %v3069
  %v3554 = vpack.c.b16 %v3074, %v3070
  %v3555 = vpack.c.b16 %v3075, %v3071
  %v3556 = vpack.c.b16 %v3080, %v3076
  %v3557 = vpack.c.b16 %v3081, %v3077
  %v3558 = vpack.c.b16 %v3082, %v3078
  %v3559 = vpack.c.b16 %v3083, %v3079
  %v3560 = vpack.c.b16 %v3088, %v3084
  %v3561 = vpack.c.b16 %v3089, %v3085
  %v3562 = vpack.c.b16 %v3090, %v3086
  %v3563 = vpack.c.b16 %v3091, %v3087
  %v3564 = vpack.c.b16 %v3096, %v3092
  %v3565 = vpack.c.b16 %v3097, %v3093
  %v3566 = vpack.c.b16 %v3098, %v3094
  %v3567 = vpack.c.b16 %v3099, %v3095
  %v3568 = vpack.c.b16 %v3104, %v3100
  %v3569 = vpack.c.b16 %v3105, %v3101
  %v3570 = vpack.c.b16 %v3106, %v3102
  %v3571 = vpack.c.b16 %v3107, %v3103
  %v3572 = vpack.c.b16 %v3112, %v3108
  %v3573 = vpack.c.b16 %v3113, %v3109
  %v3574 = vpack.c.b16 %v3114, %v3110
  %v3575 = vpack.c.b16 %v3115, %v3111
  %v3576 = vpack.c.b16 %v3120, %v3116
  %v3577 = vpack.c.b16 %v3121, %v3117
  %v3578 = vpack.c.b16 %v3122, %v3118
  %v3579 = vpack.c.b16 %v3123, %v3119
  %v3580 = vpack.c.b16 %v3128, %v3124
  %v3581 = vpack.c.b16 %v3129, %v3125
  %v3582 = vpack.c.b16 %v3130, %v3126
  %v3583 = vpack.c.b16 %v3131, %v3127
  %v3584 = vpack.c.b16 %v3136, %v3132
  %v3585 = vpack.c.b16 %v3137, %v3133
  %v3586 = vpack.c.b16 %v3138, %v3134
  %v3587 = vpack.c.b16 %v3139, %v3135
  %v3588 = vpack.c.b16 %v3144, %v3140
  %v3589 = vpack.c.b16 %v3145, %v3141
  %v3590 = vpack.c.b16 %v3146, %v3142
  %v3591 = vpack.c.b16 %v3147, %v3143
  %v3592 = vpack.c.b16 %v3152, %v3148
  %v3593 = vpack.c.b16 %v3153, %v3149
  %v3594 = vpack.c.b16 %v3154, %v3150
  %v3595 = vpack.c.b16 %v3155, %v3151
  %v3596 = vpack.c.b16 %v3160, %v3156
  %v3597 = vpack.c.b16 %v3161, %v3157
  %v3598 = vpack.c.b16 %v3162, %v3158
  %v3599 = vpack.c.b16 %v3163, %v3159
  %v3600 = vpack.c.b16 %v3168, %v3164
  %v3601 = vpack.c.b16 %v3169, %v3165
  %v3602 = vpack.c.b16 %v3170, %v3166
  %v3603 = vpack.c.b16 %v3171, %v3167
  %v3604 = vpack.c.b16 %v3176, %v3172
  %v3605 = vpack.c.b16 %v3177, %v3173
  %v3606 = vpack.c.b16 %v3178, %v3174
  %v3607 = vpack.c.b16 %v3179, %v3175
  %v3608 = vpack.c.b16 %v3184, %v3180
  %v3609 = vpack.c.b16 %v3185, %v3181
  %v3610 = vpack.c.b16 %v3186, %v3182
  %v3611 = vpack.c.b16 %v3187, %v3183
  %v3612 = vpack.c.b16 %v3192, %v3188
  %v3613 = vpack.c.b16 %v3193, %v3189
  %v3614 = vpack.c.b16 %v3194, %v3190
  %v3615 = vpack.c.b16 %v3195, %v3191
  %v3616 = vpack.c.b16 %v3200, %v3196
  %v3617 = vpack.c.b16 %v3201, %v3197
  %v3618 = vpack.c.b16 %v3202, %v3198
  %v3619 = vpack.c.b16 %v3203, %v3199
  %v3620 = vpack.c.b16 %v3208, %v3204
  %v3621 = vpack.c.b16 %v3209, %v3205
  %v3622 = vpack.c.b16 %v3210, %v3206
  %v3623 = vpack.c.b16 %v3211, %v3207
  %v3624 = vpack.c.b16 %v3216, %v3212
  %v3625 = vpack.c.b16 %v3217, %v3213
  %v3626 = vpack.c.b16 %v3218, %v3214
  %v3627 = vpack.c.b16 %v3219, %v3215
  %v3628 = vpack.c.b16 %v3224, %v3220
  %v3629 = vpack.c.b16 %v3225, %v3221
  %v3630 = vpack.c.b16 %v3226, %v3222
  %v3631 = vpack.c.b16 %v3227, %v3223
  %v3632 = vpack.c.b16 %v3232, %v3228
  %v3633 = vpack.c.b16 %v3233, %v3229
  %v3634 = vpack.c.b16 %v3234, %v3230
  %v3635 = vpack.c.b16 %v3235, %v3231
  %v3636 = vpack.c.b16 %v3240, %v3236
  %v3637 = vpack.c.b16 %v3241, %v3237
  %v3638 = vpack.c.b16 %v3242, %v3238
  %v3639 = vpack.c.b16 %v3243, %v3239
  %v3640 = vpack.c.b16 %v3248, %v3244
  %v3641 = vpack.c.b16 %v3249, %v3245
  %v3642 = vpack.c.b16 %v3250, %v3246
  %v3643 = vpack.c.b16 %v3251, %v3247
  %v3644 = vpack.c.b16 %v3256, %v3252
  %v3645 = vpack.c.b16 %v3257, %v3253
  %v3646 = vpack.c.b16 %v3258, %v3254
  %v3647 = vpack.c.b16 %v3259, %v3255
  %v3648 = vpack.c.b16 %v3264, %v3260
  %v3649 = vpack.c.b16 %v3265, %v3261
  %v3650 = vpack.c.b16 %v3266, %v3262
  %v3651 = vpack.c.b16 %v3267, %v3263
  %v3652 = vpack.c.b16 %v3272, %v3268
  %v3653 = vpack.c.b16 %v3273, %v3269
  %v3654 = vpack.c.b16 %v3274, %v3270
  %v3655 = vpack.c.b16 %v3275, %v3271
  %v3656 = vpack.c.b16 %v3280, %v3276
  %v3657 = vpack.c.b16 %v3281, %v3277
  %v3658 = vpack.c.b16 %v3282, %v3278
  %v3659 = vpack.c.b16 %v3283, %v3279
  %v3660 = vpack.c.b16 %v3288, %v3284
  %v3661 = vpack.c.b16 %v3289, %v3285
  %v3662 = vpack.c.b16 %v3290, %v3286
  %v3663 = vpack.c.b16 %v3291, %v3287
  %v3664 = vpack.c.b16 %v3296, %v3292
  %v3665 = vpack.c.b16 %v3297, %v3293
  %v3666 = vpack.c.b16 %v3298, %v3294
  %v3667 = vpack.c.b16 %v3299, %v3295
  %v3668 = vpack.c.b16 %v3304, %v3300
  %v3669 = vpack.c.b16 %v3305, %v3301
  %v3670 = vpack.c.b16 %v3306, %v3302
  %v3671 = vpack.c.b16 %v3307, %v3303
  %v3672 = vpack.c.b16 %v3312, %v3308
  %v3673 = vpack.c.b16 %v3313, %v3309
  %v3674 = vpack.c.b16 %v3314, %v3310
  %v3675 = vpack.c.b16 %v3315, %v3311
  %v3676 = vpack.c.b16 %v3320, %v3316
  %v3677 = vpack.c.b16 %v3321, %v3317
  %v3678 = vpack.c.b16 %v3322, %v3318
  %v3679 = vpack.c.b16 %v3323, %v3319
  %v3680 = vpack.c.b16 %v3328, %v3324
  %v3681 = vpack.c.b16 %v3329, %v3325
  %v3682 = vpack.c.b16 %v3330, %v3326
  %v3683 = vpack.c.b16 %v3331, %v3327
  %v3684 = vpack.c.b16 %v3336, %v3332
  %v3685 = vpack.c.b16 %v3337, %v3333
  %v3686 = vpack.c.b16 %v3338, %v3334
  %v3687 = vpack.c.b16 %v3339, %v3335
  %v3688 = vpack.c.b16 %v3344, %v3340
  %v3689 = vpack.c.b16 %v3345, %v3341
  %v3690 = vpack.c.b16 %v3346, %v3342
  %v3691 = vpack.c.b16 %v3347, %v3343
  %v3692 = vpack.c.b16 %v3352, %v3348
  %v3693 = vpack.c.b16 %v3353, %v3349
  %v3694 = vpack.c.b16 %v3354, %v3350
  %v3695 = vpack.c.b16 %v3355, %v3351
  %v3696 = vpack.c.b16 %v3360, %v3356
  %v3697 = vpack.c.b16 %v3361, %v3357
  %v3698 = vpack.c.b16 %v3362, %v3358
  %v3699 = vpack.c.b16 %v3363, %v3359
  %v3700 = vpack.c.b16 %v3368, %v3364
  %v3701 = vpack.c.b16 %v3369, %v3365
  %v3702 = vpack.c.b16 %v3370, %v3366
  %v3703 = vpack.c.b16 %v3371, %v3367
  %v3704 = vpack.c.b16 %v3376, %v3372
  %v3705 = vpack.c.b16 %v3377, %v3373
  %v3706 = vpack.c.b16 %v3378, %v3374
  %v3707 = vpack.c.b16 %v3379, %v3375
  %v3708 = vpack.c.b16 %v3384, %v3380
  %v3709 = vpack.c.b16 %v3385, %v3381
  %v3710 = vpack.c.b16 %v3386, %v3382
  %v3711 = vpack.c.b16 %v3387, %v3383
  %v3712 = vpack.c.b16 %v3392, %v3388
  %v3713 = vpack.c.b16 %v3393, %v3389
  %v3714 = vpack.c.b16 %v3394, %v3390
  %v3715 = vpack.c.b16 %v3395, %v3391
  %v3716 = vpack.c.b16 %v3400, %v3396
  %v3717 = vpack.c.b16 %v3401, %v3397
  %v3718 = vpack.c.b16 %v3402, %v3398
  %v3719 = vpack.c.b16 %v3403, %v3399
  %v3720 = vpack.c.b16 %v3408, %v3404
  %v3721 = vpack.c.b16 %v3409, %v3405
  %v3722 = vpack.c.b16 %v3410, %v3406
  %v3723 = vpack.c.b16 %v3411, %v3407
  %v3724 = vpack.c.b16 %v3416, %v3412
  %v3725 = vpack.c.b16 %v3417, %v3413
  %v3726 = vpack.c.b16 %v3418, %v3414
  %v3727 = vpack.c.b16 %v3419, %v3415
  %v3728 = vpack.c.b16 %v3424, %v3420
  %v3729 = vpack.c.b16 %v3425, %v3421
  %v3730 = vpack.c.b16 %v3426, %v3422
  %v3731 = vpack.c.b16 %v3427, %v3423
  %v3732 = vpack.c.b16 %v3432, %v3428
  %v3733 = vpack.c.b16 %v3433, %v3429
  %v3734 = vpack.c.b16 %v3434, %v3430
  %v3735 = vpack.c.b16 %v3435, %v3431
  %v3736 = vpack.c.b16 %v3440, %v3436
  %v3737 = vpack.c.b16 %v3441, %v3437
  %v3738 = vpack.c.b16 %v3442, %v3438
  %v3739 = vpack.c.b16 %v3443, %v3439
  %v3740 = vpack.c.b16 %v3444, %v3444
  %v3741 = vpack.c.b16 %v3445, %v3445
  %v3742 = vpack.c.b16 %v3446, %v3446
  %v3743 = vpack.c.b16 %v3447, %v3447
  %v4037 = vsel %vm1849, %v3740, 0
  %v4040 = vsel %vm1849, %v3741, 0
  %v4043 = vsel %vm1849, %v3742, 0
  %v4046 = vsel %vm1849, %v3743, 0
  %4048 = vmatprep.subr.bf16.mxu0 %v3449
  %4049 = vmatpush1.bf16.msra.mxu0 %v3448
  %4050 = vmatprep.subr.bf16.mxu0 %v3453
  %4051 = vmatpush1.bf16.msra.mxu0 %v3452
  %4052 = vmatprep.subr.bf16.mxu0 %v3457
  %4053 = vmatpush1.bf16.msra.mxu0 %v3456
  %4054 = vmatprep.subr.bf16.mxu0 %v3461
  %4055 = vmatpush1.bf16.msra.mxu0 %v3460
  %4056 = vmatprep.subr.bf16.mxu0 %v3465
  %4057 = vmatpush1.bf16.msra.mxu0 %v3464
  %4058 = vmatprep.subr.bf16.mxu0 %v3469
  %4059 = vmatpush1.bf16.msra.mxu0 %v3468
  %4060 = vmatprep.subr.bf16.mxu0 %v3473
  %4061 = vmatpush1.bf16.msra.mxu0 %v3472
  %4062 = vmatprep.subr.bf16.mxu0 %v3477
  %4063 = vmatpush1.bf16.msra.mxu0 %v3476
  %4064 = vmatprep.subr.bf16.mxu0 %v3481
  %4065 = vmatpush1.bf16.msra.mxu0 %v3480
  %4066 = vmatprep.subr.bf16.mxu0 %v3485
  %4067 = vmatpush1.bf16.msra.mxu0 %v3484
  %4068 = vmatprep.subr.bf16.mxu0 %v3489
  %4069 = vmatpush1.bf16.msra.mxu0 %v3488
  %4070 = vmatprep.subr.bf16.mxu0 %v3493
  %4071 = vmatpush1.bf16.msra.mxu0 %v3492
  %4072 = vmatprep.subr.bf16.mxu0 %v3497
  %4073 = vmatpush1.bf16.msra.mxu0 %v3496
  %4074 = vmatprep.subr.bf16.mxu0 %v3501
  %4075 = vmatpush1.bf16.msra.mxu0 %v3500
  %4076 = vmatprep.subr.bf16.mxu0 %v3505
  %4077 = vmatpush1.bf16.msra.mxu0 %v3504
  %4078 = vmatprep.subr.bf16.mxu0 %v3509
  %4079 = vmatpush1.bf16.msra.mxu0 %v3508
  %4080 = vmatprep.mubr.bf16.mxu0 %v357
  %4081 = vmatmul.mubr.bf16.gmra.mrb[0].mxu0 %v356
  %v4082 = vpop.f32.mrb[0].mxu0
  %v4083 = vadd.f32 0.0, %v4082
  %v4084 = vpop.f32.mrb[0].mxu0
  %v4085 = vadd.f32 0.0, %v4084
  %v4086 = vpop.f32.mrb[0].mxu0
  %v4087 = vpop.f32.mrb[0].mxu0
  %4088 = vdwg.mxu0
  %4089 = vmatprep.subr.bf16.mxu0 %v3513
  %4090 = vmatpush1.bf16.msra.mxu0 %v3512
  %4091 = vmatprep.subr.bf16.mxu0 %v3517
  %4092 = vmatpush1.bf16.msra.mxu0 %v3516
  %4093 = vmatprep.subr.bf16.mxu0 %v3521
  %4094 = vmatpush1.bf16.msra.mxu0 %v3520
  %4095 = vmatprep.subr.bf16.mxu0 %v3525
  %4096 = vmatpush1.bf16.msra.mxu0 %v3524
  %4097 = vmatprep.subr.bf16.mxu0 %v3529
  %4098 = vmatpush1.bf16.msra.mxu0 %v3528
  %4099 = vmatprep.subr.bf16.mxu0 %v3533
  %4100 = vmatpush1.bf16.msra.mxu0 %v3532
  %4101 = vmatprep.subr.bf16.mxu0 %v3537
  %4102 = vmatpush1.bf16.msra.mxu0 %v3536
  %4103 = vmatprep.subr.bf16.mxu0 %v3541
  %4104 = vmatpush1.bf16.msra.mxu0 %v3540
  %4105 = vmatprep.subr.bf16.mxu0 %v3545
  %4106 = vmatpush1.bf16.msra.mxu0 %v3544
  %4107 = vmatprep.subr.bf16.mxu0 %v3549
  %4108 = vmatpush1.bf16.msra.mxu0 %v3548
  %4109 = vmatprep.subr.bf16.mxu0 %v3553
  %4110 = vmatpush1.bf16.msra.mxu0 %v3552
  %4111 = vmatprep.subr.bf16.mxu0 %v3557
  %4112 = vmatpush1.bf16.msra.mxu0 %v3556
  %4113 = vmatprep.subr.bf16.mxu0 %v3561
  %4114 = vmatpush1.bf16.msra.mxu0 %v3560
  %4115 = vmatprep.subr.bf16.mxu0 %v3565
  %4116 = vmatpush1.bf16.msra.mxu0 %v3564
  %4117 = vmatprep.subr.bf16.mxu0 %v3569
  %4118 = vmatpush1.bf16.msra.mxu0 %v3568
  %4119 = vmatprep.subr.bf16.mxu0 %v3573
  %4120 = vmatpush1.bf16.msra.mxu0 %v3572
  %4121 = vmatprep.mubr.bf16.mxu0 %v359
  %4122 = vmatmul.mubr.bf16.gmra.mrb[0].mxu0 %v358
  %v4123 = vpop.f32.mrb[0].mxu0
  %v4124 = vadd.f32 %v4083, %v4123
  %v4125 = vpop.f32.mrb[0].mxu0
  %v4126 = vadd.f32 %v4085, %v4125
  %v4127 = vpop.f32.mrb[0].mxu0
  %v4128 = vpop.f32.mrb[0].mxu0
  %4129 = vdwg.mxu0
  %4130 = vmatprep.subr.bf16.mxu0 %v3577
  %4131 = vmatpush1.bf16.msra.mxu0 %v3576
  %4132 = vmatprep.subr.bf16.mxu0 %v3581
  %4133 = vmatpush1.bf16.msra.mxu0 %v3580
  %4134 = vmatprep.subr.bf16.mxu0 %v3585
  %4135 = vmatpush1.bf16.msra.mxu0 %v3584
  %4136 = vmatprep.subr.bf16.mxu0 %v3589
  %4137 = vmatpush1.bf16.msra.mxu0 %v3588
  %4138 = vmatprep.subr.bf16.mxu0 %v3593
  %4139 = vmatpush1.bf16.msra.mxu0 %v3592
  %4140 = vmatprep.subr.bf16.mxu0 %v3597
  %4141 = vmatpush1.bf16.msra.mxu0 %v3596
  %4142 = vmatprep.subr.bf16.mxu0 %v3601
  %4143 = vmatpush1.bf16.msra.mxu0 %v3600
  %4144 = vmatprep.subr.bf16.mxu0 %v3605
  %4145 = vmatpush1.bf16.msra.mxu0 %v3604
  %4146 = vmatprep.subr.bf16.mxu0 %v3609
  %4147 = vmatpush1.bf16.msra.mxu0 %v3608
  %4148 = vmatprep.subr.bf16.mxu0 %v3613
  %4149 = vmatpush1.bf16.msra.mxu0 %v3612
  %4150 = vmatprep.subr.bf16.mxu0 %v3617
  %4151 = vmatpush1.bf16.msra.mxu0 %v3616
  %4152 = vmatprep.subr.bf16.mxu0 %v3621
  %4153 = vmatpush1.bf16.msra.mxu0 %v3620
  %4154 = vmatprep.subr.bf16.mxu0 %v3625
  %4155 = vmatpush1.bf16.msra.mxu0 %v3624
  %4156 = vmatprep.subr.bf16.mxu0 %v3629
  %4157 = vmatpush1.bf16.msra.mxu0 %v3628
  %4158 = vmatprep.subr.bf16.mxu0 %v3633
  %4159 = vmatpush1.bf16.msra.mxu0 %v3632
  %4160 = vmatprep.subr.bf16.mxu0 %v3637
  %4161 = vmatpush1.bf16.msra.mxu0 %v3636
  %4162 = vmatprep.mubr.bf16.mxu0 %v361
  %4163 = vmatmul.mubr.bf16.gmra.mrb[0].mxu0 %v360
  %v4164 = vpop.f32.mrb[0].mxu0
  %v4165 = vadd.f32 %v4124, %v4164
  %v4166 = vpop.f32.mrb[0].mxu0
  %v4167 = vadd.f32 %v4126, %v4166
  %v4168 = vpop.f32.mrb[0].mxu0
  %v4169 = vpop.f32.mrb[0].mxu0
  %4170 = vdwg.mxu0
  %4171 = vmatprep.subr.bf16.mxu0 %v3641
  %4172 = vmatpush1.bf16.msra.mxu0 %v3640
  %4173 = vmatprep.subr.bf16.mxu0 %v3645
  %4174 = vmatpush1.bf16.msra.mxu0 %v3644
  %4175 = vmatprep.subr.bf16.mxu0 %v3649
  %4176 = vmatpush1.bf16.msra.mxu0 %v3648
  %4177 = vmatprep.subr.bf16.mxu0 %v3653
  %4178 = vmatpush1.bf16.msra.mxu0 %v3652
  %4179 = vmatprep.subr.bf16.mxu0 %v3657
  %4180 = vmatpush1.bf16.msra.mxu0 %v3656
  %4181 = vmatprep.subr.bf16.mxu0 %v3661
  %4182 = vmatpush1.bf16.msra.mxu0 %v3660
  %4183 = vmatprep.subr.bf16.mxu0 %v3665
  %4184 = vmatpush1.bf16.msra.mxu0 %v3664
  %4185 = vmatprep.subr.bf16.mxu0 %v3669
  %4186 = vmatpush1.bf16.msra.mxu0 %v3668
  %4187 = vmatprep.subr.bf16.mxu0 %v3673
  %4188 = vmatpush1.bf16.msra.mxu0 %v3672
  %4189 = vmatprep.subr.bf16.mxu0 %v3677
  %4190 = vmatpush1.bf16.msra.mxu0 %v3676
  %4191 = vmatprep.subr.bf16.mxu0 %v3681
  %4192 = vmatpush1.bf16.msra.mxu0 %v3680
  %4193 = vmatprep.subr.bf16.mxu0 %v3685
  %4194 = vmatpush1.bf16.msra.mxu0 %v3684
  %4195 = vmatprep.subr.bf16.mxu0 %v3689
  %4196 = vmatpush1.bf16.msra.mxu0 %v3688
  %4197 = vmatprep.subr.bf16.mxu0 %v3693
  %4198 = vmatpush1.bf16.msra.mxu0 %v3692
  %4199 = vmatprep.subr.bf16.mxu0 %v3697
  %4200 = vmatpush1.bf16.msra.mxu0 %v3696
  %4201 = vmatprep.subr.bf16.mxu0 %v3701
  %4202 = vmatpush1.bf16.msra.mxu0 %v3700
  %4203 = vmatprep.mubr.bf16.mxu0 %v363
  %4204 = vmatmul.mubr.bf16.gmra.mrb[0].mxu0 %v362
  %v4205 = vpop.f32.mrb[0].mxu0
  %v4206 = vadd.f32 %v4165, %v4205
  %v4207 = vpop.f32.mrb[0].mxu0
  %v4208 = vadd.f32 %v4167, %v4207
  %v4209 = vpop.f32.mrb[0].mxu0
  %v4210 = vpop.f32.mrb[0].mxu0
  %4211 = vdwg.mxu0
  %4212 = vmatprep.subr.bf16.mxu0 %v3705
  %4213 = vmatpush1.bf16.msra.mxu0 %v3704
  %4214 = vmatprep.subr.bf16.mxu0 %v3709
  %4215 = vmatpush1.bf16.msra.mxu0 %v3708
  %4216 = vmatprep.subr.bf16.mxu0 %v3713
  %4217 = vmatpush1.bf16.msra.mxu0 %v3712
  %4218 = vmatprep.subr.bf16.mxu0 %v3717
  %4219 = vmatpush1.bf16.msra.mxu0 %v3716
  %4220 = vmatprep.subr.bf16.mxu0 %v3721
  %4221 = vmatpush1.bf16.msra.mxu0 %v3720
  %4222 = vmatprep.subr.bf16.mxu0 %v3725
  %4223 = vmatpush1.bf16.msra.mxu0 %v3724
  %4224 = vmatprep.subr.bf16.mxu0 %v3729
  %4225 = vmatpush1.bf16.msra.mxu0 %v3728
  %4226 = vmatprep.subr.bf16.mxu0 %v3733
  %4227 = vmatpush1.bf16.msra.mxu0 %v3732
  %4228 = vmatprep.subr.bf16.mxu0 %v3737
  %4229 = vmatpush1.bf16.msra.mxu0 %v3736
  %4230 = vmatprep.subr.bf16.mxu0 %v4040
  %4231 = vmatpush1.bf16.msra.mxu0 %v4037
  %4232 = vmatprep.subr.bf16.mxu0 0
  %4233 = vmatpush1.bf16.msra.mxu0 0
  %4234 = vmatprep.subr.bf16.mxu0 0
  %4235 = vmatpush1.bf16.msra.mxu0 0
  %4236 = vmatprep.subr.bf16.mxu0 0
  %4237 = vmatpush1.bf16.msra.mxu0 0
  %4238 = vmatprep.subr.bf16.mxu0 0
  %4239 = vmatpush1.bf16.msra.mxu0 0
  %4240 = vmatprep.subr.bf16.mxu0 0
  %4241 = vmatpush1.bf16.msra.mxu0 0
  %4242 = vmatprep.subr.bf16.mxu0 0
  %4243 = vmatpush1.bf16.msra.mxu0 0
  %4244 = vmatprep.mubr.bf16.mxu0 %v1847
  %4245 = vmatmul.mubr.bf16.gmra.mrb[0].mxu0 %v364
  %v4246 = vpop.f32.mrb[0].mxu0
  %v4247 = vadd.f32 %v4206, %v4246
  %v4248 = vpop.f32.mrb[0].mxu0
  %v4249 = vadd.f32 %v4208, %v4248
  %v4250 = vpop.f32.mrb[0].mxu0
  %v4251 = vpop.f32.mrb[0].mxu0
  %4252 = vdwg.mxu0
  %4253 = vmatprep.subr.bf16.mxu0 %v3451
  %4254 = vmatpush1.bf16.msra.mxu0 %v3450
  %4255 = vmatprep.subr.bf16.mxu0 %v3455
  %4256 = vmatpush1.bf16.msra.mxu0 %v3454
  %4257 = vmatprep.subr.bf16.mxu0 %v3459
  %4258 = vmatpush1.bf16.msra.mxu0 %v3458
  %4259 = vmatprep.subr.bf16.mxu0 %v3463
  %4260 = vmatpush1.bf16.msra.mxu0 %v3462
  %4261 = vmatprep.subr.bf16.mxu0 %v3467
  %4262 = vmatpush1.bf16.msra.mxu0 %v3466
  %4263 = vmatprep.subr.bf16.mxu0 %v3471
  %4264 = vmatpush1.bf16.msra.mxu0 %v3470
  %4265 = vmatprep.subr.bf16.mxu0 %v3475
  %4266 = vmatpush1.bf16.msra.mxu0 %v3474
  %4267 = vmatprep.subr.bf16.mxu0 %v3479
  %4268 = vmatpush1.bf16.msra.mxu0 %v3478
  %4269 = vmatprep.subr.bf16.mxu0 %v3483
  %4270 = vmatpush1.bf16.msra.mxu0 %v3482
  %4271 = vmatprep.subr.bf16.mxu0 %v3487
  %4272 = vmatpush1.bf16.msra.mxu0 %v3486
  %4273 = vmatprep.subr.bf16.mxu0 %v3491
  %4274 = vmatpush1.bf16.msra.mxu0 %v3490
  %4275 = vmatprep.subr.bf16.mxu0 %v3495
  %4276 = vmatpush1.bf16.msra.mxu0 %v3494
  %4277 = vmatprep.subr.bf16.mxu0 %v3499
  %4278 = vmatpush1.bf16.msra.mxu0 %v3498
  %4279 = vmatprep.subr.bf16.mxu0 %v3503
  %4280 = vmatpush1.bf16.msra.mxu0 %v3502
  %4281 = vmatprep.subr.bf16.mxu0 %v3507
  %4282 = vmatpush1.bf16.msra.mxu0 %v3506
  %4283 = vmatprep.subr.bf16.mxu0 %v3511
  %4284 = vmatpush1.bf16.msra.mxu0 %v3510
  %4285 = vmatprep.mubr.bf16.mxu0 %v357
  %4286 = vmatmul.mubr.bf16.gmra.mrb[0].mxu0 %v356
  %v4287 = vpop.f32.mrb[0].mxu0
  %v4288 = vadd.f32 0.0, %v4287
  %v4289 = vpop.f32.mrb[0].mxu0
  %v4290 = vadd.f32 0.0, %v4289
  %v4291 = vpop.f32.mrb[0].mxu0
  %v4292 = vpop.f32.mrb[0].mxu0
  %4293 = vdwg.mxu0
  %4294 = vmatprep.subr.bf16.mxu0 %v3515
  %4295 = vmatpush1.bf16.msra.mxu0 %v3514
  %4296 = vmatprep.subr.bf16.mxu0 %v3519
  %4297 = vmatpush1.bf16.msra.mxu0 %v3518
  %4298 = vmatprep.subr.bf16.mxu0 %v3523
  %4299 = vmatpush1.bf16.msra.mxu0 %v3522
  %4300 = vmatprep.subr.bf16.mxu0 %v3527
  %4301 = vmatpush1.bf16.msra.mxu0 %v3526
  %4302 = vmatprep.subr.bf16.mxu0 %v3531
  %4303 = vmatpush1.bf16.msra.mxu0 %v3530
  %4304 = vmatprep.subr.bf16.mxu0 %v3535
  %4305 = vmatpush1.bf16.msra.mxu0 %v3534
  %4306 = vmatprep.subr.bf16.mxu0 %v3539
  %4307 = vmatpush1.bf16.msra.mxu0 %v3538
  %4308 = vmatprep.subr.bf16.mxu0 %v3543
  %4309 = vmatpush1.bf16.msra.mxu0 %v3542
  %4310 = vmatprep.subr.bf16.mxu0 %v3547
  %4311 = vmatpush1.bf16.msra.mxu0 %v3546
  %4312 = vmatprep.subr.bf16.mxu0 %v3551
  %4313 = vmatpush1.bf16.msra.mxu0 %v3550
  %4314 = vmatprep.subr.bf16.mxu0 %v3555
  %4315 = vmatpush1.bf16.msra.mxu0 %v3554
  %4316 = vmatprep.subr.bf16.mxu0 %v3559
  %4317 = vmatpush1.bf16.msra.mxu0 %v3558
  %4318 = vmatprep.subr.bf16.mxu0 %v3563
  %4319 = vmatpush1.bf16.msra.mxu0 %v3562
  %4320 = vmatprep.subr.bf16.mxu0 %v3567
  %4321 = vmatpush1.bf16.msra.mxu0 %v3566
  %4322 = vmatprep.subr.bf16.mxu0 %v3571
  %4323 = vmatpush1.bf16.msra.mxu0 %v3570
  %4324 = vmatprep.subr.bf16.mxu0 %v3575
  %4325 = vmatpush1.bf16.msra.mxu0 %v3574
  %4326 = vmatprep.mubr.bf16.mxu0 %v359
  %4327 = vmatmul.mubr.bf16.gmra.mrb[0].mxu0 %v358
  %v4328 = vpop.f32.mrb[0].mxu0
  %v4329 = vadd.f32 %v4288, %v4328
  %v4330 = vpop.f32.mrb[0].mxu0
  %v4331 = vadd.f32 %v4290, %v4330
  %v4332 = vpop.f32.mrb[0].mxu0
  %v4333 = vpop.f32.mrb[0].mxu0
  %4334 = vdwg.mxu0
  %4335 = vmatprep.subr.bf16.mxu0 %v3579
  %4336 = vmatpush1.bf16.msra.mxu0 %v3578
  %4337 = vmatprep.subr.bf16.mxu0 %v3583
  %4338 = vmatpush1.bf16.msra.mxu0 %v3582
  %4339 = vmatprep.subr.bf16.mxu0 %v3587
  %4340 = vmatpush1.bf16.msra.mxu0 %v3586
  %4341 = vmatprep.subr.bf16.mxu0 %v3591
  %4342 = vmatpush1.bf16.msra.mxu0 %v3590
  %4343 = vmatprep.subr.bf16.mxu0 %v3595
  %4344 = vmatpush1.bf16.msra.mxu0 %v3594
  %4345 = vmatprep.subr.bf16.mxu0 %v3599
  %4346 = vmatpush1.bf16.msra.mxu0 %v3598
  %4347 = vmatprep.subr.bf16.mxu0 %v3603
  %4348 = vmatpush1.bf16.msra.mxu0 %v3602
  %4349 = vmatprep.subr.bf16.mxu0 %v3607
  %4350 = vmatpush1.bf16.msra.mxu0 %v3606
  %4351 = vmatprep.subr.bf16.mxu0 %v3611
  %4352 = vmatpush1.bf16.msra.mxu0 %v3610
  %4353 = vmatprep.subr.bf16.mxu0 %v3615
  %4354 = vmatpush1.bf16.msra.mxu0 %v3614
  %4355 = vmatprep.subr.bf16.mxu0 %v3619
  %4356 = vmatpush1.bf16.msra.mxu0 %v3618
  %4357 = vmatprep.subr.bf16.mxu0 %v3623
  %4358 = vmatpush1.bf16.msra.mxu0 %v3622
  %4359 = vmatprep.subr.bf16.mxu0 %v3627
  %4360 = vmatpush1.bf16.msra.mxu0 %v3626
  %4361 = vmatprep.subr.bf16.mxu0 %v3631
  %4362 = vmatpush1.bf16.msra.mxu0 %v3630
  %4363 = vmatprep.subr.bf16.mxu0 %v3635
  %4364 = vmatpush1.bf16.msra.mxu0 %v3634
  %4365 = vmatprep.subr.bf16.mxu0 %v3639
  %4366 = vmatpush1.bf16.msra.mxu0 %v3638
  %4367 = vmatprep.mubr.bf16.mxu0 %v361
  %4368 = vmatmul.mubr.bf16.gmra.mrb[0].mxu0 %v360
  %v4369 = vpop.f32.mrb[0].mxu0
  %v4370 = vadd.f32 %v4329, %v4369
  %v4371 = vpop.f32.mrb[0].mxu0
  %v4372 = vadd.f32 %v4331, %v4371
  %v4373 = vpop.f32.mrb[0].mxu0
  %v4374 = vpop.f32.mrb[0].mxu0
  %4375 = vdwg.mxu0
  %4376 = vmatprep.subr.bf16.mxu0 %v3643
  %4377 = vmatpush1.bf16.msra.mxu0 %v3642
  %4378 = vmatprep.subr.bf16.mxu0 %v3647
  %4379 = vmatpush1.bf16.msra.mxu0 %v3646
  %4380 = vmatprep.subr.bf16.mxu0 %v3651
  %4381 = vmatpush1.bf16.msra.mxu0 %v3650
  %4382 = vmatprep.subr.bf16.mxu0 %v3655
  %4383 = vmatpush1.bf16.msra.mxu0 %v3654
  %4384 = vmatprep.subr.bf16.mxu0 %v3659
  %4385 = vmatpush1.bf16.msra.mxu0 %v3658
  %4386 = vmatprep.subr.bf16.mxu0 %v3663
  %4387 = vmatpush1.bf16.msra.mxu0 %v3662
  %4388 = vmatprep.subr.bf16.mxu0 %v3667
  %4389 = vmatpush1.bf16.msra.mxu0 %v3666
  %4390 = vmatprep.subr.bf16.mxu0 %v3671
  %4391 = vmatpush1.bf16.msra.mxu0 %v3670
  %4392 = vmatprep.subr.bf16.mxu0 %v3675
  %4393 = vmatpush1.bf16.msra.mxu0 %v3674
  %4394 = vmatprep.subr.bf16.mxu0 %v3679
  %4395 = vmatpush1.bf16.msra.mxu0 %v3678
  %4396 = vmatprep.subr.bf16.mxu0 %v3683
  %4397 = vmatpush1.bf16.msra.mxu0 %v3682
  %4398 = vmatprep.subr.bf16.mxu0 %v3687
  %4399 = vmatpush1.bf16.msra.mxu0 %v3686
  %4400 = vmatprep.subr.bf16.mxu0 %v3691
  %4401 = vmatpush1.bf16.msra.mxu0 %v3690
  %4402 = vmatprep.subr.bf16.mxu0 %v3695
  %4403 = vmatpush1.bf16.msra.mxu0 %v3694
  %4404 = vmatprep.subr.bf16.mxu0 %v3699
  %4405 = vmatpush1.bf16.msra.mxu0 %v3698
  %4406 = vmatprep.subr.bf16.mxu0 %v3703
  %4407 = vmatpush1.bf16.msra.mxu0 %v3702
  %4408 = vmatprep.mubr.bf16.mxu0 %v363
  %4409 = vmatmul.mubr.bf16.gmra.mrb[0].mxu0 %v362
  %v4410 = vpop.f32.mrb[0].mxu0
  %v4411 = vadd.f32 %v4370, %v4410
  %v4412 = vpop.f32.mrb[0].mxu0
  %v4413 = vadd.f32 %v4372, %v4412
  %v4414 = vpop.f32.mrb[0].mxu0
  %v4415 = vpop.f32.mrb[0].mxu0
  %4416 = vdwg.mxu0
  %4417 = vmatprep.subr.bf16.mxu0 %v3707
  %4418 = vmatpush1.bf16.msra.mxu0 %v3706
  %4419 = vmatprep.subr.bf16.mxu0 %v3711
  %4420 = vmatpush1.bf16.msra.mxu0 %v3710
  %4421 = vmatprep.subr.bf16.mxu0 %v3715
  %4422 = vmatpush1.bf16.msra.mxu0 %v3714
  %4423 = vmatprep.subr.bf16.mxu0 %v3719
  %4424 = vmatpush1.bf16.msra.mxu0 %v3718
  %4425 = vmatprep.subr.bf16.mxu0 %v3723
  %4426 = vmatpush1.bf16.msra.mxu0 %v3722
  %4427 = vmatprep.subr.bf16.mxu0 %v3727
  %4428 = vmatpush1.bf16.msra.mxu0 %v3726
  %4429 = vmatprep.subr.bf16.mxu0 %v3731
  %4430 = vmatpush1.bf16.msra.mxu0 %v3730
  %4431 = vmatprep.subr.bf16.mxu0 %v3735
  %4432 = vmatpush1.bf16.msra.mxu0 %v3734
  %4433 = vmatprep.subr.bf16.mxu0 %v3739
  %4434 = vmatpush1.bf16.msra.mxu0 %v3738
  %4435 = vmatprep.subr.bf16.mxu0 %v4046
  %4436 = vmatpush1.bf16.msra.mxu0 %v4043
  %4437 = vmatprep.subr.bf16.mxu0 0
  %4438 = vmatpush1.bf16.msra.mxu0 0
  %4439 = vmatprep.subr.bf16.mxu0 0
  %4440 = vmatpush1.bf16.msra.mxu0 0
  %4441 = vmatprep.subr.bf16.mxu0 0
  %4442 = vmatpush1.bf16.msra.mxu0 0
  %4443 = vmatprep.subr.bf16.mxu0 0
  %4444 = vmatpush1.bf16.msra.mxu0 0
  %4445 = vmatprep.subr.bf16.mxu0 0
  %4446 = vmatpush1.bf16.msra.mxu0 0
  %4447 = vmatprep.subr.bf16.mxu0 0
  %4448 = vmatpush1.bf16.msra.mxu0 0
  %4449 = vmatprep.mubr.bf16.mxu0 %v1847
  %4450 = vmatmul.mubr.bf16.gmra.mrb[0].mxu0 %v364
  %v4451 = vpop.f32.mrb[0].mxu0
  %v4452 = vadd.f32 %v4411, %v4451
  %v4453 = vpop.f32.mrb[0].mxu0
  %v4454 = vadd.f32 %v4413, %v4453
  %v4455 = vpop.f32.mrb[0].mxu0
  %v4456 = vpop.f32.mrb[0].mxu0
  %4457 = vdwg.mxu0
  %v4458 = vld [vmem:[%s3] sm:$0xff]
  %v4459 = vld [vmem:[%s3 + $0x8] sm:$0xff]
  %v4460 = vld [vmem:[%s3 + $0x10] sm:$0xff]
  %v4461 = vld [vmem:[%s3 + $0x18] sm:$0xff]
  %v4462 = vld [vmem:[%s3 + $0x20] sm:$0xff]
  %v4463 = vld [vmem:[%s3 + $0x28] sm:$0xff]
  %v4464 = vld [vmem:[%s3 + $0x30] sm:$0xff]
  %v4465 = vld [vmem:[%s3 + $0x38] sm:$0xff]
  %v4466 = vld [vmem:[%s3 + $0x40] sm:$0xff]
  %v4467 = vld [vmem:[%s3 + $0x48] sm:$0xff]
  %v4468 = vld [vmem:[%s3 + $0x50] sm:$0xff]
  %v4469 = vld [vmem:[%s3 + $0x58] sm:$0xff]
  %v4470 = vld [vmem:[%s3 + $0x60] sm:$0xff]
  %v4471 = vld [vmem:[%s3 + $0x68] sm:$0xff]
  %v4472 = vld [vmem:[%s3 + $0x70] sm:$0xff]
  %v4473 = vld [vmem:[%s3 + $0x78] sm:$0xff]
  %v4474 = vld [vmem:[%s3 + $0x80] sm:$0xff]
  %v4475 = vld [vmem:[%s3 + $0x88] sm:$0xff]
  %v4476 = vld [vmem:[%s3 + $0x90] sm:$0xff]
  %v4477 = vld [vmem:[%s3 + $0x98] sm:$0xff]
  %v4478 = vld [vmem:[%s3 + $0xa0] sm:$0xff]
  %v4479 = vld [vmem:[%s3 + $0xa8] sm:$0xff]
  %v4480 = vld [vmem:[%s3 + $0xb0] sm:$0xff]
  %v4481 = vld [vmem:[%s3 + $0xb8] sm:$0xff]
  %v4482 = vld [vmem:[%s3 + $0xc0] sm:$0xff]
  %v4483 = vld [vmem:[%s3 + $0xc8] sm:$0xff]
  %v4484 = vld [vmem:[%s3 + $0xd0] sm:$0xff]
  %v4485 = vld [vmem:[%s3 + $0xd8] sm:$0xff]
  %v4486 = vld [vmem:[%s3 + $0xe0] sm:$0xff]
  %v4487 = vld [vmem:[%s3 + $0xe8] sm:$0xff]
  %v4488 = vld [vmem:[%s3 + $0xf0] sm:$0xff]
  %v4489 = vld [vmem:[%s3 + $0xf8] sm:$0xff]
  %v4490 = vld [vmem:[%s3 + $0x100] sm:$0xff]
  %v4491 = vld [vmem:[%s3 + $0x108] sm:$0xff]
  %v4492 = vld [vmem:[%s3 + $0x110] sm:$0xff]
  %v4493 = vld [vmem:[%s3 + $0x118] sm:$0xff]
  %v4494 = vld [vmem:[%s3 + $0x120] sm:$0xff]
  %v4495 = vld [vmem:[%s3 + $0x128] sm:$0xff]
  %v4496 = vld [vmem:[%s3 + $0x130] sm:$0xff]
  %v4497 = vld [vmem:[%s3 + $0x138] sm:$0xff]
  %v4498 = vld [vmem:[%s3 + $0x140] sm:$0xff]
  %v4499 = vld [vmem:[%s3 + $0x148] sm:$0xff]
  %v4500 = vld [vmem:[%s3 + $0x150] sm:$0xff]
  %v4501 = vld [vmem:[%s3 + $0x158] sm:$0xff]
  %v4502 = vld [vmem:[%s3 + $0x160] sm:$0xff]
  %v4503 = vld [vmem:[%s3 + $0x168] sm:$0xff]
  %v4504 = vld [vmem:[%s3 + $0x170] sm:$0xff]
  %v4505 = vld [vmem:[%s3 + $0x178] sm:$0xff]
  %v4506 = vld [vmem:[%s3 + $0x180] sm:$0xff]
  %v4507 = vld [vmem:[%s3 + $0x188] sm:$0xff]
  %v4508 = vld [vmem:[%s3 + $0x190] sm:$0xff]
  %v4509 = vld [vmem:[%s3 + $0x198] sm:$0xff]
  %v4510 = vld [vmem:[%s3 + $0x1a0] sm:$0xff]
  %v4511 = vld [vmem:[%s3 + $0x1a8] sm:$0xff]
  %v4512 = vld [vmem:[%s3 + $0x1b0] sm:$0xff]
  %v4513 = vld [vmem:[%s3 + $0x1b8] sm:$0xff]
  %v4514 = vld [vmem:[%s3 + $0x1c0] sm:$0xff]
  %v4515 = vld [vmem:[%s3 + $0x1c8] sm:$0xff]
  %v4516 = vld [vmem:[%s3 + $0x1d0] sm:$0xff]
  %v4517 = vld [vmem:[%s3 + $0x1d8] sm:$0xff]
  %v4518 = vld [vmem:[%s3 + $0x1e0] sm:$0xff]
  %v4519 = vld [vmem:[%s3 + $0x1e8] sm:$0xff]
  %v4520 = vld [vmem:[%s3 + $0x1f0] sm:$0xff]
  %v4521 = vld [vmem:[%s3 + $0x1f8] sm:$0xff]
  %v4522 = vld [vmem:[%s3 + $0x200] sm:$0xff]
  %v4523 = vld [vmem:[%s3 + $0x208] sm:$0xff]
  %v4524 = vld [vmem:[%s3 + $0x210] sm:$0xff]
  %v4525 = vld [vmem:[%s3 + $0x218] sm:$0xff]
  %v4526 = vld [vmem:[%s3 + $0x220] sm:$0xff]
  %v4527 = vld [vmem:[%s3 + $0x228] sm:$0xff]
  %v4528 = vld [vmem:[%s3 + $0x230] sm:$0xff]
  %v4529 = vld [vmem:[%s3 + $0x238] sm:$0xff]
  %v4530 = vld [vmem:[%s3 + $0x240] sm:$0xff]
  %v4531 = vld [vmem:[%s3 + $0x248] sm:$0xff]
  %v4532 = vld [vmem:[%s3 + $0x250] sm:$0xff]
  %v4533 = vld [vmem:[%s3 + $0x258] sm:$0xff]
  %v4534 = vld [vmem:[%s3 + $0x260] sm:$0xff]
  %v4535 = vld [vmem:[%s3 + $0x268] sm:$0xff]
  %v4536 = vld [vmem:[%s3 + $0x270] sm:$0xff]
  %v4537 = vld [vmem:[%s3 + $0x278] sm:$0xff]
  %v4538 = vld [vmem:[%s3 + $0x280] sm:$0xff]
  %v4539 = vld [vmem:[%s3 + $0x288] sm:$0xff]
  %v4540 = vld [vmem:[%s3 + $0x290] sm:$0xff]
  %v4541 = vld [vmem:[%s3 + $0x298] sm:$0xff]
  %v4542 = vld [vmem:[%s3 + $0x2a0] sm:$0xff]
  %v4543 = vld [vmem:[%s3 + $0x2a8] sm:$0xff]
  %v4544 = vld [vmem:[%s3 + $0x2b0] sm:$0xff]
  %v4545 = vld [vmem:[%s3 + $0x2b8] sm:$0xff]
  %v4546 = vld [vmem:[%s3 + $0x2c0] sm:$0xff]
  %v4547 = vld [vmem:[%s3 + $0x2c8] sm:$0xff]
  %v4548 = vld [vmem:[%s3 + $0x2d0] sm:$0xff]
  %v4549 = vld [vmem:[%s3 + $0x2d8] sm:$0xff]
  %v4550 = vld [vmem:[%s3 + $0x2e0] sm:$0xff]
  %v4551 = vld [vmem:[%s3 + $0x2e8] sm:$0xff]
  %v4552 = vld [vmem:[%s3 + $0x2f0] sm:$0xff]
  %v4553 = vld [vmem:[%s3 + $0x2f8] sm:$0xff]
  %v4554 = vld [vmem:[%s3 + $0x300] sm:$0xff]
  %v4555 = vld [vmem:[%s3 + $0x308] sm:$0xff]
  %v4556 = vld [vmem:[%s3 + $0x310] sm:$0xff]
  %v4557 = vld [vmem:[%s3 + $0x318] sm:$0xff]
  %v4558 = vld [vmem:[%s3 + $0x320] sm:$0xff]
  %v4559 = vld [vmem:[%s3 + $0x328] sm:$0xff]
  %v4560 = vld [vmem:[%s3 + $0x330] sm:$0xff]
  %v4561 = vld [vmem:[%s3 + $0x338] sm:$0xff]
  %v4562 = vld [vmem:[%s3 + $0x340] sm:$0xff]
  %v4563 = vld [vmem:[%s3 + $0x348] sm:$0xff]
  %v4564 = vld [vmem:[%s3 + $0x350] sm:$0xff]
  %v4565 = vld [vmem:[%s3 + $0x358] sm:$0xff]
  %v4566 = vld [vmem:[%s3 + $0x360] sm:$0xff]
  %v4567 = vld [vmem:[%s3 + $0x368] sm:$0xff]
  %v4568 = vld [vmem:[%s3 + $0x370] sm:$0xff]
  %v4569 = vld [vmem:[%s3 + $0x378] sm:$0xff]
  %v4570 = vld [vmem:[%s3 + $0x380] sm:$0xff]
  %v4571 = vld [vmem:[%s3 + $0x388] sm:$0xff]
  %v4572 = vld [vmem:[%s3 + $0x390] sm:$0xff]
  %v4573 = vld [vmem:[%s3 + $0x398] sm:$0xff]
  %v4574 = vld [vmem:[%s3 + $0x3a0] sm:$0xff]
  %v4575 = vld [vmem:[%s3 + $0x3a8] sm:$0xff]
  %v4576 = vld [vmem:[%s3 + $0x3b0] sm:$0xff]
  %v4577 = vld [vmem:[%s3 + $0x3b8] sm:$0xff]
  %v4578 = vld [vmem:[%s3 + $0x3c0] sm:$0xff]
  %v4579 = vld [vmem:[%s3 + $0x3c8] sm:$0xff]
  %v4580 = vld [vmem:[%s3 + $0x3d0] sm:$0xff]
  %v4581 = vld [vmem:[%s3 + $0x3d8] sm:$0xff]
  %v4582 = vld [vmem:[%s3 + $0x3e0] sm:$0xff]
  %v4583 = vld [vmem:[%s3 + $0x3e8] sm:$0xff]
  %v4584 = vld [vmem:[%s3 + $0x3f0] sm:$0xff]
  %v4585 = vld [vmem:[%s3 + $0x3f8] sm:$0xff]
  %v4586 = vld [vmem:[%s3 + $0x400] sm:$0xff]
  %v4587 = vld [vmem:[%s3 + $0x408] sm:$0xff]
  %v4588 = vld [vmem:[%s3 + $0x410] sm:$0xff]
  %v4589 = vld [vmem:[%s3 + $0x418] sm:$0xff]
  %v4590 = vld [vmem:[%s3 + $0x420] sm:$0xff]
  %v4591 = vld [vmem:[%s3 + $0x428] sm:$0xff]
  %v4592 = vld [vmem:[%s3 + $0x430] sm:$0xff]
  %v4593 = vld [vmem:[%s3 + $0x438] sm:$0xff]
  %v4594 = vld [vmem:[%s3 + $0x440] sm:$0xff]
  %v4595 = vld [vmem:[%s3 + $0x448] sm:$0xff]
  %v4596 = vld [vmem:[%s3 + $0x450] sm:$0xff]
  %v4597 = vld [vmem:[%s3 + $0x458] sm:$0xff]
  %v4598 = vld [vmem:[%s3 + $0x460] sm:$0xff]
  %v4599 = vld [vmem:[%s3 + $0x468] sm:$0xff]
  %v4600 = vld [vmem:[%s3 + $0x470] sm:$0xff]
  %v4601 = vld [vmem:[%s3 + $0x478] sm:$0xff]
  %v4602 = vld [vmem:[%s3 + $0x480] sm:$0xff]
  %v4603 = vld [vmem:[%s3 + $0x488] sm:$0xff]
  %v4604 = vld [vmem:[%s3 + $0x490] sm:$0xff]
  %v4605 = vld [vmem:[%s3 + $0x498] sm:$0xff]
  %v4606 = vld [vmem:[%s3 + $0x4a0] sm:$0xff]
  %v4607 = vld [vmem:[%s3 + $0x4a8] sm:$0xff]
  %v4608 = vld [vmem:[%s3 + $0x4b0] sm:$0xff]
  %v4609 = vld [vmem:[%s3 + $0x4b8] sm:$0xff]
  %v4610 = vld [vmem:[%s3 + $0x4c0] sm:$0xff]
  %v4611 = vld [vmem:[%s3 + $0x4c8] sm:$0xff]
  %v4612 = vld [vmem:[%s3 + $0x4d0] sm:$0xff]
  %v4613 = vld [vmem:[%s3 + $0x4d8] sm:$0xff]
  %v4614 = vld [vmem:[%s3 + $0x4e0] sm:$0xff]
  %v4615 = vld [vmem:[%s3 + $0x4e8] sm:$0xff]
  %v4616 = vld [vmem:[%s3 + $0x4f0] sm:$0xff]
  %v4617 = vld [vmem:[%s3 + $0x4f8] sm:$0xff]
  %v4618 = vld [vmem:[%s3 + $0x500] sm:$0xff]
  %v4619 = vld [vmem:[%s3 + $0x508] sm:$0xff]
  %v4620 = vld [vmem:[%s3 + $0x510] sm:$0xff]
  %v4621 = vld [vmem:[%s3 + $0x518] sm:$0xff]
  %v4622 = vld [vmem:[%s3 + $0x520] sm:$0xff]
  %v4623 = vld [vmem:[%s3 + $0x528] sm:$0xff]
  %v4624 = vld [vmem:[%s3 + $0x530] sm:$0xff]
  %v4625 = vld [vmem:[%s3 + $0x538] sm:$0xff]
  %v4626 = vld [vmem:[%s3 + $0x540] sm:$0xff]
  %v4627 = vld [vmem:[%s3 + $0x548] sm:$0xff]
  %v4628 = vld [vmem:[%s3 + $0x550] sm:$0xff]
  %v4629 = vld [vmem:[%s3 + $0x558] sm:$0xff]
  %v4630 = vld [vmem:[%s3 + $0x560] sm:$0xff]
  %v4631 = vld [vmem:[%s3 + $0x568] sm:$0xff]
  %v4632 = vld [vmem:[%s3 + $0x570] sm:$0xff]
  %v4633 = vld [vmem:[%s3 + $0x578] sm:$0xff]
  %v4634 = vld [vmem:[%s3 + $0x580] sm:$0xff]
  %v4635 = vld [vmem:[%s3 + $0x588] sm:$0xff]
  %v4636 = vld [vmem:[%s3 + $0x590] sm:$0xff]
  %v4637 = vld [vmem:[%s3 + $0x598] sm:$0xff]
  %v4638 = vld [vmem:[%s3 + $0x5a0] sm:$0xff]
  %v4639 = vld [vmem:[%s3 + $0x5a8] sm:$0xff]
  %v4640 = vld [vmem:[%s3 + $0x5b0] sm:$0xff]
  %v4641 = vld [vmem:[%s3 + $0x5b8] sm:$0xff]
  %v4642 = vld [vmem:[%s3 + $0x5c0] sm:$0xff]
  %v4643 = vld [vmem:[%s3 + $0x5c8] sm:$0xff]
  %v4644 = vld [vmem:[%s3 + $0x5d0] sm:$0xff]
  %v4645 = vld [vmem:[%s3 + $0x5d8] sm:$0xff]
  %v4646 = vld [vmem:[%s3 + $0x5e0] sm:$0xff]
  %v4647 = vld [vmem:[%s3 + $0x5e8] sm:$0xff]
  %v4648 = vld [vmem:[%s3 + $0x5f0] sm:$0xff]
  %v4649 = vld [vmem:[%s3 + $0x5f8] sm:$0xff]
  %v4650 = vld [vmem:[%s3 + $0x600] sm:$0xff]
  %v4651 = vld [vmem:[%s3 + $0x608] sm:$0xff]
  %v4652 = vld [vmem:[%s3 + $0x610] sm:$0xff]
  %v4653 = vld [vmem:[%s3 + $0x618] sm:$0xff]
  %v4654 = vld [vmem:[%s3 + $0x620] sm:$0xff]
  %v4655 = vld [vmem:[%s3 + $0x628] sm:$0xff]
  %v4656 = vld [vmem:[%s3 + $0x630] sm:$0xff]
  %v4657 = vld [vmem:[%s3 + $0x638] sm:$0xff]
  %v4658 = vld [vmem:[%s3 + $0x640] sm:$0xff]
  %v4659 = vld [vmem:[%s3 + $0x648] sm:$0xff]
  %v4660 = vld [vmem:[%s3 + $0x650] sm:$0xff]
  %v4661 = vld [vmem:[%s3 + $0x658] sm:$0xff]
  %v4662 = vld [vmem:[%s3 + $0x660] sm:$0xff]
  %v4663 = vld [vmem:[%s3 + $0x668] sm:$0xff]
  %v4664 = vld [vmem:[%s3 + $0x670] sm:$0xff]
  %v4665 = vld [vmem:[%s3 + $0x678] sm:$0xff]
  %v4666 = vld [vmem:[%s3 + $0x680] sm:$0xff]
  %v4667 = vld [vmem:[%s3 + $0x688] sm:$0xff]
  %v4668 = vld [vmem:[%s3 + $0x690] sm:$0xff]
  %v4669 = vld [vmem:[%s3 + $0x698] sm:$0xff]
  %v4670 = vld [vmem:[%s3 + $0x6a0] sm:$0xff]
  %v4671 = vld [vmem:[%s3 + $0x6a8] sm:$0xff]
  %v4672 = vld [vmem:[%s3 + $0x6b0] sm:$0xff]
  %v4673 = vld [vmem:[%s3 + $0x6b8] sm:$0xff]
  %v4674 = vld [vmem:[%s3 + $0x6c0] sm:$0xff]
  %v4675 = vld [vmem:[%s3 + $0x6c8] sm:$0xff]
  %v4676 = vld [vmem:[%s3 + $0x6d0] sm:$0xff]
  %v4677 = vld [vmem:[%s3 + $0x6d8] sm:$0xff]
  %v4678 = vld [vmem:[%s3 + $0x6e0] sm:$0xff]
  %v4679 = vld [vmem:[%s3 + $0x6e8] sm:$0xff]
  %v4680 = vld [vmem:[%s3 + $0x6f0] sm:$0xff]
  %v4681 = vld [vmem:[%s3 + $0x6f8] sm:$0xff]
  %v4682 = vld [vmem:[%s3 + $0x700] sm:$0xff]
  %v4683 = vld [vmem:[%s3 + $0x708] sm:$0xff]
  %v4684 = vld [vmem:[%s3 + $0x710] sm:$0xff]
  %v4685 = vld [vmem:[%s3 + $0x718] sm:$0xff]
  %v4686 = vld [vmem:[%s3 + $0x720] sm:$0xff]
  %v4687 = vld [vmem:[%s3 + $0x728] sm:$0xff]
  %v4688 = vld [vmem:[%s3 + $0x730] sm:$0xff]
  %v4689 = vld [vmem:[%s3 + $0x738] sm:$0xff]
  %v4690 = vld [vmem:[%s3 + $0x740] sm:$0xff]
  %v4691 = vld [vmem:[%s3 + $0x748] sm:$0xff]
  %v4692 = vld [vmem:[%s3 + $0x750] sm:$0xff]
  %v4693 = vld [vmem:[%s3 + $0x758] sm:$0xff]
  %v4694 = vld [vmem:[%s3 + $0x760] sm:$0xff]
  %v4695 = vld [vmem:[%s3 + $0x768] sm:$0xff]
  %v4696 = vld [vmem:[%s3 + $0x770] sm:$0xff]
  %v4697 = vld [vmem:[%s3 + $0x778] sm:$0xff]
  %v4698 = vld [vmem:[%s3 + $0x780] sm:$0xff]
  %v4699 = vld [vmem:[%s3 + $0x788] sm:$0xff]
  %v4700 = vld [vmem:[%s3 + $0x790] sm:$0xff]
  %v4701 = vld [vmem:[%s3 + $0x798] sm:$0xff]
  %v4702 = vld [vmem:[%s3 + $0x7a0] sm:$0xff]
  %v4703 = vld [vmem:[%s3 + $0x7a8] sm:$0xff]
  %v4704 = vld [vmem:[%s3 + $0x7b0] sm:$0xff]
  %v4705 = vld [vmem:[%s3 + $0x7b8] sm:$0xff]
  %v4706 = vld [vmem:[%s3 + $0x7c0] sm:$0xff]
  %v4707 = vld [vmem:[%s3 + $0x7c8] sm:$0xff]
  %v4708 = vld [vmem:[%s3 + $0x7d0] sm:$0xff]
  %v4709 = vld [vmem:[%s3 + $0x7d8] sm:$0xff]
  %v4710 = vld [vmem:[%s3 + $0x7e0] sm:$0xff]
  %v4711 = vld [vmem:[%s3 + $0x7e8] sm:$0xff]
  %v4712 = vld [vmem:[%s3 + $0x7f0] sm:$0xff]
  %v4713 = vld [vmem:[%s3 + $0x7f8] sm:$0xff]
  %v4714 = vld [vmem:[%s3 + $0x800] sm:$0xff]
  %v4715 = vld [vmem:[%s3 + $0x808] sm:$0xff]
  %v4716 = vld [vmem:[%s3 + $0x810] sm:$0xff]
  %v4717 = vld [vmem:[%s3 + $0x818] sm:$0xff]
  %v4718 = vld [vmem:[%s3 + $0x820] sm:$0xff]
  %v4719 = vld [vmem:[%s3 + $0x828] sm:$0xff]
  %v4720 = vld [vmem:[%s3 + $0x830] sm:$0xff]
  %v4721 = vld [vmem:[%s3 + $0x838] sm:$0xff]
  %v4722 = vld [vmem:[%s3 + $0x840] sm:$0xff]
  %v4723 = vld [vmem:[%s3 + $0x848] sm:$0xff]
  %v4724 = vld [vmem:[%s3 + $0x850] sm:$0xff]
  %v4725 = vld [vmem:[%s3 + $0x858] sm:$0xff]
  %v4726 = vld [vmem:[%s3 + $0x860] sm:$0xff]
  %v4727 = vld [vmem:[%s3 + $0x868] sm:$0xff]
  %v4728 = vld [vmem:[%s3 + $0x870] sm:$0xff]
  %v4729 = vld [vmem:[%s3 + $0x878] sm:$0xff]
  %v4730 = vld [vmem:[%s3 + $0x880] sm:$0xff]
  %v4731 = vld [vmem:[%s3 + $0x888] sm:$0xff]
  %v4732 = vld [vmem:[%s3 + $0x890] sm:$0xff]
  %v4733 = vld [vmem:[%s3 + $0x898] sm:$0xff]
  %v4734 = vld [vmem:[%s3 + $0x8a0] sm:$0xff]
  %v4735 = vld [vmem:[%s3 + $0x8a8] sm:$0xff]
  %v4736 = vld [vmem:[%s3 + $0x8b0] sm:$0xff]
  %v4737 = vld [vmem:[%s3 + $0x8b8] sm:$0xff]
  %v4738 = vld [vmem:[%s3 + $0x8c0] sm:$0xff]
  %v4739 = vld [vmem:[%s3 + $0x8c8] sm:$0xff]
  %v4740 = vld [vmem:[%s3 + $0x8d0] sm:$0xff]
  %v4741 = vld [vmem:[%s3 + $0x8d8] sm:$0xff]
  %v4742 = vld [vmem:[%s3 + $0x8e0] sm:$0xff]
  %v4743 = vld [vmem:[%s3 + $0x8e8] sm:$0xff]
  %v4744 = vld [vmem:[%s3 + $0x8f0] sm:$0xff]
  %v4745 = vld [vmem:[%s3 + $0x8f8] sm:$0xff]
  %v4746 = vld [vmem:[%s3 + $0x900] sm:$0xff]
  %v4747 = vld [vmem:[%s3 + $0x908] sm:$0xff]
  %v4748 = vld [vmem:[%s3 + $0x910] sm:$0xff]
  %v4749 = vld [vmem:[%s3 + $0x918] sm:$0xff]
  %v4750 = vld [vmem:[%s3 + $0x920] sm:$0xff]
  %v4751 = vld [vmem:[%s3 + $0x928] sm:$0xff]
  %v5046 = vunpack.c.l.b16 %v4458
  %v5047 = vunpack.c.h.b16 %v4458
  %v5048 = vunpack.c.l.b16 %v4459
  %v5049 = vunpack.c.h.b16 %v4459
  %v5050 = vunpack.c.l.b16 %v4460
  %v5051 = vunpack.c.h.b16 %v4460
  %v5052 = vunpack.c.l.b16 %v4461
  %v5053 = vunpack.c.h.b16 %v4461
  %v5054 = vunpack.c.l.b16 %v4462
  %v5055 = vunpack.c.h.b16 %v4462
  %v5056 = vunpack.c.l.b16 %v4463
  %v5057 = vunpack.c.h.b16 %v4463
  %v5058 = vunpack.c.l.b16 %v4464
  %v5059 = vunpack.c.h.b16 %v4464
  %v5060 = vunpack.c.l.b16 %v4465
  %v5061 = vunpack.c.h.b16 %v4465
  %v5062 = vunpack.c.l.b16 %v4466
  %v5063 = vunpack.c.h.b16 %v4466
  %v5064 = vunpack.c.l.b16 %v4467
  %v5065 = vunpack.c.h.b16 %v4467
  %v5066 = vunpack.c.l.b16 %v4468
  %v5067 = vunpack.c.h.b16 %v4468
  %v5068 = vunpack.c.l.b16 %v4469
  %v5069 = vunpack.c.h.b16 %v4469
  %v5070 = vunpack.c.l.b16 %v4470
  %v5071 = vunpack.c.h.b16 %v4470
  %v5072 = vunpack.c.l.b16 %v4471
  %v5073 = vunpack.c.h.b16 %v4471
  %v5074 = vunpack.c.l.b16 %v4472
  %v5075 = vunpack.c.h.b16 %v4472
  %v5076 = vunpack.c.l.b16 %v4473
  %v5077 = vunpack.c.h.b16 %v4473
  %v5078 = vunpack.c.l.b16 %v4474
  %v5079 = vunpack.c.h.b16 %v4474
  %v5080 = vunpack.c.l.b16 %v4475
  %v5081 = vunpack.c.h.b16 %v4475
  %v5082 = vunpack.c.l.b16 %v4476
  %v5083 = vunpack.c.h.b16 %v4476
  %v5084 = vunpack.c.l.b16 %v4477
  %v5085 = vunpack.c.h.b16 %v4477
  %v5086 = vunpack.c.l.b16 %v4478
  %v5087 = vunpack.c.h.b16 %v4478
  %v5088 = vunpack.c.l.b16 %v4479
  %v5089 = vunpack.c.h.b16 %v4479
  %v5090 = vunpack.c.l.b16 %v4480
  %v5091 = vunpack.c.h.b16 %v4480
  %v5092 = vunpack.c.l.b16 %v4481
  %v5093 = vunpack.c.h.b16 %v4481
  %v5094 = vunpack.c.l.b16 %v4482
  %v5095 = vunpack.c.h.b16 %v4482
  %v5096 = vunpack.c.l.b16 %v4483
  %v5097 = vunpack.c.h.b16 %v4483
  %v5098 = vunpack.c.l.b16 %v4484
  %v5099 = vunpack.c.h.b16 %v4484
  %v5100 = vunpack.c.l.b16 %v4485
  %v5101 = vunpack.c.h.b16 %v4485
  %v5102 = vunpack.c.l.b16 %v4486
  %v5103 = vunpack.c.h.b16 %v4486
  %v5104 = vunpack.c.l.b16 %v4487
  %v5105 = vunpack.c.h.b16 %v4487
  %v5106 = vunpack.c.l.b16 %v4488
  %v5107 = vunpack.c.h.b16 %v4488
  %v5108 = vunpack.c.l.b16 %v4489
  %v5109 = vunpack.c.h.b16 %v4489
  %v5110 = vunpack.c.l.b16 %v4490
  %v5111 = vunpack.c.h.b16 %v4490
  %v5112 = vunpack.c.l.b16 %v4491
  %v5113 = vunpack.c.h.b16 %v4491
  %v5114 = vunpack.c.l.b16 %v4492
  %v5115 = vunpack.c.h.b16 %v4492
  %v5116 = vunpack.c.l.b16 %v4493
  %v5117 = vunpack.c.h.b16 %v4493
  %v5118 = vunpack.c.l.b16 %v4494
  %v5119 = vunpack.c.h.b16 %v4494
  %v5120 = vunpack.c.l.b16 %v4495
  %v5121 = vunpack.c.h.b16 %v4495
  %v5122 = vunpack.c.l.b16 %v4496
  %v5123 = vunpack.c.h.b16 %v4496
  %v5124 = vunpack.c.l.b16 %v4497
  %v5125 = vunpack.c.h.b16 %v4497
  %v5126 = vunpack.c.l.b16 %v4498
  %v5127 = vunpack.c.h.b16 %v4498
  %v5128 = vunpack.c.l.b16 %v4499
  %v5129 = vunpack.c.h.b16 %v4499
  %v5130 = vunpack.c.l.b16 %v4500
  %v5131 = vunpack.c.h.b16 %v4500
  %v5132 = vunpack.c.l.b16 %v4501
  %v5133 = vunpack.c.h.b16 %v4501
  %v5134 = vunpack.c.l.b16 %v4502
  %v5135 = vunpack.c.h.b16 %v4502
  %v5136 = vunpack.c.l.b16 %v4503
  %v5137 = vunpack.c.h.b16 %v4503
  %v5138 = vunpack.c.l.b16 %v4504
  %v5139 = vunpack.c.h.b16 %v4504
  %v5140 = vunpack.c.l.b16 %v4505
  %v5141 = vunpack.c.h.b16 %v4505
  %v5142 = vunpack.c.l.b16 %v4506
  %v5143 = vunpack.c.h.b16 %v4506
  %v5144 = vunpack.c.l.b16 %v4507
  %v5145 = vunpack.c.h.b16 %v4507
  %v5146 = vunpack.c.l.b16 %v4508
  %v5147 = vunpack.c.h.b16 %v4508
  %v5148 = vunpack.c.l.b16 %v4509
  %v5149 = vunpack.c.h.b16 %v4509
  %v5150 = vunpack.c.l.b16 %v4510
  %v5151 = vunpack.c.h.b16 %v4510
  %v5152 = vunpack.c.l.b16 %v4511
  %v5153 = vunpack.c.h.b16 %v4511
  %v5154 = vunpack.c.l.b16 %v4512
  %v5155 = vunpack.c.h.b16 %v4512
  %v5156 = vunpack.c.l.b16 %v4513
  %v5157 = vunpack.c.h.b16 %v4513
  %v5158 = vunpack.c.l.b16 %v4514
  %v5159 = vunpack.c.h.b16 %v4514
  %v5160 = vunpack.c.l.b16 %v4515
  %v5161 = vunpack.c.h.b16 %v4515
  %v5162 = vunpack.c.l.b16 %v4516
  %v5163 = vunpack.c.h.b16 %v4516
  %v5164 = vunpack.c.l.b16 %v4517
  %v5165 = vunpack.c.h.b16 %v4517
  %v5166 = vunpack.c.l.b16 %v4518
  %v5167 = vunpack.c.h.b16 %v4518
  %v5168 = vunpack.c.l.b16 %v4519
  %v5169 = vunpack.c.h.b16 %v4519
  %v5170 = vunpack.c.l.b16 %v4520
  %v5171 = vunpack.c.h.b16 %v4520
  %v5172 = vunpack.c.l.b16 %v4521
  %v5173 = vunpack.c.h.b16 %v4521
  %v5174 = vunpack.c.l.b16 %v4522
  %v5175 = vunpack.c.h.b16 %v4522
  %v5176 = vunpack.c.l.b16 %v4523
  %v5177 = vunpack.c.h.b16 %v4523
  %v5178 = vunpack.c.l.b16 %v4524
  %v5179 = vunpack.c.h.b16 %v4524
  %v5180 = vunpack.c.l.b16 %v4525
  %v5181 = vunpack.c.h.b16 %v4525
  %v5182 = vunpack.c.l.b16 %v4526
  %v5183 = vunpack.c.h.b16 %v4526
  %v5184 = vunpack.c.l.b16 %v4527
  %v5185 = vunpack.c.h.b16 %v4527
  %v5186 = vunpack.c.l.b16 %v4528
  %v5187 = vunpack.c.h.b16 %v4528
  %v5188 = vunpack.c.l.b16 %v4529
  %v5189 = vunpack.c.h.b16 %v4529
  %v5190 = vunpack.c.l.b16 %v4530
  %v5191 = vunpack.c.h.b16 %v4530
  %v5192 = vunpack.c.l.b16 %v4531
  %v5193 = vunpack.c.h.b16 %v4531
  %v5194 = vunpack.c.l.b16 %v4532
  %v5195 = vunpack.c.h.b16 %v4532
  %v5196 = vunpack.c.l.b16 %v4533
  %v5197 = vunpack.c.h.b16 %v4533
  %v5198 = vunpack.c.l.b16 %v4534
  %v5199 = vunpack.c.h.b16 %v4534
  %v5200 = vunpack.c.l.b16 %v4535
  %v5201 = vunpack.c.h.b16 %v4535
  %v5202 = vunpack.c.l.b16 %v4536
  %v5203 = vunpack.c.h.b16 %v4536
  %v5204 = vunpack.c.l.b16 %v4537
  %v5205 = vunpack.c.h.b16 %v4537
  %v5206 = vunpack.c.l.b16 %v4538
  %v5207 = vunpack.c.h.b16 %v4538
  %v5208 = vunpack.c.l.b16 %v4539
  %v5209 = vunpack.c.h.b16 %v4539
  %v5210 = vunpack.c.l.b16 %v4540
  %v5211 = vunpack.c.h.b16 %v4540
  %v5212 = vunpack.c.l.b16 %v4541
  %v5213 = vunpack.c.h.b16 %v4541
  %v5214 = vunpack.c.l.b16 %v4542
  %v5215 = vunpack.c.h.b16 %v4542
  %v5216 = vunpack.c.l.b16 %v4543
  %v5217 = vunpack.c.h.b16 %v4543
  %v5218 = vunpack.c.l.b16 %v4544
  %v5219 = vunpack.c.h.b16 %v4544
  %v5220 = vunpack.c.l.b16 %v4545
  %v5221 = vunpack.c.h.b16 %v4545
  %v5222 = vunpack.c.l.b16 %v4546
  %v5223 = vunpack.c.h.b16 %v4546
  %v5224 = vunpack.c.l.b16 %v4547
  %v5225 = vunpack.c.h.b16 %v4547
  %v5226 = vunpack.c.l.b16 %v4548
  %v5227 = vunpack.c.h.b16 %v4548
  %v5228 = vunpack.c.l.b16 %v4549
  %v5229 = vunpack.c.h.b16 %v4549
  %v5230 = vunpack.c.l.b16 %v4550
  %v5231 = vunpack.c.h.b16 %v4550
  %v5232 = vunpack.c.l.b16 %v4551
  %v5233 = vunpack.c.h.b16 %v4551
  %v5234 = vunpack.c.l.b16 %v4552
  %v5235 = vunpack.c.h.b16 %v4552
  %v5236 = vunpack.c.l.b16 %v4553
  %v5237 = vunpack.c.h.b16 %v4553
  %v5238 = vunpack.c.l.b16 %v4554
  %v5239 = vunpack.c.h.b16 %v4554
  %v5240 = vunpack.c.l.b16 %v4555
  %v5241 = vunpack.c.h.b16 %v4555
  %v5242 = vunpack.c.l.b16 %v4556
  %v5243 = vunpack.c.h.b16 %v4556
  %v5244 = vunpack.c.l.b16 %v4557
  %v5245 = vunpack.c.h.b16 %v4557
  %v5246 = vunpack.c.l.b16 %v4558
  %v5247 = vunpack.c.h.b16 %v4558
  %v5248 = vunpack.c.l.b16 %v4559
  %v5249 = vunpack.c.h.b16 %v4559
  %v5250 = vunpack.c.l.b16 %v4560
  %v5251 = vunpack.c.h.b16 %v4560
  %v5252 = vunpack.c.l.b16 %v4561
  %v5253 = vunpack.c.h.b16 %v4561
  %v5254 = vunpack.c.l.b16 %v4562
  %v5255 = vunpack.c.h.b16 %v4562
  %v5256 = vunpack.c.l.b16 %v4563
  %v5257 = vunpack.c.h.b16 %v4563
  %v5258 = vunpack.c.l.b16 %v4564
  %v5259 = vunpack.c.h.b16 %v4564
  %v5260 = vunpack.c.l.b16 %v4565
  %v5261 = vunpack.c.h.b16 %v4565
  %v5262 = vunpack.c.l.b16 %v4566
  %v5263 = vunpack.c.h.b16 %v4566
  %v5264 = vunpack.c.l.b16 %v4567
  %v5265 = vunpack.c.h.b16 %v4567
  %v5266 = vunpack.c.l.b16 %v4568
  %v5267 = vunpack.c.h.b16 %v4568
  %v5268 = vunpack.c.l.b16 %v4569
  %v5269 = vunpack.c.h.b16 %v4569
  %v5270 = vunpack.c.l.b16 %v4570
  %v5271 = vunpack.c.h.b16 %v4570
  %v5272 = vunpack.c.l.b16 %v4571
  %v5273 = vunpack.c.h.b16 %v4571
  %v5274 = vunpack.c.l.b16 %v4572
  %v5275 = vunpack.c.h.b16 %v4572
  %v5276 = vunpack.c.l.b16 %v4573
  %v5277 = vunpack.c.h.b16 %v4573
  %v5278 = vunpack.c.l.b16 %v4574
  %v5279 = vunpack.c.h.b16 %v4574
  %v5280 = vunpack.c.l.b16 %v4575
  %v5281 = vunpack.c.h.b16 %v4575
  %v5282 = vunpack.c.l.b16 %v4576
  %v5283 = vunpack.c.h.b16 %v4576
  %v5284 = vunpack.c.l.b16 %v4577
  %v5285 = vunpack.c.h.b16 %v4577
  %v5286 = vunpack.c.l.b16 %v4578
  %v5287 = vunpack.c.h.b16 %v4578
  %v5288 = vunpack.c.l.b16 %v4579
  %v5289 = vunpack.c.h.b16 %v4579
  %v5290 = vunpack.c.l.b16 %v4580
  %v5291 = vunpack.c.h.b16 %v4580
  %v5292 = vunpack.c.l.b16 %v4581
  %v5293 = vunpack.c.h.b16 %v4581
  %v5294 = vunpack.c.l.b16 %v4582
  %v5295 = vunpack.c.h.b16 %v4582
  %v5296 = vunpack.c.l.b16 %v4583
  %v5297 = vunpack.c.h.b16 %v4583
  %v5298 = vunpack.c.l.b16 %v4584
  %v5299 = vunpack.c.h.b16 %v4584
  %v5300 = vunpack.c.l.b16 %v4585
  %v5301 = vunpack.c.h.b16 %v4585
  %v5302 = vunpack.c.l.b16 %v4586
  %v5303 = vunpack.c.h.b16 %v4586
  %v5304 = vunpack.c.l.b16 %v4587
  %v5305 = vunpack.c.h.b16 %v4587
  %v5306 = vunpack.c.l.b16 %v4588
  %v5307 = vunpack.c.h.b16 %v4588
  %v5308 = vunpack.c.l.b16 %v4589
  %v5309 = vunpack.c.h.b16 %v4589
  %v5310 = vunpack.c.l.b16 %v4590
  %v5311 = vunpack.c.h.b16 %v4590
  %v5312 = vunpack.c.l.b16 %v4591
  %v5313 = vunpack.c.h.b16 %v4591
  %v5314 = vunpack.c.l.b16 %v4592
  %v5315 = vunpack.c.h.b16 %v4592
  %v5316 = vunpack.c.l.b16 %v4593
  %v5317 = vunpack.c.h.b16 %v4593
  %v5318 = vunpack.c.l.b16 %v4594
  %v5319 = vunpack.c.h.b16 %v4594
  %v5320 = vunpack.c.l.b16 %v4595
  %v5321 = vunpack.c.h.b16 %v4595
  %v5322 = vunpack.c.l.b16 %v4596
  %v5323 = vunpack.c.h.b16 %v4596
  %v5324 = vunpack.c.l.b16 %v4597
  %v5325 = vunpack.c.h.b16 %v4597
  %v5326 = vunpack.c.l.b16 %v4598
  %v5327 = vunpack.c.h.b16 %v4598
  %v5328 = vunpack.c.l.b16 %v4599
  %v5329 = vunpack.c.h.b16 %v4599
  %v5330 = vunpack.c.l.b16 %v4600
  %v5331 = vunpack.c.h.b16 %v4600
  %v5332 = vunpack.c.l.b16 %v4601
  %v5333 = vunpack.c.h.b16 %v4601
  %v5334 = vunpack.c.l.b16 %v4602
  %v5335 = vunpack.c.h.b16 %v4602
  %v5336 = vunpack.c.l.b16 %v4603
  %v5337 = vunpack.c.h.b16 %v4603
  %v5338 = vunpack.c.l.b16 %v4604
  %v5339 = vunpack.c.h.b16 %v4604
  %v5340 = vunpack.c.l.b16 %v4605
  %v5341 = vunpack.c.h.b16 %v4605
  %v5342 = vunpack.c.l.b16 %v4606
  %v5343 = vunpack.c.h.b16 %v4606
  %v5344 = vunpack.c.l.b16 %v4607
  %v5345 = vunpack.c.h.b16 %v4607
  %v5346 = vunpack.c.l.b16 %v4608
  %v5347 = vunpack.c.h.b16 %v4608
  %v5348 = vunpack.c.l.b16 %v4609
  %v5349 = vunpack.c.h.b16 %v4609
  %v5350 = vunpack.c.l.b16 %v4610
  %v5351 = vunpack.c.h.b16 %v4610
  %v5352 = vunpack.c.l.b16 %v4611
  %v5353 = vunpack.c.h.b16 %v4611
  %v5354 = vunpack.c.l.b16 %v4612
  %v5355 = vunpack.c.h.b16 %v4612
  %v5356 = vunpack.c.l.b16 %v4613
  %v5357 = vunpack.c.h.b16 %v4613
  %v5358 = vunpack.c.l.b16 %v4614
  %v5359 = vunpack.c.h.b16 %v4614
  %v5360 = vunpack.c.l.b16 %v4615
  %v5361 = vunpack.c.h.b16 %v4615
  %v5362 = vunpack.c.l.b16 %v4616
  %v5363 = vunpack.c.h.b16 %v4616
  %v5364 = vunpack.c.l.b16 %v4617
  %v5365 = vunpack.c.h.b16 %v4617
  %v5366 = vunpack.c.l.b16 %v4618
  %v5367 = vunpack.c.h.b16 %v4618
  %v5368 = vunpack.c.l.b16 %v4619
  %v5369 = vunpack.c.h.b16 %v4619
  %v5370 = vunpack.c.l.b16 %v4620
  %v5371 = vunpack.c.h.b16 %v4620
  %v5372 = vunpack.c.l.b16 %v4621
  %v5373 = vunpack.c.h.b16 %v4621
  %v5374 = vunpack.c.l.b16 %v4622
  %v5375 = vunpack.c.h.b16 %v4622
  %v5376 = vunpack.c.l.b16 %v4623
  %v5377 = vunpack.c.h.b16 %v4623
  %v5378 = vunpack.c.l.b16 %v4624
  %v5379 = vunpack.c.h.b16 %v4624
  %v5380 = vunpack.c.l.b16 %v4625
  %v5381 = vunpack.c.h.b16 %v4625
  %v5382 = vunpack.c.l.b16 %v4626
  %v5383 = vunpack.c.h.b16 %v4626
  %v5384 = vunpack.c.l.b16 %v4627
  %v5385 = vunpack.c.h.b16 %v4627
  %v5386 = vunpack.c.l.b16 %v4628
  %v5387 = vunpack.c.h.b16 %v4628
  %v5388 = vunpack.c.l.b16 %v4629
  %v5389 = vunpack.c.h.b16 %v4629
  %v5390 = vunpack.c.l.b16 %v4630
  %v5391 = vunpack.c.h.b16 %v4630
  %v5392 = vunpack.c.l.b16 %v4631
  %v5393 = vunpack.c.h.b16 %v4631
  %v5394 = vunpack.c.l.b16 %v4632
  %v5395 = vunpack.c.h.b16 %v4632
  %v5396 = vunpack.c.l.b16 %v4633
  %v5397 = vunpack.c.h.b16 %v4633
  %v5398 = vunpack.c.l.b16 %v4634
  %v5399 = vunpack.c.h.b16 %v4634
  %v5400 = vunpack.c.l.b16 %v4635
  %v5401 = vunpack.c.h.b16 %v4635
  %v5402 = vunpack.c.l.b16 %v4636
  %v5403 = vunpack.c.h.b16 %v4636
  %v5404 = vunpack.c.l.b16 %v4637
  %v5405 = vunpack.c.h.b16 %v4637
  %v5406 = vunpack.c.l.b16 %v4638
  %v5407 = vunpack.c.h.b16 %v4638
  %v5408 = vunpack.c.l.b16 %v4639
  %v5409 = vunpack.c.h.b16 %v4639
  %v5410 = vunpack.c.l.b16 %v4640
  %v5411 = vunpack.c.h.b16 %v4640
  %v5412 = vunpack.c.l.b16 %v4641
  %v5413 = vunpack.c.h.b16 %v4641
  %v5414 = vunpack.c.l.b16 %v4642
  %v5415 = vunpack.c.h.b16 %v4642
  %v5416 = vunpack.c.l.b16 %v4643
  %v5417 = vunpack.c.h.b16 %v4643
  %v5418 = vunpack.c.l.b16 %v4644
  %v5419 = vunpack.c.h.b16 %v4644
  %v5420 = vunpack.c.l.b16 %v4645
  %v5421 = vunpack.c.h.b16 %v4645
  %v5422 = vunpack.c.l.b16 %v4646
  %v5423 = vunpack.c.h.b16 %v4646
  %v5424 = vunpack.c.l.b16 %v4647
  %v5425 = vunpack.c.h.b16 %v4647
  %v5426 = vunpack.c.l.b16 %v4648
  %v5427 = vunpack.c.h.b16 %v4648
  %v5428 = vunpack.c.l.b16 %v4649
  %v5429 = vunpack.c.h.b16 %v4649
  %v5430 = vunpack.c.l.b16 %v4650
  %v5431 = vunpack.c.h.b16 %v4650
  %v5432 = vunpack.c.l.b16 %v4651
  %v5433 = vunpack.c.h.b16 %v4651
  %v5434 = vunpack.c.l.b16 %v4652
  %v5435 = vunpack.c.h.b16 %v4652
  %v5436 = vunpack.c.l.b16 %v4653
  %v5437 = vunpack.c.h.b16 %v4653
  %v5438 = vunpack.c.l.b16 %v4654
  %v5439 = vunpack.c.h.b16 %v4654
  %v5440 = vunpack.c.l.b16 %v4655
  %v5441 = vunpack.c.h.b16 %v4655
  %v5442 = vunpack.c.l.b16 %v4656
  %v5443 = vunpack.c.h.b16 %v4656
  %v5444 = vunpack.c.l.b16 %v4657
  %v5445 = vunpack.c.h.b16 %v4657
  %v5446 = vunpack.c.l.b16 %v4658
  %v5447 = vunpack.c.h.b16 %v4658
  %v5448 = vunpack.c.l.b16 %v4659
  %v5449 = vunpack.c.h.b16 %v4659
  %v5450 = vunpack.c.l.b16 %v4660
  %v5451 = vunpack.c.h.b16 %v4660
  %v5452 = vunpack.c.l.b16 %v4661
  %v5453 = vunpack.c.h.b16 %v4661
  %v5454 = vunpack.c.l.b16 %v4662
  %v5455 = vunpack.c.h.b16 %v4662
  %v5456 = vunpack.c.l.b16 %v4663
  %v5457 = vunpack.c.h.b16 %v4663
  %v5458 = vunpack.c.l.b16 %v4664
  %v5459 = vunpack.c.h.b16 %v4664
  %v5460 = vunpack.c.l.b16 %v4665
  %v5461 = vunpack.c.h.b16 %v4665
  %v5462 = vunpack.c.l.b16 %v4666
  %v5463 = vunpack.c.h.b16 %v4666
  %v5464 = vunpack.c.l.b16 %v4667
  %v5465 = vunpack.c.h.b16 %v4667
  %v5466 = vunpack.c.l.b16 %v4668
  %v5467 = vunpack.c.h.b16 %v4668
  %v5468 = vunpack.c.l.b16 %v4669
  %v5469 = vunpack.c.h.b16 %v4669
  %v5470 = vunpack.c.l.b16 %v4670
  %v5471 = vunpack.c.h.b16 %v4670
  %v5472 = vunpack.c.l.b16 %v4671
  %v5473 = vunpack.c.h.b16 %v4671
  %v5474 = vunpack.c.l.b16 %v4672
  %v5475 = vunpack.c.h.b16 %v4672
  %v5476 = vunpack.c.l.b16 %v4673
  %v5477 = vunpack.c.h.b16 %v4673
  %v5478 = vunpack.c.l.b16 %v4674
  %v5479 = vunpack.c.h.b16 %v4674
  %v5480 = vunpack.c.l.b16 %v4675
  %v5481 = vunpack.c.h.b16 %v4675
  %v5482 = vunpack.c.l.b16 %v4676
  %v5483 = vunpack.c.h.b16 %v4676
  %v5484 = vunpack.c.l.b16 %v4677
  %v5485 = vunpack.c.h.b16 %v4677
  %v5486 = vunpack.c.l.b16 %v4678
  %v5487 = vunpack.c.h.b16 %v4678
  %v5488 = vunpack.c.l.b16 %v4679
  %v5489 = vunpack.c.h.b16 %v4679
  %v5490 = vunpack.c.l.b16 %v4680
  %v5491 = vunpack.c.h.b16 %v4680
  %v5492 = vunpack.c.l.b16 %v4681
  %v5493 = vunpack.c.h.b16 %v4681
  %v5494 = vunpack.c.l.b16 %v4682
  %v5495 = vunpack.c.h.b16 %v4682
  %v5496 = vunpack.c.l.b16 %v4683
  %v5497 = vunpack.c.h.b16 %v4683
  %v5498 = vunpack.c.l.b16 %v4684
  %v5499 = vunpack.c.h.b16 %v4684
  %v5500 = vunpack.c.l.b16 %v4685
  %v5501 = vunpack.c.h.b16 %v4685
  %v5502 = vunpack.c.l.b16 %v4686
  %v5503 = vunpack.c.h.b16 %v4686
  %v5504 = vunpack.c.l.b16 %v4687
  %v5505 = vunpack.c.h.b16 %v4687
  %v5506 = vunpack.c.l.b16 %v4688
  %v5507 = vunpack.c.h.b16 %v4688
  %v5508 = vunpack.c.l.b16 %v4689
  %v5509 = vunpack.c.h.b16 %v4689
  %v5510 = vunpack.c.l.b16 %v4690
  %v5511 = vunpack.c.h.b16 %v4690
  %v5512 = vunpack.c.l.b16 %v4691
  %v5513 = vunpack.c.h.b16 %v4691
  %v5514 = vunpack.c.l.b16 %v4692
  %v5515 = vunpack.c.h.b16 %v4692
  %v5516 = vunpack.c.l.b16 %v4693
  %v5517 = vunpack.c.h.b16 %v4693
  %v5518 = vunpack.c.l.b16 %v4694
  %v5519 = vunpack.c.h.b16 %v4694
  %v5520 = vunpack.c.l.b16 %v4695
  %v5521 = vunpack.c.h.b16 %v4695
  %v5522 = vunpack.c.l.b16 %v4696
  %v5523 = vunpack.c.h.b16 %v4696
  %v5524 = vunpack.c.l.b16 %v4697
  %v5525 = vunpack.c.h.b16 %v4697
  %v5526 = vunpack.c.l.b16 %v4698
  %v5527 = vunpack.c.h.b16 %v4698
  %v5528 = vunpack.c.l.b16 %v4699
  %v5529 = vunpack.c.h.b16 %v4699
  %v5530 = vunpack.c.l.b16 %v4700
  %v5531 = vunpack.c.h.b16 %v4700
  %v5532 = vunpack.c.l.b16 %v4701
  %v5533 = vunpack.c.h.b16 %v4701
  %v5534 = vunpack.c.l.b16 %v4702
  %v5535 = vunpack.c.h.b16 %v4702
  %v5536 = vunpack.c.l.b16 %v4703
  %v5537 = vunpack.c.h.b16 %v4703
  %v5538 = vunpack.c.l.b16 %v4704
  %v5539 = vunpack.c.h.b16 %v4704
  %v5540 = vunpack.c.l.b16 %v4705
  %v5541 = vunpack.c.h.b16 %v4705
  %v5542 = vunpack.c.l.b16 %v4706
  %v5543 = vunpack.c.h.b16 %v4706
  %v5544 = vunpack.c.l.b16 %v4707
  %v5545 = vunpack.c.h.b16 %v4707
  %v5546 = vunpack.c.l.b16 %v4708
  %v5547 = vunpack.c.h.b16 %v4708
  %v5548 = vunpack.c.l.b16 %v4709
  %v5549 = vunpack.c.h.b16 %v4709
  %v5550 = vunpack.c.l.b16 %v4710
  %v5551 = vunpack.c.h.b16 %v4710
  %v5552 = vunpack.c.l.b16 %v4711
  %v5553 = vunpack.c.h.b16 %v4711
  %v5554 = vunpack.c.l.b16 %v4712
  %v5555 = vunpack.c.h.b16 %v4712
  %v5556 = vunpack.c.l.b16 %v4713
  %v5557 = vunpack.c.h.b16 %v4713
  %v5558 = vunpack.c.l.b16 %v4714
  %v5559 = vunpack.c.h.b16 %v4714
  %v5560 = vunpack.c.l.b16 %v4715
  %v5561 = vunpack.c.h.b16 %v4715
  %v5562 = vunpack.c.l.b16 %v4716
  %v5563 = vunpack.c.h.b16 %v4716
  %v5564 = vunpack.c.l.b16 %v4717
  %v5565 = vunpack.c.h.b16 %v4717
  %v5566 = vunpack.c.l.b16 %v4718
  %v5567 = vunpack.c.h.b16 %v4718
  %v5568 = vunpack.c.l.b16 %v4719
  %v5569 = vunpack.c.h.b16 %v4719
  %v5570 = vunpack.c.l.b16 %v4720
  %v5571 = vunpack.c.h.b16 %v4720
  %v5572 = vunpack.c.l.b16 %v4721
  %v5573 = vunpack.c.h.b16 %v4721
  %v5574 = vunpack.c.l.b16 %v4722
  %v5575 = vunpack.c.h.b16 %v4722
  %v5576 = vunpack.c.l.b16 %v4723
  %v5577 = vunpack.c.h.b16 %v4723
  %v5578 = vunpack.c.l.b16 %v4724
  %v5579 = vunpack.c.h.b16 %v4724
  %v5580 = vunpack.c.l.b16 %v4725
  %v5581 = vunpack.c.h.b16 %v4725
  %v5582 = vunpack.c.l.b16 %v4726
  %v5583 = vunpack.c.h.b16 %v4726
  %v5584 = vunpack.c.l.b16 %v4727
  %v5585 = vunpack.c.h.b16 %v4727
  %v5586 = vunpack.c.l.b16 %v4728
  %v5587 = vunpack.c.h.b16 %v4728
  %v5588 = vunpack.c.l.b16 %v4729
  %v5589 = vunpack.c.h.b16 %v4729
  %v5590 = vunpack.c.l.b16 %v4730
  %v5591 = vunpack.c.h.b16 %v4730
  %v5592 = vunpack.c.l.b16 %v4731
  %v5593 = vunpack.c.h.b16 %v4731
  %v5594 = vunpack.c.l.b16 %v4732
  %v5595 = vunpack.c.h.b16 %v4732
  %v5596 = vunpack.c.l.b16 %v4733
  %v5597 = vunpack.c.h.b16 %v4733
  %v5598 = vunpack.c.l.b16 %v4734
  %v5599 = vunpack.c.h.b16 %v4734
  %v5600 = vunpack.c.l.b16 %v4735
  %v5601 = vunpack.c.h.b16 %v4735
  %v5602 = vunpack.c.l.b16 %v4736
  %v5603 = vunpack.c.h.b16 %v4736
  %v5604 = vunpack.c.l.b16 %v4737
  %v5605 = vunpack.c.h.b16 %v4737
  %v5606 = vunpack.c.l.b16 %v4738
  %v5607 = vunpack.c.h.b16 %v4738
  %v5608 = vunpack.c.l.b16 %v4739
  %v5609 = vunpack.c.h.b16 %v4739
  %v5610 = vunpack.c.l.b16 %v4740
  %v5611 = vunpack.c.h.b16 %v4740
  %v5612 = vunpack.c.l.b16 %v4741
  %v5613 = vunpack.c.h.b16 %v4741
  %v5614 = vunpack.c.l.b16 %v4742
  %v5615 = vunpack.c.h.b16 %v4742
  %v5616 = vunpack.c.l.b16 %v4743
  %v5617 = vunpack.c.h.b16 %v4743
  %v5618 = vunpack.c.l.b16 %v4744
  %v5619 = vunpack.c.h.b16 %v4744
  %v5620 = vunpack.c.l.b16 %v4745
  %v5621 = vunpack.c.h.b16 %v4745
  %v5622 = vunpack.c.l.b16 %v4746
  %v5623 = vunpack.c.h.b16 %v4746
  %v5624 = vunpack.c.l.b16 %v4747
  %v5625 = vunpack.c.h.b16 %v4747
  %v5626 = vunpack.c.l.b16 %v4748
  %v5627 = vunpack.c.h.b16 %v4748
  %v5628 = vunpack.c.l.b16 %v4749
  %v5629 = vunpack.c.h.b16 %v4749
  %v5630 = vunpack.c.l.b16 %v4750
  %v5631 = vunpack.c.h.b16 %v4750
  %v5632 = vunpack.c.l.b16 %v4751
  %v5633 = vunpack.c.h.b16 %v4751
  %v5634 = vpack.c.b16 %v5050, %v5046
  %v5635 = vpack.c.b16 %v5051, %v5047
  %v5636 = vpack.c.b16 %v5052, %v5048
  %v5637 = vpack.c.b16 %v5053, %v5049
  %v5638 = vpack.c.b16 %v5058, %v5054
  %v5639 = vpack.c.b16 %v5059, %v5055
  %v5640 = vpack.c.b16 %v5060, %v5056
  %v5641 = vpack.c.b16 %v5061, %v5057
  %v5642 = vpack.c.b16 %v5066, %v5062
  %v5643 = vpack.c.b16 %v5067, %v5063
  %v5644 = vpack.c.b16 %v5068, %v5064
  %v5645 = vpack.c.b16 %v5069, %v5065
  %v5646 = vpack.c.b16 %v5074, %v5070
  %v5647 = vpack.c.b16 %v5075, %v5071
  %v5648 = vpack.c.b16 %v5076, %v5072
  %v5649 = vpack.c.b16 %v5077, %v5073
  %v5650 = vpack.c.b16 %v5082, %v5078
  %v5651 = vpack.c.b16 %v5083, %v5079
  %v5652 = vpack.c.b16 %v5084, %v5080
  %v5653 = vpack.c.b16 %v5085, %v5081
  %v5654 = vpack.c.b16 %v5090, %v5086
  %v5655 = vpack.c.b16 %v5091, %v5087
  %v5656 = vpack.c.b16 %v5092, %v5088
  %v5657 = vpack.c.b16 %v5093, %v5089
  %v5658 = vpack.c.b16 %v5098, %v5094
  %v5659 = vpack.c.b16 %v5099, %v5095
  %v5660 = vpack.c.b16 %v5100, %v5096
  %v5661 = vpack.c.b16 %v5101, %v5097
  %v5662 = vpack.c.b16 %v5106, %v5102
  %v5663 = vpack.c.b16 %v5107, %v5103
  %v5664 = vpack.c.b16 %v5108, %v5104
  %v5665 = vpack.c.b16 %v5109, %v5105
  %v5666 = vpack.c.b16 %v5114, %v5110
  %v5667 = vpack.c.b16 %v5115, %v5111
  %v5668 = vpack.c.b16 %v5116, %v5112
  %v5669 = vpack.c.b16 %v5117, %v5113
  %v5670 = vpack.c.b16 %v5122, %v5118
  %v5671 = vpack.c.b16 %v5123, %v5119
  %v5672 = vpack.c.b16 %v5124, %v5120
  %v5673 = vpack.c.b16 %v5125, %v5121
  %v5674 = vpack.c.b16 %v5130, %v5126
  %v5675 = vpack.c.b16 %v5131, %v5127
  %v5676 = vpack.c.b16 %v5132, %v5128
  %v5677 = vpack.c.b16 %v5133, %v5129
  %v5678 = vpack.c.b16 %v5138, %v5134
  %v5679 = vpack.c.b16 %v5139, %v5135
  %v5680 = vpack.c.b16 %v5140, %v5136
  %v5681 = vpack.c.b16 %v5141, %v5137
  %v5682 = vpack.c.b16 %v5146, %v5142
  %v5683 = vpack.c.b16 %v5147, %v5143
  %v5684 = vpack.c.b16 %v5148, %v5144
  %v5685 = vpack.c.b16 %v5149, %v5145
  %v5686 = vpack.c.b16 %v5154, %v5150
  %v5687 = vpack.c.b16 %v5155, %v5151
  %v5688 = vpack.c.b16 %v5156, %v5152
  %v5689 = vpack.c.b16 %v5157, %v5153
  %v5690 = vpack.c.b16 %v5162, %v5158
  %v5691 = vpack.c.b16 %v5163, %v5159
  %v5692 = vpack.c.b16 %v5164, %v5160
  %v5693 = vpack.c.b16 %v5165, %v5161
  %v5694 = vpack.c.b16 %v5170, %v5166
  %v5695 = vpack.c.b16 %v5171, %v5167
  %v5696 = vpack.c.b16 %v5172, %v5168
  %v5697 = vpack.c.b16 %v5173, %v5169
  %v5698 = vpack.c.b16 %v5178, %v5174
  %v5699 = vpack.c.b16 %v5179, %v5175
  %v5700 = vpack.c.b16 %v5180, %v5176
  %v5701 = vpack.c.b16 %v5181, %v5177
  %v5702 = vpack.c.b16 %v5186, %v5182
  %v5703 = vpack.c.b16 %v5187, %v5183
  %v5704 = vpack.c.b16 %v5188, %v5184
  %v5705 = vpack.c.b16 %v5189, %v5185
  %v5706 = vpack.c.b16 %v5194, %v5190
  %v5707 = vpack.c.b16 %v5195, %v5191
  %v5708 = vpack.c.b16 %v5196, %v5192
  %v5709 = vpack.c.b16 %v5197, %v5193
  %v5710 = vpack.c.b16 %v5202, %v5198
  %v5711 = vpack.c.b16 %v5203, %v5199
  %v5712 = vpack.c.b16 %v5204, %v5200
  %v5713 = vpack.c.b16 %v5205, %v5201
  %v5714 = vpack.c.b16 %v5210, %v5206
  %v5715 = vpack.c.b16 %v5211, %v5207
  %v5716 = vpack.c.b16 %v5212, %v5208
  %v5717 = vpack.c.b16 %v5213, %v5209
  %v5718 = vpack.c.b16 %v5218, %v5214
  %v5719 = vpack.c.b16 %v5219, %v5215
  %v5720 = vpack.c.b16 %v5220, %v5216
  %v5721 = vpack.c.b16 %v5221, %v5217
  %v5722 = vpack.c.b16 %v5226, %v5222
  %v5723 = vpack.c.b16 %v5227, %v5223
  %v5724 = vpack.c.b16 %v5228, %v5224
  %v5725 = vpack.c.b16 %v5229, %v5225
  %v5726 = vpack.c.b16 %v5234, %v5230
  %v5727 = vpack.c.b16 %v5235, %v5231
  %v5728 = vpack.c.b16 %v5236, %v5232
  %v5729 = vpack.c.b16 %v5237, %v5233
  %v5730 = vpack.c.b16 %v5242, %v5238
  %v5731 = vpack.c.b16 %v5243, %v5239
  %v5732 = vpack.c.b16 %v5244, %v5240
  %v5733 = vpack.c.b16 %v5245, %v5241
  %v5734 = vpack.c.b16 %v5250, %v5246
  %v5735 = vpack.c.b16 %v5251, %v5247
  %v5736 = vpack.c.b16 %v5252, %v5248
  %v5737 = vpack.c.b16 %v5253, %v5249
  %v5738 = vpack.c.b16 %v5258, %v5254
  %v5739 = vpack.c.b16 %v5259, %v5255
  %v5740 = vpack.c.b16 %v5260, %v5256
  %v5741 = vpack.c.b16 %v5261, %v5257
  %v5742 = vpack.c.b16 %v5266, %v5262
  %v5743 = vpack.c.b16 %v5267, %v5263
  %v5744 = vpack.c.b16 %v5268, %v5264
  %v5745 = vpack.c.b16 %v5269, %v5265
  %v5746 = vpack.c.b16 %v5274, %v5270
  %v5747 = vpack.c.b16 %v5275, %v5271
  %v5748 = vpack.c.b16 %v5276, %v5272
  %v5749 = vpack.c.b16 %v5277, %v5273
  %v5750 = vpack.c.b16 %v5282, %v5278
  %v5751 = vpack.c.b16 %v5283, %v5279
  %v5752 = vpack.c.b16 %v5284, %v5280
  %v5753 = vpack.c.b16 %v5285, %v5281
  %v5754 = vpack.c.b16 %v5290, %v5286
  %v5755 = vpack.c.b16 %v5291, %v5287
  %v5756 = vpack.c.b16 %v5292, %v5288
  %v5757 = vpack.c.b16 %v5293, %v5289
  %v5758 = vpack.c.b16 %v5298, %v5294
  %v5759 = vpack.c.b16 %v5299, %v5295
  %v5760 = vpack.c.b16 %v5300, %v5296
  %v5761 = vpack.c.b16 %v5301, %v5297
  %v5762 = vpack.c.b16 %v5306, %v5302
  %v5763 = vpack.c.b16 %v5307, %v5303
  %v5764 = vpack.c.b16 %v5308, %v5304
  %v5765 = vpack.c.b16 %v5309, %v5305
  %v5766 = vpack.c.b16 %v5314, %v5310
  %v5767 = vpack.c.b16 %v5315, %v5311
  %v5768 = vpack.c.b16 %v5316, %v5312
  %v5769 = vpack.c.b16 %v5317, %v5313
  %v5770 = vpack.c.b16 %v5322, %v5318
  %v5771 = vpack.c.b16 %v5323, %v5319
  %v5772 = vpack.c.b16 %v5324, %v5320
  %v5773 = vpack.c.b16 %v5325, %v5321
  %v5774 = vpack.c.b16 %v5330, %v5326
  %v5775 = vpack.c.b16 %v5331, %v5327
  %v5776 = vpack.c.b16 %v5332, %v5328
  %v5777 = vpack.c.b16 %v5333, %v5329
  %v5778 = vpack.c.b16 %v5338, %v5334
  %v5779 = vpack.c.b16 %v5339, %v5335
  %v5780 = vpack.c.b16 %v5340, %v5336
  %v5781 = vpack.c.b16 %v5341, %v5337
  %v5782 = vpack.c.b16 %v5346, %v5342
  %v5783 = vpack.c.b16 %v5347, %v5343
  %v5784 = vpack.c.b16 %v5348, %v5344
  %v5785 = vpack.c.b16 %v5349, %v5345
  %v5786 = vpack.c.b16 %v5354, %v5350
  %v5787 = vpack.c.b16 %v5355, %v5351
  %v5788 = vpack.c.b16 %v5356, %v5352
  %v5789 = vpack.c.b16 %v5357, %v5353
  %v5790 = vpack.c.b16 %v5362, %v5358
  %v5791 = vpack.c.b16 %v5363, %v5359
  %v5792 = vpack.c.b16 %v5364, %v5360
  %v5793 = vpack.c.b16 %v5365, %v5361
  %v5794 = vpack.c.b16 %v5370, %v5366
  %v5795 = vpack.c.b16 %v5371, %v5367
  %v5796 = vpack.c.b16 %v5372, %v5368
  %v5797 = vpack.c.b16 %v5373, %v5369
  %v5798 = vpack.c.b16 %v5378, %v5374
  %v5799 = vpack.c.b16 %v5379, %v5375
  %v5800 = vpack.c.b16 %v5380, %v5376
  %v5801 = vpack.c.b16 %v5381, %v5377
  %v5802 = vpack.c.b16 %v5386, %v5382
  %v5803 = vpack.c.b16 %v5387, %v5383
  %v5804 = vpack.c.b16 %v5388, %v5384
  %v5805 = vpack.c.b16 %v5389, %v5385
  %v5806 = vpack.c.b16 %v5394, %v5390
  %v5807 = vpack.c.b16 %v5395, %v5391
  %v5808 = vpack.c.b16 %v5396, %v5392
  %v5809 = vpack.c.b16 %v5397, %v5393
  %v5810 = vpack.c.b16 %v5402, %v5398
  %v5811 = vpack.c.b16 %v5403, %v5399
  %v5812 = vpack.c.b16 %v5404, %v5400
  %v5813 = vpack.c.b16 %v5405, %v5401
  %v5814 = vpack.c.b16 %v5410, %v5406
  %v5815 = vpack.c.b16 %v5411, %v5407
  %v5816 = vpack.c.b16 %v5412, %v5408
  %v5817 = vpack.c.b16 %v5413, %v5409
  %v5818 = vpack.c.b16 %v5418, %v5414
  %v5819 = vpack.c.b16 %v5419, %v5415
  %v5820 = vpack.c.b16 %v5420, %v5416
  %v5821 = vpack.c.b16 %v5421, %v5417
  %v5822 = vpack.c.b16 %v5426, %v5422
  %v5823 = vpack.c.b16 %v5427, %v5423
  %v5824 = vpack.c.b16 %v5428, %v5424
  %v5825 = vpack.c.b16 %v5429, %v5425
  %v5826 = vpack.c.b16 %v5434, %v5430
  %v5827 = vpack.c.b16 %v5435, %v5431
  %v5828 = vpack.c.b16 %v5436, %v5432
  %v5829 = vpack.c.b16 %v5437, %v5433
  %v5830 = vpack.c.b16 %v5442, %v5438
  %v5831 = vpack.c.b16 %v5443, %v5439
  %v5832 = vpack.c.b16 %v5444, %v5440
  %v5833 = vpack.c.b16 %v5445, %v5441
  %v5834 = vpack.c.b16 %v5450, %v5446
  %v5835 = vpack.c.b16 %v5451, %v5447
  %v5836 = vpack.c.b16 %v5452, %v5448
  %v5837 = vpack.c.b16 %v5453, %v5449
  %v5838 = vpack.c.b16 %v5458, %v5454
  %v5839 = vpack.c.b16 %v5459, %v5455
  %v5840 = vpack.c.b16 %v5460, %v5456
  %v5841 = vpack.c.b16 %v5461, %v5457
  %v5842 = vpack.c.b16 %v5466, %v5462
  %v5843 = vpack.c.b16 %v5467, %v5463
  %v5844 = vpack.c.b16 %v5468, %v5464
  %v5845 = vpack.c.b16 %v5469, %v5465
  %v5846 = vpack.c.b16 %v5474, %v5470
  %v5847 = vpack.c.b16 %v5475, %v5471
  %v5848 = vpack.c.b16 %v5476, %v5472
  %v5849 = vpack.c.b16 %v5477, %v5473
  %v5850 = vpack.c.b16 %v5482, %v5478
  %v5851 = vpack.c.b16 %v5483, %v5479
  %v5852 = vpack.c.b16 %v5484, %v5480
  %v5853 = vpack.c.b16 %v5485, %v5481
  %v5854 = vpack.c.b16 %v5490, %v5486
  %v5855 = vpack.c.b16 %v5491, %v5487
  %v5856 = vpack.c.b16 %v5492, %v5488
  %v5857 = vpack.c.b16 %v5493, %v5489
  %v5858 = vpack.c.b16 %v5498, %v5494
  %v5859 = vpack.c.b16 %v5499, %v5495
  %v5860 = vpack.c.b16 %v5500, %v5496
  %v5861 = vpack.c.b16 %v5501, %v5497
  %v5862 = vpack.c.b16 %v5506, %v5502
  %v5863 = vpack.c.b16 %v5507, %v5503
  %v5864 = vpack.c.b16 %v5508, %v5504
  %v5865 = vpack.c.b16 %v5509, %v5505
  %v5866 = vpack.c.b16 %v5514, %v5510
  %v5867 = vpack.c.b16 %v5515, %v5511
  %v5868 = vpack.c.b16 %v5516, %v5512
  %v5869 = vpack.c.b16 %v5517, %v5513
  %v5870 = vpack.c.b16 %v5522, %v5518
  %v5871 = vpack.c.b16 %v5523, %v5519
  %v5872 = vpack.c.b16 %v5524, %v5520
  %v5873 = vpack.c.b16 %v5525, %v5521
  %v5874 = vpack.c.b16 %v5530, %v5526
  %v5875 = vpack.c.b16 %v5531, %v5527
  %v5876 = vpack.c.b16 %v5532, %v5528
  %v5877 = vpack.c.b16 %v5533, %v5529
  %v5878 = vpack.c.b16 %v5538, %v5534
  %v5879 = vpack.c.b16 %v5539, %v5535
  %v5880 = vpack.c.b16 %v5540, %v5536
  %v5881 = vpack.c.b16 %v5541, %v5537
  %v5882 = vpack.c.b16 %v5546, %v5542
  %v5883 = vpack.c.b16 %v5547, %v5543
  %v5884 = vpack.c.b16 %v5548, %v5544
  %v5885 = vpack.c.b16 %v5549, %v5545
  %v5886 = vpack.c.b16 %v5554, %v5550
  %v5887 = vpack.c.b16 %v5555, %v5551
  %v5888 = vpack.c.b16 %v5556, %v5552
  %v5889 = vpack.c.b16 %v5557, %v5553
  %v5890 = vpack.c.b16 %v5562, %v5558
  %v5891 = vpack.c.b16 %v5563, %v5559
  %v5892 = vpack.c.b16 %v5564, %v5560
  %v5893 = vpack.c.b16 %v5565, %v5561
  %v5894 = vpack.c.b16 %v5570, %v5566
  %v5895 = vpack.c.b16 %v5571, %v5567
  %v5896 = vpack.c.b16 %v5572, %v5568
  %v5897 = vpack.c.b16 %v5573, %v5569
  %v5898 = vpack.c.b16 %v5578, %v5574
  %v5899 = vpack.c.b16 %v5579, %v5575
  %v5900 = vpack.c.b16 %v5580, %v5576
  %v5901 = vpack.c.b16 %v5581, %v5577
  %v5902 = vpack.c.b16 %v5586, %v5582
  %v5903 = vpack.c.b16 %v5587, %v5583
  %v5904 = vpack.c.b16 %v5588, %v5584
  %v5905 = vpack.c.b16 %v5589, %v5585
  %v5906 = vpack.c.b16 %v5594, %v5590
  %v5907 = vpack.c.b16 %v5595, %v5591
  %v5908 = vpack.c.b16 %v5596, %v5592
  %v5909 = vpack.c.b16 %v5597, %v5593
  %v5910 = vpack.c.b16 %v5602, %v5598
  %v5911 = vpack.c.b16 %v5603, %v5599
  %v5912 = vpack.c.b16 %v5604, %v5600
  %v5913 = vpack.c.b16 %v5605, %v5601
  %v5914 = vpack.c.b16 %v5610, %v5606
  %v5915 = vpack.c.b16 %v5611, %v5607
  %v5916 = vpack.c.b16 %v5612, %v5608
  %v5917 = vpack.c.b16 %v5613, %v5609
  %v5918 = vpack.c.b16 %v5618, %v5614
  %v5919 = vpack.c.b16 %v5619, %v5615
  %v5920 = vpack.c.b16 %v5620, %v5616
  %v5921 = vpack.c.b16 %v5621, %v5617
  %v5922 = vpack.c.b16 %v5626, %v5622
  %v5923 = vpack.c.b16 %v5627, %v5623
  %v5924 = vpack.c.b16 %v5628, %v5624
  %v5925 = vpack.c.b16 %v5629, %v5625
  %v5926 = vpack.c.b16 %v5630, %v5630
  %v5927 = vpack.c.b16 %v5631, %v5631
  %v5928 = vpack.c.b16 %v5632, %v5632
  %v5929 = vpack.c.b16 %v5633, %v5633
  %v6223 = vsel %vm1849, %v5926, 0
  %v6226 = vsel %vm1849, %v5927, 0
  %v6229 = vsel %vm1849, %v5928, 0
  %v6232 = vsel %vm1849, %v5929, 0
  %6234 = vmatprep.subr.bf16.mxu0 %v5635
  %6235 = vmatpush1.bf16.msra.mxu0 %v5634
  %6236 = vmatprep.subr.bf16.mxu0 %v5639
  %6237 = vmatpush1.bf16.msra.mxu0 %v5638
  %6238 = vmatprep.subr.bf16.mxu0 %v5643
  %6239 = vmatpush1.bf16.msra.mxu0 %v5642
  %6240 = vmatprep.subr.bf16.mxu0 %v5647
  %6241 = vmatpush1.bf16.msra.mxu0 %v5646
  %6242 = vmatprep.subr.bf16.mxu0 %v5651
  %6243 = vmatpush1.bf16.msra.mxu0 %v5650
  %6244 = vmatprep.subr.bf16.mxu0 %v5655
  %6245 = vmatpush1.bf16.msra.mxu0 %v5654
  %6246 = vmatprep.subr.bf16.mxu0 %v5659
  %6247 = vmatpush1.bf16.msra.mxu0 %v5658
  %6248 = vmatprep.subr.bf16.mxu0 %v5663
  %6249 = vmatpush1.bf16.msra.mxu0 %v5662
  %6250 = vmatprep.subr.bf16.mxu0 %v5667
  %6251 = vmatpush1.bf16.msra.mxu0 %v5666
  %6252 = vmatprep.subr.bf16.mxu0 %v5671
  %6253 = vmatpush1.bf16.msra.mxu0 %v5670
  %6254 = vmatprep.subr.bf16.mxu0 %v5675
  %6255 = vmatpush1.bf16.msra.mxu0 %v5674
  %6256 = vmatprep.subr.bf16.mxu0 %v5679
  %6257 = vmatpush1.bf16.msra.mxu0 %v5678
  %6258 = vmatprep.subr.bf16.mxu0 %v5683
  %6259 = vmatpush1.bf16.msra.mxu0 %v5682
  %6260 = vmatprep.subr.bf16.mxu0 %v5687
  %6261 = vmatpush1.bf16.msra.mxu0 %v5686
  %6262 = vmatprep.subr.bf16.mxu0 %v5691
  %6263 = vmatpush1.bf16.msra.mxu0 %v5690
  %6264 = vmatprep.subr.bf16.mxu0 %v5695
  %6265 = vmatpush1.bf16.msra.mxu0 %v5694
  %6266 = vmatprep.mubr.bf16.mxu0 %v357
  %6267 = vmatmul.mubr.bf16.gmra.mrb[0].mxu0 %v356
  %v6268 = vpop.f32.mrb[0].mxu0
  %v6269 = vadd.f32 0.0, %v6268
  %v6270 = vpop.f32.mrb[0].mxu0
  %v6271 = vadd.f32 0.0, %v6270
  %v6272 = vpop.f32.mrb[0].mxu0
  %v6273 = vpop.f32.mrb[0].mxu0
  %6274 = vdwg.mxu0
  %6275 = vmatprep.subr.bf16.mxu0 %v5699
  %6276 = vmatpush1.bf16.msra.mxu0 %v5698
  %6277 = vmatprep.subr.bf16.mxu0 %v5703
  %6278 = vmatpush1.bf16.msra.mxu0 %v5702
  %6279 = vmatprep.subr.bf16.mxu0 %v5707
  %6280 = vmatpush1.bf16.msra.mxu0 %v5706
  %6281 = vmatprep.subr.bf16.mxu0 %v5711
  %6282 = vmatpush1.bf16.msra.mxu0 %v5710
  %6283 = vmatprep.subr.bf16.mxu0 %v5715
  %6284 = vmatpush1.bf16.msra.mxu0 %v5714
  %6285 = vmatprep.subr.bf16.mxu0 %v5719
  %6286 = vmatpush1.bf16.msra.mxu0 %v5718
  %6287 = vmatprep.subr.bf16.mxu0 %v5723
  %6288 = vmatpush1.bf16.msra.mxu0 %v5722
  %6289 = vmatprep.subr.bf16.mxu0 %v5727
  %6290 = vmatpush1.bf16.msra.mxu0 %v5726
  %6291 = vmatprep.subr.bf16.mxu0 %v5731
  %6292 = vmatpush1.bf16.msra.mxu0 %v5730
  %6293 = vmatprep.subr.bf16.mxu0 %v5735
  %6294 = vmatpush1.bf16.msra.mxu0 %v5734
  %6295 = vmatprep.subr.bf16.mxu0 %v5739
  %6296 = vmatpush1.bf16.msra.mxu0 %v5738
  %6297 = vmatprep.subr.bf16.mxu0 %v5743
  %6298 = vmatpush1.bf16.msra.mxu0 %v5742
  %6299 = vmatprep.subr.bf16.mxu0 %v5747
  %6300 = vmatpush1.bf16.msra.mxu0 %v5746
  %6301 = vmatprep.subr.bf16.mxu0 %v5751
  %6302 = vmatpush1.bf16.msra.mxu0 %v5750
  %6303 = vmatprep.subr.bf16.mxu0 %v5755
  %6304 = vmatpush1.bf16.msra.mxu0 %v5754
  %6305 = vmatprep.subr.bf16.mxu0 %v5759
  %6306 = vmatpush1.bf16.msra.mxu0 %v5758
  %6307 = vmatprep.mubr.bf16.mxu0 %v359
  %6308 = vmatmul.mubr.bf16.gmra.mrb[0].mxu0 %v358
  %v6309 = vpop.f32.mrb[0].mxu0
  %v6310 = vadd.f32 %v6269, %v6309
  %v6311 = vpop.f32.mrb[0].mxu0
  %v6312 = vadd.f32 %v6271, %v6311
  %v6313 = vpop.f32.mrb[0].mxu0
  %v6314 = vpop.f32.mrb[0].mxu0
  %6315 = vdwg.mxu0
  %6316 = vmatprep.subr.bf16.mxu0 %v5763
  %6317 = vmatpush1.bf16.msra.mxu0 %v5762
  %6318 = vmatprep.subr.bf16.mxu0 %v5767
  %6319 = vmatpush1.bf16.msra.mxu0 %v5766
  %6320 = vmatprep.subr.bf16.mxu0 %v5771
  %6321 = vmatpush1.bf16.msra.mxu0 %v5770
  %6322 = vmatprep.subr.bf16.mxu0 %v5775
  %6323 = vmatpush1.bf16.msra.mxu0 %v5774
  %6324 = vmatprep.subr.bf16.mxu0 %v5779
  %6325 = vmatpush1.bf16.msra.mxu0 %v5778
  %6326 = vmatprep.subr.bf16.mxu0 %v5783
  %6327 = vmatpush1.bf16.msra.mxu0 %v5782
  %6328 = vmatprep.subr.bf16.mxu0 %v5787
  %6329 = vmatpush1.bf16.msra.mxu0 %v5786
  %6330 = vmatprep.subr.bf16.mxu0 %v5791
  %6331 = vmatpush1.bf16.msra.mxu0 %v5790
  %6332 = vmatprep.subr.bf16.mxu0 %v5795
  %6333 = vmatpush1.bf16.msra.mxu0 %v5794
  %6334 = vmatprep.subr.bf16.mxu0 %v5799
  %6335 = vmatpush1.bf16.msra.mxu0 %v5798
  %6336 = vmatprep.subr.bf16.mxu0 %v5803
  %6337 = vmatpush1.bf16.msra.mxu0 %v5802
  %6338 = vmatprep.subr.bf16.mxu0 %v5807
  %6339 = vmatpush1.bf16.msra.mxu0 %v5806
  %6340 = vmatprep.subr.bf16.mxu0 %v5811
  %6341 = vmatpush1.bf16.msra.mxu0 %v5810
  %6342 = vmatprep.subr.bf16.mxu0 %v5815
  %6343 = vmatpush1.bf16.msra.mxu0 %v5814
  %6344 = vmatprep.subr.bf16.mxu0 %v5819
  %6345 = vmatpush1.bf16.msra.mxu0 %v5818
  %6346 = vmatprep.subr.bf16.mxu0 %v5823
  %6347 = vmatpush1.bf16.msra.mxu0 %v5822
  %6348 = vmatprep.mubr.bf16.mxu0 %v361
  %6349 = vmatmul.mubr.bf16.gmra.mrb[0].mxu0 %v360
  %v6350 = vpop.f32.mrb[0].mxu0
  %v6351 = vadd.f32 %v6310, %v6350
  %v6352 = vpop.f32.mrb[0].mxu0
  %v6353 = vadd.f32 %v6312, %v6352
  %v6354 = vpop.f32.mrb[0].mxu0
  %v6355 = vpop.f32.mrb[0].mxu0
  %6356 = vdwg.mxu0
  %6357 = vmatprep.subr.bf16.mxu0 %v5827
  %6358 = vmatpush1.bf16.msra.mxu0 %v5826
  %6359 = vmatprep.subr.bf16.mxu0 %v5831
  %6360 = vmatpush1.bf16.msra.mxu0 %v5830
  %6361 = vmatprep.subr.bf16.mxu0 %v5835
  %6362 = vmatpush1.bf16.msra.mxu0 %v5834
  %6363 = vmatprep.subr.bf16.mxu0 %v5839
  %6364 = vmatpush1.bf16.msra.mxu0 %v5838
  %6365 = vmatprep.subr.bf16.mxu0 %v5843
  %6366 = vmatpush1.bf16.msra.mxu0 %v5842
  %6367 = vmatprep.subr.bf16.mxu0 %v5847
  %6368 = vmatpush1.bf16.msra.mxu0 %v5846
  %6369 = vmatprep.subr.bf16.mxu0 %v5851
  %6370 = vmatpush1.bf16.msra.mxu0 %v5850
  %6371 = vmatprep.subr.bf16.mxu0 %v5855
  %6372 = vmatpush1.bf16.msra.mxu0 %v5854
  %6373 = vmatprep.subr.bf16.mxu0 %v5859
  %6374 = vmatpush1.bf16.msra.mxu0 %v5858
  %6375 = vmatprep.subr.bf16.mxu0 %v5863
  %6376 = vmatpush1.bf16.msra.mxu0 %v5862
  %6377 = vmatprep.subr.bf16.mxu0 %v5867
  %6378 = vmatpush1.bf16.msra.mxu0 %v5866
  %6379 = vmatprep.subr.bf16.mxu0 %v5871
  %6380 = vmatpush1.bf16.msra.mxu0 %v5870
  %6381 = vmatprep.subr.bf16.mxu0 %v5875
  %6382 = vmatpush1.bf16.msra.mxu0 %v5874
  %6383 = vmatprep.subr.bf16.mxu0 %v5879
  %6384 = vmatpush1.bf16.msra.mxu0 %v5878
  %6385 = vmatprep.subr.bf16.mxu0 %v5883
  %6386 = vmatpush1.bf16.msra.mxu0 %v5882
  %6387 = vmatprep.subr.bf16.mxu0 %v5887
  %6388 = vmatpush1.bf16.msra.mxu0 %v5886
  %6389 = vmatprep.mubr.bf16.mxu0 %v363
  %6390 = vmatmul.mubr.bf16.gmra.mrb[0].mxu0 %v362
  %v6391 = vpop.f32.mrb[0].mxu0
  %v6392 = vadd.f32 %v6351, %v6391
  %v6393 = vpop.f32.mrb[0].mxu0
  %v6394 = vadd.f32 %v6353, %v6393
  %v6395 = vpop.f32.mrb[0].mxu0
  %v6396 = vpop.f32.mrb[0].mxu0
  %6397 = vdwg.mxu0
  %6398 = vmatprep.subr.bf16.mxu0 %v5891
  %6399 = vmatpush1.bf16.msra.mxu0 %v5890
  %6400 = vmatprep.subr.bf16.mxu0 %v5895
  %6401 = vmatpush1.bf16.msra.mxu0 %v5894
  %6402 = vmatprep.subr.bf16.mxu0 %v5899
  %6403 = vmatpush1.bf16.msra.mxu0 %v5898
  %6404 = vmatprep.subr.bf16.mxu0 %v5903
  %6405 = vmatpush1.bf16.msra.mxu0 %v5902
  %6406 = vmatprep.subr.bf16.mxu0 %v5907
  %6407 = vmatpush1.bf16.msra.mxu0 %v5906
  %6408 = vmatprep.subr.bf16.mxu0 %v5911
  %6409 = vmatpush1.bf16.msra.mxu0 %v5910
  %6410 = vmatprep.subr.bf16.mxu0 %v5915
  %6411 = vmatpush1.bf16.msra.mxu0 %v5914
  %6412 = vmatprep.subr.bf16.mxu0 %v5919
  %6413 = vmatpush1.bf16.msra.mxu0 %v5918
  %6414 = vmatprep.subr.bf16.mxu0 %v5923
  %6415 = vmatpush1.bf16.msra.mxu0 %v5922
  %6416 = vmatprep.subr.bf16.mxu0 %v6226
  %6417 = vmatpush1.bf16.msra.mxu0 %v6223
  %6418 = vmatprep.subr.bf16.mxu0 0
  %6419 = vmatpush1.bf16.msra.mxu0 0
  %6420 = vmatprep.subr.bf16.mxu0 0
  %6421 = vmatpush1.bf16.msra.mxu0 0
  %6422 = vmatprep.subr.bf16.mxu0 0
  %6423 = vmatpush1.bf16.msra.mxu0 0
  %6424 = vmatprep.subr.bf16.mxu0 0
  %6425 = vmatpush1.bf16.msra.mxu0 0
  %6426 = vmatprep.subr.bf16.mxu0 0
  %6427 = vmatpush1.bf16.msra.mxu0 0
  %6428 = vmatprep.subr.bf16.mxu0 0
  %6429 = vmatpush1.bf16.msra.mxu0 0
  %6430 = vmatprep.mubr.bf16.mxu0 %v1847
  %6431 = vmatmul.mubr.bf16.gmra.mrb[0].mxu0 %v364
  %v6432 = vpop.f32.mrb[0].mxu0
  %v6433 = vadd.f32 %v6392, %v6432
  %v6434 = vpop.f32.mrb[0].mxu0
  %v6435 = vadd.f32 %v6394, %v6434
  %v6436 = vpop.f32.mrb[0].mxu0
  %v6437 = vpop.f32.mrb[0].mxu0
  %6438 = vdwg.mxu0
  %6439 = vmatprep.subr.bf16.mxu0 %v5637
  %6440 = vmatpush1.bf16.msra.mxu0 %v5636
  %6441 = vmatprep.subr.bf16.mxu0 %v5641
  %6442 = vmatpush1.bf16.msra.mxu0 %v5640
  %6443 = vmatprep.subr.bf16.mxu0 %v5645
  %6444 = vmatpush1.bf16.msra.mxu0 %v5644
  %6445 = vmatprep.subr.bf16.mxu0 %v5649
  %6446 = vmatpush1.bf16.msra.mxu0 %v5648
  %6447 = vmatprep.subr.bf16.mxu0 %v5653
  %6448 = vmatpush1.bf16.msra.mxu0 %v5652
  %6449 = vmatprep.subr.bf16.mxu0 %v5657
  %6450 = vmatpush1.bf16.msra.mxu0 %v5656
  %6451 = vmatprep.subr.bf16.mxu0 %v5661
  %6452 = vmatpush1.bf16.msra.mxu0 %v5660
  %6453 = vmatprep.subr.bf16.mxu0 %v5665
  %6454 = vmatpush1.bf16.msra.mxu0 %v5664
  %6455 = vmatprep.subr.bf16.mxu0 %v5669
  %6456 = vmatpush1.bf16.msra.mxu0 %v5668
  %6457 = vmatprep.subr.bf16.mxu0 %v5673
  %6458 = vmatpush1.bf16.msra.mxu0 %v5672
  %6459 = vmatprep.subr.bf16.mxu0 %v5677
  %6460 = vmatpush1.bf16.msra.mxu0 %v5676
  %6461 = vmatprep.subr.bf16.mxu0 %v5681
  %6462 = vmatpush1.bf16.msra.mxu0 %v5680
  %6463 = vmatprep.subr.bf16.mxu0 %v5685
  %6464 = vmatpush1.bf16.msra.mxu0 %v5684
  %6465 = vmatprep.subr.bf16.mxu0 %v5689
  %6466 = vmatpush1.bf16.msra.mxu0 %v5688
  %6467 = vmatprep.subr.bf16.mxu0 %v5693
  %6468 = vmatpush1.bf16.msra.mxu0 %v5692
  %6469 = vmatprep.subr.bf16.mxu0 %v5697
  %6470 = vmatpush1.bf16.msra.mxu0 %v5696
  %6471 = vmatprep.mubr.bf16.mxu0 %v357
  %6472 = vmatmul.mubr.bf16.gmra.mrb[0].mxu0 %v356
  %v6473 = vpop.f32.mrb[0].mxu0
  %v6474 = vadd.f32 0.0, %v6473
  %v6475 = vpop.f32.mrb[0].mxu0
  %v6476 = vadd.f32 0.0, %v6475
  %v6477 = vpop.f32.mrb[0].mxu0
  %v6478 = vpop.f32.mrb[0].mxu0
  %6479 = vdwg.mxu0
  %6480 = vmatprep.subr.bf16.mxu0 %v5701
  %6481 = vmatpush1.bf16.msra.mxu0 %v5700
  %6482 = vmatprep.subr.bf16.mxu0 %v5705
  %6483 = vmatpush1.bf16.msra.mxu0 %v5704
  %6484 = vmatprep.subr.bf16.mxu0 %v5709
  %6485 = vmatpush1.bf16.msra.mxu0 %v5708
  %6486 = vmatprep.subr.bf16.mxu0 %v5713
  %6487 = vmatpush1.bf16.msra.mxu0 %v5712
  %6488 = vmatprep.subr.bf16.mxu0 %v5717
  %6489 = vmatpush1.bf16.msra.mxu0 %v5716
  %6490 = vmatprep.subr.bf16.mxu0 %v5721
  %6491 = vmatpush1.bf16.msra.mxu0 %v5720
  %6492 = vmatprep.subr.bf16.mxu0 %v5725
  %6493 = vmatpush1.bf16.msra.mxu0 %v5724
  %6494 = vmatprep.subr.bf16.mxu0 %v5729
  %6495 = vmatpush1.bf16.msra.mxu0 %v5728
  %6496 = vmatprep.subr.bf16.mxu0 %v5733
  %6497 = vmatpush1.bf16.msra.mxu0 %v5732
  %6498 = vmatprep.subr.bf16.mxu0 %v5737
  %6499 = vmatpush1.bf16.msra.mxu0 %v5736
  %6500 = vmatprep.subr.bf16.mxu0 %v5741
  %6501 = vmatpush1.bf16.msra.mxu0 %v5740
  %6502 = vmatprep.subr.bf16.mxu0 %v5745
  %6503 = vmatpush1.bf16.msra.mxu0 %v5744
  %6504 = vmatprep.subr.bf16.mxu0 %v5749
  %6505 = vmatpush1.bf16.msra.mxu0 %v5748
  %6506 = vmatprep.subr.bf16.mxu0 %v5753
  %6507 = vmatpush1.bf16.msra.mxu0 %v5752
  %6508 = vmatprep.subr.bf16.mxu0 %v5757
  %6509 = vmatpush1.bf16.msra.mxu0 %v5756
  %6510 = vmatprep.subr.bf16.mxu0 %v5761
  %6511 = vmatpush1.bf16.msra.mxu0 %v5760
  %6512 = vmatprep.mubr.bf16.mxu0 %v359
  %6513 = vmatmul.mubr.bf16.gmra.mrb[0].mxu0 %v358
  %v6514 = vpop.f32.mrb[0].mxu0
  %v6515 = vadd.f32 %v6474, %v6514
  %v6516 = vpop.f32.mrb[0].mxu0
  %v6517 = vadd.f32 %v6476, %v6516
  %v6518 = vpop.f32.mrb[0].mxu0
  %v6519 = vpop.f32.mrb[0].mxu0
  %6520 = vdwg.mxu0
  %6521 = vmatprep.subr.bf16.mxu0 %v5765
  %6522 = vmatpush1.bf16.msra.mxu0 %v5764
  %6523 = vmatprep.subr.bf16.mxu0 %v5769
  %6524 = vmatpush1.bf16.msra.mxu0 %v5768
  %6525 = vmatprep.subr.bf16.mxu0 %v5773
  %6526 = vmatpush1.bf16.msra.mxu0 %v5772
  %6527 = vmatprep.subr.bf16.mxu0 %v5777
  %6528 = vmatpush1.bf16.msra.mxu0 %v5776
  %6529 = vmatprep.subr.bf16.mxu0 %v5781
  %6530 = vmatpush1.bf16.msra.mxu0 %v5780
  %6531 = vmatprep.subr.bf16.mxu0 %v5785
  %6532 = vmatpush1.bf16.msra.mxu0 %v5784
  %6533 = vmatprep.subr.bf16.mxu0 %v5789
  %6534 = vmatpush1.bf16.msra.mxu0 %v5788
  %6535 = vmatprep.subr.bf16.mxu0 %v5793
  %6536 = vmatpush1.bf16.msra.mxu0 %v5792
  %6537 = vmatprep.subr.bf16.mxu0 %v5797
  %6538 = vmatpush1.bf16.msra.mxu0 %v5796
  %6539 = vmatprep.subr.bf16.mxu0 %v5801
  %6540 = vmatpush1.bf16.msra.mxu0 %v5800
  %6541 = vmatprep.subr.bf16.mxu0 %v5805
  %6542 = vmatpush1.bf16.msra.mxu0 %v5804
  %6543 = vmatprep.subr.bf16.mxu0 %v5809
  %6544 = vmatpush1.bf16.msra.mxu0 %v5808
  %6545 = vmatprep.subr.bf16.mxu0 %v5813
  %6546 = vmatpush1.bf16.msra.mxu0 %v5812
  %6547 = vmatprep.subr.bf16.mxu0 %v5817
  %6548 = vmatpush1.bf16.msra.mxu0 %v5816
  %6549 = vmatprep.subr.bf16.mxu0 %v5821
  %6550 = vmatpush1.bf16.msra.mxu0 %v5820
  %6551 = vmatprep.subr.bf16.mxu0 %v5825
  %6552 = vmatpush1.bf16.msra.mxu0 %v5824
  %6553 = vmatprep.mubr.bf16.mxu0 %v361
  %6554 = vmatmul.mubr.bf16.gmra.mrb[0].mxu0 %v360
  %v6555 = vpop.f32.mrb[0].mxu0
  %v6556 = vadd.f32 %v6515, %v6555
  %v6557 = vpop.f32.mrb[0].mxu0
  %v6558 = vadd.f32 %v6517, %v6557
  %v6559 = vpop.f32.mrb[0].mxu0
  %v6560 = vpop.f32.mrb[0].mxu0
  %6561 = vdwg.mxu0
  %6562 = vmatprep.subr.bf16.mxu0 %v5829
  %6563 = vmatpush1.bf16.msra.mxu0 %v5828
  %6564 = vmatprep.subr.bf16.mxu0 %v5833
  %6565 = vmatpush1.bf16.msra.mxu0 %v5832
  %6566 = vmatprep.subr.bf16.mxu0 %v5837
  %6567 = vmatpush1.bf16.msra.mxu0 %v5836
  %6568 = vmatprep.subr.bf16.mxu0 %v5841
  %6569 = vmatpush1.bf16.msra.mxu0 %v5840
  %6570 = vmatprep.subr.bf16.mxu0 %v5845
  %6571 = vmatpush1.bf16.msra.mxu0 %v5844
  %6572 = vmatprep.subr.bf16.mxu0 %v5849
  %6573 = vmatpush1.bf16.msra.mxu0 %v5848
  %6574 = vmatprep.subr.bf16.mxu0 %v5853
  %6575 = vmatpush1.bf16.msra.mxu0 %v5852
  %6576 = vmatprep.subr.bf16.mxu0 %v5857
  %6577 = vmatpush1.bf16.msra.mxu0 %v5856
  %6578 = vmatprep.subr.bf16.mxu0 %v5861
  %6579 = vmatpush1.bf16.msra.mxu0 %v5860
  %6580 = vmatprep.subr.bf16.mxu0 %v5865
  %6581 = vmatpush1.bf16.msra.mxu0 %v5864
  %6582 = vmatprep.subr.bf16.mxu0 %v5869
  %6583 = vmatpush1.bf16.msra.mxu0 %v5868
  %6584 = vmatprep.subr.bf16.mxu0 %v5873
  %6585 = vmatpush1.bf16.msra.mxu0 %v5872
  %6586 = vmatprep.subr.bf16.mxu0 %v5877
  %6587 = vmatpush1.bf16.msra.mxu0 %v5876
  %6588 = vmatprep.subr.bf16.mxu0 %v5881
  %6589 = vmatpush1.bf16.msra.mxu0 %v5880
  %6590 = vmatprep.subr.bf16.mxu0 %v5885
  %6591 = vmatpush1.bf16.msra.mxu0 %v5884
  %6592 = vmatprep.subr.bf16.mxu0 %v5889
  %6593 = vmatpush1.bf16.msra.mxu0 %v5888
  %6594 = vmatprep.mubr.bf16.mxu0 %v363
  %6595 = vmatmul.mubr.bf16.gmra.mrb[0].mxu0 %v362
  %v6596 = vpop.f32.mrb[0].mxu0
  %v6597 = vadd.f32 %v6556, %v6596
  %v6598 = vpop.f32.mrb[0].mxu0
  %v6599 = vadd.f32 %v6558, %v6598
  %v6600 = vpop.f32.mrb[0].mxu0
  %v6601 = vpop.f32.mrb[0].mxu0
  %6602 = vdwg.mxu0
  %6603 = vmatprep.subr.bf16.mxu0 %v5893
  %6604 = vmatpush1.bf16.msra.mxu0 %v5892
  %6605 = vmatprep.subr.bf16.mxu0 %v5897
  %6606 = vmatpush1.bf16.msra.mxu0 %v5896
  %6607 = vmatprep.subr.bf16.mxu0 %v5901
  %6608 = vmatpush1.bf16.msra.mxu0 %v5900
  %6609 = vmatprep.subr.bf16.mxu0 %v5905
  %6610 = vmatpush1.bf16.msra.mxu0 %v5904
  %6611 = vmatprep.subr.bf16.mxu0 %v5909
  %6612 = vmatpush1.bf16.msra.mxu0 %v5908
  %6613 = vmatprep.subr.bf16.mxu0 %v5913
  %6614 = vmatpush1.bf16.msra.mxu0 %v5912
  %6615 = vmatprep.subr.bf16.mxu0 %v5917
  %6616 = vmatpush1.bf16.msra.mxu0 %v5916
  %6617 = vmatprep.subr.bf16.mxu0 %v5921
  %6618 = vmatpush1.bf16.msra.mxu0 %v5920
  %6619 = vmatprep.subr.bf16.mxu0 %v5925
  %6620 = vmatpush1.bf16.msra.mxu0 %v5924
  %6621 = vmatprep.subr.bf16.mxu0 %v6232
  %6622 = vmatpush1.bf16.msra.mxu0 %v6229
  %6623 = vmatprep.subr.bf16.mxu0 0
  %6624 = vmatpush1.bf16.msra.mxu0 0
  %6625 = vmatprep.subr.bf16.mxu0 0
  %6626 = vmatpush1.bf16.msra.mxu0 0
  %6627 = vmatprep.subr.bf16.mxu0 0
  %6628 = vmatpush1.bf16.msra.mxu0 0
  %6629 = vmatprep.subr.bf16.mxu0 0
  %6630 = vmatpush1.bf16.msra.mxu0 0
  %6631 = vmatprep.subr.bf16.mxu0 0
  %6632 = vmatpush1.bf16.msra.mxu0 0
  %6633 = vmatprep.subr.bf16.mxu0 0
  %6634 = vmatpush1.bf16.msra.mxu0 0
  %6635 = vmatprep.mubr.bf16.mxu0 %v1847
  %6636 = vmatmul.mubr.bf16.gmra.mrb[0].mxu0 %v364
  %v6637 = vpop.f32.mrb[0].mxu0
  %v6638 = vadd.f32 %v6597, %v6637
  %v6639 = vpop.f32.mrb[0].mxu0
  %v6640 = vadd.f32 %v6599, %v6639
  %v6641 = vpop.f32.mrb[0].mxu0
  %v6642 = vpop.f32.mrb[0].mxu0
  %6643 = vdwg.mxu0
  %v6644 = vld [vmem:[%s4] sm:$0xff]
  %v6645 = vld [vmem:[%s4 + $0x8] sm:$0xff]
  %v6646 = vld [vmem:[%s4 + $0x10] sm:$0xff]
  %v6647 = vld [vmem:[%s4 + $0x18] sm:$0xff]
  %v6648 = vld [vmem:[%s4 + $0x20] sm:$0xff]
  %v6649 = vld [vmem:[%s4 + $0x28] sm:$0xff]
  %v6650 = vld [vmem:[%s4 + $0x30] sm:$0xff]
  %v6651 = vld [vmem:[%s4 + $0x38] sm:$0xff]
  %v6652 = vld [vmem:[%s4 + $0x40] sm:$0xff]
  %v6653 = vld [vmem:[%s4 + $0x48] sm:$0xff]
  %v6654 = vld [vmem:[%s4 + $0x50] sm:$0xff]
  %v6655 = vld [vmem:[%s4 + $0x58] sm:$0xff]
  %v6656 = vld [vmem:[%s4 + $0x60] sm:$0xff]
  %v6657 = vld [vmem:[%s4 + $0x68] sm:$0xff]
  %v6658 = vld [vmem:[%s4 + $0x70] sm:$0xff]
  %v6659 = vld [vmem:[%s4 + $0x78] sm:$0xff]
  %v6660 = vld [vmem:[%s4 + $0x80] sm:$0xff]
  %v6661 = vld [vmem:[%s4 + $0x88] sm:$0xff]
  %v6662 = vld [vmem:[%s4 + $0x90] sm:$0xff]
  %v6663 = vld [vmem:[%s4 + $0x98] sm:$0xff]
  %v6664 = vld [vmem:[%s4 + $0xa0] sm:$0xff]
  %v6665 = vld [vmem:[%s4 + $0xa8] sm:$0xff]
  %v6666 = vld [vmem:[%s4 + $0xb0] sm:$0xff]
  %v6667 = vld [vmem:[%s4 + $0xb8] sm:$0xff]
  %v6668 = vld [vmem:[%s4 + $0xc0] sm:$0xff]
  %v6669 = vld [vmem:[%s4 + $0xc8] sm:$0xff]
  %v6670 = vld [vmem:[%s4 + $0xd0] sm:$0xff]
  %v6671 = vld [vmem:[%s4 + $0xd8] sm:$0xff]
  %v6672 = vld [vmem:[%s4 + $0xe0] sm:$0xff]
  %v6673 = vld [vmem:[%s4 + $0xe8] sm:$0xff]
  %v6674 = vld [vmem:[%s4 + $0xf0] sm:$0xff]
  %v6675 = vld [vmem:[%s4 + $0xf8] sm:$0xff]
  %v6676 = vld [vmem:[%s4 + $0x100] sm:$0xff]
  %v6677 = vld [vmem:[%s4 + $0x108] sm:$0xff]
  %v6678 = vld [vmem:[%s4 + $0x110] sm:$0xff]
  %v6679 = vld [vmem:[%s4 + $0x118] sm:$0xff]
  %v6680 = vld [vmem:[%s4 + $0x120] sm:$0xff]
  %v6681 = vld [vmem:[%s4 + $0x128] sm:$0xff]
  %v6682 = vld [vmem:[%s4 + $0x130] sm:$0xff]
  %v6683 = vld [vmem:[%s4 + $0x138] sm:$0xff]
  %v6684 = vld [vmem:[%s4 + $0x140] sm:$0xff]
  %v6685 = vld [vmem:[%s4 + $0x148] sm:$0xff]
  %v6686 = vld [vmem:[%s4 + $0x150] sm:$0xff]
  %v6687 = vld [vmem:[%s4 + $0x158] sm:$0xff]
  %v6688 = vld [vmem:[%s4 + $0x160] sm:$0xff]
  %v6689 = vld [vmem:[%s4 + $0x168] sm:$0xff]
  %v6690 = vld [vmem:[%s4 + $0x170] sm:$0xff]
  %v6691 = vld [vmem:[%s4 + $0x178] sm:$0xff]
  %v6692 = vld [vmem:[%s4 + $0x180] sm:$0xff]
  %v6693 = vld [vmem:[%s4 + $0x188] sm:$0xff]
  %v6694 = vld [vmem:[%s4 + $0x190] sm:$0xff]
  %v6695 = vld [vmem:[%s4 + $0x198] sm:$0xff]
  %v6696 = vld [vmem:[%s4 + $0x1a0] sm:$0xff]
  %v6697 = vld [vmem:[%s4 + $0x1a8] sm:$0xff]
  %v6698 = vld [vmem:[%s4 + $0x1b0] sm:$0xff]
  %v6699 = vld [vmem:[%s4 + $0x1b8] sm:$0xff]
  %v6700 = vld [vmem:[%s4 + $0x1c0] sm:$0xff]
  %v6701 = vld [vmem:[%s4 + $0x1c8] sm:$0xff]
  %v6702 = vld [vmem:[%s4 + $0x1d0] sm:$0xff]
  %v6703 = vld [vmem:[%s4 + $0x1d8] sm:$0xff]
  %v6704 = vld [vmem:[%s4 + $0x1e0] sm:$0xff]
  %v6705 = vld [vmem:[%s4 + $0x1e8] sm:$0xff]
  %v6706 = vld [vmem:[%s4 + $0x1f0] sm:$0xff]
  %v6707 = vld [vmem:[%s4 + $0x1f8] sm:$0xff]
  %v6708 = vld [vmem:[%s4 + $0x200] sm:$0xff]
  %v6709 = vld [vmem:[%s4 + $0x208] sm:$0xff]
  %v6710 = vld [vmem:[%s4 + $0x210] sm:$0xff]
  %v6711 = vld [vmem:[%s4 + $0x218] sm:$0xff]
  %v6712 = vld [vmem:[%s4 + $0x220] sm:$0xff]
  %v6713 = vld [vmem:[%s4 + $0x228] sm:$0xff]
  %v6714 = vld [vmem:[%s4 + $0x230] sm:$0xff]
  %v6715 = vld [vmem:[%s4 + $0x238] sm:$0xff]
  %v6716 = vld [vmem:[%s4 + $0x240] sm:$0xff]
  %v6717 = vld [vmem:[%s4 + $0x248] sm:$0xff]
  %v6718 = vld [vmem:[%s4 + $0x250] sm:$0xff]
  %v6719 = vld [vmem:[%s4 + $0x258] sm:$0xff]
  %v6720 = vld [vmem:[%s4 + $0x260] sm:$0xff]
  %v6721 = vld [vmem:[%s4 + $0x268] sm:$0xff]
  %v6722 = vld [vmem:[%s4 + $0x270] sm:$0xff]
  %v6723 = vld [vmem:[%s4 + $0x278] sm:$0xff]
  %v6724 = vld [vmem:[%s4 + $0x280] sm:$0xff]
  %v6725 = vld [vmem:[%s4 + $0x288] sm:$0xff]
  %v6726 = vld [vmem:[%s4 + $0x290] sm:$0xff]
  %v6727 = vld [vmem:[%s4 + $0x298] sm:$0xff]
  %v6728 = vld [vmem:[%s4 + $0x2a0] sm:$0xff]
  %v6729 = vld [vmem:[%s4 + $0x2a8] sm:$0xff]
  %v6730 = vld [vmem:[%s4 + $0x2b0] sm:$0xff]
  %v6731 = vld [vmem:[%s4 + $0x2b8] sm:$0xff]
  %v6732 = vld [vmem:[%s4 + $0x2c0] sm:$0xff]
  %v6733 = vld [vmem:[%s4 + $0x2c8] sm:$0xff]
  %v6734 = vld [vmem:[%s4 + $0x2d0] sm:$0xff]
  %v6735 = vld [vmem:[%s4 + $0x2d8] sm:$0xff]
  %v6736 = vld [vmem:[%s4 + $0x2e0] sm:$0xff]
  %v6737 = vld [vmem:[%s4 + $0x2e8] sm:$0xff]
  %v6738 = vld [vmem:[%s4 + $0x2f0] sm:$0xff]
  %v6739 = vld [vmem:[%s4 + $0x2f8] sm:$0xff]
  %v6740 = vld [vmem:[%s4 + $0x300] sm:$0xff]
  %v6741 = vld [vmem:[%s4 + $0x308] sm:$0xff]
  %v6742 = vld [vmem:[%s4 + $0x310] sm:$0xff]
  %v6743 = vld [vmem:[%s4 + $0x318] sm:$0xff]
  %v6744 = vld [vmem:[%s4 + $0x320] sm:$0xff]
  %v6745 = vld [vmem:[%s4 + $0x328] sm:$0xff]
  %v6746 = vld [vmem:[%s4 + $0x330] sm:$0xff]
  %v6747 = vld [vmem:[%s4 + $0x338] sm:$0xff]
  %v6748 = vld [vmem:[%s4 + $0x340] sm:$0xff]
  %v6749 = vld [vmem:[%s4 + $0x348] sm:$0xff]
  %v6750 = vld [vmem:[%s4 + $0x350] sm:$0xff]
  %v6751 = vld [vmem:[%s4 + $0x358] sm:$0xff]
  %v6752 = vld [vmem:[%s4 + $0x360] sm:$0xff]
  %v6753 = vld [vmem:[%s4 + $0x368] sm:$0xff]
  %v6754 = vld [vmem:[%s4 + $0x370] sm:$0xff]
  %v6755 = vld [vmem:[%s4 + $0x378] sm:$0xff]
  %v6756 = vld [vmem:[%s4 + $0x380] sm:$0xff]
  %v6757 = vld [vmem:[%s4 + $0x388] sm:$0xff]
  %v6758 = vld [vmem:[%s4 + $0x390] sm:$0xff]
  %v6759 = vld [vmem:[%s4 + $0x398] sm:$0xff]
  %v6760 = vld [vmem:[%s4 + $0x3a0] sm:$0xff]
  %v6761 = vld [vmem:[%s4 + $0x3a8] sm:$0xff]
  %v6762 = vld [vmem:[%s4 + $0x3b0] sm:$0xff]
  %v6763 = vld [vmem:[%s4 + $0x3b8] sm:$0xff]
  %v6764 = vld [vmem:[%s4 + $0x3c0] sm:$0xff]
  %v6765 = vld [vmem:[%s4 + $0x3c8] sm:$0xff]
  %v6766 = vld [vmem:[%s4 + $0x3d0] sm:$0xff]
  %v6767 = vld [vmem:[%s4 + $0x3d8] sm:$0xff]
  %v6768 = vld [vmem:[%s4 + $0x3e0] sm:$0xff]
  %v6769 = vld [vmem:[%s4 + $0x3e8] sm:$0xff]
  %v6770 = vld [vmem:[%s4 + $0x3f0] sm:$0xff]
  %v6771 = vld [vmem:[%s4 + $0x3f8] sm:$0xff]
  %v6772 = vld [vmem:[%s4 + $0x400] sm:$0xff]
  %v6773 = vld [vmem:[%s4 + $0x408] sm:$0xff]
  %v6774 = vld [vmem:[%s4 + $0x410] sm:$0xff]
  %v6775 = vld [vmem:[%s4 + $0x418] sm:$0xff]
  %v6776 = vld [vmem:[%s4 + $0x420] sm:$0xff]
  %v6777 = vld [vmem:[%s4 + $0x428] sm:$0xff]
  %v6778 = vld [vmem:[%s4 + $0x430] sm:$0xff]
  %v6779 = vld [vmem:[%s4 + $0x438] sm:$0xff]
  %v6780 = vld [vmem:[%s4 + $0x440] sm:$0xff]
  %v6781 = vld [vmem:[%s4 + $0x448] sm:$0xff]
  %v6782 = vld [vmem:[%s4 + $0x450] sm:$0xff]
  %v6783 = vld [vmem:[%s4 + $0x458] sm:$0xff]
  %v6784 = vld [vmem:[%s4 + $0x460] sm:$0xff]
  %v6785 = vld [vmem:[%s4 + $0x468] sm:$0xff]
  %v6786 = vld [vmem:[%s4 + $0x470] sm:$0xff]
  %v6787 = vld [vmem:[%s4 + $0x478] sm:$0xff]
  %v6788 = vld [vmem:[%s4 + $0x480] sm:$0xff]
  %v6789 = vld [vmem:[%s4 + $0x488] sm:$0xff]
  %v6790 = vld [vmem:[%s4 + $0x490] sm:$0xff]
  %v6791 = vld [vmem:[%s4 + $0x498] sm:$0xff]
  %v6792 = vld [vmem:[%s4 + $0x4a0] sm:$0xff]
  %v6793 = vld [vmem:[%s4 + $0x4a8] sm:$0xff]
  %v6794 = vld [vmem:[%s4 + $0x4b0] sm:$0xff]
  %v6795 = vld [vmem:[%s4 + $0x4b8] sm:$0xff]
  %v6796 = vld [vmem:[%s4 + $0x4c0] sm:$0xff]
  %v6797 = vld [vmem:[%s4 + $0x4c8] sm:$0xff]
  %v6798 = vld [vmem:[%s4 + $0x4d0] sm:$0xff]
  %v6799 = vld [vmem:[%s4 + $0x4d8] sm:$0xff]
  %v6800 = vld [vmem:[%s4 + $0x4e0] sm:$0xff]
  %v6801 = vld [vmem:[%s4 + $0x4e8] sm:$0xff]
  %v6802 = vld [vmem:[%s4 + $0x4f0] sm:$0xff]
  %v6803 = vld [vmem:[%s4 + $0x4f8] sm:$0xff]
  %v6804 = vld [vmem:[%s4 + $0x500] sm:$0xff]
  %v6805 = vld [vmem:[%s4 + $0x508] sm:$0xff]
  %v6806 = vld [vmem:[%s4 + $0x510] sm:$0xff]
  %v6807 = vld [vmem:[%s4 + $0x518] sm:$0xff]
  %v6808 = vld [vmem:[%s4 + $0x520] sm:$0xff]
  %v6809 = vld [vmem:[%s4 + $0x528] sm:$0xff]
  %v6810 = vld [vmem:[%s4 + $0x530] sm:$0xff]
  %v6811 = vld [vmem:[%s4 + $0x538] sm:$0xff]
  %v6812 = vld [vmem:[%s4 + $0x540] sm:$0xff]
  %v6813 = vld [vmem:[%s4 + $0x548] sm:$0xff]
  %v6814 = vld [vmem:[%s4 + $0x550] sm:$0xff]
  %v6815 = vld [vmem:[%s4 + $0x558] sm:$0xff]
  %v6816 = vld [vmem:[%s4 + $0x560] sm:$0xff]
  %v6817 = vld [vmem:[%s4 + $0x568] sm:$0xff]
  %v6818 = vld [vmem:[%s4 + $0x570] sm:$0xff]
  %v6819 = vld [vmem:[%s4 + $0x578] sm:$0xff]
  %v6820 = vld [vmem:[%s4 + $0x580] sm:$0xff]
  %v6821 = vld [vmem:[%s4 + $0x588] sm:$0xff]
  %v6822 = vld [vmem:[%s4 + $0x590] sm:$0xff]
  %v6823 = vld [vmem:[%s4 + $0x598] sm:$0xff]
  %v6824 = vld [vmem:[%s4 + $0x5a0] sm:$0xff]
  %v6825 = vld [vmem:[%s4 + $0x5a8] sm:$0xff]
  %v6826 = vld [vmem:[%s4 + $0x5b0] sm:$0xff]
  %v6827 = vld [vmem:[%s4 + $0x5b8] sm:$0xff]
  %v6828 = vld [vmem:[%s4 + $0x5c0] sm:$0xff]
  %v6829 = vld [vmem:[%s4 + $0x5c8] sm:$0xff]
  %v6830 = vld [vmem:[%s4 + $0x5d0] sm:$0xff]
  %v6831 = vld [vmem:[%s4 + $0x5d8] sm:$0xff]
  %v6832 = vld [vmem:[%s4 + $0x5e0] sm:$0xff]
  %v6833 = vld [vmem:[%s4 + $0x5e8] sm:$0xff]
  %v6834 = vld [vmem:[%s4 + $0x5f0] sm:$0xff]
  %v6835 = vld [vmem:[%s4 + $0x5f8] sm:$0xff]
  %v6836 = vld [vmem:[%s4 + $0x600] sm:$0xff]
  %v6837 = vld [vmem:[%s4 + $0x608] sm:$0xff]
  %v6838 = vld [vmem:[%s4 + $0x610] sm:$0xff]
  %v6839 = vld [vmem:[%s4 + $0x618] sm:$0xff]
  %v6840 = vld [vmem:[%s4 + $0x620] sm:$0xff]
  %v6841 = vld [vmem:[%s4 + $0x628] sm:$0xff]
  %v6842 = vld [vmem:[%s4 + $0x630] sm:$0xff]
  %v6843 = vld [vmem:[%s4 + $0x638] sm:$0xff]
  %v6844 = vld [vmem:[%s4 + $0x640] sm:$0xff]
  %v6845 = vld [vmem:[%s4 + $0x648] sm:$0xff]
  %v6846 = vld [vmem:[%s4 + $0x650] sm:$0xff]
  %v6847 = vld [vmem:[%s4 + $0x658] sm:$0xff]
  %v6848 = vld [vmem:[%s4 + $0x660] sm:$0xff]
  %v6849 = vld [vmem:[%s4 + $0x668] sm:$0xff]
  %v6850 = vld [vmem:[%s4 + $0x670] sm:$0xff]
  %v6851 = vld [vmem:[%s4 + $0x678] sm:$0xff]
  %v6852 = vld [vmem:[%s4 + $0x680] sm:$0xff]
  %v6853 = vld [vmem:[%s4 + $0x688] sm:$0xff]
  %v6854 = vld [vmem:[%s4 + $0x690] sm:$0xff]
  %v6855 = vld [vmem:[%s4 + $0x698] sm:$0xff]
  %v6856 = vld [vmem:[%s4 + $0x6a0] sm:$0xff]
  %v6857 = vld [vmem:[%s4 + $0x6a8] sm:$0xff]
  %v6858 = vld [vmem:[%s4 + $0x6b0] sm:$0xff]
  %v6859 = vld [vmem:[%s4 + $0x6b8] sm:$0xff]
  %v6860 = vld [vmem:[%s4 + $0x6c0] sm:$0xff]
  %v6861 = vld [vmem:[%s4 + $0x6c8] sm:$0xff]
  %v6862 = vld [vmem:[%s4 + $0x6d0] sm:$0xff]
  %v6863 = vld [vmem:[%s4 + $0x6d8] sm:$0xff]
  %v6864 = vld [vmem:[%s4 + $0x6e0] sm:$0xff]
  %v6865 = vld [vmem:[%s4 + $0x6e8] sm:$0xff]
  %v6866 = vld [vmem:[%s4 + $0x6f0] sm:$0xff]
  %v6867 = vld [vmem:[%s4 + $0x6f8] sm:$0xff]
  %v6868 = vld [vmem:[%s4 + $0x700] sm:$0xff]
  %v6869 = vld [vmem:[%s4 + $0x708] sm:$0xff]
  %v6870 = vld [vmem:[%s4 + $0x710] sm:$0xff]
  %v6871 = vld [vmem:[%s4 + $0x718] sm:$0xff]
  %v6872 = vld [vmem:[%s4 + $0x720] sm:$0xff]
  %v6873 = vld [vmem:[%s4 + $0x728] sm:$0xff]
  %v6874 = vld [vmem:[%s4 + $0x730] sm:$0xff]
  %v6875 = vld [vmem:[%s4 + $0x738] sm:$0xff]
  %v6876 = vld [vmem:[%s4 + $0x740] sm:$0xff]
  %v6877 = vld [vmem:[%s4 + $0x748] sm:$0xff]
  %v6878 = vld [vmem:[%s4 + $0x750] sm:$0xff]
  %v6879 = vld [vmem:[%s4 + $0x758] sm:$0xff]
  %v6880 = vld [vmem:[%s4 + $0x760] sm:$0xff]
  %v6881 = vld [vmem:[%s4 + $0x768] sm:$0xff]
  %v6882 = vld [vmem:[%s4 + $0x770] sm:$0xff]
  %v6883 = vld [vmem:[%s4 + $0x778] sm:$0xff]
  %v6884 = vld [vmem:[%s4 + $0x780] sm:$0xff]
  %v6885 = vld [vmem:[%s4 + $0x788] sm:$0xff]
  %v6886 = vld [vmem:[%s4 + $0x790] sm:$0xff]
  %v6887 = vld [vmem:[%s4 + $0x798] sm:$0xff]
  %v6888 = vld [vmem:[%s4 + $0x7a0] sm:$0xff]
  %v6889 = vld [vmem:[%s4 + $0x7a8] sm:$0xff]
  %v6890 = vld [vmem:[%s4 + $0x7b0] sm:$0xff]
  %v6891 = vld [vmem:[%s4 + $0x7b8] sm:$0xff]
  %v6892 = vld [vmem:[%s4 + $0x7c0] sm:$0xff]
  %v6893 = vld [vmem:[%s4 + $0x7c8] sm:$0xff]
  %v6894 = vld [vmem:[%s4 + $0x7d0] sm:$0xff]
  %v6895 = vld [vmem:[%s4 + $0x7d8] sm:$0xff]
  %v6896 = vld [vmem:[%s4 + $0x7e0] sm:$0xff]
  %v6897 = vld [vmem:[%s4 + $0x7e8] sm:$0xff]
  %v6898 = vld [vmem:[%s4 + $0x7f0] sm:$0xff]
  %v6899 = vld [vmem:[%s4 + $0x7f8] sm:$0xff]
  %v6900 = vld [vmem:[%s4 + $0x800] sm:$0xff]
  %v6901 = vld [vmem:[%s4 + $0x808] sm:$0xff]
  %v6902 = vld [vmem:[%s4 + $0x810] sm:$0xff]
  %v6903 = vld [vmem:[%s4 + $0x818] sm:$0xff]
  %v6904 = vld [vmem:[%s4 + $0x820] sm:$0xff]
  %v6905 = vld [vmem:[%s4 + $0x828] sm:$0xff]
  %v6906 = vld [vmem:[%s4 + $0x830] sm:$0xff]
  %v6907 = vld [vmem:[%s4 + $0x838] sm:$0xff]
  %v6908 = vld [vmem:[%s4 + $0x840] sm:$0xff]
  %v6909 = vld [vmem:[%s4 + $0x848] sm:$0xff]
  %v6910 = vld [vmem:[%s4 + $0x850] sm:$0xff]
  %v6911 = vld [vmem:[%s4 + $0x858] sm:$0xff]
  %v6912 = vld [vmem:[%s4 + $0x860] sm:$0xff]
  %v6913 = vld [vmem:[%s4 + $0x868] sm:$0xff]
  %v6914 = vld [vmem:[%s4 + $0x870] sm:$0xff]
  %v6915 = vld [vmem:[%s4 + $0x878] sm:$0xff]
  %v6916 = vld [vmem:[%s4 + $0x880] sm:$0xff]
  %v6917 = vld [vmem:[%s4 + $0x888] sm:$0xff]
  %v6918 = vld [vmem:[%s4 + $0x890] sm:$0xff]
  %v6919 = vld [vmem:[%s4 + $0x898] sm:$0xff]
  %v6920 = vld [vmem:[%s4 + $0x8a0] sm:$0xff]
  %v6921 = vld [vmem:[%s4 + $0x8a8] sm:$0xff]
  %v6922 = vld [vmem:[%s4 + $0x8b0] sm:$0xff]
  %v6923 = vld [vmem:[%s4 + $0x8b8] sm:$0xff]
  %v6924 = vld [vmem:[%s4 + $0x8c0] sm:$0xff]
  %v6925 = vld [vmem:[%s4 + $0x8c8] sm:$0xff]
  %v6926 = vld [vmem:[%s4 + $0x8d0] sm:$0xff]
  %v6927 = vld [vmem:[%s4 + $0x8d8] sm:$0xff]
  %v6928 = vld [vmem:[%s4 + $0x8e0] sm:$0xff]
  %v6929 = vld [vmem:[%s4 + $0x8e8] sm:$0xff]
  %v6930 = vld [vmem:[%s4 + $0x8f0] sm:$0xff]
  %v6931 = vld [vmem:[%s4 + $0x8f8] sm:$0xff]
  %v6932 = vld [vmem:[%s4 + $0x900] sm:$0xff]
  %v6933 = vld [vmem:[%s4 + $0x908] sm:$0xff]
  %v6934 = vld [vmem:[%s4 + $0x910] sm:$0xff]
  %v6935 = vld [vmem:[%s4 + $0x918] sm:$0xff]
  %v6936 = vld [vmem:[%s4 + $0x920] sm:$0xff]
  %v6937 = vld [vmem:[%s4 + $0x928] sm:$0xff]
  %v7232 = vunpack.c.l.b16 %v6644
  %v7233 = vunpack.c.h.b16 %v6644
  %v7234 = vunpack.c.l.b16 %v6645
  %v7235 = vunpack.c.h.b16 %v6645
  %v7236 = vunpack.c.l.b16 %v6646
  %v7237 = vunpack.c.h.b16 %v6646
  %v7238 = vunpack.c.l.b16 %v6647
  %v7239 = vunpack.c.h.b16 %v6647
  %v7240 = vunpack.c.l.b16 %v6648
  %v7241 = vunpack.c.h.b16 %v6648
  %v7242 = vunpack.c.l.b16 %v6649
  %v7243 = vunpack.c.h.b16 %v6649
  %v7244 = vunpack.c.l.b16 %v6650
  %v7245 = vunpack.c.h.b16 %v6650
  %v7246 = vunpack.c.l.b16 %v6651
  %v7247 = vunpack.c.h.b16 %v6651
  %v7248 = vunpack.c.l.b16 %v6652
  %v7249 = vunpack.c.h.b16 %v6652
  %v7250 = vunpack.c.l.b16 %v6653
  %v7251 = vunpack.c.h.b16 %v6653
  %v7252 = vunpack.c.l.b16 %v6654
  %v7253 = vunpack.c.h.b16 %v6654
  %v7254 = vunpack.c.l.b16 %v6655
  %v7255 = vunpack.c.h.b16 %v6655
  %v7256 = vunpack.c.l.b16 %v6656
  %v7257 = vunpack.c.h.b16 %v6656
  %v7258 = vunpack.c.l.b16 %v6657
  %v7259 = vunpack.c.h.b16 %v6657
  %v7260 = vunpack.c.l.b16 %v6658
  %v7261 = vunpack.c.h.b16 %v6658
  %v7262 = vunpack.c.l.b16 %v6659
  %v7263 = vunpack.c.h.b16 %v6659
  %v7264 = vunpack.c.l.b16 %v6660
  %v7265 = vunpack.c.h.b16 %v6660
  %v7266 = vunpack.c.l.b16 %v6661
  %v7267 = vunpack.c.h.b16 %v6661
  %v7268 = vunpack.c.l.b16 %v6662
  %v7269 = vunpack.c.h.b16 %v6662
  %v7270 = vunpack.c.l.b16 %v6663
  %v7271 = vunpack.c.h.b16 %v6663
  %v7272 = vunpack.c.l.b16 %v6664
  %v7273 = vunpack.c.h.b16 %v6664
  %v7274 = vunpack.c.l.b16 %v6665
  %v7275 = vunpack.c.h.b16 %v6665
  %v7276 = vunpack.c.l.b16 %v6666
  %v7277 = vunpack.c.h.b16 %v6666
  %v7278 = vunpack.c.l.b16 %v6667
  %v7279 = vunpack.c.h.b16 %v6667
  %v7280 = vunpack.c.l.b16 %v6668
  %v7281 = vunpack.c.h.b16 %v6668
  %v7282 = vunpack.c.l.b16 %v6669
  %v7283 = vunpack.c.h.b16 %v6669
  %v7284 = vunpack.c.l.b16 %v6670
  %v7285 = vunpack.c.h.b16 %v6670
  %v7286 = vunpack.c.l.b16 %v6671
  %v7287 = vunpack.c.h.b16 %v6671
  %v7288 = vunpack.c.l.b16 %v6672
  %v7289 = vunpack.c.h.b16 %v6672
  %v7290 = vunpack.c.l.b16 %v6673
  %v7291 = vunpack.c.h.b16 %v6673
  %v7292 = vunpack.c.l.b16 %v6674
  %v7293 = vunpack.c.h.b16 %v6674
  %v7294 = vunpack.c.l.b16 %v6675
  %v7295 = vunpack.c.h.b16 %v6675
  %v7296 = vunpack.c.l.b16 %v6676
  %v7297 = vunpack.c.h.b16 %v6676
  %v7298 = vunpack.c.l.b16 %v6677
  %v7299 = vunpack.c.h.b16 %v6677
  %v7300 = vunpack.c.l.b16 %v6678
  %v7301 = vunpack.c.h.b16 %v6678
  %v7302 = vunpack.c.l.b16 %v6679
  %v7303 = vunpack.c.h.b16 %v6679
  %v7304 = vunpack.c.l.b16 %v6680
  %v7305 = vunpack.c.h.b16 %v6680
  %v7306 = vunpack.c.l.b16 %v6681
  %v7307 = vunpack.c.h.b16 %v6681
  %v7308 = vunpack.c.l.b16 %v6682
  %v7309 = vunpack.c.h.b16 %v6682
  %v7310 = vunpack.c.l.b16 %v6683
  %v7311 = vunpack.c.h.b16 %v6683
  %v7312 = vunpack.c.l.b16 %v6684
  %v7313 = vunpack.c.h.b16 %v6684
  %v7314 = vunpack.c.l.b16 %v6685
  %v7315 = vunpack.c.h.b16 %v6685
  %v7316 = vunpack.c.l.b16 %v6686
  %v7317 = vunpack.c.h.b16 %v6686
  %v7318 = vunpack.c.l.b16 %v6687
  %v7319 = vunpack.c.h.b16 %v6687
  %v7320 = vunpack.c.l.b16 %v6688
  %v7321 = vunpack.c.h.b16 %v6688
  %v7322 = vunpack.c.l.b16 %v6689
  %v7323 = vunpack.c.h.b16 %v6689
  %v7324 = vunpack.c.l.b16 %v6690
  %v7325 = vunpack.c.h.b16 %v6690
  %v7326 = vunpack.c.l.b16 %v6691
  %v7327 = vunpack.c.h.b16 %v6691
  %v7328 = vunpack.c.l.b16 %v6692
  %v7329 = vunpack.c.h.b16 %v6692
  %v7330 = vunpack.c.l.b16 %v6693
  %v7331 = vunpack.c.h.b16 %v6693
  %v7332 = vunpack.c.l.b16 %v6694
  %v7333 = vunpack.c.h.b16 %v6694
  %v7334 = vunpack.c.l.b16 %v6695
  %v7335 = vunpack.c.h.b16 %v6695
  %v7336 = vunpack.c.l.b16 %v6696
  %v7337 = vunpack.c.h.b16 %v6696
  %v7338 = vunpack.c.l.b16 %v6697
  %v7339 = vunpack.c.h.b16 %v6697
  %v7340 = vunpack.c.l.b16 %v6698
  %v7341 = vunpack.c.h.b16 %v6698
  %v7342 = vunpack.c.l.b16 %v6699
  %v7343 = vunpack.c.h.b16 %v6699
  %v7344 = vunpack.c.l.b16 %v6700
  %v7345 = vunpack.c.h.b16 %v6700
  %v7346 = vunpack.c.l.b16 %v6701
  %v7347 = vunpack.c.h.b16 %v6701
  %v7348 = vunpack.c.l.b16 %v6702
  %v7349 = vunpack.c.h.b16 %v6702
  %v7350 = vunpack.c.l.b16 %v6703
  %v7351 = vunpack.c.h.b16 %v6703
  %v7352 = vunpack.c.l.b16 %v6704
  %v7353 = vunpack.c.h.b16 %v6704
  %v7354 = vunpack.c.l.b16 %v6705
  %v7355 = vunpack.c.h.b16 %v6705
  %v7356 = vunpack.c.l.b16 %v6706
  %v7357 = vunpack.c.h.b16 %v6706
  %v7358 = vunpack.c.l.b16 %v6707
  %v7359 = vunpack.c.h.b16 %v6707
  %v7360 = vunpack.c.l.b16 %v6708
  %v7361 = vunpack.c.h.b16 %v6708
  %v7362 = vunpack.c.l.b16 %v6709
  %v7363 = vunpack.c.h.b16 %v6709
  %v7364 = vunpack.c.l.b16 %v6710
  %v7365 = vunpack.c.h.b16 %v6710
  %v7366 = vunpack.c.l.b16 %v6711
  %v7367 = vunpack.c.h.b16 %v6711
  %v7368 = vunpack.c.l.b16 %v6712
  %v7369 = vunpack.c.h.b16 %v6712
  %v7370 = vunpack.c.l.b16 %v6713
  %v7371 = vunpack.c.h.b16 %v6713
  %v7372 = vunpack.c.l.b16 %v6714
  %v7373 = vunpack.c.h.b16 %v6714
  %v7374 = vunpack.c.l.b16 %v6715
  %v7375 = vunpack.c.h.b16 %v6715
  %v7376 = vunpack.c.l.b16 %v6716
  %v7377 = vunpack.c.h.b16 %v6716
  %v7378 = vunpack.c.l.b16 %v6717
  %v7379 = vunpack.c.h.b16 %v6717
  %v7380 = vunpack.c.l.b16 %v6718
  %v7381 = vunpack.c.h.b16 %v6718
  %v7382 = vunpack.c.l.b16 %v6719
  %v7383 = vunpack.c.h.b16 %v6719
  %v7384 = vunpack.c.l.b16 %v6720
  %v7385 = vunpack.c.h.b16 %v6720
  %v7386 = vunpack.c.l.b16 %v6721
  %v7387 = vunpack.c.h.b16 %v6721
  %v7388 = vunpack.c.l.b16 %v6722
  %v7389 = vunpack.c.h.b16 %v6722
  %v7390 = vunpack.c.l.b16 %v6723
  %v7391 = vunpack.c.h.b16 %v6723
  %v7392 = vunpack.c.l.b16 %v6724
  %v7393 = vunpack.c.h.b16 %v6724
  %v7394 = vunpack.c.l.b16 %v6725
  %v7395 = vunpack.c.h.b16 %v6725
  %v7396 = vunpack.c.l.b16 %v6726
  %v7397 = vunpack.c.h.b16 %v6726
  %v7398 = vunpack.c.l.b16 %v6727
  %v7399 = vunpack.c.h.b16 %v6727
  %v7400 = vunpack.c.l.b16 %v6728
  %v7401 = vunpack.c.h.b16 %v6728
  %v7402 = vunpack.c.l.b16 %v6729
  %v7403 = vunpack.c.h.b16 %v6729
  %v7404 = vunpack.c.l.b16 %v6730
  %v7405 = vunpack.c.h.b16 %v6730
  %v7406 = vunpack.c.l.b16 %v6731
  %v7407 = vunpack.c.h.b16 %v6731
  %v7408 = vunpack.c.l.b16 %v6732
  %v7409 = vunpack.c.h.b16 %v6732
  %v7410 = vunpack.c.l.b16 %v6733
  %v7411 = vunpack.c.h.b16 %v6733
  %v7412 = vunpack.c.l.b16 %v6734
  %v7413 = vunpack.c.h.b16 %v6734
  %v7414 = vunpack.c.l.b16 %v6735
  %v7415 = vunpack.c.h.b16 %v6735
  %v7416 = vunpack.c.l.b16 %v6736
  %v7417 = vunpack.c.h.b16 %v6736
  %v7418 = vunpack.c.l.b16 %v6737
  %v7419 = vunpack.c.h.b16 %v6737
  %v7420 = vunpack.c.l.b16 %v6738
  %v7421 = vunpack.c.h.b16 %v6738
  %v7422 = vunpack.c.l.b16 %v6739
  %v7423 = vunpack.c.h.b16 %v6739
  %v7424 = vunpack.c.l.b16 %v6740
  %v7425 = vunpack.c.h.b16 %v6740
  %v7426 = vunpack.c.l.b16 %v6741
  %v7427 = vunpack.c.h.b16 %v6741
  %v7428 = vunpack.c.l.b16 %v6742
  %v7429 = vunpack.c.h.b16 %v6742
  %v7430 = vunpack.c.l.b16 %v6743
  %v7431 = vunpack.c.h.b16 %v6743
  %v7432 = vunpack.c.l.b16 %v6744
  %v7433 = vunpack.c.h.b16 %v6744
  %v7434 = vunpack.c.l.b16 %v6745
  %v7435 = vunpack.c.h.b16 %v6745
  %v7436 = vunpack.c.l.b16 %v6746
  %v7437 = vunpack.c.h.b16 %v6746
  %v7438 = vunpack.c.l.b16 %v6747
  %v7439 = vunpack.c.h.b16 %v6747
  %v7440 = vunpack.c.l.b16 %v6748
  %v7441 = vunpack.c.h.b16 %v6748
  %v7442 = vunpack.c.l.b16 %v6749
  %v7443 = vunpack.c.h.b16 %v6749
  %v7444 = vunpack.c.l.b16 %v6750
  %v7445 = vunpack.c.h.b16 %v6750
  %v7446 = vunpack.c.l.b16 %v6751
  %v7447 = vunpack.c.h.b16 %v6751
  %v7448 = vunpack.c.l.b16 %v6752
  %v7449 = vunpack.c.h.b16 %v6752
  %v7450 = vunpack.c.l.b16 %v6753
  %v7451 = vunpack.c.h.b16 %v6753
  %v7452 = vunpack.c.l.b16 %v6754
  %v7453 = vunpack.c.h.b16 %v6754
  %v7454 = vunpack.c.l.b16 %v6755
  %v7455 = vunpack.c.h.b16 %v6755
  %v7456 = vunpack.c.l.b16 %v6756
  %v7457 = vunpack.c.h.b16 %v6756
  %v7458 = vunpack.c.l.b16 %v6757
  %v7459 = vunpack.c.h.b16 %v6757
  %v7460 = vunpack.c.l.b16 %v6758
  %v7461 = vunpack.c.h.b16 %v6758
  %v7462 = vunpack.c.l.b16 %v6759
  %v7463 = vunpack.c.h.b16 %v6759
  %v7464 = vunpack.c.l.b16 %v6760
  %v7465 = vunpack.c.h.b16 %v6760
  %v7466 = vunpack.c.l.b16 %v6761
  %v7467 = vunpack.c.h.b16 %v6761
  %v7468 = vunpack.c.l.b16 %v6762
  %v7469 = vunpack.c.h.b16 %v6762
  %v7470 = vunpack.c.l.b16 %v6763
  %v7471 = vunpack.c.h.b16 %v6763
  %v7472 = vunpack.c.l.b16 %v6764
  %v7473 = vunpack.c.h.b16 %v6764
  %v7474 = vunpack.c.l.b16 %v6765
  %v7475 = vunpack.c.h.b16 %v6765
  %v7476 = vunpack.c.l.b16 %v6766
  %v7477 = vunpack.c.h.b16 %v6766
  %v7478 = vunpack.c.l.b16 %v6767
  %v7479 = vunpack.c.h.b16 %v6767
  %v7480 = vunpack.c.l.b16 %v6768
  %v7481 = vunpack.c.h.b16 %v6768
  %v7482 = vunpack.c.l.b16 %v6769
  %v7483 = vunpack.c.h.b16 %v6769
  %v7484 = vunpack.c.l.b16 %v6770
  %v7485 = vunpack.c.h.b16 %v6770
  %v7486 = vunpack.c.l.b16 %v6771
  %v7487 = vunpack.c.h.b16 %v6771
  %v7488 = vunpack.c.l.b16 %v6772
  %v7489 = vunpack.c.h.b16 %v6772
  %v7490 = vunpack.c.l.b16 %v6773
  %v7491 = vunpack.c.h.b16 %v6773
  %v7492 = vunpack.c.l.b16 %v6774
  %v7493 = vunpack.c.h.b16 %v6774
  %v7494 = vunpack.c.l.b16 %v6775
  %v7495 = vunpack.c.h.b16 %v6775
  %v7496 = vunpack.c.l.b16 %v6776
  %v7497 = vunpack.c.h.b16 %v6776
  %v7498 = vunpack.c.l.b16 %v6777
  %v7499 = vunpack.c.h.b16 %v6777
  %v7500 = vunpack.c.l.b16 %v6778
  %v7501 = vunpack.c.h.b16 %v6778
  %v7502 = vunpack.c.l.b16 %v6779
  %v7503 = vunpack.c.h.b16 %v6779
  %v7504 = vunpack.c.l.b16 %v6780
  %v7505 = vunpack.c.h.b16 %v6780
  %v7506 = vunpack.c.l.b16 %v6781
  %v7507 = vunpack.c.h.b16 %v6781
  %v7508 = vunpack.c.l.b16 %v6782
  %v7509 = vunpack.c.h.b16 %v6782
  %v7510 = vunpack.c.l.b16 %v6783
  %v7511 = vunpack.c.h.b16 %v6783
  %v7512 = vunpack.c.l.b16 %v6784
  %v7513 = vunpack.c.h.b16 %v6784
  %v7514 = vunpack.c.l.b16 %v6785
  %v7515 = vunpack.c.h.b16 %v6785
  %v7516 = vunpack.c.l.b16 %v6786
  %v7517 = vunpack.c.h.b16 %v6786
  %v7518 = vunpack.c.l.b16 %v6787
  %v7519 = vunpack.c.h.b16 %v6787
  %v7520 = vunpack.c.l.b16 %v6788
  %v7521 = vunpack.c.h.b16 %v6788
  %v7522 = vunpack.c.l.b16 %v6789
  %v7523 = vunpack.c.h.b16 %v6789
  %v7524 = vunpack.c.l.b16 %v6790
  %v7525 = vunpack.c.h.b16 %v6790
  %v7526 = vunpack.c.l.b16 %v6791
  %v7527 = vunpack.c.h.b16 %v6791
  %v7528 = vunpack.c.l.b16 %v6792
  %v7529 = vunpack.c.h.b16 %v6792
  %v7530 = vunpack.c.l.b16 %v6793
  %v7531 = vunpack.c.h.b16 %v6793
  %v7532 = vunpack.c.l.b16 %v6794
  %v7533 = vunpack.c.h.b16 %v6794
  %v7534 = vunpack.c.l.b16 %v6795
  %v7535 = vunpack.c.h.b16 %v6795
  %v7536 = vunpack.c.l.b16 %v6796
  %v7537 = vunpack.c.h.b16 %v6796
  %v7538 = vunpack.c.l.b16 %v6797
  %v7539 = vunpack.c.h.b16 %v6797
  %v7540 = vunpack.c.l.b16 %v6798
  %v7541 = vunpack.c.h.b16 %v6798
  %v7542 = vunpack.c.l.b16 %v6799
  %v7543 = vunpack.c.h.b16 %v6799
  %v7544 = vunpack.c.l.b16 %v6800
  %v7545 = vunpack.c.h.b16 %v6800
  %v7546 = vunpack.c.l.b16 %v6801
  %v7547 = vunpack.c.h.b16 %v6801
  %v7548 = vunpack.c.l.b16 %v6802
  %v7549 = vunpack.c.h.b16 %v6802
  %v7550 = vunpack.c.l.b16 %v6803
  %v7551 = vunpack.c.h.b16 %v6803
  %v7552 = vunpack.c.l.b16 %v6804
  %v7553 = vunpack.c.h.b16 %v6804
  %v7554 = vunpack.c.l.b16 %v6805
  %v7555 = vunpack.c.h.b16 %v6805
  %v7556 = vunpack.c.l.b16 %v6806
  %v7557 = vunpack.c.h.b16 %v6806
  %v7558 = vunpack.c.l.b16 %v6807
  %v7559 = vunpack.c.h.b16 %v6807
  %v7560 = vunpack.c.l.b16 %v6808
  %v7561 = vunpack.c.h.b16 %v6808
  %v7562 = vunpack.c.l.b16 %v6809
  %v7563 = vunpack.c.h.b16 %v6809
  %v7564 = vunpack.c.l.b16 %v6810
  %v7565 = vunpack.c.h.b16 %v6810
  %v7566 = vunpack.c.l.b16 %v6811
  %v7567 = vunpack.c.h.b16 %v6811
  %v7568 = vunpack.c.l.b16 %v6812
  %v7569 = vunpack.c.h.b16 %v6812
  %v7570 = vunpack.c.l.b16 %v6813
  %v7571 = vunpack.c.h.b16 %v6813
  %v7572 = vunpack.c.l.b16 %v6814
  %v7573 = vunpack.c.h.b16 %v6814
  %v7574 = vunpack.c.l.b16 %v6815
  %v7575 = vunpack.c.h.b16 %v6815
  %v7576 = vunpack.c.l.b16 %v6816
  %v7577 = vunpack.c.h.b16 %v6816
  %v7578 = vunpack.c.l.b16 %v6817
  %v7579 = vunpack.c.h.b16 %v6817
  %v7580 = vunpack.c.l.b16 %v6818
  %v7581 = vunpack.c.h.b16 %v6818
  %v7582 = vunpack.c.l.b16 %v6819
  %v7583 = vunpack.c.h.b16 %v6819
  %v7584 = vunpack.c.l.b16 %v6820
  %v7585 = vunpack.c.h.b16 %v6820
  %v7586 = vunpack.c.l.b16 %v6821
  %v7587 = vunpack.c.h.b16 %v6821
  %v7588 = vunpack.c.l.b16 %v6822
  %v7589 = vunpack.c.h.b16 %v6822
  %v7590 = vunpack.c.l.b16 %v6823
  %v7591 = vunpack.c.h.b16 %v6823
  %v7592 = vunpack.c.l.b16 %v6824
  %v7593 = vunpack.c.h.b16 %v6824
  %v7594 = vunpack.c.l.b16 %v6825
  %v7595 = vunpack.c.h.b16 %v6825
  %v7596 = vunpack.c.l.b16 %v6826
  %v7597 = vunpack.c.h.b16 %v6826
  %v7598 = vunpack.c.l.b16 %v6827
  %v7599 = vunpack.c.h.b16 %v6827
  %v7600 = vunpack.c.l.b16 %v6828
  %v7601 = vunpack.c.h.b16 %v6828
  %v7602 = vunpack.c.l.b16 %v6829
  %v7603 = vunpack.c.h.b16 %v6829
  %v7604 = vunpack.c.l.b16 %v6830
  %v7605 = vunpack.c.h.b16 %v6830
  %v7606 = vunpack.c.l.b16 %v6831
  %v7607 = vunpack.c.h.b16 %v6831
  %v7608 = vunpack.c.l.b16 %v6832
  %v7609 = vunpack.c.h.b16 %v6832
  %v7610 = vunpack.c.l.b16 %v6833
  %v7611 = vunpack.c.h.b16 %v6833
  %v7612 = vunpack.c.l.b16 %v6834
  %v7613 = vunpack.c.h.b16 %v6834
  %v7614 = vunpack.c.l.b16 %v6835
  %v7615 = vunpack.c.h.b16 %v6835
  %v7616 = vunpack.c.l.b16 %v6836
  %v7617 = vunpack.c.h.b16 %v6836
  %v7618 = vunpack.c.l.b16 %v6837
  %v7619 = vunpack.c.h.b16 %v6837
  %v7620 = vunpack.c.l.b16 %v6838
  %v7621 = vunpack.c.h.b16 %v6838
  %v7622 = vunpack.c.l.b16 %v6839
  %v7623 = vunpack.c.h.b16 %v6839
  %v7624 = vunpack.c.l.b16 %v6840
  %v7625 = vunpack.c.h.b16 %v6840
  %v7626 = vunpack.c.l.b16 %v6841
  %v7627 = vunpack.c.h.b16 %v6841
  %v7628 = vunpack.c.l.b16 %v6842
  %v7629 = vunpack.c.h.b16 %v6842
  %v7630 = vunpack.c.l.b16 %v6843
  %v7631 = vunpack.c.h.b16 %v6843
  %v7632 = vunpack.c.l.b16 %v6844
  %v7633 = vunpack.c.h.b16 %v6844
  %v7634 = vunpack.c.l.b16 %v6845
  %v7635 = vunpack.c.h.b16 %v6845
  %v7636 = vunpack.c.l.b16 %v6846
  %v7637 = vunpack.c.h.b16 %v6846
  %v7638 = vunpack.c.l.b16 %v6847
  %v7639 = vunpack.c.h.b16 %v6847
  %v7640 = vunpack.c.l.b16 %v6848
  %v7641 = vunpack.c.h.b16 %v6848
  %v7642 = vunpack.c.l.b16 %v6849
  %v7643 = vunpack.c.h.b16 %v6849
  %v7644 = vunpack.c.l.b16 %v6850
  %v7645 = vunpack.c.h.b16 %v6850
  %v7646 = vunpack.c.l.b16 %v6851
  %v7647 = vunpack.c.h.b16 %v6851
  %v7648 = vunpack.c.l.b16 %v6852
  %v7649 = vunpack.c.h.b16 %v6852
  %v7650 = vunpack.c.l.b16 %v6853
  %v7651 = vunpack.c.h.b16 %v6853
  %v7652 = vunpack.c.l.b16 %v6854
  %v7653 = vunpack.c.h.b16 %v6854
  %v7654 = vunpack.c.l.b16 %v6855
  %v7655 = vunpack.c.h.b16 %v6855
  %v7656 = vunpack.c.l.b16 %v6856
  %v7657 = vunpack.c.h.b16 %v6856
  %v7658 = vunpack.c.l.b16 %v6857
  %v7659 = vunpack.c.h.b16 %v6857
  %v7660 = vunpack.c.l.b16 %v6858
  %v7661 = vunpack.c.h.b16 %v6858
  %v7662 = vunpack.c.l.b16 %v6859
  %v7663 = vunpack.c.h.b16 %v6859
  %v7664 = vunpack.c.l.b16 %v6860
  %v7665 = vunpack.c.h.b16 %v6860
  %v7666 = vunpack.c.l.b16 %v6861
  %v7667 = vunpack.c.h.b16 %v6861
  %v7668 = vunpack.c.l.b16 %v6862
  %v7669 = vunpack.c.h.b16 %v6862
  %v7670 = vunpack.c.l.b16 %v6863
  %v7671 = vunpack.c.h.b16 %v6863
  %v7672 = vunpack.c.l.b16 %v6864
  %v7673 = vunpack.c.h.b16 %v6864
  %v7674 = vunpack.c.l.b16 %v6865
  %v7675 = vunpack.c.h.b16 %v6865
  %v7676 = vunpack.c.l.b16 %v6866
  %v7677 = vunpack.c.h.b16 %v6866
  %v7678 = vunpack.c.l.b16 %v6867
  %v7679 = vunpack.c.h.b16 %v6867
  %v7680 = vunpack.c.l.b16 %v6868
  %v7681 = vunpack.c.h.b16 %v6868
  %v7682 = vunpack.c.l.b16 %v6869
  %v7683 = vunpack.c.h.b16 %v6869
  %v7684 = vunpack.c.l.b16 %v6870
  %v7685 = vunpack.c.h.b16 %v6870
  %v7686 = vunpack.c.l.b16 %v6871
  %v7687 = vunpack.c.h.b16 %v6871
  %v7688 = vunpack.c.l.b16 %v6872
  %v7689 = vunpack.c.h.b16 %v6872
  %v7690 = vunpack.c.l.b16 %v6873
  %v7691 = vunpack.c.h.b16 %v6873
  %v7692 = vunpack.c.l.b16 %v6874
  %v7693 = vunpack.c.h.b16 %v6874
  %v7694 = vunpack.c.l.b16 %v6875
  %v7695 = vunpack.c.h.b16 %v6875
  %v7696 = vunpack.c.l.b16 %v6876
  %v7697 = vunpack.c.h.b16 %v6876
  %v7698 = vunpack.c.l.b16 %v6877
  %v7699 = vunpack.c.h.b16 %v6877
  %v7700 = vunpack.c.l.b16 %v6878
  %v7701 = vunpack.c.h.b16 %v6878
  %v7702 = vunpack.c.l.b16 %v6879
  %v7703 = vunpack.c.h.b16 %v6879
  %v7704 = vunpack.c.l.b16 %v6880
  %v7705 = vunpack.c.h.b16 %v6880
  %v7706 = vunpack.c.l.b16 %v6881
  %v7707 = vunpack.c.h.b16 %v6881
  %v7708 = vunpack.c.l.b16 %v6882
  %v7709 = vunpack.c.h.b16 %v6882
  %v7710 = vunpack.c.l.b16 %v6883
  %v7711 = vunpack.c.h.b16 %v6883
  %v7712 = vunpack.c.l.b16 %v6884
  %v7713 = vunpack.c.h.b16 %v6884
  %v7714 = vunpack.c.l.b16 %v6885
  %v7715 = vunpack.c.h.b16 %v6885
  %v7716 = vunpack.c.l.b16 %v6886
  %v7717 = vunpack.c.h.b16 %v6886
  %v7718 = vunpack.c.l.b16 %v6887
  %v7719 = vunpack.c.h.b16 %v6887
  %v7720 = vunpack.c.l.b16 %v6888
  %v7721 = vunpack.c.h.b16 %v6888
  %v7722 = vunpack.c.l.b16 %v6889
  %v7723 = vunpack.c.h.b16 %v6889
  %v7724 = vunpack.c.l.b16 %v6890
  %v7725 = vunpack.c.h.b16 %v6890
  %v7726 = vunpack.c.l.b16 %v6891
  %v7727 = vunpack.c.h.b16 %v6891
  %v7728 = vunpack.c.l.b16 %v6892
  %v7729 = vunpack.c.h.b16 %v6892
  %v7730 = vunpack.c.l.b16 %v6893
  %v7731 = vunpack.c.h.b16 %v6893
  %v7732 = vunpack.c.l.b16 %v6894
  %v7733 = vunpack.c.h.b16 %v6894
  %v7734 = vunpack.c.l.b16 %v6895
  %v7735 = vunpack.c.h.b16 %v6895
  %v7736 = vunpack.c.l.b16 %v6896
  %v7737 = vunpack.c.h.b16 %v6896
  %v7738 = vunpack.c.l.b16 %v6897
  %v7739 = vunpack.c.h.b16 %v6897
  %v7740 = vunpack.c.l.b16 %v6898
  %v7741 = vunpack.c.h.b16 %v6898
  %v7742 = vunpack.c.l.b16 %v6899
  %v7743 = vunpack.c.h.b16 %v6899
  %v7744 = vunpack.c.l.b16 %v6900
  %v7745 = vunpack.c.h.b16 %v6900
  %v7746 = vunpack.c.l.b16 %v6901
  %v7747 = vunpack.c.h.b16 %v6901
  %v7748 = vunpack.c.l.b16 %v6902
  %v7749 = vunpack.c.h.b16 %v6902
  %v7750 = vunpack.c.l.b16 %v6903
  %v7751 = vunpack.c.h.b16 %v6903
  %v7752 = vunpack.c.l.b16 %v6904
  %v7753 = vunpack.c.h.b16 %v6904
  %v7754 = vunpack.c.l.b16 %v6905
  %v7755 = vunpack.c.h.b16 %v6905
  %v7756 = vunpack.c.l.b16 %v6906
  %v7757 = vunpack.c.h.b16 %v6906
  %v7758 = vunpack.c.l.b16 %v6907
  %v7759 = vunpack.c.h.b16 %v6907
  %v7760 = vunpack.c.l.b16 %v6908
  %v7761 = vunpack.c.h.b16 %v6908
  %v7762 = vunpack.c.l.b16 %v6909
  %v7763 = vunpack.c.h.b16 %v6909
  %v7764 = vunpack.c.l.b16 %v6910
  %v7765 = vunpack.c.h.b16 %v6910
  %v7766 = vunpack.c.l.b16 %v6911
  %v7767 = vunpack.c.h.b16 %v6911
  %v7768 = vunpack.c.l.b16 %v6912
  %v7769 = vunpack.c.h.b16 %v6912
  %v7770 = vunpack.c.l.b16 %v6913
  %v7771 = vunpack.c.h.b16 %v6913
  %v7772 = vunpack.c.l.b16 %v6914
  %v7773 = vunpack.c.h.b16 %v6914
  %v7774 = vunpack.c.l.b16 %v6915
  %v7775 = vunpack.c.h.b16 %v6915
  %v7776 = vunpack.c.l.b16 %v6916
  %v7777 = vunpack.c.h.b16 %v6916
  %v7778 = vunpack.c.l.b16 %v6917
  %v7779 = vunpack.c.h.b16 %v6917
  %v7780 = vunpack.c.l.b16 %v6918
  %v7781 = vunpack.c.h.b16 %v6918
  %v7782 = vunpack.c.l.b16 %v6919
  %v7783 = vunpack.c.h.b16 %v6919
  %v7784 = vunpack.c.l.b16 %v6920
  %v7785 = vunpack.c.h.b16 %v6920
  %v7786 = vunpack.c.l.b16 %v6921
  %v7787 = vunpack.c.h.b16 %v6921
  %v7788 = vunpack.c.l.b16 %v6922
  %v7789 = vunpack.c.h.b16 %v6922
  %v7790 = vunpack.c.l.b16 %v6923
  %v7791 = vunpack.c.h.b16 %v6923
  %v7792 = vunpack.c.l.b16 %v6924
  %v7793 = vunpack.c.h.b16 %v6924
  %v7794 = vunpack.c.l.b16 %v6925
  %v7795 = vunpack.c.h.b16 %v6925
  %v7796 = vunpack.c.l.b16 %v6926
  %v7797 = vunpack.c.h.b16 %v6926
  %v7798 = vunpack.c.l.b16 %v6927
  %v7799 = vunpack.c.h.b16 %v6927
  %v7800 = vunpack.c.l.b16 %v6928
  %v7801 = vunpack.c.h.b16 %v6928
  %v7802 = vunpack.c.l.b16 %v6929
  %v7803 = vunpack.c.h.b16 %v6929
  %v7804 = vunpack.c.l.b16 %v6930
  %v7805 = vunpack.c.h.b16 %v6930
  %v7806 = vunpack.c.l.b16 %v6931
  %v7807 = vunpack.c.h.b16 %v6931
  %v7808 = vunpack.c.l.b16 %v6932
  %v7809 = vunpack.c.h.b16 %v6932
  %v7810 = vunpack.c.l.b16 %v6933
  %v7811 = vunpack.c.h.b16 %v6933
  %v7812 = vunpack.c.l.b16 %v6934
  %v7813 = vunpack.c.h.b16 %v6934
  %v7814 = vunpack.c.l.b16 %v6935
  %v7815 = vunpack.c.h.b16 %v6935
  %v7816 = vunpack.c.l.b16 %v6936
  %v7817 = vunpack.c.h.b16 %v6936
  %v7818 = vunpack.c.l.b16 %v6937
  %v7819 = vunpack.c.h.b16 %v6937
  %v7820 = vpack.c.b16 %v7236, %v7232
  %v7821 = vpack.c.b16 %v7237, %v7233
  %v7822 = vpack.c.b16 %v7238, %v7234
  %v7823 = vpack.c.b16 %v7239, %v7235
  %v7824 = vpack.c.b16 %v7244, %v7240
  %v7825 = vpack.c.b16 %v7245, %v7241
  %v7826 = vpack.c.b16 %v7246, %v7242
  %v7827 = vpack.c.b16 %v7247, %v7243
  %v7828 = vpack.c.b16 %v7252, %v7248
  %v7829 = vpack.c.b16 %v7253, %v7249
  %v7830 = vpack.c.b16 %v7254, %v7250
  %v7831 = vpack.c.b16 %v7255, %v7251
  %v7832 = vpack.c.b16 %v7260, %v7256
  %v7833 = vpack.c.b16 %v7261, %v7257
  %v7834 = vpack.c.b16 %v7262, %v7258
  %v7835 = vpack.c.b16 %v7263, %v7259
  %v7836 = vpack.c.b16 %v7268, %v7264
  %v7837 = vpack.c.b16 %v7269, %v7265
  %v7838 = vpack.c.b16 %v7270, %v7266
  %v7839 = vpack.c.b16 %v7271, %v7267
  %v7840 = vpack.c.b16 %v7276, %v7272
  %v7841 = vpack.c.b16 %v7277, %v7273
  %v7842 = vpack.c.b16 %v7278, %v7274
  %v7843 = vpack.c.b16 %v7279, %v7275
  %v7844 = vpack.c.b16 %v7284, %v7280
  %v7845 = vpack.c.b16 %v7285, %v7281
  %v7846 = vpack.c.b16 %v7286, %v7282
  %v7847 = vpack.c.b16 %v7287, %v7283
  %v7848 = vpack.c.b16 %v7292, %v7288
  %v7849 = vpack.c.b16 %v7293, %v7289
  %v7850 = vpack.c.b16 %v7294, %v7290
  %v7851 = vpack.c.b16 %v7295, %v7291
  %v7852 = vpack.c.b16 %v7300, %v7296
  %v7853 = vpack.c.b16 %v7301, %v7297
  %v7854 = vpack.c.b16 %v7302, %v7298
  %v7855 = vpack.c.b16 %v7303, %v7299
  %v7856 = vpack.c.b16 %v7308, %v7304
  %v7857 = vpack.c.b16 %v7309, %v7305
  %v7858 = vpack.c.b16 %v7310, %v7306
  %v7859 = vpack.c.b16 %v7311, %v7307
  %v7860 = vpack.c.b16 %v7316, %v7312
  %v7861 = vpack.c.b16 %v7317, %v7313
  %v7862 = vpack.c.b16 %v7318, %v7314
  %v7863 = vpack.c.b16 %v7319, %v7315
  %v7864 = vpack.c.b16 %v7324, %v7320
  %v7865 = vpack.c.b16 %v7325, %v7321
  %v7866 = vpack.c.b16 %v7326, %v7322
  %v7867 = vpack.c.b16 %v7327, %v7323
  %v7868 = vpack.c.b16 %v7332, %v7328
  %v7869 = vpack.c.b16 %v7333, %v7329
  %v7870 = vpack.c.b16 %v7334, %v7330
  %v7871 = vpack.c.b16 %v7335, %v7331
  %v7872 = vpack.c.b16 %v7340, %v7336
  %v7873 = vpack.c.b16 %v7341, %v7337
  %v7874 = vpack.c.b16 %v7342, %v7338
  %v7875 = vpack.c.b16 %v7343, %v7339
  %v7876 = vpack.c.b16 %v7348, %v7344
  %v7877 = vpack.c.b16 %v7349, %v7345
  %v7878 = vpack.c.b16 %v7350, %v7346
  %v7879 = vpack.c.b16 %v7351, %v7347
  %v7880 = vpack.c.b16 %v7356, %v7352
  %v7881 = vpack.c.b16 %v7357, %v7353
  %v7882 = vpack.c.b16 %v7358, %v7354
  %v7883 = vpack.c.b16 %v7359, %v7355
  %v7884 = vpack.c.b16 %v7364, %v7360
  %v7885 = vpack.c.b16 %v7365, %v7361
  %v7886 = vpack.c.b16 %v7366, %v7362
  %v7887 = vpack.c.b16 %v7367, %v7363
  %v7888 = vpack.c.b16 %v7372, %v7368
  %v7889 = vpack.c.b16 %v7373, %v7369
  %v7890 = vpack.c.b16 %v7374, %v7370
  %v7891 = vpack.c.b16 %v7375, %v7371
  %v7892 = vpack.c.b16 %v7380, %v7376
  %v7893 = vpack.c.b16 %v7381, %v7377
  %v7894 = vpack.c.b16 %v7382, %v7378
  %v7895 = vpack.c.b16 %v7383, %v7379
  %v7896 = vpack.c.b16 %v7388, %v7384
  %v7897 = vpack.c.b16 %v7389, %v7385
  %v7898 = vpack.c.b16 %v7390, %v7386
  %v7899 = vpack.c.b16 %v7391, %v7387
  %v7900 = vpack.c.b16 %v7396, %v7392
  %v7901 = vpack.c.b16 %v7397, %v7393
  %v7902 = vpack.c.b16 %v7398, %v7394
  %v7903 = vpack.c.b16 %v7399, %v7395
  %v7904 = vpack.c.b16 %v7404, %v7400
  %v7905 = vpack.c.b16 %v7405, %v7401
  %v7906 = vpack.c.b16 %v7406, %v7402
  %v7907 = vpack.c.b16 %v7407, %v7403
  %v7908 = vpack.c.b16 %v7412, %v7408
  %v7909 = vpack.c.b16 %v7413, %v7409
  %v7910 = vpack.c.b16 %v7414, %v7410
  %v7911 = vpack.c.b16 %v7415, %v7411
  %v7912 = vpack.c.b16 %v7420, %v7416
  %v7913 = vpack.c.b16 %v7421, %v7417
  %v7914 = vpack.c.b16 %v7422, %v7418
  %v7915 = vpack.c.b16 %v7423, %v7419
  %v7916 = vpack.c.b16 %v7428, %v7424
  %v7917 = vpack.c.b16 %v7429, %v7425
  %v7918 = vpack.c.b16 %v7430, %v7426
  %v7919 = vpack.c.b16 %v7431, %v7427
  %v7920 = vpack.c.b16 %v7436, %v7432
  %v7921 = vpack.c.b16 %v7437, %v7433
  %v7922 = vpack.c.b16 %v7438, %v7434
  %v7923 = vpack.c.b16 %v7439, %v7435
  %v7924 = vpack.c.b16 %v7444, %v7440
  %v7925 = vpack.c.b16 %v7445, %v7441
  %v7926 = vpack.c.b16 %v7446, %v7442
  %v7927 = vpack.c.b16 %v7447, %v7443
  %v7928 = vpack.c.b16 %v7452, %v7448
  %v7929 = vpack.c.b16 %v7453, %v7449
  %v7930 = vpack.c.b16 %v7454, %v7450
  %v7931 = vpack.c.b16 %v7455, %v7451
  %v7932 = vpack.c.b16 %v7460, %v7456
  %v7933 = vpack.c.b16 %v7461, %v7457
  %v7934 = vpack.c.b16 %v7462, %v7458
  %v7935 = vpack.c.b16 %v7463, %v7459
  %v7936 = vpack.c.b16 %v7468, %v7464
  %v7937 = vpack.c.b16 %v7469, %v7465
  %v7938 = vpack.c.b16 %v7470, %v7466
  %v7939 = vpack.c.b16 %v7471, %v7467
  %v7940 = vpack.c.b16 %v7476, %v7472
  %v7941 = vpack.c.b16 %v7477, %v7473
  %v7942 = vpack.c.b16 %v7478, %v7474
  %v7943 = vpack.c.b16 %v7479, %v7475
  %v7944 = vpack.c.b16 %v7484, %v7480
  %v7945 = vpack.c.b16 %v7485, %v7481
  %v7946 = vpack.c.b16 %v7486, %v7482
  %v7947 = vpack.c.b16 %v7487, %v7483
  %v7948 = vpack.c.b16 %v7492, %v7488
  %v7949 = vpack.c.b16 %v7493, %v7489
  %v7950 = vpack.c.b16 %v7494, %v7490
  %v7951 = vpack.c.b16 %v7495, %v7491
  %v7952 = vpack.c.b16 %v7500, %v7496
  %v7953 = vpack.c.b16 %v7501, %v7497
  %v7954 = vpack.c.b16 %v7502, %v7498
  %v7955 = vpack.c.b16 %v7503, %v7499
  %v7956 = vpack.c.b16 %v7508, %v7504
  %v7957 = vpack.c.b16 %v7509, %v7505
  %v7958 = vpack.c.b16 %v7510, %v7506
  %v7959 = vpack.c.b16 %v7511, %v7507
  %v7960 = vpack.c.b16 %v7516, %v7512
  %v7961 = vpack.c.b16 %v7517, %v7513
  %v7962 = vpack.c.b16 %v7518, %v7514
  %v7963 = vpack.c.b16 %v7519, %v7515
  %v7964 = vpack.c.b16 %v7524, %v7520
  %v7965 = vpack.c.b16 %v7525, %v7521
  %v7966 = vpack.c.b16 %v7526, %v7522
  %v7967 = vpack.c.b16 %v7527, %v7523
  %v7968 = vpack.c.b16 %v7532, %v7528
  %v7969 = vpack.c.b16 %v7533, %v7529
  %v7970 = vpack.c.b16 %v7534, %v7530
  %v7971 = vpack.c.b16 %v7535, %v7531
  %v7972 = vpack.c.b16 %v7540, %v7536
  %v7973 = vpack.c.b16 %v7541, %v7537
  %v7974 = vpack.c.b16 %v7542, %v7538
  %v7975 = vpack.c.b16 %v7543, %v7539
  %v7976 = vpack.c.b16 %v7548, %v7544
  %v7977 = vpack.c.b16 %v7549, %v7545
  %v7978 = vpack.c.b16 %v7550, %v7546
  %v7979 = vpack.c.b16 %v7551, %v7547
  %v7980 = vpack.c.b16 %v7556, %v7552
  %v7981 = vpack.c.b16 %v7557, %v7553
  %v7982 = vpack.c.b16 %v7558, %v7554
  %v7983 = vpack.c.b16 %v7559, %v7555
  %v7984 = vpack.c.b16 %v7564, %v7560
  %v7985 = vpack.c.b16 %v7565, %v7561
  %v7986 = vpack.c.b16 %v7566, %v7562
  %v7987 = vpack.c.b16 %v7567, %v7563
  %v7988 = vpack.c.b16 %v7572, %v7568
  %v7989 = vpack.c.b16 %v7573, %v7569
  %v7990 = vpack.c.b16 %v7574, %v7570
  %v7991 = vpack.c.b16 %v7575, %v7571
  %v7992 = vpack.c.b16 %v7580, %v7576
  %v7993 = vpack.c.b16 %v7581, %v7577
  %v7994 = vpack.c.b16 %v7582, %v7578
  %v7995 = vpack.c.b16 %v7583, %v7579
  %v7996 = vpack.c.b16 %v7588, %v7584
  %v7997 = vpack.c.b16 %v7589, %v7585
  %v7998 = vpack.c.b16 %v7590, %v7586
  %v7999 = vpack.c.b16 %v7591, %v7587
  %v8000 = vpack.c.b16 %v7596, %v7592
  %v8001 = vpack.c.b16 %v7597, %v7593
  %v8002 = vpack.c.b16 %v7598, %v7594
  %v8003 = vpack.c.b16 %v7599, %v7595
  %v8004 = vpack.c.b16 %v7604, %v7600
  %v8005 = vpack.c.b16 %v7605, %v7601
  %v8006 = vpack.c.b16 %v7606, %v7602
  %v8007 = vpack.c.b16 %v7607, %v7603
  %v8008 = vpack.c.b16 %v7612, %v7608
  %v8009 = vpack.c.b16 %v7613, %v7609
  %v8010 = vpack.c.b16 %v7614, %v7610
  %v8011 = vpack.c.b16 %v7615, %v7611
  %v8012 = vpack.c.b16 %v7620, %v7616
  %v8013 = vpack.c.b16 %v7621, %v7617
  %v8014 = vpack.c.b16 %v7622, %v7618
  %v8015 = vpack.c.b16 %v7623, %v7619
  %v8016 = vpack.c.b16 %v7628, %v7624
  %v8017 = vpack.c.b16 %v7629, %v7625
  %v8018 = vpack.c.b16 %v7630, %v7626
  %v8019 = vpack.c.b16 %v7631, %v7627
  %v8020 = vpack.c.b16 %v7636, %v7632
  %v8021 = vpack.c.b16 %v7637, %v7633
  %v8022 = vpack.c.b16 %v7638, %v7634
  %v8023 = vpack.c.b16 %v7639, %v7635
  %v8024 = vpack.c.b16 %v7644, %v7640
  %v8025 = vpack.c.b16 %v7645, %v7641
  %v8026 = vpack.c.b16 %v7646, %v7642
  %v8027 = vpack.c.b16 %v7647, %v7643
  %v8028 = vpack.c.b16 %v7652, %v7648
  %v8029 = vpack.c.b16 %v7653, %v7649
  %v8030 = vpack.c.b16 %v7654, %v7650
  %v8031 = vpack.c.b16 %v7655, %v7651
  %v8032 = vpack.c.b16 %v7660, %v7656
  %v8033 = vpack.c.b16 %v7661, %v7657
  %v8034 = vpack.c.b16 %v7662, %v7658
  %v8035 = vpack.c.b16 %v7663, %v7659
  %v8036 = vpack.c.b16 %v7668, %v7664
  %v8037 = vpack.c.b16 %v7669, %v7665
  %v8038 = vpack.c.b16 %v7670, %v7666
  %v8039 = vpack.c.b16 %v7671, %v7667
  %v8040 = vpack.c.b16 %v7676, %v7672
  %v8041 = vpack.c.b16 %v7677, %v7673
  %v8042 = vpack.c.b16 %v7678, %v7674
  %v8043 = vpack.c.b16 %v7679, %v7675
  %v8044 = vpack.c.b16 %v7684, %v7680
  %v8045 = vpack.c.b16 %v7685, %v7681
  %v8046 = vpack.c.b16 %v7686, %v7682
  %v8047 = vpack.c.b16 %v7687, %v7683
  %v8048 = vpack.c.b16 %v7692, %v7688
  %v8049 = vpack.c.b16 %v7693, %v7689
  %v8050 = vpack.c.b16 %v7694, %v7690
  %v8051 = vpack.c.b16 %v7695, %v7691
  %v8052 = vpack.c.b16 %v7700, %v7696
  %v8053 = vpack.c.b16 %v7701, %v7697
  %v8054 = vpack.c.b16 %v7702, %v7698
  %v8055 = vpack.c.b16 %v7703, %v7699
  %v8056 = vpack.c.b16 %v7708, %v7704
  %v8057 = vpack.c.b16 %v7709, %v7705
  %v8058 = vpack.c.b16 %v7710, %v7706
  %v8059 = vpack.c.b16 %v7711, %v7707
  %v8060 = vpack.c.b16 %v7716, %v7712
  %v8061 = vpack.c.b16 %v7717, %v7713
  %v8062 = vpack.c.b16 %v7718, %v7714
  %v8063 = vpack.c.b16 %v7719, %v7715
  %v8064 = vpack.c.b16 %v7724, %v7720
  %v8065 = vpack.c.b16 %v7725, %v7721
  %v8066 = vpack.c.b16 %v7726, %v7722
  %v8067 = vpack.c.b16 %v7727, %v7723
  %v8068 = vpack.c.b16 %v7732, %v7728
  %v8069 = vpack.c.b16 %v7733, %v7729
  %v8070 = vpack.c.b16 %v7734, %v7730
  %v8071 = vpack.c.b16 %v7735, %v7731
  %v8072 = vpack.c.b16 %v7740, %v7736
  %v8073 = vpack.c.b16 %v7741, %v7737
  %v8074 = vpack.c.b16 %v7742, %v7738
  %v8075 = vpack.c.b16 %v7743, %v7739
  %v8076 = vpack.c.b16 %v7748, %v7744
  %v8077 = vpack.c.b16 %v7749, %v7745
  %v8078 = vpack.c.b16 %v7750, %v7746
  %v8079 = vpack.c.b16 %v7751, %v7747
  %v8080 = vpack.c.b16 %v7756, %v7752
  %v8081 = vpack.c.b16 %v7757, %v7753
  %v8082 = vpack.c.b16 %v7758, %v7754
  %v8083 = vpack.c.b16 %v7759, %v7755
  %v8084 = vpack.c.b16 %v7764, %v7760
  %v8085 = vpack.c.b16 %v7765, %v7761
  %v8086 = vpack.c.b16 %v7766, %v7762
  %v8087 = vpack.c.b16 %v7767, %v7763
  %v8088 = vpack.c.b16 %v7772, %v7768
  %v8089 = vpack.c.b16 %v7773, %v7769
  %v8090 = vpack.c.b16 %v7774, %v7770
  %v8091 = vpack.c.b16 %v7775, %v7771
  %v8092 = vpack.c.b16 %v7780, %v7776
  %v8093 = vpack.c.b16 %v7781, %v7777
  %v8094 = vpack.c.b16 %v7782, %v7778
  %v8095 = vpack.c.b16 %v7783, %v7779
  %v8096 = vpack.c.b16 %v7788, %v7784
  %v8097 = vpack.c.b16 %v7789, %v7785
  %v8098 = vpack.c.b16 %v7790, %v7786
  %v8099 = vpack.c.b16 %v7791, %v7787
  %v8100 = vpack.c.b16 %v7796, %v7792
  %v8101 = vpack.c.b16 %v7797, %v7793
  %v8102 = vpack.c.b16 %v7798, %v7794
  %v8103 = vpack.c.b16 %v7799, %v7795
  %v8104 = vpack.c.b16 %v7804, %v7800
  %v8105 = vpack.c.b16 %v7805, %v7801
  %v8106 = vpack.c.b16 %v7806, %v7802
  %v8107 = vpack.c.b16 %v7807, %v7803
  %v8108 = vpack.c.b16 %v7812, %v7808
  %v8109 = vpack.c.b16 %v7813, %v7809
  %v8110 = vpack.c.b16 %v7814, %v7810
  %v8111 = vpack.c.b16 %v7815, %v7811
  %v8112 = vpack.c.b16 %v7816, %v7816
  %v8113 = vpack.c.b16 %v7817, %v7817
  %v8114 = vpack.c.b16 %v7818, %v7818
  %v8115 = vpack.c.b16 %v7819, %v7819
  %v8409 = vsel %vm1849, %v8112, 0
  %v8412 = vsel %vm1849, %v8113, 0
  %v8415 = vsel %vm1849, %v8114, 0
  %v8418 = vsel %vm1849, %v8115, 0
  %8420 = vmatprep.subr.bf16.mxu0 %v7821
  %8421 = vmatpush1.bf16.msra.mxu0 %v7820
  %8422 = vmatprep.subr.bf16.mxu0 %v7825
  %8423 = vmatpush1.bf16.msra.mxu0 %v7824
  %8424 = vmatprep.subr.bf16.mxu0 %v7829
  %8425 = vmatpush1.bf16.msra.mxu0 %v7828
  %8426 = vmatprep.subr.bf16.mxu0 %v7833
  %8427 = vmatpush1.bf16.msra.mxu0 %v7832
  %8428 = vmatprep.subr.bf16.mxu0 %v7837
  %8429 = vmatpush1.bf16.msra.mxu0 %v7836
  %8430 = vmatprep.subr.bf16.mxu0 %v7841
  %8431 = vmatpush1.bf16.msra.mxu0 %v7840
  %8432 = vmatprep.subr.bf16.mxu0 %v7845
  %8433 = vmatpush1.bf16.msra.mxu0 %v7844
  %8434 = vmatprep.subr.bf16.mxu0 %v7849
  %8435 = vmatpush1.bf16.msra.mxu0 %v7848
  %8436 = vmatprep.subr.bf16.mxu0 %v7853
  %8437 = vmatpush1.bf16.msra.mxu0 %v7852
  %8438 = vmatprep.subr.bf16.mxu0 %v7857
  %8439 = vmatpush1.bf16.msra.mxu0 %v7856
  %8440 = vmatprep.subr.bf16.mxu0 %v7861
  %8441 = vmatpush1.bf16.msra.mxu0 %v7860
  %8442 = vmatprep.subr.bf16.mxu0 %v7865
  %8443 = vmatpush1.bf16.msra.mxu0 %v7864
  %8444 = vmatprep.subr.bf16.mxu0 %v7869
  %8445 = vmatpush1.bf16.msra.mxu0 %v7868
  %8446 = vmatprep.subr.bf16.mxu0 %v7873
  %8447 = vmatpush1.bf16.msra.mxu0 %v7872
  %8448 = vmatprep.subr.bf16.mxu0 %v7877
  %8449 = vmatpush1.bf16.msra.mxu0 %v7876
  %8450 = vmatprep.subr.bf16.mxu0 %v7881
  %8451 = vmatpush1.bf16.msra.mxu0 %v7880
  %8452 = vmatprep.mubr.bf16.mxu0 %v357
  %8453 = vmatmul.mubr.bf16.gmra.mrb[0].mxu0 %v356
  %v8454 = vpop.f32.mrb[0].mxu0
  %v8455 = vadd.f32 0.0, %v8454
  %v8456 = vpop.f32.mrb[0].mxu0
  %v8457 = vadd.f32 0.0, %v8456
  %v8458 = vpop.f32.mrb[0].mxu0
  %v8459 = vpop.f32.mrb[0].mxu0
  %8460 = vdwg.mxu0
  %8461 = vmatprep.subr.bf16.mxu0 %v7885
  %8462 = vmatpush1.bf16.msra.mxu0 %v7884
  %8463 = vmatprep.subr.bf16.mxu0 %v7889
  %8464 = vmatpush1.bf16.msra.mxu0 %v7888
  %8465 = vmatprep.subr.bf16.mxu0 %v7893
  %8466 = vmatpush1.bf16.msra.mxu0 %v7892
  %8467 = vmatprep.subr.bf16.mxu0 %v7897
  %8468 = vmatpush1.bf16.msra.mxu0 %v7896
  %8469 = vmatprep.subr.bf16.mxu0 %v7901
  %8470 = vmatpush1.bf16.msra.mxu0 %v7900
  %8471 = vmatprep.subr.bf16.mxu0 %v7905
  %8472 = vmatpush1.bf16.msra.mxu0 %v7904
  %8473 = vmatprep.subr.bf16.mxu0 %v7909
  %8474 = vmatpush1.bf16.msra.mxu0 %v7908
  %8475 = vmatprep.subr.bf16.mxu0 %v7913
  %8476 = vmatpush1.bf16.msra.mxu0 %v7912
  %8477 = vmatprep.subr.bf16.mxu0 %v7917
  %8478 = vmatpush1.bf16.msra.mxu0 %v7916
  %8479 = vmatprep.subr.bf16.mxu0 %v7921
  %8480 = vmatpush1.bf16.msra.mxu0 %v7920
  %8481 = vmatprep.subr.bf16.mxu0 %v7925
  %8482 = vmatpush1.bf16.msra.mxu0 %v7924
  %8483 = vmatprep.subr.bf16.mxu0 %v7929
  %8484 = vmatpush1.bf16.msra.mxu0 %v7928
  %8485 = vmatprep.subr.bf16.mxu0 %v7933
  %8486 = vmatpush1.bf16.msra.mxu0 %v7932
  %8487 = vmatprep.subr.bf16.mxu0 %v7937
  %8488 = vmatpush1.bf16.msra.mxu0 %v7936
  %8489 = vmatprep.subr.bf16.mxu0 %v7941
  %8490 = vmatpush1.bf16.msra.mxu0 %v7940
  %8491 = vmatprep.subr.bf16.mxu0 %v7945
  %8492 = vmatpush1.bf16.msra.mxu0 %v7944
  %8493 = vmatprep.mubr.bf16.mxu0 %v359
  %8494 = vmatmul.mubr.bf16.gmra.mrb[0].mxu0 %v358
  %v8495 = vpop.f32.mrb[0].mxu0
  %v8496 = vadd.f32 %v8455, %v8495
  %v8497 = vpop.f32.mrb[0].mxu0
  %v8498 = vadd.f32 %v8457, %v8497
  %v8499 = vpop.f32.mrb[0].mxu0
  %v8500 = vpop.f32.mrb[0].mxu0
  %8501 = vdwg.mxu0
  %8502 = vmatprep.subr.bf16.mxu0 %v7949
  %8503 = vmatpush1.bf16.msra.mxu0 %v7948
  %8504 = vmatprep.subr.bf16.mxu0 %v7953
  %8505 = vmatpush1.bf16.msra.mxu0 %v7952
  %8506 = vmatprep.subr.bf16.mxu0 %v7957
  %8507 = vmatpush1.bf16.msra.mxu0 %v7956
  %8508 = vmatprep.subr.bf16.mxu0 %v7961
  %8509 = vmatpush1.bf16.msra.mxu0 %v7960
  %8510 = vmatprep.subr.bf16.mxu0 %v7965
  %8511 = vmatpush1.bf16.msra.mxu0 %v7964
  %8512 = vmatprep.subr.bf16.mxu0 %v7969
  %8513 = vmatpush1.bf16.msra.mxu0 %v7968
  %8514 = vmatprep.subr.bf16.mxu0 %v7973
  %8515 = vmatpush1.bf16.msra.mxu0 %v7972
  %8516 = vmatprep.subr.bf16.mxu0 %v7977
  %8517 = vmatpush1.bf16.msra.mxu0 %v7976
  %8518 = vmatprep.subr.bf16.mxu0 %v7981
  %8519 = vmatpush1.bf16.msra.mxu0 %v7980
  %8520 = vmatprep.subr.bf16.mxu0 %v7985
  %8521 = vmatpush1.bf16.msra.mxu0 %v7984
  %8522 = vmatprep.subr.bf16.mxu0 %v7989
  %8523 = vmatpush1.bf16.msra.mxu0 %v7988
  %8524 = vmatprep.subr.bf16.mxu0 %v7993
  %8525 = vmatpush1.bf16.msra.mxu0 %v7992
  %8526 = vmatprep.subr.bf16.mxu0 %v7997
  %8527 = vmatpush1.bf16.msra.mxu0 %v7996
  %8528 = vmatprep.subr.bf16.mxu0 %v8001
  %8529 = vmatpush1.bf16.msra.mxu0 %v8000
  %8530 = vmatprep.subr.bf16.mxu0 %v8005
  %8531 = vmatpush1.bf16.msra.mxu0 %v8004
  %8532 = vmatprep.subr.bf16.mxu0 %v8009
  %8533 = vmatpush1.bf16.msra.mxu0 %v8008
  %8534 = vmatprep.mubr.bf16.mxu0 %v361
  %8535 = vmatmul.mubr.bf16.gmra.mrb[0].mxu0 %v360
  %v8536 = vpop.f32.mrb[0].mxu0
  %v8537 = vadd.f32 %v8496, %v8536
  %v8538 = vpop.f32.mrb[0].mxu0
  %v8539 = vadd.f32 %v8498, %v8538
  %v8540 = vpop.f32.mrb[0].mxu0
  %v8541 = vpop.f32.mrb[0].mxu0
  %8542 = vdwg.mxu0
  %8543 = vmatprep.subr.bf16.mxu0 %v8013
  %8544 = vmatpush1.bf16.msra.mxu0 %v8012
  %8545 = vmatprep.subr.bf16.mxu0 %v8017
  %8546 = vmatpush1.bf16.msra.mxu0 %v8016
  %8547 = vmatprep.subr.bf16.mxu0 %v8021
  %8548 = vmatpush1.bf16.msra.mxu0 %v8020
  %8549 = vmatprep.subr.bf16.mxu0 %v8025
  %8550 = vmatpush1.bf16.msra.mxu0 %v8024
  %8551 = vmatprep.subr.bf16.mxu0 %v8029
  %8552 = vmatpush1.bf16.msra.mxu0 %v8028
  %8553 = vmatprep.subr.bf16.mxu0 %v8033
  %8554 = vmatpush1.bf16.msra.mxu0 %v8032
  %8555 = vmatprep.subr.bf16.mxu0 %v8037
  %8556 = vmatpush1.bf16.msra.mxu0 %v8036
  %8557 = vmatprep.subr.bf16.mxu0 %v8041
  %8558 = vmatpush1.bf16.msra.mxu0 %v8040
  %8559 = vmatprep.subr.bf16.mxu0 %v8045
  %8560 = vmatpush1.bf16.msra.mxu0 %v8044
  %8561 = vmatprep.subr.bf16.mxu0 %v8049
  %8562 = vmatpush1.bf16.msra.mxu0 %v8048
  %8563 = vmatprep.subr.bf16.mxu0 %v8053
  %8564 = vmatpush1.bf16.msra.mxu0 %v8052
  %8565 = vmatprep.subr.bf16.mxu0 %v8057
  %8566 = vmatpush1.bf16.msra.mxu0 %v8056
  %8567 = vmatprep.subr.bf16.mxu0 %v8061
  %8568 = vmatpush1.bf16.msra.mxu0 %v8060
  %8569 = vmatprep.subr.bf16.mxu0 %v8065
  %8570 = vmatpush1.bf16.msra.mxu0 %v8064
  %8571 = vmatprep.subr.bf16.mxu0 %v8069
  %8572 = vmatpush1.bf16.msra.mxu0 %v8068
  %8573 = vmatprep.subr.bf16.mxu0 %v8073
  %8574 = vmatpush1.bf16.msra.mxu0 %v8072
  %8575 = vmatprep.mubr.bf16.mxu0 %v363
  %8576 = vmatmul.mubr.bf16.gmra.mrb[0].mxu0 %v362
  %v8577 = vpop.f32.mrb[0].mxu0
  %v8578 = vadd.f32 %v8537, %v8577
  %v8579 = vpop.f32.mrb[0].mxu0
  %v8580 = vadd.f32 %v8539, %v8579
  %v8581 = vpop.f32.mrb[0].mxu0
  %v8582 = vpop.f32.mrb[0].mxu0
  %8583 = vdwg.mxu0
  %8584 = vmatprep.subr.bf16.mxu0 %v8077
  %8585 = vmatpush1.bf16.msra.mxu0 %v8076
  %8586 = vmatprep.subr.bf16.mxu0 %v8081
  %8587 = vmatpush1.bf16.msra.mxu0 %v8080
  %8588 = vmatprep.subr.bf16.mxu0 %v8085
  %8589 = vmatpush1.bf16.msra.mxu0 %v8084
  %8590 = vmatprep.subr.bf16.mxu0 %v8089
  %8591 = vmatpush1.bf16.msra.mxu0 %v8088
  %8592 = vmatprep.subr.bf16.mxu0 %v8093
  %8593 = vmatpush1.bf16.msra.mxu0 %v8092
  %8594 = vmatprep.subr.bf16.mxu0 %v8097
  %8595 = vmatpush1.bf16.msra.mxu0 %v8096
  %8596 = vmatprep.subr.bf16.mxu0 %v8101
  %8597 = vmatpush1.bf16.msra.mxu0 %v8100
  %8598 = vmatprep.subr.bf16.mxu0 %v8105
  %8599 = vmatpush1.bf16.msra.mxu0 %v8104
  %8600 = vmatprep.subr.bf16.mxu0 %v8109
  %8601 = vmatpush1.bf16.msra.mxu0 %v8108
  %8602 = vmatprep.subr.bf16.mxu0 %v8412
  %8603 = vmatpush1.bf16.msra.mxu0 %v8409
  %8604 = vmatprep.subr.bf16.mxu0 0
  %8605 = vmatpush1.bf16.msra.mxu0 0
  %8606 = vmatprep.subr.bf16.mxu0 0
  %8607 = vmatpush1.bf16.msra.mxu0 0
  %8608 = vmatprep.subr.bf16.mxu0 0
  %8609 = vmatpush1.bf16.msra.mxu0 0
  %8610 = vmatprep.subr.bf16.mxu0 0
  %8611 = vmatpush1.bf16.msra.mxu0 0
  %8612 = vmatprep.subr.bf16.mxu0 0
  %8613 = vmatpush1.bf16.msra.mxu0 0
  %8614 = vmatprep.subr.bf16.mxu0 0
  %8615 = vmatpush1.bf16.msra.mxu0 0
  %8616 = vmatprep.mubr.bf16.mxu0 %v1847
  %8617 = vmatmul.mubr.bf16.gmra.mrb[0].mxu0 %v364
  %v8618 = vpop.f32.mrb[0].mxu0
  %v8619 = vadd.f32 %v8578, %v8618
  %v8620 = vpop.f32.mrb[0].mxu0
  %v8621 = vadd.f32 %v8580, %v8620
  %v8622 = vpop.f32.mrb[0].mxu0
  %v8623 = vpop.f32.mrb[0].mxu0
  %8624 = vdwg.mxu0
  %8625 = vmatprep.subr.bf16.mxu0 %v7823
  %8626 = vmatpush1.bf16.msra.mxu0 %v7822
  %8627 = vmatprep.subr.bf16.mxu0 %v7827
  %8628 = vmatpush1.bf16.msra.mxu0 %v7826
  %8629 = vmatprep.subr.bf16.mxu0 %v7831
  %8630 = vmatpush1.bf16.msra.mxu0 %v7830
  %8631 = vmatprep.subr.bf16.mxu0 %v7835
  %8632 = vmatpush1.bf16.msra.mxu0 %v7834
  %8633 = vmatprep.subr.bf16.mxu0 %v7839
  %8634 = vmatpush1.bf16.msra.mxu0 %v7838
  %8635 = vmatprep.subr.bf16.mxu0 %v7843
  %8636 = vmatpush1.bf16.msra.mxu0 %v7842
  %8637 = vmatprep.subr.bf16.mxu0 %v7847
  %8638 = vmatpush1.bf16.msra.mxu0 %v7846
  %8639 = vmatprep.subr.bf16.mxu0 %v7851
  %8640 = vmatpush1.bf16.msra.mxu0 %v7850
  %8641 = vmatprep.subr.bf16.mxu0 %v7855
  %8642 = vmatpush1.bf16.msra.mxu0 %v7854
  %8643 = vmatprep.subr.bf16.mxu0 %v7859
  %8644 = vmatpush1.bf16.msra.mxu0 %v7858
  %8645 = vmatprep.subr.bf16.mxu0 %v7863
  %8646 = vmatpush1.bf16.msra.mxu0 %v7862
  %8647 = vmatprep.subr.bf16.mxu0 %v7867
  %8648 = vmatpush1.bf16.msra.mxu0 %v7866
  %8649 = vmatprep.subr.bf16.mxu0 %v7871
  %8650 = vmatpush1.bf16.msra.mxu0 %v7870
  %8651 = vmatprep.subr.bf16.mxu0 %v7875
  %8652 = vmatpush1.bf16.msra.mxu0 %v7874
  %8653 = vmatprep.subr.bf16.mxu0 %v7879
  %8654 = vmatpush1.bf16.msra.mxu0 %v7878
  %8655 = vmatprep.subr.bf16.mxu0 %v7883
  %8656 = vmatpush1.bf16.msra.mxu0 %v7882
  %8657 = vmatprep.mubr.bf16.mxu0 %v357
  %8658 = vmatmul.mubr.bf16.gmra.mrb[0].mxu0 %v356
  %v8659 = vpop.f32.mrb[0].mxu0
  %v8660 = vadd.f32 0.0, %v8659
  %v8661 = vpop.f32.mrb[0].mxu0
  %v8662 = vadd.f32 0.0, %v8661
  %v8663 = vpop.f32.mrb[0].mxu0
  %v8664 = vpop.f32.mrb[0].mxu0
  %8665 = vdwg.mxu0
  %8666 = vmatprep.subr.bf16.mxu0 %v7887
  %8667 = vmatpush1.bf16.msra.mxu0 %v7886
  %8668 = vmatprep.subr.bf16.mxu0 %v7891
  %8669 = vmatpush1.bf16.msra.mxu0 %v7890
  %8670 = vmatprep.subr.bf16.mxu0 %v7895
  %8671 = vmatpush1.bf16.msra.mxu0 %v7894
  %8672 = vmatprep.subr.bf16.mxu0 %v7899
  %8673 = vmatpush1.bf16.msra.mxu0 %v7898
  %8674 = vmatprep.subr.bf16.mxu0 %v7903
  %8675 = vmatpush1.bf16.msra.mxu0 %v7902
  %8676 = vmatprep.subr.bf16.mxu0 %v7907
  %8677 = vmatpush1.bf16.msra.mxu0 %v7906
  %8678 = vmatprep.subr.bf16.mxu0 %v7911
  %8679 = vmatpush1.bf16.msra.mxu0 %v7910
  %8680 = vmatprep.subr.bf16.mxu0 %v7915
  %8681 = vmatpush1.bf16.msra.mxu0 %v7914
  %8682 = vmatprep.subr.bf16.mxu0 %v7919
  %8683 = vmatpush1.bf16.msra.mxu0 %v7918
  %8684 = vmatprep.subr.bf16.mxu0 %v7923
  %8685 = vmatpush1.bf16.msra.mxu0 %v7922
  %8686 = vmatprep.subr.bf16.mxu0 %v7927
  %8687 = vmatpush1.bf16.msra.mxu0 %v7926
  %8688 = vmatprep.subr.bf16.mxu0 %v7931
  %8689 = vmatpush1.bf16.msra.mxu0 %v7930
  %8690 = vmatprep.subr.bf16.mxu0 %v7935
  %8691 = vmatpush1.bf16.msra.mxu0 %v7934
  %8692 = vmatprep.subr.bf16.mxu0 %v7939
  %8693 = vmatpush1.bf16.msra.mxu0 %v7938
  %8694 = vmatprep.subr.bf16.mxu0 %v7943
  %8695 = vmatpush1.bf16.msra.mxu0 %v7942
  %8696 = vmatprep.subr.bf16.mxu0 %v7947
  %8697 = vmatpush1.bf16.msra.mxu0 %v7946
  %8698 = vmatprep.mubr.bf16.mxu0 %v359
  %8699 = vmatmul.mubr.bf16.gmra.mrb[0].mxu0 %v358
  %v8700 = vpop.f32.mrb[0].mxu0
  %v8701 = vadd.f32 %v8660, %v8700
  %v8702 = vpop.f32.mrb[0].mxu0
  %v8703 = vadd.f32 %v8662, %v8702
  %v8704 = vpop.f32.mrb[0].mxu0
  %v8705 = vpop.f32.mrb[0].mxu0
  %8706 = vdwg.mxu0
  %8707 = vmatprep.subr.bf16.mxu0 %v7951
  %8708 = vmatpush1.bf16.msra.mxu0 %v7950
  %8709 = vmatprep.subr.bf16.mxu0 %v7955
  %8710 = vmatpush1.bf16.msra.mxu0 %v7954
  %8711 = vmatprep.subr.bf16.mxu0 %v7959
  %8712 = vmatpush1.bf16.msra.mxu0 %v7958
  %8713 = vmatprep.subr.bf16.mxu0 %v7963
  %8714 = vmatpush1.bf16.msra.mxu0 %v7962
  %8715 = vmatprep.subr.bf16.mxu0 %v7967
  %8716 = vmatpush1.bf16.msra.mxu0 %v7966
  %8717 = vmatprep.subr.bf16.mxu0 %v7971
  %8718 = vmatpush1.bf16.msra.mxu0 %v7970
  %8719 = vmatprep.subr.bf16.mxu0 %v7975
  %8720 = vmatpush1.bf16.msra.mxu0 %v7974
  %8721 = vmatprep.subr.bf16.mxu0 %v7979
  %8722 = vmatpush1.bf16.msra.mxu0 %v7978
  %8723 = vmatprep.subr.bf16.mxu0 %v7983
  %8724 = vmatpush1.bf16.msra.mxu0 %v7982
  %8725 = vmatprep.subr.bf16.mxu0 %v7987
  %8726 = vmatpush1.bf16.msra.mxu0 %v7986
  %8727 = vmatprep.subr.bf16.mxu0 %v7991
  %8728 = vmatpush1.bf16.msra.mxu0 %v7990
  %8729 = vmatprep.subr.bf16.mxu0 %v7995
  %8730 = vmatpush1.bf16.msra.mxu0 %v7994
  %8731 = vmatprep.subr.bf16.mxu0 %v7999
  %8732 = vmatpush1.bf16.msra.mxu0 %v7998
  %8733 = vmatprep.subr.bf16.mxu0 %v8003
  %8734 = vmatpush1.bf16.msra.mxu0 %v8002
  %8735 = vmatprep.subr.bf16.mxu0 %v8007
  %8736 = vmatpush1.bf16.msra.mxu0 %v8006
  %8737 = vmatprep.subr.bf16.mxu0 %v8011
  %8738 = vmatpush1.bf16.msra.mxu0 %v8010
  %8739 = vmatprep.mubr.bf16.mxu0 %v361
  %8740 = vmatmul.mubr.bf16.gmra.mrb[0].mxu0 %v360
  %v8741 = vpop.f32.mrb[0].mxu0
  %v8742 = vadd.f32 %v8701, %v8741
  %v8743 = vpop.f32.mrb[0].mxu0
  %v8744 = vadd.f32 %v8703, %v8743
  %v8745 = vpop.f32.mrb[0].mxu0
  %v8746 = vpop.f32.mrb[0].mxu0
  %8747 = vdwg.mxu0
  %8748 = vmatprep.subr.bf16.mxu0 %v8015
  %8749 = vmatpush1.bf16.msra.mxu0 %v8014
  %8750 = vmatprep.subr.bf16.mxu0 %v8019
  %8751 = vmatpush1.bf16.msra.mxu0 %v8018
  %8752 = vmatprep.subr.bf16.mxu0 %v8023
  %8753 = vmatpush1.bf16.msra.mxu0 %v8022
  %8754 = vmatprep.subr.bf16.mxu0 %v8027
  %8755 = vmatpush1.bf16.msra.mxu0 %v8026
  %8756 = vmatprep.subr.bf16.mxu0 %v8031
  %8757 = vmatpush1.bf16.msra.mxu0 %v8030
  %8758 = vmatprep.subr.bf16.mxu0 %v8035
  %8759 = vmatpush1.bf16.msra.mxu0 %v8034
  %8760 = vmatprep.subr.bf16.mxu0 %v8039
  %8761 = vmatpush1.bf16.msra.mxu0 %v8038
  %8762 = vmatprep.subr.bf16.mxu0 %v8043
  %8763 = vmatpush1.bf16.msra.mxu0 %v8042
  %8764 = vmatprep.subr.bf16.mxu0 %v8047
  %8765 = vmatpush1.bf16.msra.mxu0 %v8046
  %8766 = vmatprep.subr.bf16.mxu0 %v8051
  %8767 = vmatpush1.bf16.msra.mxu0 %v8050
  %8768 = vmatprep.subr.bf16.mxu0 %v8055
  %8769 = vmatpush1.bf16.msra.mxu0 %v8054
  %8770 = vmatprep.subr.bf16.mxu0 %v8059
  %8771 = vmatpush1.bf16.msra.mxu0 %v8058
  %8772 = vmatprep.subr.bf16.mxu0 %v8063
  %8773 = vmatpush1.bf16.msra.mxu0 %v8062
  %8774 = vmatprep.subr.bf16.mxu0 %v8067
  %8775 = vmatpush1.bf16.msra.mxu0 %v8066
  %8776 = vmatprep.subr.bf16.mxu0 %v8071
  %8777 = vmatpush1.bf16.msra.mxu0 %v8070
  %8778 = vmatprep.subr.bf16.mxu0 %v8075
  %8779 = vmatpush1.bf16.msra.mxu0 %v8074
  %8780 = vmatprep.mubr.bf16.mxu0 %v363
  %8781 = vmatmul.mubr.bf16.gmra.mrb[0].mxu0 %v362
  %v8782 = vpop.f32.mrb[0].mxu0
  %v8783 = vadd.f32 %v8742, %v8782
  %v8784 = vpop.f32.mrb[0].mxu0
  %v8785 = vadd.f32 %v8744, %v8784
  %v8786 = vpop.f32.mrb[0].mxu0
  %v8787 = vpop.f32.mrb[0].mxu0
  %8788 = vdwg.mxu0
  %8789 = vmatprep.subr.bf16.mxu0 %v8079
  %8790 = vmatpush1.bf16.msra.mxu0 %v8078
  %8791 = vmatprep.subr.bf16.mxu0 %v8083
  %8792 = vmatpush1.bf16.msra.mxu0 %v8082
  %8793 = vmatprep.subr.bf16.mxu0 %v8087
  %8794 = vmatpush1.bf16.msra.mxu0 %v8086
  %8795 = vmatprep.subr.bf16.mxu0 %v8091
  %8796 = vmatpush1.bf16.msra.mxu0 %v8090
  %8797 = vmatprep.subr.bf16.mxu0 %v8095
  %8798 = vmatpush1.bf16.msra.mxu0 %v8094
  %8799 = vmatprep.subr.bf16.mxu0 %v8099
  %8800 = vmatpush1.bf16.msra.mxu0 %v8098
  %8801 = vmatprep.subr.bf16.mxu0 %v8103
  %8802 = vmatpush1.bf16.msra.mxu0 %v8102
  %8803 = vmatprep.subr.bf16.mxu0 %v8107
  %8804 = vmatpush1.bf16.msra.mxu0 %v8106
  %8805 = vmatprep.subr.bf16.mxu0 %v8111
  %8806 = vmatpush1.bf16.msra.mxu0 %v8110
  %8807 = vmatprep.subr.bf16.mxu0 %v8418
  %8808 = vmatpush1.bf16.msra.mxu0 %v8415
  %8809 = vmatprep.subr.bf16.mxu0 0
  %8810 = vmatpush1.bf16.msra.mxu0 0
  %8811 = vmatprep.subr.bf16.mxu0 0
  %8812 = vmatpush1.bf16.msra.mxu0 0
  %8813 = vmatprep.subr.bf16.mxu0 0
  %8814 = vmatpush1.bf16.msra.mxu0 0
  %8815 = vmatprep.subr.bf16.mxu0 0
  %8816 = vmatpush1.bf16.msra.mxu0 0
  %8817 = vmatprep.subr.bf16.mxu0 0
  %8818 = vmatpush1.bf16.msra.mxu0 0
  %8819 = vmatprep.subr.bf16.mxu0 0
  %8820 = vmatpush1.bf16.msra.mxu0 0
  %8821 = vmatprep.mubr.bf16.mxu0 %v1847
  %8822 = vmatmul.mubr.bf16.gmra.mrb[0].mxu0 %v364
  %v8823 = vpop.f32.mrb[0].mxu0
  %v8824 = vadd.f32 %v8783, %v8823
  %v8825 = vpop.f32.mrb[0].mxu0
  %v8826 = vadd.f32 %v8785, %v8825
  %v8827 = vpop.f32.mrb[0].mxu0
  %v8828 = vpop.f32.mrb[0].mxu0
  %8829 = vdwg.mxu0
  %v8830 = vmax.f32 %v2061, %v4247
  %v8831 = vmax.f32 %v2063, %v4249
  %v8832 = vmax.f32 %v2266, %v4452
  %v8833 = vmax.f32 %v2268, %v4454
  %v8834 = vmax.f32 %v6433, %v8619
  %v8835 = vmax.f32 %v6435, %v8621
  %v8836 = vmax.f32 %v6638, %v8824
  %v8837 = vmax.f32 %v6640, %v8826
  %v8838 = vmax.f32 %v8830, %v8834
  %v8839 = vmax.f32 %v8831, %v8835
  %v8840 = vmax.f32 %v8832, %v8836
  %v8841 = vmax.f32 %v8833, %v8837
  %v8842 = vld [vmem:[%s5] sm:$0xf]
  %v8844 = vlaneseq
  %v8845 = vshrl.u32 %v8844, 7
  %v8846 = vsub.s32 0, %v8845
  %v8847 = vrot.slane %v8842, %v8846
  %v8848 = vlaneseq
  %v8849 = vshrl.u32 %v8848, 7
  %v8850 = vsub.s32 1, %v8849
  %v8851 = vrot.slane %v8842, %v8850
  %v8852 = vlaneseq
  %v8853 = vshrl.u32 %v8852, 7
  %v8854 = vsub.s32 2, %v8853
  %v8855 = vrot.slane %v8842, %v8854
  %v8856 = vlaneseq
  %v8857 = vshrl.u32 %v8856, 7
  %v8858 = vsub.s32 3, %v8857
  %v8859 = vrot.slane %v8842, %v8858
  %v8864 = vadd.f32 %v8838, %v8847
  %v8865 = vadd.f32 %v8839, %v8851
  %v8866 = vadd.f32 %v8840, %v8855
  %v8867 = vadd.f32 %v8841, %v8859
  %v8868 = vmax.f32 %v8864, 0.0
  %v8869 = vmax.f32 %v8865, 0.0
  %v8870 = vmax.f32 %v8866, 0.0
  %v8871 = vmax.f32 %v8867, 0.0
  %v8872 = vld [vmem:[%s6] sm:$0xff]
  %v8873 = vld [vmem:[%s6 + $0x8] sm:$0xff]
  %v8874 = vld [vmem:[%s6 + $0x10] sm:$0xff]
  %v8875 = vld [vmem:[%s6 + $0x18] sm:$0xff]
  %v8876 = vld [vmem:[%s6 + $0x20] sm:$0xff]
  %v8877 = vld [vmem:[%s6 + $0x28] sm:$0xff]
  %v8878 = vld [vmem:[%s6 + $0x30] sm:$0xff]
  %v8879 = vld [vmem:[%s6 + $0x38] sm:$0xff]
  %v8880 = vld [vmem:[%s6 + $0x40] sm:$0xff]
  %v8881 = vld [vmem:[%s6 + $0x48] sm:$0xff]
  %v8882 = vld [vmem:[%s6 + $0x50] sm:$0xff]
  %v8883 = vld [vmem:[%s6 + $0x58] sm:$0xff]
  %v8884 = vld [vmem:[%s6 + $0x60] sm:$0xff]
  %v8885 = vld [vmem:[%s6 + $0x68] sm:$0xff]
  %v8886 = vld [vmem:[%s6 + $0x70] sm:$0xff]
  %v8887 = vld [vmem:[%s6 + $0x78] sm:$0xff]
  %v8888 = vld [vmem:[%s6 + $0x80] sm:$0xff]
  %v8889 = vld [vmem:[%s6 + $0x88] sm:$0xff]
  %v8890 = vld [vmem:[%s6 + $0x90] sm:$0xff]
  %v8891 = vld [vmem:[%s6 + $0x98] sm:$0xff]
  %v8892 = vld [vmem:[%s6 + $0xa0] sm:$0xff]
  %v8893 = vld [vmem:[%s6 + $0xa8] sm:$0xff]
  %v8894 = vld [vmem:[%s6 + $0xb0] sm:$0xff]
  %v8895 = vld [vmem:[%s6 + $0xb8] sm:$0xff]
  %v8896 = vld [vmem:[%s6 + $0xc0] sm:$0xff]
  %v8897 = vld [vmem:[%s6 + $0xc8] sm:$0xff]
  %v8898 = vld [vmem:[%s6 + $0xd0] sm:$0xff]
  %v8899 = vld [vmem:[%s6 + $0xd8] sm:$0xff]
  %v8900 = vld [vmem:[%s6 + $0xe0] sm:$0xff]
  %v8901 = vld [vmem:[%s6 + $0xe8] sm:$0xff]
  %v8902 = vld [vmem:[%s6 + $0xf0] sm:$0xff]
  %v8903 = vld [vmem:[%s6 + $0xf8] sm:$0xff]
  %v8904 = vld [vmem:[%s6 + $0x100] sm:$0xff]
  %v8905 = vld [vmem:[%s6 + $0x108] sm:$0xff]
  %v8906 = vld [vmem:[%s6 + $0x110] sm:$0xff]
  %v8907 = vld [vmem:[%s6 + $0x118] sm:$0xff]
  %v8908 = vld [vmem:[%s6 + $0x120] sm:$0xff]
  %v8909 = vld [vmem:[%s6 + $0x128] sm:$0xff]
  %v8910 = vld [vmem:[%s6 + $0x130] sm:$0xff]
  %v8911 = vld [vmem:[%s6 + $0x138] sm:$0xff]
  %v8912 = vld [vmem:[%s6 + $0x140] sm:$0xff]
  %v8913 = vld [vmem:[%s6 + $0x148] sm:$0xff]
  %v8914 = vld [vmem:[%s6 + $0x150] sm:$0xff]
  %v8915 = vld [vmem:[%s6 + $0x158] sm:$0xff]
  %v8916 = vld [vmem:[%s6 + $0x160] sm:$0xff]
  %v8917 = vld [vmem:[%s6 + $0x168] sm:$0xff]
  %v8918 = vld [vmem:[%s6 + $0x170] sm:$0xff]
  %v8919 = vld [vmem:[%s6 + $0x178] sm:$0xff]
  %v8920 = vld [vmem:[%s6 + $0x180] sm:$0xff]
  %v8921 = vld [vmem:[%s6 + $0x188] sm:$0xff]
  %v8922 = vld [vmem:[%s7] sm:$0x1]
  %v8924 = vlaneseq
  %v8925 = vshrl.u32 %v8924, 7
  %v8926 = vsub.s32 0, %v8925
  %v8927 = vrot.slane %v8922, %v8926
  %vm8929 = vcmask 130048
  %v8931 = vsel %vm8929, %v8871, 0
  %8933 = vmatprep.subr.mxu0 0.0
  %8934 = vmatpush1.msra.mxu0 %v8872
  %8935 = vmatprep.subr.mxu0 0.0
  %8936 = vmatpush1.msra.mxu0 %v8873
  %8937 = vmatprep.subr.mxu0 0.0
  %8938 = vmatpush1.msra.mxu0 %v8874
  %8939 = vmatprep.subr.mxu0 0.0
  %8940 = vmatpush1.msra.mxu0 %v8875
  %8941 = vmatprep.subr.mxu0 0.0
  %8942 = vmatpush1.msra.mxu0 %v8876
  %8943 = vmatprep.subr.mxu0 0.0
  %8944 = vmatpush1.msra.mxu0 %v8877
  %8945 = vmatprep.subr.mxu0 0.0
  %8946 = vmatpush1.msra.mxu0 %v8878
  %8947 = vmatprep.subr.mxu0 0.0
  %8948 = vmatpush1.msra.mxu0 %v8879
  %8949 = vmatprep.subr.mxu0 0.0
  %8950 = vmatpush1.msra.mxu0 %v8880
  %8951 = vmatprep.subr.mxu0 0.0
  %8952 = vmatpush1.msra.mxu0 %v8881
  %8953 = vmatprep.subr.mxu0 0.0
  %8954 = vmatpush1.msra.mxu0 %v8882
  %8955 = vmatprep.subr.mxu0 0.0
  %8956 = vmatpush1.msra.mxu0 %v8883
  %8957 = vmatprep.subr.mxu0 0.0
  %8958 = vmatpush1.msra.mxu0 %v8884
  %8959 = vmatprep.subr.mxu0 0.0
  %8960 = vmatpush1.msra.mxu0 %v8885
  %8961 = vmatprep.subr.mxu0 0.0
  %8962 = vmatpush1.msra.mxu0 %v8886
  %8963 = vmatprep.subr.mxu0 0.0
  %8964 = vmatpush1.msra.mxu0 %v8887
  %8965 = vmatprep.subr.mxu0 0.0
  %8966 = vmatpush1.msra.mxu0 %v8888
  %8967 = vmatprep.subr.mxu0 0.0
  %8968 = vmatpush1.msra.mxu0 %v8889
  %8969 = vmatprep.subr.mxu0 0.0
  %8970 = vmatpush1.msra.mxu0 %v8890
  %8971 = vmatprep.subr.mxu0 0.0
  %8972 = vmatpush1.msra.mxu0 %v8891
  %8973 = vmatprep.subr.mxu0 0.0
  %8974 = vmatpush1.msra.mxu0 %v8892
  %8975 = vmatprep.subr.mxu0 0.0
  %8976 = vmatpush1.msra.mxu0 %v8893
  %8977 = vmatprep.subr.mxu0 0.0
  %8978 = vmatpush1.msra.mxu0 %v8894
  %8979 = vmatprep.subr.mxu0 0.0
  %8980 = vmatpush1.msra.mxu0 %v8895
  %8981 = vmatprep.subr.mxu0 0.0
  %8982 = vmatpush1.msra.mxu0 %v8896
  %8983 = vmatprep.subr.mxu0 0.0
  %8984 = vmatpush1.msra.mxu0 %v8897
  %8985 = vmatprep.subr.mxu0 0.0
  %8986 = vmatpush1.msra.mxu0 %v8898
  %8987 = vmatprep.subr.mxu0 0.0
  %8988 = vmatpush1.msra.mxu0 %v8899
  %8989 = vmatprep.subr.mxu0 0.0
  %8990 = vmatpush1.msra.mxu0 %v8900
  %8991 = vmatprep.subr.mxu0 0.0
  %8992 = vmatpush1.msra.mxu0 %v8901
  %8993 = vmatprep.subr.mxu0 0.0
  %8994 = vmatpush1.msra.mxu0 %v8902
  %8995 = vmatprep.subr.mxu0 0.0
  %8996 = vmatpush1.msra.mxu0 %v8903
  %8997 = vmatprep.mubr.f32.mxu0 %v8869
  %8998 = vmatmul.mubr.f32.gmra.mrb[0].mxu0 %v8868
  %v8999 = vpop.f32.mrb[0].mxu0
  %v9000 = vadd.f32 %v8927, %v8999
  %v9001 = vpop.f32.mrb[0].mxu0
  %9002 = vdwg.mxu0
  %9003 = vmatprep.subr.mxu0 0.0
  %9004 = vmatpush1.msra.mxu0 %v8904
  %9005 = vmatprep.subr.mxu0 0.0
  %9006 = vmatpush1.msra.mxu0 %v8905
  %9007 = vmatprep.subr.mxu0 0.0
  %9008 = vmatpush1.msra.mxu0 %v8906
  %9009 = vmatprep.subr.mxu0 0.0
  %9010 = vmatpush1.msra.mxu0 %v8907
  %9011 = vmatprep.subr.mxu0 0.0
  %9012 = vmatpush1.msra.mxu0 %v8908
  %9013 = vmatprep.subr.mxu0 0.0
  %9014 = vmatpush1.msra.mxu0 %v8909
  %9015 = vmatprep.subr.mxu0 0.0
  %9016 = vmatpush1.msra.mxu0 %v8910
  %9017 = vmatprep.subr.mxu0 0.0
  %9018 = vmatpush1.msra.mxu0 %v8911
  %9019 = vmatprep.subr.mxu0 0.0
  %9020 = vmatpush1.msra.mxu0 %v8912
  %9021 = vmatprep.subr.mxu0 0.0
  %9022 = vmatpush1.msra.mxu0 %v8913
  %9023 = vmatprep.subr.mxu0 0.0
  %9024 = vmatpush1.msra.mxu0 %v8914
  %9025 = vmatprep.subr.mxu0 0.0
  %9026 = vmatpush1.msra.mxu0 %v8915
  %9027 = vmatprep.subr.mxu0 0.0
  %9028 = vmatpush1.msra.mxu0 %v8916
  %9029 = vmatprep.subr.mxu0 0.0
  %9030 = vmatpush1.msra.mxu0 %v8917
  %9031 = vmatprep.subr.mxu0 0.0
  %9032 = vmatpush1.msra.mxu0 %v8918
  %9033 = vmatprep.subr.mxu0 0.0
  %9034 = vmatpush1.msra.mxu0 %v8919
  %9035 = vmatprep.subr.mxu0 0.0
  %9036 = vmatpush1.msra.mxu0 %v8920
  %9037 = vmatprep.subr.mxu0 0.0
  %9038 = vmatpush1.msra.mxu0 %v8921
  %9039 = vmatprep.subr.mxu0 0.0
  %9040 = vmatpush1.msra.mxu0 0.0
  %9041 = vmatprep.subr.mxu0 0.0
  %9042 = vmatpush1.msra.mxu0 0.0
  %9043 = vmatprep.subr.mxu0 0.0
  %9044 = vmatpush1.msra.mxu0 0.0
  %9045 = vmatprep.subr.mxu0 0.0
  %9046 = vmatpush1.msra.mxu0 0.0
  %9047 = vmatprep.subr.mxu0 0.0
  %9048 = vmatpush1.msra.mxu0 0.0
  %9049 = vmatprep.subr.mxu0 0.0
  %9050 = vmatpush1.msra.mxu0 0.0
  %9051 = vmatprep.subr.mxu0 0.0
  %9052 = vmatpush1.msra.mxu0 0.0
  %9053 = vmatprep.subr.mxu0 0.0
  %9054 = vmatpush1.msra.mxu0 0.0
  %9055 = vmatprep.subr.mxu0 0.0
  %9056 = vmatpush1.msra.mxu0 0.0
  %9057 = vmatprep.subr.mxu0 0.0
  %9058 = vmatpush1.msra.mxu0 0.0
  %9059 = vmatprep.subr.mxu0 0.0
  %9060 = vmatpush1.msra.mxu0 0.0
  %9061 = vmatprep.subr.mxu0 0.0
  %9062 = vmatpush1.msra.mxu0 0.0
  %9063 = vmatprep.subr.mxu0 0.0
  %9064 = vmatpush1.msra.mxu0 0.0
  %9065 = vmatprep.subr.mxu0 0.0
  %9066 = vmatpush1.msra.mxu0 0.0
  %9067 = vmatprep.mubr.f32.mxu0 %v8931
  %9068 = vmatmul.mubr.f32.gmra.mrb[0].mxu0 %v8870
  %v9069 = vpop.f32.mrb[0].mxu0
  %v9070 = vadd.f32 %v9000, %v9069
  %v9071 = vpop.f32.mrb[0].mxu0
  %9072 = vdwg.mxu0
  %v9073 = vmax.f32 %v9070, 0.0
  %v9074 = vld [vmem:[%s8] sm:$0xff]
  %v9075 = vld [vmem:[%s8 + $0x8] sm:$0xff]
  %v9076 = vld [vmem:[%s8 + $0x10] sm:$0xff]
  %v9077 = vld [vmem:[%s8 + $0x18] sm:$0xff]
  %v9078 = vld [vmem:[%s8 + $0x20] sm:$0xff]
  %v9079 = vld [vmem:[%s8 + $0x28] sm:$0xff]
  %v9080 = vld [vmem:[%s8 + $0x30] sm:$0xff]
  %v9081 = vld [vmem:[%s8 + $0x38] sm:$0xff]
  %v9082 = vld [vmem:[%s8 + $0x40] sm:$0xff]
  %v9083 = vld [vmem:[%s8 + $0x48] sm:$0xff]
  %v9084 = vld [vmem:[%s8 + $0x50] sm:$0xff]
  %v9085 = vld [vmem:[%s8 + $0x58] sm:$0xff]
  %v9086 = vld [vmem:[%s8 + $0x60] sm:$0xff]
  %v9087 = vld [vmem:[%s8 + $0x68] sm:$0xff]
  %v9088 = vld [vmem:[%s8 + $0x70] sm:$0xff]
  %v9089 = vld [vmem:[%s9] sm:$0x1]
  %v9091 = vlaneseq
  %v9092 = vshrl.u32 %v9091, 7
  %v9093 = vsub.s32 0, %v9092
  %v9094 = vrot.slane %v9089, %v9093
  %vm9096 = vcmask 982016
  %v9098 = vsel %vm9096, %v9073, 0
  %9100 = vmatprep.subr.mxu0 0.0
  %9101 = vmatpush1.msra.mxu0 %v9074
  %9102 = vmatprep.subr.mxu0 0.0
  %9103 = vmatpush1.msra.mxu0 %v9075
  %9104 = vmatprep.subr.mxu0 0.0
  %9105 = vmatpush1.msra.mxu0 %v9076
  %9106 = vmatprep.subr.mxu0 0.0
  %9107 = vmatpush1.msra.mxu0 %v9077
  %9108 = vmatprep.subr.mxu0 0.0
  %9109 = vmatpush1.msra.mxu0 %v9078
  %9110 = vmatprep.subr.mxu0 0.0
  %9111 = vmatpush1.msra.mxu0 %v9079
  %9112 = vmatprep.subr.mxu0 0.0
  %9113 = vmatpush1.msra.mxu0 %v9080
  %9114 = vmatprep.subr.mxu0 0.0
  %9115 = vmatpush1.msra.mxu0 %v9081
  %9116 = vmatprep.subr.mxu0 0.0
  %9117 = vmatpush1.msra.mxu0 %v9082
  %9118 = vmatprep.subr.mxu0 0.0
  %9119 = vmatpush1.msra.mxu0 %v9083
  %9120 = vmatprep.subr.mxu0 0.0
  %9121 = vmatpush1.msra.mxu0 %v9084
  %9122 = vmatprep.subr.mxu0 0.0
  %9123 = vmatpush1.msra.mxu0 %v9085
  %9124 = vmatprep.subr.mxu0 0.0
  %9125 = vmatpush1.msra.mxu0 %v9086
  %9126 = vmatprep.subr.mxu0 0.0
  %9127 = vmatpush1.msra.mxu0 %v9087
  %9128 = vmatprep.subr.mxu0 0.0
  %9129 = vmatpush1.msra.mxu0 %v9088
  %9130 = vmatprep.subr.mxu0 0.0
  %9131 = vmatpush1.msra.mxu0 0.0
  %9132 = vmatprep.subr.mxu0 0.0
  %9133 = vmatpush1.msra.mxu0 0.0
  %9134 = vmatprep.subr.mxu0 0.0
  %9135 = vmatpush1.msra.mxu0 0.0
  %9136 = vmatprep.subr.mxu0 0.0
  %9137 = vmatpush1.msra.mxu0 0.0
  %9138 = vmatprep.subr.mxu0 0.0
  %9139 = vmatpush1.msra.mxu0 0.0
  %9140 = vmatprep.subr.mxu0 0.0
  %9141 = vmatpush1.msra.mxu0 0.0
  %9142 = vmatprep.subr.mxu0 0.0
  %9143 = vmatpush1.msra.mxu0 0.0
  %9144 = vmatprep.subr.mxu0 0.0
  %9145 = vmatpush1.msra.mxu0 0.0
  %9146 = vmatprep.subr.mxu0 0.0
  %9147 = vmatpush1.msra.mxu0 0.0
  %9148 = vmatprep.subr.mxu0 0.0
  %9149 = vmatpush1.msra.mxu0 0.0
  %9150 = vmatprep.subr.mxu0 0.0
  %9151 = vmatpush1.msra.mxu0 0.0
  %9152 = vmatprep.subr.mxu0 0.0
  %9153 = vmatpush1.msra.mxu0 0.0
  %9154 = vmatprep.subr.mxu0 0.0
  %9155 = vmatpush1.msra.mxu0 0.0
  %9156 = vmatprep.subr.mxu0 0.0
  %9157 = vmatpush1.msra.mxu0 0.0
  %9158 = vmatprep.subr.mxu0 0.0
  %9159 = vmatpush1.msra.mxu0 0.0
  %9160 = vmatprep.subr.mxu0 0.0
  %9161 = vmatpush1.msra.mxu0 0.0
  %9162 = vmatprep.subr.mxu0 0.0
  %9163 = vmatpush1.msra.mxu0 0.0
  %9164 = vmatprep.mubr.f32.mxu0 0.0
  %9165 = vmatmul.mubr.f32.gmra.mrb[0].mxu0 %v9098
  %v9166 = vpop.f32.mrb[0].mxu0
  %v9167 = vadd.f32 %v9094, %v9166
  %v9168 = vpop.f32.mrb[0].mxu0
  %9169 = vdwg.mxu0
  %v9170 = vmax.f32 %v9167, 0.0
  %v9171 = vld [vmem:[%s10] sm:$0xff]
  %v9172 = vld [vmem:[%s10 + $0x8] sm:$0xff]
  %v9173 = vld [vmem:[%s10 + $0x10] sm:$0xff]
  %v9174 = vld [vmem:[%s10 + $0x18] sm:$0xff]
  %v9175 = vld [vmem:[%s10 + $0x20] sm:$0xff]
  %v9176 = vld [vmem:[%s10 + $0x28] sm:$0xff]
  %v9177 = vld [vmem:[%s10 + $0x30] sm:$0xff]
  %v9178 = vld [vmem:[%s10 + $0x38] sm:$0xff]
  %v9179 = vld [vmem:[%s10 + $0x40] sm:$0xff]
  %v9180 = vld [vmem:[%s10 + $0x48] sm:$0xff]
  %v9181 = vld [vmem:[%s10 + $0x50] sm:$0xf]
  %v9182 = vld [vmem:[%s11] sm:$0x1]
  %v9184 = vlaneseq
  %v9185 = vshrl.u32 %v9184, 7
  %v9186 = vsub.s32 0, %v9185
  %v9187 = vrot.slane %v9182, %v9186
  %vm9189 = vcmask 687104
  %v9191 = vsel %vm9189, %v9170, 0
  %v9194 = vsel %vm1849, %v9181, 0
  %9196 = vmatprep.subr.mxu0 0.0
  %9197 = vmatpush1.msra.mxu0 %v9171
  %9198 = vmatprep.subr.mxu0 0.0
  %9199 = vmatpush1.msra.mxu0 %v9172
  %9200 = vmatprep.subr.mxu0 0.0
  %9201 = vmatpush1.msra.mxu0 %v9173
  %9202 = vmatprep.subr.mxu0 0.0
  %9203 = vmatpush1.msra.mxu0 %v9174
  %9204 = vmatprep.subr.mxu0 0.0
  %9205 = vmatpush1.msra.mxu0 %v9175
  %9206 = vmatprep.subr.mxu0 0.0
  %9207 = vmatpush1.msra.mxu0 %v9176
  %9208 = vmatprep.subr.mxu0 0.0
  %9209 = vmatpush1.msra.mxu0 %v9177
  %9210 = vmatprep.subr.mxu0 0.0
  %9211 = vmatpush1.msra.mxu0 %v9178
  %9212 = vmatprep.subr.mxu0 0.0
  %9213 = vmatpush1.msra.mxu0 %v9179
  %9214 = vmatprep.subr.mxu0 0.0
  %9215 = vmatpush1.msra.mxu0 %v9180
  %9216 = vmatprep.subr.mxu0 0.0
  %9217 = vmatpush1.msra.mxu0 %v9194
  %9218 = vmatprep.subr.mxu0 0.0
  %9219 = vmatpush1.msra.mxu0 0.0
  %9220 = vmatprep.subr.mxu0 0.0
  %9221 = vmatpush1.msra.mxu0 0.0
  %9222 = vmatprep.subr.mxu0 0.0
  %9223 = vmatpush1.msra.mxu0 0.0
  %9224 = vmatprep.subr.mxu0 0.0
  %9225 = vmatpush1.msra.mxu0 0.0
  %9226 = vmatprep.subr.mxu0 0.0
  %9227 = vmatpush1.msra.mxu0 0.0
  %9228 = vmatprep.subr.mxu0 0.0
  %9229 = vmatpush1.msra.mxu0 0.0
  %9230 = vmatprep.subr.mxu0 0.0
  %9231 = vmatpush1.msra.mxu0 0.0
  %9232 = vmatprep.subr.mxu0 0.0
  %9233 = vmatpush1.msra.mxu0 0.0
  %9234 = vmatprep.subr.mxu0 0.0
  %9235 = vmatpush1.msra.mxu0 0.0
  %9236 = vmatprep.subr.mxu0 0.0
  %9237 = vmatpush1.msra.mxu0 0.0
  %9238 = vmatprep.subr.mxu0 0.0
  %9239 = vmatpush1.msra.mxu0 0.0
  %9240 = vmatprep.subr.mxu0 0.0
  %9241 = vmatpush1.msra.mxu0 0.0
  %9242 = vmatprep.subr.mxu0 0.0
  %9243 = vmatpush1.msra.mxu0 0.0
  %9244 = vmatprep.subr.mxu0 0.0
  %9245 = vmatpush1.msra.mxu0 0.0
  %9246 = vmatprep.subr.mxu0 0.0
  %9247 = vmatpush1.msra.mxu0 0.0
  %9248 = vmatprep.subr.mxu0 0.0
  %9249 = vmatpush1.msra.mxu0 0.0
  %9250 = vmatprep.subr.mxu0 0.0
  %9251 = vmatpush1.msra.mxu0 0.0
  %9252 = vmatprep.subr.mxu0 0.0
  %9253 = vmatpush1.msra.mxu0 0.0
  %9254 = vmatprep.subr.mxu0 0.0
  %9255 = vmatpush1.msra.mxu0 0.0
  %9256 = vmatprep.subr.mxu0 0.0
  %9257 = vmatpush1.msra.mxu0 0.0
  %9258 = vmatprep.subr.mxu0 0.0
  %9259 = vmatpush1.msra.mxu0 0.0
  %9260 = vmatprep.mubr.f32.mxu0 0.0
  %9261 = vmatmul.mubr.f32.gmra.mrb[0].mxu0 %v9191
  %v9262 = vpop.f32.mrb[0].mxu0
  %v9263 = vadd.f32 %v9187, %v9262
  %v9264 = vpop.f32.mrb[0].mxu0
  %9265 = vdwg.mxu0
  %9266 = vst [vmem:[%s12] sm:$0xff] %v9263
  // Predicated region
  $region50: #{cnn_stl10_forward.3} parent=0 // pred_check
    _
  $region51: #{cnn_stl10_forward.3} parent=0 // pred_check_branch
    %9268 = sbr.rel (0) target = $region53
  $region52: #{cnn_stl10_forward.3} parent=0 // pred_region
    _
  $region53: #{cnn_stl10_forward.3} parent=0 // pred_fallthru
    _
  // Predicated region
  $region54: #{cnn_stl10_forward.3} parent=0 // pred_check
    _
  $region55: #{cnn_stl10_forward.3} parent=0 // pred_check_branch
    %9270 = sbr.rel (0) target = $region57
  $region56: #{cnn_stl10_forward.3} parent=0 // pred_region
    _
  $region57: #{cnn_stl10_forward.3} parent=0 // pred_fallthru
    _

</llo_original>
